<compile_context>
chip_gen: v7x
topology: tpu7x:2x2x1
jax: 0.10.0
libtpu: 0.0.40
codegen_flags: <defaults>
</compile_context>

<pallas_src>
import jax
import jax.numpy as jnp
from jax.experimental import pallas as pl
from jax.experimental.pallas import tpu as pltpu

K_DIM = 1024  # fixed by the module: weights = randn(1024, 1024)
N_DIM = 1024


def _mm_relu_sqrt_kernel(x_ref, w_ref, o_ref):
    """Grid = (N // tn,). Full-K, full-M dot per N panel; fused ReLU + sqrt."""
    x = x_ref[...]
    w = w_ref[...]
    if w.dtype == jnp.bfloat16:
        # bf16-weight fast path: cast x on the VPU (nearly free) so the MXU
        # runs a single bf16 pass with f32 accumulation; halves W HBM bytes.
        acc = jnp.dot(x.astype(jnp.bfloat16), w,
                      preferred_element_type=jnp.float32)
    else:
        # Explicit HIGHEST precision to match torch.mm float32 numerics
        # (TPU DEFAULT would demote f32 operands to a single bf16 pass).
        acc = jnp.dot(x, w, preferred_element_type=jnp.float32,
                      precision=jax.lax.Precision.HIGHEST)
    # Fused epilogue: ReLU on the VPU, sqrt on the EUP slot -- hidden under
    # the MXU / W-panel DMA.
    o_ref[...] = jnp.sqrt(jnp.maximum(acc, 0.0)).astype(o_ref.dtype)


def _default_tn():
    """Per-generation N-panel width (from the perf review)."""
    try:
        kind = jax.devices()[0].device_kind.lower()
    except Exception:
        return 256
    if "v5" in kind:
        return 512  # keep 2 big steps; multi-pass f32 dot hides the W DMA
    return 256      # v6e: ~wash; v7x: 2 steps per TC so DMA pipelines


def mm_relu_sqrt(inputs, weights, *, tn=None, bf16_weights=False):
    """out = sqrt(relu(inputs @ weights)) as one fused Pallas kernel.

    bf16_weights=True halves the dominant W HBM stream (~40% faster on
    v5e/v6e) but deviates from torch.mm float32 numerics; default is the
    faithful f32/HIGHEST path.
    """
    M, K = inputs.shape
    K2, N = weights.shape
    assert K == K2, "inner dimensions must match"
    # (8, 128) tiling constraint on the resident (M, K) x block.
    assert M % 8 == 0, "M must be a multiple of 8 (sublane granule)"
    # TODO(synk): pad M up to the next multiple of 8 (and slice the output)
    # if ragged batch sizes ever show up, instead of asserting.

    if tn is None:
        tn = _default_tn()
    assert N % tn == 0 and tn % 128 == 0, "tn must be a lane-dense divisor of N"

    if bf16_weights:
        weights = weights.astype(jnp.bfloat16)

    out_dtype = inputs.dtype
    grid = (N // tn,)

    cost = pl.CostEstimate(
        flops=2 * M * K * N,
        transcendentals=M * N,  # sqrt epilogue
        bytes_accessed=(M * K * inputs.dtype.itemsize
                        + K * N * weights.dtype.itemsize
                        + M * N * jnp.dtype(out_dtype).itemsize),
    )

    return pl.pallas_call(
        _mm_relu_sqrt_kernel,
        out_shape=jax.ShapeDtypeStruct((M, N), out_dtype),
        grid_spec=pl.GridSpec(
            grid=grid,
            in_specs=[
                # x: full (M, K) block, constant block index -> DMA'd from HBM
                # once, stays resident in VMEM across every N panel.
                pl.BlockSpec((M, K), lambda j: (0, 0)),
                # w: stream full-K column panels of width tn; the auto-pipeline
                # double-buffers them against the MXU.
                pl.BlockSpec((K, tn), lambda j: (0, j)),
            ],
            # Lane-dense output tile (tn is a multiple of 128) -> unmasked vst.
            out_specs=pl.BlockSpec((M, tn), lambda j: (0, j)),
        ),
        compiler_params=pltpu.CompilerParams(
            # Independent N panels: lets v7x shard the grid across its 2 TCs.
            dimension_semantics=("parallel",),
        ),
        cost_estimate=cost,
    )(inputs, weights)


if __name__ == "__main__":
    key = jax.random.PRNGKey(0)
    k_x, k_w = jax.random.split(key)

    # Module shapes: weights (1024, 1024); inputs must be (M, 1024) for mm.
    M = 128
    x = jax.random.normal(k_x, (M, K_DIM), dtype=jnp.float32)
    w = jax.random.normal(k_w, (K_DIM, N_DIM), dtype=jnp.float32)

    out = mm_relu_sqrt(x, w)
    out = jax.block_until_ready(out)

    # Reference at matching float32/HIGHEST matmul precision.
    mm_ref = jnp.dot(x, w, precision=jax.lax.Precision.HIGHEST)
    ref = jnp.sqrt(jnp.maximum(mm_ref, 0.0))

    assert out.shape == (M, N_DIM)
    max_diff = float(jnp.max(jnp.abs(out - ref)))
    # atol is loosened only for elements sitting exactly on the ReLU boundary,
    # where sqrt amplifies a ~1e-4 accumulation-order difference.
    assert jnp.allclose(out, ref, atol=2e-2, rtol=1e-3), max_diff

    print("KERNEL_OK")
</pallas_src>

<mosaic_0001>
module attributes {stable_mosaic.version = 11 : i64} {
  func.func @_mm_relu_sqrt_kernel(%arg0: i32, %arg1: memref<128x1024xf32, #tpu.memory_space<vmem>>, %arg2: memref<1024x256xf32, #tpu.memory_space<vmem>>, %arg3: memref<128x256xf32, #tpu.memory_space<vmem>>) attributes {dimension_semantics = [#tpu.dimension_semantics<parallel>], iteration_bounds = array<i64: 4>, scalar_prefetch = 0 : i64, scratch_operands = 0 : i64, tpu.core_type = #tpu.core_type<tc>, window_params = [{pipeline_mode = #tpu.pipeline_mode<synchronous>, transform_indices = @transform_0, window_bounds = array<i64: 128, 1024>}, {transform_indices = @transform_1, window_bounds = array<i64: 1024, 256>}, {transform_indices = @transform_2, window_bounds = array<i64: 128, 256>}]} {
    %c0 = arith.constant 0 : index
    %c0_0 = arith.constant 0 : index
    %0 = vector.load %arg1[%c0, %c0_0] : memref<128x1024xf32, #tpu.memory_space<vmem>>, vector<128x1024xf32>
    %c0_1 = arith.constant 0 : index
    %c0_2 = arith.constant 0 : index
    %1 = vector.load %arg2[%c0_1, %c0_2] : memref<1024x256xf32, #tpu.memory_space<vmem>>, vector<1024x256xf32>
    %cst = arith.constant dense<0.000000e+00> : vector<128x256xf32>
    %2 = tpu.matmul %0, %1, %cst {dimension_numbers = #tpu.dot_dimension_numbers<[1], [0], [0], [1], [0, 0, 1, 1], [], []>, precision = #tpu.contract_precision<fp32>} : vector<128x1024xf32>, vector<1024x256xf32>, vector<128x256xf32> -> vector<128x256xf32>
    %cst_3 = arith.constant 0.000000e+00 : f32
    %3 = vector.broadcast %cst_3 : f32 to vector<128x256xf32>
    %4 = arith.maximumf %2, %3 : vector<128x256xf32>
    %5 = math.sqrt %4 : vector<128x256xf32>
    %c0_4 = arith.constant 0 : index
    %c0_5 = arith.constant 0 : index
    %6 = vector.load %arg3[%c0_4, %c0_5] : memref<128x256xf32, #tpu.memory_space<vmem>>, vector<128x256xf32>
    tpu.vector_store %arg3[%c0_4, %c0_5], %5 {strides = array<i32>} : memref<128x256xf32, #tpu.memory_space<vmem>>, vector<128x256xf32>,
    return
  }
  func.func @transform_0(%arg0: i32) -> (i32, i32) {
    %c0_i32 = arith.constant 0 : i32
    %c0_i32_0 = arith.constant 0 : i32
    %c0_i32_1 = arith.constant 0 : i32
    return %c0_i32, %c0_i32_0 : i32, i32
  }
  func.func @transform_1(%arg0: i32) -> (i32, i32) {
    %c0_i32 = arith.constant 0 : i32
    %c0_i32_0 = arith.constant 0 : i32
    return %c0_i32, %arg0 : i32, i32
  }
  func.func @transform_2(%arg0: i32) -> (i32, i32) {
    %c0_i32 = arith.constant 0 : i32
    %c0_i32_0 = arith.constant 0 : i32
    return %c0_i32, %arg0 : i32, i32
  }
}

</mosaic_0001>

<llo_original>
// kernel: tpu_custom_call.1
$region0: #{tpu_custom_call.1}
  #allocation0 [shape = 'u32[]', space=smem, size = 0x4, offset = 0x4, fixed_abs, tag = 'smem constant byte address 0x4 - core index']
  #allocation1 [shape = 'u32[144,128]{1,0:T(1,128)}', space=vmem, size = 0x12000, scoped, tag = 'internal scratch']
  %s0 = inlined_call_operand.hbm [shape: f32[128,1024], index: 0, kind: input, shape index: {}]
  %s1 = inlined_call_operand.hbm [shape: f32[1024,1024], index: 1, kind: input, shape index: {}]
  %s2 = inlined_call_operand.hbm [shape: f32[128,1024], index: 2, kind: output, shape index: {}]
  %s3 = sld [smem:[#allocation0]]
  $region49: #{tpu_custom_call.1} parent=0
    _
  %s5 = ssub.s32 1, %s3
  %s6 = scalar_select 0, %s5, %s3
  $region1: #{tpu_custom_call.1} parent=0
    #allocation2 [shape = 'u8[524288]{0}', space=vmem, size = 0x80000, scoped, tag = 'input window, operand 0, single buffered']
    #allocation3 [shape = 's32[2]{0}', space=sflag, size = 0x8, scoped, tag = 'scoped memory for tpu_custom_call.1']
    #allocation4 [shape = 's32[2]{0}', space=sflag, size = 0x8, scoped, tag = 'scoped memory for tpu_custom_call.1']
    #allocation5 [shape = 'u8[2097152]{0}', space=vmem, size = 0x200000, scoped, tag = 'input window, operand 1']
    #allocation6 [shape = 's32[2]{0}', space=sflag, size = 0x8, scoped, tag = 'scoped memory for tpu_custom_call.1']
    #allocation7 [shape = 'u8[262144]{0}', space=vmem, size = 0x40000, scoped, tag = 'output window, operand 0']
    %7 = vsyncpa [#allocation3], 0
    %8 = vsyncpa [#allocation6], 0
    %s9 = scalar_lea.sflag [#allocation6], 1
    %10 = vsyncpa %s9, 0
    %11 = vsyncpa [#allocation4], 0
    %s12 = scalar_lea.sflag [#allocation4], 1
    %13 = vsyncpa %s12, 0
    loop: start=0, step=1, limit=6
    $region2: #{tpu_custom_call.1} parent=1 // loop_pre_header
      _
    $region3: #{tpu_custom_call.1} parent=1 // loop_header
      %s15 = sphi 0, %s19
      %p16 = scmp.ge.s32.totalorder %s15, 6
      %s23 = sphi 0, %s23
      %s25 = sphi 0, %s23
      %s26 = sphi 0, %s25
      %s40 = sphi 0, %s26
      %s46 = sphi 0, %s48
      %s49 = sphi 0, %s46
      %s50 = sphi 0, %s49
      %s66 = sphi 0, %s50
      %s72 = sphi 0, %s74
      %s75 = sphi 0, %s72
      %s76 = sphi 0, %s75
      %s92 = sphi 0, %s76
    $region4: #{tpu_custom_call.1} parent=1 // loop_header_branch
      %18 = sbr.rel (%p16) target = $region8
    $region5: #{tpu_custom_call.1} parent=1 // loop_body
      %s20 = ssub.s32 %s15, 1
      %s21 = ssub.s32 %s15, 2
      %s22 = sadd.s32 %s15, 1
      %s24 = sadd.s32 %s23, 1
      %p27 = scmp.eq.s32.totalorder %s15, 3
      %p28 = scmp.ne.s32.totalorder %s23, %s25
      %p29 = scmp.eq.s32.totalorder %s15, 0
      %p30 = por %p28, %p29
      %p31 = scmp.ne.s32.totalorder %s23, %s25
      %p32 = scmp.eq.s32.totalorder %s20, 3
      %p33 = por %p31, %p32
      %p34 = scmp.ne.s32.totalorder %s25, %s26
      %p35 = scmp.eq.s32.totalorder %s20, 0
      %p36 = por %p34, %p35
      %p37 = scmp.ne.s32.totalorder %s25, %s26
      %p38 = scmp.eq.s32.totalorder %s21, 3
      %p39 = por %p37, %p38
      %p41 = scmp.ne.s32.totalorder %s26, %s40
      %p42 = scmp.eq.s32.totalorder %s21, 0
      %p43 = por %p41, %p42
      %s44 = ssub.s32 %s15, %s22
      %p45 = scmp.eq.s32.totalorder %s44, 0
      %s47 = sadd.s32 %s46, 1
      %s48 = scalar_select %p45, %s46, %s47
      %p51 = pneg %p45
      %p52 = scmp.eq.s32.totalorder %s15, 3
      %p53 = por %p51, %p52
      %p54 = scmp.ne.s32.totalorder %s46, %s49
      %p55 = scmp.eq.s32.totalorder %s15, 0
      %p56 = por %p54, %p55
      %p57 = scmp.ne.s32.totalorder %s46, %s49
      %p58 = scmp.eq.s32.totalorder %s20, 3
      %p59 = por %p57, %p58
      %p60 = scmp.ne.s32.totalorder %s49, %s50
      %p61 = scmp.eq.s32.totalorder %s20, 0
      %p62 = por %p60, %p61
      %p63 = scmp.ne.s32.totalorder %s49, %s50
      %p64 = scmp.eq.s32.totalorder %s21, 3
      %p65 = por %p63, %p64
      %p67 = scmp.ne.s32.totalorder %s50, %s66
      %p68 = scmp.eq.s32.totalorder %s21, 0
      %p69 = por %p67, %p68
      %s70 = ssub.s32 %s15, %s22
      %p71 = scmp.eq.s32.totalorder %s70, 0
      %s73 = sadd.s32 %s72, 1
      %s74 = scalar_select %p71, %s72, %s73
      %p77 = pneg %p71
      %p78 = scmp.eq.s32.totalorder %s15, 3
      %p79 = por %p77, %p78
      %p80 = scmp.ne.s32.totalorder %s72, %s75
      %p81 = scmp.eq.s32.totalorder %s15, 0
      %p82 = por %p80, %p81
      %p83 = scmp.ne.s32.totalorder %s72, %s75
      %p84 = scmp.eq.s32.totalorder %s20, 3
      %p85 = por %p83, %p84
      %p86 = scmp.ne.s32.totalorder %s75, %s76
      %p87 = scmp.eq.s32.totalorder %s20, 0
      %p88 = por %p86, %p87
      %p89 = scmp.ne.s32.totalorder %s75, %s76
      %p90 = scmp.eq.s32.totalorder %s21, 3
      %p91 = por %p89, %p90
      %p93 = scmp.ne.s32.totalorder %s76, %s92
      %p94 = scmp.eq.s32.totalorder %s21, 0
      %p95 = por %p93, %p94
      %p96 = scmp.le.s32.totalorder 1, %s15
      %p97 = scmp.lt.s32.totalorder %s15, 5
      %p98 = pnand %p96, %p97
      %p99 = pneg %p98
      // Predicated region
      $region9: #{tpu_custom_call.1} parent=5 // pred_check
        _
      $region10: #{tpu_custom_call.1} parent=5 // pred_check_branch
        %101 = sbr.rel (%p98) target = $region12
      $region11: #{tpu_custom_call.1} parent=5 // pred_region
        %s102 = ssub.s32 %s15, 1
        // Predicated region
        $region13: #{tpu_custom_call.1} parent=11 // pred_check
          %p103 = pneg %p36
        $region14: #{tpu_custom_call.1} parent=11 // pred_check_branch
          %105 = sbr.rel (%p103) target = $region16
        $region15: #{tpu_custom_call.1} parent=11 // pred_region
          %s107 = ssub.s32 16384, 16384
          %108 = vsyncadd [#allocation3], %s107
          %s109 = sshll.u32 [#allocation2], 4
          %s110 = int_to_ptr.vmem [resolvable:$true] %s109
          %115 = dma.hbm_to_vmem [thread:$0]  %s0, 16384, %s110, [#allocation3], 1024, 1024, 64
        $region16: #{tpu_custom_call.1} parent=11 // pred_fallthru
          _
      $region12: #{tpu_custom_call.1} parent=5 // pred_fallthru
        _
      %p116 = scmp.lt.s32.totalorder %s15, 4
      // Predicated region
      $region17: #{tpu_custom_call.1} parent=5 // pred_check
        %p117 = pneg %p116
      $region18: #{tpu_custom_call.1} parent=5 // pred_check_branch
        %119 = sbr.rel (%p117) target = $region20
      $region19: #{tpu_custom_call.1} parent=5 // pred_region
        // Predicated region
        $region21: #{tpu_custom_call.1} parent=19 // pred_check
          %p120 = pneg %p56
        $region22: #{tpu_custom_call.1} parent=19 // pred_check_branch
          %122 = sbr.rel (%p120) target = $region24
        $region23: #{tpu_custom_call.1} parent=19 // pred_region
          %s123 = sand.u32 %s46, 1
          %s124 = scalar_lea.sflag [#allocation6], %s123
          %s125 = sand.u32 %s46, 1
          %s126 = smul.addr %s125, 2048
          %s127 = scalar_lea.vmem [#allocation5], %s126
          %s128 = smul.u32 2, %s15
          %s130 = ssub.s32 32768, 32768
          %131 = vsyncadd %s124, %s130
          %s132 = smul.addr %s128, 128
          %s133 = scalar_lea.hbm %s1, %s132
          %s134 = sshll.u32 %s127, 4
          %s135 = int_to_ptr.vmem [resolvable:$true] %s134
          %140 = dma.hbm_to_vmem [thread:$0]  %s133, 32768, %s135, %s124, 1024, 256, 16
        $region24: #{tpu_custom_call.1} parent=19 // pred_fallthru
          _
      $region20: #{tpu_custom_call.1} parent=5 // pred_fallthru
        _
      %p141 = scmp.le.s32.totalorder 1, %s15
      %p142 = scmp.lt.s32.totalorder %s15, 5
      %p143 = pnand %p141, %p142
      %p144 = pneg %p143
      // Predicated region
      $region25: #{tpu_custom_call.1} parent=5 // pred_check
        _
      $region26: #{tpu_custom_call.1} parent=5 // pred_check_branch
        %146 = sbr.rel (%p143) target = $region28
      $region27: #{tpu_custom_call.1} parent=5 // pred_region
        %s147 = ssub.s32 %s15, 1
        // Predicated region
        $region29: #{tpu_custom_call.1} parent=27 // pred_check
          %p148 = pneg %p36
        $region30: #{tpu_custom_call.1} parent=27 // pred_check_branch
          %150 = sbr.rel (%p148) target = $region32
        $region31: #{tpu_custom_call.1} parent=27 // pred_region
          %151 = dma.done [#allocation3], 16384
        $region32: #{tpu_custom_call.1} parent=27 // pred_fallthru
          _
        %s152 = sand.u32 %s49, 1
        %s153 = scalar_lea.sflag [#allocation6], %s152
        %s154 = sand.u32 %s49, 1
        %s155 = smul.addr %s154, 2048
        %s156 = scalar_lea.vmem [#allocation5], %s155
        // Predicated region
        $region33: #{tpu_custom_call.1} parent=27 // pred_check
          %p157 = pneg %p62
        $region34: #{tpu_custom_call.1} parent=27 // pred_check_branch
          %159 = sbr.rel (%p157) target = $region36
        $region35: #{tpu_custom_call.1} parent=27 // pred_region
          %160 = dma.done %s153, 32768
        $region36: #{tpu_custom_call.1} parent=27 // pred_fallthru
          _
        %p161 = pneg %p36
        %p162 = pneg %p33
        %s163 = sand.u32 %s49, 1
        %s164 = scalar_lea.sflag [#allocation6], %s163
        %s165 = sand.u32 %s49, 1
        %s166 = smul.addr %s165, 2048
        %s167 = scalar_lea.vmem [#allocation5], %s166
        %p168 = pneg %p62
        %p169 = pneg %p59
        %p170 = pneg %p88
        %p171 = pneg %p85
        %s172 = sand.u32 %s75, 1
        %s173 = scalar_lea.sflag [#allocation4], %s172
        %s174 = sand.u32 %s75, 1
        %s175 = smul.addr %s174, 256
        %s176 = scalar_lea.vmem [#allocation7], %s175
        %s177 = smul.u32 2, %s20
        %s178 = smul.u32 2, %s20
        %v179 = vld [vmem:[#allocation2] sm:$0xff]
        %v180 = vld [vmem:[#allocation2 + $0x8] sm:$0xff]
        %v181 = vld [vmem:[#allocation2 + $0x10] sm:$0xff]
        %v182 = vld [vmem:[#allocation2 + $0x18] sm:$0xff]
        %v183 = vld [vmem:[#allocation2 + $0x20] sm:$0xff]
        %v184 = vld [vmem:[#allocation2 + $0x28] sm:$0xff]
        %v185 = vld [vmem:[#allocation2 + $0x30] sm:$0xff]
        %v186 = vld [vmem:[#allocation2 + $0x38] sm:$0xff]
        %v187 = vld [vmem:[#allocation2 + $0x40] sm:$0xff]
        %v188 = vld [vmem:[#allocation2 + $0x48] sm:$0xff]
        %v189 = vld [vmem:[#allocation2 + $0x50] sm:$0xff]
        %v190 = vld [vmem:[#allocation2 + $0x58] sm:$0xff]
        %v191 = vld [vmem:[#allocation2 + $0x60] sm:$0xff]
        %v192 = vld [vmem:[#allocation2 + $0x68] sm:$0xff]
        %v193 = vld [vmem:[#allocation2 + $0x70] sm:$0xff]
        %v194 = vld [vmem:[#allocation2 + $0x78] sm:$0xff]
        %v195 = vld [vmem:[#allocation2 + $0x80] sm:$0xff]
        %v196 = vld [vmem:[#allocation2 + $0x88] sm:$0xff]
        %v197 = vld [vmem:[#allocation2 + $0x90] sm:$0xff]
        %v198 = vld [vmem:[#allocation2 + $0x98] sm:$0xff]
        %v199 = vld [vmem:[#allocation2 + $0xa0] sm:$0xff]
        %v200 = vld [vmem:[#allocation2 + $0xa8] sm:$0xff]
        %v201 = vld [vmem:[#allocation2 + $0xb0] sm:$0xff]
        %v202 = vld [vmem:[#allocation2 + $0xb8] sm:$0xff]
        %v203 = vld [vmem:[#allocation2 + $0xc0] sm:$0xff]
        %v204 = vld [vmem:[#allocation2 + $0xc8] sm:$0xff]
        %v205 = vld [vmem:[#allocation2 + $0xd0] sm:$0xff]
        %v206 = vld [vmem:[#allocation2 + $0xd8] sm:$0xff]
        %v207 = vld [vmem:[#allocation2 + $0xe0] sm:$0xff]
        %v208 = vld [vmem:[#allocation2 + $0xe8] sm:$0xff]
        %v209 = vld [vmem:[#allocation2 + $0xf0] sm:$0xff]
        %v210 = vld [vmem:[#allocation2 + $0xf8] sm:$0xff]
        %v211 = vld [vmem:[#allocation2 + $0x100] sm:$0xff]
        %v212 = vld [vmem:[#allocation2 + $0x108] sm:$0xff]
        %v213 = vld [vmem:[#allocation2 + $0x110] sm:$0xff]
        %v214 = vld [vmem:[#allocation2 + $0x118] sm:$0xff]
        %v215 = vld [vmem:[#allocation2 + $0x120] sm:$0xff]
        %v216 = vld [vmem:[#allocation2 + $0x128] sm:$0xff]
        %v217 = vld [vmem:[#allocation2 + $0x130] sm:$0xff]
        %v218 = vld [vmem:[#allocation2 + $0x138] sm:$0xff]
        %v219 = vld [vmem:[#allocation2 + $0x140] sm:$0xff]
        %v220 = vld [vmem:[#allocation2 + $0x148] sm:$0xff]
        %v221 = vld [vmem:[#allocation2 + $0x150] sm:$0xff]
        %v222 = vld [vmem:[#allocation2 + $0x158] sm:$0xff]
        %v223 = vld [vmem:[#allocation2 + $0x160] sm:$0xff]
        %v224 = vld [vmem:[#allocation2 + $0x168] sm:$0xff]
        %v225 = vld [vmem:[#allocation2 + $0x170] sm:$0xff]
        %v226 = vld [vmem:[#allocation2 + $0x178] sm:$0xff]
        %v227 = vld [vmem:[#allocation2 + $0x180] sm:$0xff]
        %v228 = vld [vmem:[#allocation2 + $0x188] sm:$0xff]
        %v229 = vld [vmem:[#allocation2 + $0x190] sm:$0xff]
        %v230 = vld [vmem:[#allocation2 + $0x198] sm:$0xff]
        %v231 = vld [vmem:[#allocation2 + $0x1a0] sm:$0xff]
        %v232 = vld [vmem:[#allocation2 + $0x1a8] sm:$0xff]
        %v233 = vld [vmem:[#allocation2 + $0x1b0] sm:$0xff]
        %v234 = vld [vmem:[#allocation2 + $0x1b8] sm:$0xff]
        %v235 = vld [vmem:[#allocation2 + $0x1c0] sm:$0xff]
        %v236 = vld [vmem:[#allocation2 + $0x1c8] sm:$0xff]
        %v237 = vld [vmem:[#allocation2 + $0x1d0] sm:$0xff]
        %v238 = vld [vmem:[#allocation2 + $0x1d8] sm:$0xff]
        %v239 = vld [vmem:[#allocation2 + $0x1e0] sm:$0xff]
        %v240 = vld [vmem:[#allocation2 + $0x1e8] sm:$0xff]
        %v241 = vld [vmem:[#allocation2 + $0x1f0] sm:$0xff]
        %v242 = vld [vmem:[#allocation2 + $0x1f8] sm:$0xff]
        %v243 = vld [vmem:[#allocation2 + $0x200] sm:$0xff]
        %v244 = vld [vmem:[#allocation2 + $0x208] sm:$0xff]
        %v245 = vld [vmem:[#allocation2 + $0x210] sm:$0xff]
        %v246 = vld [vmem:[#allocation2 + $0x218] sm:$0xff]
        %v247 = vld [vmem:[#allocation2 + $0x220] sm:$0xff]
        %v248 = vld [vmem:[#allocation2 + $0x228] sm:$0xff]
        %v249 = vld [vmem:[#allocation2 + $0x230] sm:$0xff]
        %v250 = vld [vmem:[#allocation2 + $0x238] sm:$0xff]
        %v251 = vld [vmem:[#allocation2 + $0x240] sm:$0xff]
        %v252 = vld [vmem:[#allocation2 + $0x248] sm:$0xff]
        %v253 = vld [vmem:[#allocation2 + $0x250] sm:$0xff]
        %v254 = vld [vmem:[#allocation2 + $0x258] sm:$0xff]
        %v255 = vld [vmem:[#allocation2 + $0x260] sm:$0xff]
        %v256 = vld [vmem:[#allocation2 + $0x268] sm:$0xff]
        %v257 = vld [vmem:[#allocation2 + $0x270] sm:$0xff]
        %v258 = vld [vmem:[#allocation2 + $0x278] sm:$0xff]
        %v259 = vld [vmem:[#allocation2 + $0x280] sm:$0xff]
        %v260 = vld [vmem:[#allocation2 + $0x288] sm:$0xff]
        %v261 = vld [vmem:[#allocation2 + $0x290] sm:$0xff]
        %v262 = vld [vmem:[#allocation2 + $0x298] sm:$0xff]
        %v263 = vld [vmem:[#allocation2 + $0x2a0] sm:$0xff]
        %v264 = vld [vmem:[#allocation2 + $0x2a8] sm:$0xff]
        %v265 = vld [vmem:[#allocation2 + $0x2b0] sm:$0xff]
        %v266 = vld [vmem:[#allocation2 + $0x2b8] sm:$0xff]
        %v267 = vld [vmem:[#allocation2 + $0x2c0] sm:$0xff]
        %v268 = vld [vmem:[#allocation2 + $0x2c8] sm:$0xff]
        %v269 = vld [vmem:[#allocation2 + $0x2d0] sm:$0xff]
        %v270 = vld [vmem:[#allocation2 + $0x2d8] sm:$0xff]
        %v271 = vld [vmem:[#allocation2 + $0x2e0] sm:$0xff]
        %v272 = vld [vmem:[#allocation2 + $0x2e8] sm:$0xff]
        %v273 = vld [vmem:[#allocation2 + $0x2f0] sm:$0xff]
        %v274 = vld [vmem:[#allocation2 + $0x2f8] sm:$0xff]
        %v275 = vld [vmem:[#allocation2 + $0x300] sm:$0xff]
        %v276 = vld [vmem:[#allocation2 + $0x308] sm:$0xff]
        %v277 = vld [vmem:[#allocation2 + $0x310] sm:$0xff]
        %v278 = vld [vmem:[#allocation2 + $0x318] sm:$0xff]
        %v279 = vld [vmem:[#allocation2 + $0x320] sm:$0xff]
        %v280 = vld [vmem:[#allocation2 + $0x328] sm:$0xff]
        %v281 = vld [vmem:[#allocation2 + $0x330] sm:$0xff]
        %v282 = vld [vmem:[#allocation2 + $0x338] sm:$0xff]
        %v283 = vld [vmem:[#allocation2 + $0x340] sm:$0xff]
        %v284 = vld [vmem:[#allocation2 + $0x348] sm:$0xff]
        %v285 = vld [vmem:[#allocation2 + $0x350] sm:$0xff]
        %v286 = vld [vmem:[#allocation2 + $0x358] sm:$0xff]
        %v287 = vld [vmem:[#allocation2 + $0x360] sm:$0xff]
        %v288 = vld [vmem:[#allocation2 + $0x368] sm:$0xff]
        %v289 = vld [vmem:[#allocation2 + $0x370] sm:$0xff]
        %v290 = vld [vmem:[#allocation2 + $0x378] sm:$0xff]
        %v291 = vld [vmem:[#allocation2 + $0x380] sm:$0xff]
        %v292 = vld [vmem:[#allocation2 + $0x388] sm:$0xff]
        %v293 = vld [vmem:[#allocation2 + $0x390] sm:$0xff]
        %v294 = vld [vmem:[#allocation2 + $0x398] sm:$0xff]
        %v295 = vld [vmem:[#allocation2 + $0x3a0] sm:$0xff]
        %v296 = vld [vmem:[#allocation2 + $0x3a8] sm:$0xff]
        %v297 = vld [vmem:[#allocation2 + $0x3b0] sm:$0xff]
        %v298 = vld [vmem:[#allocation2 + $0x3b8] sm:$0xff]
        %v299 = vld [vmem:[#allocation2 + $0x3c0] sm:$0xff]
        %v300 = vld [vmem:[#allocation2 + $0x3c8] sm:$0xff]
        %v301 = vld [vmem:[#allocation2 + $0x3d0] sm:$0xff]
        %v302 = vld [vmem:[#allocation2 + $0x3d8] sm:$0xff]
        %v303 = vld [vmem:[#allocation2 + $0x3e0] sm:$0xff]
        %v304 = vld [vmem:[#allocation2 + $0x3e8] sm:$0xff]
        %v305 = vld [vmem:[#allocation2 + $0x3f0] sm:$0xff]
        %v306 = vld [vmem:[#allocation2 + $0x3f8] sm:$0xff]
        %v307 = vld [vmem:[%s156] sm:$0xff]
        %v308 = vld [vmem:[%s156 + $0x8] sm:$0xff]
        %v309 = vld [vmem:[%s156 + $0x10] sm:$0xff]
        %v310 = vld [vmem:[%s156 + $0x18] sm:$0xff]
        %v311 = vld [vmem:[%s156 + $0x20] sm:$0xff]
        %v312 = vld [vmem:[%s156 + $0x28] sm:$0xff]
        %v313 = vld [vmem:[%s156 + $0x30] sm:$0xff]
        %v314 = vld [vmem:[%s156 + $0x38] sm:$0xff]
        %v315 = vld [vmem:[%s156 + $0x40] sm:$0xff]
        %v316 = vld [vmem:[%s156 + $0x48] sm:$0xff]
        %v317 = vld [vmem:[%s156 + $0x50] sm:$0xff]
        %v318 = vld [vmem:[%s156 + $0x58] sm:$0xff]
        %v319 = vld [vmem:[%s156 + $0x60] sm:$0xff]
        %v320 = vld [vmem:[%s156 + $0x68] sm:$0xff]
        %v321 = vld [vmem:[%s156 + $0x70] sm:$0xff]
        %v322 = vld [vmem:[%s156 + $0x78] sm:$0xff]
        %v323 = vld [vmem:[%s156 + $0x80] sm:$0xff]
        %v324 = vld [vmem:[%s156 + $0x88] sm:$0xff]
        %v325 = vld [vmem:[%s156 + $0x90] sm:$0xff]
        %v326 = vld [vmem:[%s156 + $0x98] sm:$0xff]
        %v327 = vld [vmem:[%s156 + $0xa0] sm:$0xff]
        %v328 = vld [vmem:[%s156 + $0xa8] sm:$0xff]
        %v329 = vld [vmem:[%s156 + $0xb0] sm:$0xff]
        %v330 = vld [vmem:[%s156 + $0xb8] sm:$0xff]
        %v331 = vld [vmem:[%s156 + $0xc0] sm:$0xff]
        %v332 = vld [vmem:[%s156 + $0xc8] sm:$0xff]
        %v333 = vld [vmem:[%s156 + $0xd0] sm:$0xff]
        %v334 = vld [vmem:[%s156 + $0xd8] sm:$0xff]
        %v335 = vld [vmem:[%s156 + $0xe0] sm:$0xff]
        %v336 = vld [vmem:[%s156 + $0xe8] sm:$0xff]
        %v337 = vld [vmem:[%s156 + $0xf0] sm:$0xff]
        %v338 = vld [vmem:[%s156 + $0xf8] sm:$0xff]
        %v339 = vld [vmem:[%s156 + $0x100] sm:$0xff]
        %v340 = vld [vmem:[%s156 + $0x108] sm:$0xff]
        %v341 = vld [vmem:[%s156 + $0x110] sm:$0xff]
        %v342 = vld [vmem:[%s156 + $0x118] sm:$0xff]
        %v343 = vld [vmem:[%s156 + $0x120] sm:$0xff]
        %v344 = vld [vmem:[%s156 + $0x128] sm:$0xff]
        %v345 = vld [vmem:[%s156 + $0x130] sm:$0xff]
        %v346 = vld [vmem:[%s156 + $0x138] sm:$0xff]
        %v347 = vld [vmem:[%s156 + $0x140] sm:$0xff]
        %v348 = vld [vmem:[%s156 + $0x148] sm:$0xff]
        %v349 = vld [vmem:[%s156 + $0x150] sm:$0xff]
        %v350 = vld [vmem:[%s156 + $0x158] sm:$0xff]
        %v351 = vld [vmem:[%s156 + $0x160] sm:$0xff]
        %v352 = vld [vmem:[%s156 + $0x168] sm:$0xff]
        %v353 = vld [vmem:[%s156 + $0x170] sm:$0xff]
        %v354 = vld [vmem:[%s156 + $0x178] sm:$0xff]
        %v355 = vld [vmem:[%s156 + $0x180] sm:$0xff]
        %v356 = vld [vmem:[%s156 + $0x188] sm:$0xff]
        %v357 = vld [vmem:[%s156 + $0x190] sm:$0xff]
        %v358 = vld [vmem:[%s156 + $0x198] sm:$0xff]
        %v359 = vld [vmem:[%s156 + $0x1a0] sm:$0xff]
        %v360 = vld [vmem:[%s156 + $0x1a8] sm:$0xff]
        %v361 = vld [vmem:[%s156 + $0x1b0] sm:$0xff]
        %v362 = vld [vmem:[%s156 + $0x1b8] sm:$0xff]
        %v363 = vld [vmem:[%s156 + $0x1c0] sm:$0xff]
        %v364 = vld [vmem:[%s156 + $0x1c8] sm:$0xff]
        %v365 = vld [vmem:[%s156 + $0x1d0] sm:$0xff]
        %v366 = vld [vmem:[%s156 + $0x1d8] sm:$0xff]
        %v367 = vld [vmem:[%s156 + $0x1e0] sm:$0xff]
        %v368 = vld [vmem:[%s156 + $0x1e8] sm:$0xff]
        %v369 = vld [vmem:[%s156 + $0x1f0] sm:$0xff]
        %v370 = vld [vmem:[%s156 + $0x1f8] sm:$0xff]
        %v371 = vld [vmem:[%s156 + $0x200] sm:$0xff]
        %v372 = vld [vmem:[%s156 + $0x208] sm:$0xff]
        %v373 = vld [vmem:[%s156 + $0x210] sm:$0xff]
        %v374 = vld [vmem:[%s156 + $0x218] sm:$0xff]
        %v375 = vld [vmem:[%s156 + $0x220] sm:$0xff]
        %v376 = vld [vmem:[%s156 + $0x228] sm:$0xff]
        %v377 = vld [vmem:[%s156 + $0x230] sm:$0xff]
        %v378 = vld [vmem:[%s156 + $0x238] sm:$0xff]
        %v379 = vld [vmem:[%s156 + $0x240] sm:$0xff]
        %v380 = vld [vmem:[%s156 + $0x248] sm:$0xff]
        %v381 = vld [vmem:[%s156 + $0x250] sm:$0xff]
        %v382 = vld [vmem:[%s156 + $0x258] sm:$0xff]
        %v383 = vld [vmem:[%s156 + $0x260] sm:$0xff]
        %v384 = vld [vmem:[%s156 + $0x268] sm:$0xff]
        %v385 = vld [vmem:[%s156 + $0x270] sm:$0xff]
        %v386 = vld [vmem:[%s156 + $0x278] sm:$0xff]
        %v387 = vld [vmem:[%s156 + $0x280] sm:$0xff]
        %v388 = vld [vmem:[%s156 + $0x288] sm:$0xff]
        %v389 = vld [vmem:[%s156 + $0x290] sm:$0xff]
        %v390 = vld [vmem:[%s156 + $0x298] sm:$0xff]
        %v391 = vld [vmem:[%s156 + $0x2a0] sm:$0xff]
        %v392 = vld [vmem:[%s156 + $0x2a8] sm:$0xff]
        %v393 = vld [vmem:[%s156 + $0x2b0] sm:$0xff]
        %v394 = vld [vmem:[%s156 + $0x2b8] sm:$0xff]
        %v395 = vld [vmem:[%s156 + $0x2c0] sm:$0xff]
        %v396 = vld [vmem:[%s156 + $0x2c8] sm:$0xff]
        %v397 = vld [vmem:[%s156 + $0x2d0] sm:$0xff]
        %v398 = vld [vmem:[%s156 + $0x2d8] sm:$0xff]
        %v399 = vld [vmem:[%s156 + $0x2e0] sm:$0xff]
        %v400 = vld [vmem:[%s156 + $0x2e8] sm:$0xff]
        %v401 = vld [vmem:[%s156 + $0x2f0] sm:$0xff]
        %v402 = vld [vmem:[%s156 + $0x2f8] sm:$0xff]
        %v403 = vld [vmem:[%s156 + $0x300] sm:$0xff]
        %v404 = vld [vmem:[%s156 + $0x308] sm:$0xff]
        %v405 = vld [vmem:[%s156 + $0x310] sm:$0xff]
        %v406 = vld [vmem:[%s156 + $0x318] sm:$0xff]
        %v407 = vld [vmem:[%s156 + $0x320] sm:$0xff]
        %v408 = vld [vmem:[%s156 + $0x328] sm:$0xff]
        %v409 = vld [vmem:[%s156 + $0x330] sm:$0xff]
        %v410 = vld [vmem:[%s156 + $0x338] sm:$0xff]
        %v411 = vld [vmem:[%s156 + $0x340] sm:$0xff]
        %v412 = vld [vmem:[%s156 + $0x348] sm:$0xff]
        %v413 = vld [vmem:[%s156 + $0x350] sm:$0xff]
        %v414 = vld [vmem:[%s156 + $0x358] sm:$0xff]
        %v415 = vld [vmem:[%s156 + $0x360] sm:$0xff]
        %v416 = vld [vmem:[%s156 + $0x368] sm:$0xff]
        %v417 = vld [vmem:[%s156 + $0x370] sm:$0xff]
        %v418 = vld [vmem:[%s156 + $0x378] sm:$0xff]
        %v419 = vld [vmem:[%s156 + $0x380] sm:$0xff]
        %v420 = vld [vmem:[%s156 + $0x388] sm:$0xff]
        %v421 = vld [vmem:[%s156 + $0x390] sm:$0xff]
        %v422 = vld [vmem:[%s156 + $0x398] sm:$0xff]
        %v423 = vld [vmem:[%s156 + $0x3a0] sm:$0xff]
        %v424 = vld [vmem:[%s156 + $0x3a8] sm:$0xff]
        %v425 = vld [vmem:[%s156 + $0x3b0] sm:$0xff]
        %v426 = vld [vmem:[%s156 + $0x3b8] sm:$0xff]
        %v427 = vld [vmem:[%s156 + $0x3c0] sm:$0xff]
        %v428 = vld [vmem:[%s156 + $0x3c8] sm:$0xff]
        %v429 = vld [vmem:[%s156 + $0x3d0] sm:$0xff]
        %v430 = vld [vmem:[%s156 + $0x3d8] sm:$0xff]
        %v431 = vld [vmem:[%s156 + $0x3e0] sm:$0xff]
        %v432 = vld [vmem:[%s156 + $0x3e8] sm:$0xff]
        %v433 = vld [vmem:[%s156 + $0x3f0] sm:$0xff]
        %v434 = vld [vmem:[%s156 + $0x3f8] sm:$0xff]
        %v435 = vld [vmem:[%s156 + $0x400] sm:$0xff]
        %v436 = vld [vmem:[%s156 + $0x408] sm:$0xff]
        %v437 = vld [vmem:[%s156 + $0x410] sm:$0xff]
        %v438 = vld [vmem:[%s156 + $0x418] sm:$0xff]
        %v439 = vld [vmem:[%s156 + $0x420] sm:$0xff]
        %v440 = vld [vmem:[%s156 + $0x428] sm:$0xff]
        %v441 = vld [vmem:[%s156 + $0x430] sm:$0xff]
        %v442 = vld [vmem:[%s156 + $0x438] sm:$0xff]
        %v443 = vld [vmem:[%s156 + $0x440] sm:$0xff]
        %v444 = vld [vmem:[%s156 + $0x448] sm:$0xff]
        %v445 = vld [vmem:[%s156 + $0x450] sm:$0xff]
        %v446 = vld [vmem:[%s156 + $0x458] sm:$0xff]
        %v447 = vld [vmem:[%s156 + $0x460] sm:$0xff]
        %v448 = vld [vmem:[%s156 + $0x468] sm:$0xff]
        %v449 = vld [vmem:[%s156 + $0x470] sm:$0xff]
        %v450 = vld [vmem:[%s156 + $0x478] sm:$0xff]
        %v451 = vld [vmem:[%s156 + $0x480] sm:$0xff]
        %v452 = vld [vmem:[%s156 + $0x488] sm:$0xff]
        %v453 = vld [vmem:[%s156 + $0x490] sm:$0xff]
        %v454 = vld [vmem:[%s156 + $0x498] sm:$0xff]
        %v455 = vld [vmem:[%s156 + $0x4a0] sm:$0xff]
        %v456 = vld [vmem:[%s156 + $0x4a8] sm:$0xff]
        %v457 = vld [vmem:[%s156 + $0x4b0] sm:$0xff]
        %v458 = vld [vmem:[%s156 + $0x4b8] sm:$0xff]
        %v459 = vld [vmem:[%s156 + $0x4c0] sm:$0xff]
        %v460 = vld [vmem:[%s156 + $0x4c8] sm:$0xff]
        %v461 = vld [vmem:[%s156 + $0x4d0] sm:$0xff]
        %v462 = vld [vmem:[%s156 + $0x4d8] sm:$0xff]
        %v463 = vld [vmem:[%s156 + $0x4e0] sm:$0xff]
        %v464 = vld [vmem:[%s156 + $0x4e8] sm:$0xff]
        %v465 = vld [vmem:[%s156 + $0x4f0] sm:$0xff]
        %v466 = vld [vmem:[%s156 + $0x4f8] sm:$0xff]
        %v467 = vld [vmem:[%s156 + $0x500] sm:$0xff]
        %v468 = vld [vmem:[%s156 + $0x508] sm:$0xff]
        %v469 = vld [vmem:[%s156 + $0x510] sm:$0xff]
        %v470 = vld [vmem:[%s156 + $0x518] sm:$0xff]
        %v471 = vld [vmem:[%s156 + $0x520] sm:$0xff]
        %v472 = vld [vmem:[%s156 + $0x528] sm:$0xff]
        %v473 = vld [vmem:[%s156 + $0x530] sm:$0xff]
        %v474 = vld [vmem:[%s156 + $0x538] sm:$0xff]
        %v475 = vld [vmem:[%s156 + $0x540] sm:$0xff]
        %v476 = vld [vmem:[%s156 + $0x548] sm:$0xff]
        %v477 = vld [vmem:[%s156 + $0x550] sm:$0xff]
        %v478 = vld [vmem:[%s156 + $0x558] sm:$0xff]
        %v479 = vld [vmem:[%s156 + $0x560] sm:$0xff]
        %v480 = vld [vmem:[%s156 + $0x568] sm:$0xff]
        %v481 = vld [vmem:[%s156 + $0x570] sm:$0xff]
        %v482 = vld [vmem:[%s156 + $0x578] sm:$0xff]
        %v483 = vld [vmem:[%s156 + $0x580] sm:$0xff]
        %v484 = vld [vmem:[%s156 + $0x588] sm:$0xff]
        %v485 = vld [vmem:[%s156 + $0x590] sm:$0xff]
        %v486 = vld [vmem:[%s156 + $0x598] sm:$0xff]
        %v487 = vld [vmem:[%s156 + $0x5a0] sm:$0xff]
        %v488 = vld [vmem:[%s156 + $0x5a8] sm:$0xff]
        %v489 = vld [vmem:[%s156 + $0x5b0] sm:$0xff]
        %v490 = vld [vmem:[%s156 + $0x5b8] sm:$0xff]
        %v491 = vld [vmem:[%s156 + $0x5c0] sm:$0xff]
        %v492 = vld [vmem:[%s156 + $0x5c8] sm:$0xff]
        %v493 = vld [vmem:[%s156 + $0x5d0] sm:$0xff]
        %v494 = vld [vmem:[%s156 + $0x5d8] sm:$0xff]
        %v495 = vld [vmem:[%s156 + $0x5e0] sm:$0xff]
        %v496 = vld [vmem:[%s156 + $0x5e8] sm:$0xff]
        %v497 = vld [vmem:[%s156 + $0x5f0] sm:$0xff]
        %v498 = vld [vmem:[%s156 + $0x5f8] sm:$0xff]
        %v499 = vld [vmem:[%s156 + $0x600] sm:$0xff]
        %v500 = vld [vmem:[%s156 + $0x608] sm:$0xff]
        %v501 = vld [vmem:[%s156 + $0x610] sm:$0xff]
        %v502 = vld [vmem:[%s156 + $0x618] sm:$0xff]
        %v503 = vld [vmem:[%s156 + $0x620] sm:$0xff]
        %v504 = vld [vmem:[%s156 + $0x628] sm:$0xff]
        %v505 = vld [vmem:[%s156 + $0x630] sm:$0xff]
        %v506 = vld [vmem:[%s156 + $0x638] sm:$0xff]
        %v507 = vld [vmem:[%s156 + $0x640] sm:$0xff]
        %v508 = vld [vmem:[%s156 + $0x648] sm:$0xff]
        %v509 = vld [vmem:[%s156 + $0x650] sm:$0xff]
        %v510 = vld [vmem:[%s156 + $0x658] sm:$0xff]
        %v511 = vld [vmem:[%s156 + $0x660] sm:$0xff]
        %v512 = vld [vmem:[%s156 + $0x668] sm:$0xff]
        %v513 = vld [vmem:[%s156 + $0x670] sm:$0xff]
        %v514 = vld [vmem:[%s156 + $0x678] sm:$0xff]
        %v515 = vld [vmem:[%s156 + $0x680] sm:$0xff]
        %v516 = vld [vmem:[%s156 + $0x688] sm:$0xff]
        %v517 = vld [vmem:[%s156 + $0x690] sm:$0xff]
        %v518 = vld [vmem:[%s156 + $0x698] sm:$0xff]
        %v519 = vld [vmem:[%s156 + $0x6a0] sm:$0xff]
        %v520 = vld [vmem:[%s156 + $0x6a8] sm:$0xff]
        %v521 = vld [vmem:[%s156 + $0x6b0] sm:$0xff]
        %v522 = vld [vmem:[%s156 + $0x6b8] sm:$0xff]
        %v523 = vld [vmem:[%s156 + $0x6c0] sm:$0xff]
        %v524 = vld [vmem:[%s156 + $0x6c8] sm:$0xff]
        %v525 = vld [vmem:[%s156 + $0x6d0] sm:$0xff]
        %v526 = vld [vmem:[%s156 + $0x6d8] sm:$0xff]
        %v527 = vld [vmem:[%s156 + $0x6e0] sm:$0xff]
        %v528 = vld [vmem:[%s156 + $0x6e8] sm:$0xff]
        %v529 = vld [vmem:[%s156 + $0x6f0] sm:$0xff]
        %v530 = vld [vmem:[%s156 + $0x6f8] sm:$0xff]
        %v531 = vld [vmem:[%s156 + $0x700] sm:$0xff]
        %v532 = vld [vmem:[%s156 + $0x708] sm:$0xff]
        %v533 = vld [vmem:[%s156 + $0x710] sm:$0xff]
        %v534 = vld [vmem:[%s156 + $0x718] sm:$0xff]
        %v535 = vld [vmem:[%s156 + $0x720] sm:$0xff]
        %v536 = vld [vmem:[%s156 + $0x728] sm:$0xff]
        %v537 = vld [vmem:[%s156 + $0x730] sm:$0xff]
        %v538 = vld [vmem:[%s156 + $0x738] sm:$0xff]
        %v539 = vld [vmem:[%s156 + $0x740] sm:$0xff]
        %v540 = vld [vmem:[%s156 + $0x748] sm:$0xff]
        %v541 = vld [vmem:[%s156 + $0x750] sm:$0xff]
        %v542 = vld [vmem:[%s156 + $0x758] sm:$0xff]
        %v543 = vld [vmem:[%s156 + $0x760] sm:$0xff]
        %v544 = vld [vmem:[%s156 + $0x768] sm:$0xff]
        %v545 = vld [vmem:[%s156 + $0x770] sm:$0xff]
        %v546 = vld [vmem:[%s156 + $0x778] sm:$0xff]
        %v547 = vld [vmem:[%s156 + $0x780] sm:$0xff]
        %v548 = vld [vmem:[%s156 + $0x788] sm:$0xff]
        %v549 = vld [vmem:[%s156 + $0x790] sm:$0xff]
        %v550 = vld [vmem:[%s156 + $0x798] sm:$0xff]
        %v551 = vld [vmem:[%s156 + $0x7a0] sm:$0xff]
        %v552 = vld [vmem:[%s156 + $0x7a8] sm:$0xff]
        %v553 = vld [vmem:[%s156 + $0x7b0] sm:$0xff]
        %v554 = vld [vmem:[%s156 + $0x7b8] sm:$0xff]
        %v555 = vld [vmem:[%s156 + $0x7c0] sm:$0xff]
        %v556 = vld [vmem:[%s156 + $0x7c8] sm:$0xff]
        %v557 = vld [vmem:[%s156 + $0x7d0] sm:$0xff]
        %v558 = vld [vmem:[%s156 + $0x7d8] sm:$0xff]
        %v559 = vld [vmem:[%s156 + $0x7e0] sm:$0xff]
        %v560 = vld [vmem:[%s156 + $0x7e8] sm:$0xff]
        %v561 = vld [vmem:[%s156 + $0x7f0] sm:$0xff]
        %v562 = vld [vmem:[%s156 + $0x7f8] sm:$0xff]
        %v563 = vand.u32 %v308, 4294901760
        %564 = vmatprep.subr.mxu0 %v563
        %v565 = vand.u32 %v307, 4294901760
        %566 = vmatpush1.msra.mxu0 %v565
        %v567 = vand.u32 %v310, 4294901760
        %568 = vmatprep.subr.mxu0 %v567
        %v569 = vand.u32 %v309, 4294901760
        %570 = vmatpush1.msra.mxu0 %v569
        %v571 = vand.u32 %v312, 4294901760
        %572 = vmatprep.subr.mxu0 %v571
        %v573 = vand.u32 %v311, 4294901760
        %574 = vmatpush1.msra.mxu0 %v573
        %v575 = vand.u32 %v314, 4294901760
        %576 = vmatprep.subr.mxu0 %v575
        %v577 = vand.u32 %v313, 4294901760
        %578 = vmatpush1.msra.mxu0 %v577
        %v579 = vand.u32 %v316, 4294901760
        %580 = vmatprep.subr.mxu0 %v579
        %v581 = vand.u32 %v315, 4294901760
        %582 = vmatpush1.msra.mxu0 %v581
        %v583 = vand.u32 %v318, 4294901760
        %584 = vmatprep.subr.mxu0 %v583
        %v585 = vand.u32 %v317, 4294901760
        %586 = vmatpush1.msra.mxu0 %v585
        %v587 = vand.u32 %v320, 4294901760
        %588 = vmatprep.subr.mxu0 %v587
        %v589 = vand.u32 %v319, 4294901760
        %590 = vmatpush1.msra.mxu0 %v589
        %v591 = vand.u32 %v322, 4294901760
        %592 = vmatprep.subr.mxu0 %v591
        %v593 = vand.u32 %v321, 4294901760
        %594 = vmatpush1.msra.mxu0 %v593
        %v595 = vand.u32 %v324, 4294901760
        %596 = vmatprep.subr.mxu0 %v595
        %v597 = vand.u32 %v323, 4294901760
        %598 = vmatpush1.msra.mxu0 %v597
        %v599 = vand.u32 %v326, 4294901760
        %600 = vmatprep.subr.mxu0 %v599
        %v601 = vand.u32 %v325, 4294901760
        %602 = vmatpush1.msra.mxu0 %v601
        %v603 = vand.u32 %v328, 4294901760
        %604 = vmatprep.subr.mxu0 %v603
        %v605 = vand.u32 %v327, 4294901760
        %606 = vmatpush1.msra.mxu0 %v605
        %v607 = vand.u32 %v330, 4294901760
        %608 = vmatprep.subr.mxu0 %v607
        %v609 = vand.u32 %v329, 4294901760
        %610 = vmatpush1.msra.mxu0 %v609
        %v611 = vand.u32 %v332, 4294901760
        %612 = vmatprep.subr.mxu0 %v611
        %v613 = vand.u32 %v331, 4294901760
        %614 = vmatpush1.msra.mxu0 %v613
        %v615 = vand.u32 %v334, 4294901760
        %616 = vmatprep.subr.mxu0 %v615
        %v617 = vand.u32 %v333, 4294901760
        %618 = vmatpush1.msra.mxu0 %v617
        %v619 = vand.u32 %v336, 4294901760
        %620 = vmatprep.subr.mxu0 %v619
        %v621 = vand.u32 %v335, 4294901760
        %622 = vmatpush1.msra.mxu0 %v621
        %v623 = vand.u32 %v338, 4294901760
        %624 = vmatprep.subr.mxu0 %v623
        %v625 = vand.u32 %v337, 4294901760
        %626 = vmatpush1.msra.mxu0 %v625
        %v627 = vand.u32 %v340, 4294901760
        %628 = vmatprep.subr.mxu0 %v627
        %v629 = vand.u32 %v339, 4294901760
        %630 = vmatpush1.msra.mxu0 %v629
        %v631 = vand.u32 %v342, 4294901760
        %632 = vmatprep.subr.mxu0 %v631
        %v633 = vand.u32 %v341, 4294901760
        %634 = vmatpush1.msra.mxu0 %v633
        %v635 = vand.u32 %v344, 4294901760
        %636 = vmatprep.subr.mxu0 %v635
        %v637 = vand.u32 %v343, 4294901760
        %638 = vmatpush1.msra.mxu0 %v637
        %v639 = vand.u32 %v346, 4294901760
        %640 = vmatprep.subr.mxu0 %v639
        %v641 = vand.u32 %v345, 4294901760
        %642 = vmatpush1.msra.mxu0 %v641
        %v643 = vand.u32 %v348, 4294901760
        %644 = vmatprep.subr.mxu0 %v643
        %v645 = vand.u32 %v347, 4294901760
        %646 = vmatpush1.msra.mxu0 %v645
        %v647 = vand.u32 %v350, 4294901760
        %648 = vmatprep.subr.mxu0 %v647
        %v649 = vand.u32 %v349, 4294901760
        %650 = vmatpush1.msra.mxu0 %v649
        %v651 = vand.u32 %v352, 4294901760
        %652 = vmatprep.subr.mxu0 %v651
        %v653 = vand.u32 %v351, 4294901760
        %654 = vmatpush1.msra.mxu0 %v653
        %v655 = vand.u32 %v354, 4294901760
        %656 = vmatprep.subr.mxu0 %v655
        %v657 = vand.u32 %v353, 4294901760
        %658 = vmatpush1.msra.mxu0 %v657
        %v659 = vand.u32 %v356, 4294901760
        %660 = vmatprep.subr.mxu0 %v659
        %v661 = vand.u32 %v355, 4294901760
        %662 = vmatpush1.msra.mxu0 %v661
        %v663 = vand.u32 %v358, 4294901760
        %664 = vmatprep.subr.mxu0 %v663
        %v665 = vand.u32 %v357, 4294901760
        %666 = vmatpush1.msra.mxu0 %v665
        %v667 = vand.u32 %v360, 4294901760
        %668 = vmatprep.subr.mxu0 %v667
        %v669 = vand.u32 %v359, 4294901760
        %670 = vmatpush1.msra.mxu0 %v669
        %v671 = vand.u32 %v362, 4294901760
        %672 = vmatprep.subr.mxu0 %v671
        %v673 = vand.u32 %v361, 4294901760
        %674 = vmatpush1.msra.mxu0 %v673
        %v675 = vand.u32 %v364, 4294901760
        %676 = vmatprep.subr.mxu0 %v675
        %v677 = vand.u32 %v363, 4294901760
        %678 = vmatpush1.msra.mxu0 %v677
        %v679 = vand.u32 %v366, 4294901760
        %680 = vmatprep.subr.mxu0 %v679
        %v681 = vand.u32 %v365, 4294901760
        %682 = vmatpush1.msra.mxu0 %v681
        %v683 = vand.u32 %v368, 4294901760
        %684 = vmatprep.subr.mxu0 %v683
        %v685 = vand.u32 %v367, 4294901760
        %686 = vmatpush1.msra.mxu0 %v685
        %v687 = vand.u32 %v370, 4294901760
        %688 = vmatprep.subr.mxu0 %v687
        %v689 = vand.u32 %v369, 4294901760
        %690 = vmatpush1.msra.mxu0 %v689
        %v691 = vand.u32 %v180, 4294901760
        %v692 = vsub.f32 %v180, %v691
        %v693 = vand.u32 %v692, 4294901760
        %v694 = vsub.f32 %v692, %v693
        %v695 = vand.u32 %v694, 4294901760
        %696 = vmatprep.mubr.f32.mxu0 %v695
        %v697 = vand.u32 %v179, 4294901760
        %v698 = vsub.f32 %v179, %v697
        %v699 = vand.u32 %v698, 4294901760
        %v700 = vsub.f32 %v698, %v699
        %v701 = vand.u32 %v700, 4294901760
        %702 = vmatmul.mubr.f32.gmra.mrb[0].mxu0 %v701
        %v703 = vpop.f32.mrb[0].mxu0
        %v704 = vadd.f32 0.0, %v703
        %v705 = vpop.f32.mrb[0].mxu0
        %v706 = vadd.f32 0.0, %v705
        %v707 = vand.u32 %v188, 4294901760
        %v708 = vsub.f32 %v188, %v707
        %v709 = vand.u32 %v708, 4294901760
        %v710 = vsub.f32 %v708, %v709
        %v711 = vand.u32 %v710, 4294901760
        %712 = vmatprep.mubr.f32.mxu0 %v711
        %v713 = vand.u32 %v187, 4294901760
        %v714 = vsub.f32 %v187, %v713
        %v715 = vand.u32 %v714, 4294901760
        %v716 = vsub.f32 %v714, %v715
        %v717 = vand.u32 %v716, 4294901760
        %718 = vmatmul.mubr.f32.gmra.mrb[0].mxu0 %v717
        %v719 = vpop.f32.mrb[0].mxu0
        %v720 = vadd.f32 0.0, %v719
        %v721 = vpop.f32.mrb[0].mxu0
        %v722 = vadd.f32 0.0, %v721
        %v723 = vand.u32 %v196, 4294901760
        %v724 = vsub.f32 %v196, %v723
        %v725 = vand.u32 %v724, 4294901760
        %v726 = vsub.f32 %v724, %v725
        %v727 = vand.u32 %v726, 4294901760
        %728 = vmatprep.mubr.f32.mxu0 %v727
        %v729 = vand.u32 %v195, 4294901760
        %v730 = vsub.f32 %v195, %v729
        %v731 = vand.u32 %v730, 4294901760
        %v732 = vsub.f32 %v730, %v731
        %v733 = vand.u32 %v732, 4294901760
        %734 = vmatmul.mubr.f32.gmra.mrb[0].mxu0 %v733
        %v735 = vpop.f32.mrb[0].mxu0
        %v736 = vadd.f32 0.0, %v735
        %v737 = vpop.f32.mrb[0].mxu0
        %v738 = vadd.f32 0.0, %v737
        %v739 = vand.u32 %v204, 4294901760
        %v740 = vsub.f32 %v204, %v739
        %v741 = vand.u32 %v740, 4294901760
        %v742 = vsub.f32 %v740, %v741
        %v743 = vand.u32 %v742, 4294901760
        %744 = vmatprep.mubr.f32.mxu0 %v743
        %v745 = vand.u32 %v203, 4294901760
        %v746 = vsub.f32 %v203, %v745
        %v747 = vand.u32 %v746, 4294901760
        %v748 = vsub.f32 %v746, %v747
        %v749 = vand.u32 %v748, 4294901760
        %750 = vmatmul.mubr.f32.gmra.mrb[0].mxu0 %v749
        %v751 = vpop.f32.mrb[0].mxu0
        %v752 = vadd.f32 0.0, %v751
        %v753 = vpop.f32.mrb[0].mxu0
        %v754 = vadd.f32 0.0, %v753
        %v755 = vand.u32 %v212, 4294901760
        %v756 = vsub.f32 %v212, %v755
        %v757 = vand.u32 %v756, 4294901760
        %v758 = vsub.f32 %v756, %v757
        %v759 = vand.u32 %v758, 4294901760
        %760 = vmatprep.mubr.f32.mxu0 %v759
        %v761 = vand.u32 %v211, 4294901760
        %v762 = vsub.f32 %v211, %v761
        %v763 = vand.u32 %v762, 4294901760
        %v764 = vsub.f32 %v762, %v763
        %v765 = vand.u32 %v764, 4294901760
        %766 = vmatmul.mubr.f32.gmra.mrb[0].mxu0 %v765
        %v767 = vpop.f32.mrb[0].mxu0
        %v768 = vadd.f32 0.0, %v767
        %v769 = vpop.f32.mrb[0].mxu0
        %v770 = vadd.f32 0.0, %v769
        %v771 = vand.u32 %v220, 4294901760
        %v772 = vsub.f32 %v220, %v771
        %v773 = vand.u32 %v772, 4294901760
        %v774 = vsub.f32 %v772, %v773
        %v775 = vand.u32 %v774, 4294901760
        %776 = vmatprep.mubr.f32.mxu0 %v775
        %v777 = vand.u32 %v219, 4294901760
        %v778 = vsub.f32 %v219, %v777
        %v779 = vand.u32 %v778, 4294901760
        %v780 = vsub.f32 %v778, %v779
        %v781 = vand.u32 %v780, 4294901760
        %782 = vmatmul.mubr.f32.gmra.mrb[0].mxu0 %v781
        %v783 = vpop.f32.mrb[0].mxu0
        %v784 = vadd.f32 0.0, %v783
        %v785 = vpop.f32.mrb[0].mxu0
        %v786 = vadd.f32 0.0, %v785
        %v787 = vand.u32 %v228, 4294901760
        %v788 = vsub.f32 %v228, %v787
        %v789 = vand.u32 %v788, 4294901760
        %v790 = vsub.f32 %v788, %v789
        %v791 = vand.u32 %v790, 4294901760
        %792 = vmatprep.mubr.f32.mxu0 %v791
        %v793 = vand.u32 %v227, 4294901760
        %v794 = vsub.f32 %v227, %v793
        %v795 = vand.u32 %v794, 4294901760
        %v796 = vsub.f32 %v794, %v795
        %v797 = vand.u32 %v796, 4294901760
        %798 = vmatmul.mubr.f32.gmra.mrb[0].mxu0 %v797
        %v799 = vpop.f32.mrb[0].mxu0
        %v800 = vadd.f32 0.0, %v799
        %v801 = vpop.f32.mrb[0].mxu0
        %v802 = vadd.f32 0.0, %v801
        %v803 = vand.u32 %v236, 4294901760
        %v804 = vsub.f32 %v236, %v803
        %v805 = vand.u32 %v804, 4294901760
        %v806 = vsub.f32 %v804, %v805
        %v807 = vand.u32 %v806, 4294901760
        %808 = vmatprep.mubr.f32.mxu0 %v807
        %v809 = vand.u32 %v235, 4294901760
        %v810 = vsub.f32 %v235, %v809
        %v811 = vand.u32 %v810, 4294901760
        %v812 = vsub.f32 %v810, %v811
        %v813 = vand.u32 %v812, 4294901760
        %814 = vmatmul.mubr.f32.gmra.mrb[0].mxu0 %v813
        %v815 = vpop.f32.mrb[0].mxu0
        %v816 = vadd.f32 0.0, %v815
        %v817 = vpop.f32.mrb[0].mxu0
        %v818 = vadd.f32 0.0, %v817
        %v819 = vand.u32 %v244, 4294901760
        %v820 = vsub.f32 %v244, %v819
        %v821 = vand.u32 %v820, 4294901760
        %v822 = vsub.f32 %v820, %v821
        %v823 = vand.u32 %v822, 4294901760
        %824 = vmatprep.mubr.f32.mxu0 %v823
        %v825 = vand.u32 %v243, 4294901760
        %v826 = vsub.f32 %v243, %v825
        %v827 = vand.u32 %v826, 4294901760
        %v828 = vsub.f32 %v826, %v827
        %v829 = vand.u32 %v828, 4294901760
        %830 = vmatmul.mubr.f32.gmra.mrb[0].mxu0 %v829
        %v831 = vpop.f32.mrb[0].mxu0
        %v832 = vadd.f32 0.0, %v831
        %v833 = vpop.f32.mrb[0].mxu0
        %v834 = vadd.f32 0.0, %v833
        %v835 = vand.u32 %v252, 4294901760
        %v836 = vsub.f32 %v252, %v835
        %v837 = vand.u32 %v836, 4294901760
        %v838 = vsub.f32 %v836, %v837
        %v839 = vand.u32 %v838, 4294901760
        %840 = vmatprep.mubr.f32.mxu0 %v839
        %v841 = vand.u32 %v251, 4294901760
        %v842 = vsub.f32 %v251, %v841
        %v843 = vand.u32 %v842, 4294901760
        %v844 = vsub.f32 %v842, %v843
        %v845 = vand.u32 %v844, 4294901760
        %846 = vmatmul.mubr.f32.gmra.mrb[0].mxu0 %v845
        %v847 = vpop.f32.mrb[0].mxu0
        %v848 = vadd.f32 0.0, %v847
        %v849 = vpop.f32.mrb[0].mxu0
        %v850 = vadd.f32 0.0, %v849
        %v851 = vand.u32 %v260, 4294901760
        %v852 = vsub.f32 %v260, %v851
        %v853 = vand.u32 %v852, 4294901760
        %v854 = vsub.f32 %v852, %v853
        %v855 = vand.u32 %v854, 4294901760
        %856 = vmatprep.mubr.f32.mxu0 %v855
        %v857 = vand.u32 %v259, 4294901760
        %v858 = vsub.f32 %v259, %v857
        %v859 = vand.u32 %v858, 4294901760
        %v860 = vsub.f32 %v858, %v859
        %v861 = vand.u32 %v860, 4294901760
        %862 = vmatmul.mubr.f32.gmra.mrb[0].mxu0 %v861
        %v863 = vpop.f32.mrb[0].mxu0
        %v864 = vadd.f32 0.0, %v863
        %v865 = vpop.f32.mrb[0].mxu0
        %v866 = vadd.f32 0.0, %v865
        %v867 = vand.u32 %v268, 4294901760
        %v868 = vsub.f32 %v268, %v867
        %v869 = vand.u32 %v868, 4294901760
        %v870 = vsub.f32 %v868, %v869
        %v871 = vand.u32 %v870, 4294901760
        %872 = vmatprep.mubr.f32.mxu0 %v871
        %v873 = vand.u32 %v267, 4294901760
        %v874 = vsub.f32 %v267, %v873
        %v875 = vand.u32 %v874, 4294901760
        %v876 = vsub.f32 %v874, %v875
        %v877 = vand.u32 %v876, 4294901760
        %878 = vmatmul.mubr.f32.gmra.mrb[0].mxu0 %v877
        %v879 = vpop.f32.mrb[0].mxu0
        %v880 = vadd.f32 0.0, %v879
        %v881 = vpop.f32.mrb[0].mxu0
        %v882 = vadd.f32 0.0, %v881
        %v883 = vand.u32 %v276, 4294901760
        %v884 = vsub.f32 %v276, %v883
        %v885 = vand.u32 %v884, 4294901760
        %v886 = vsub.f32 %v884, %v885
        %v887 = vand.u32 %v886, 4294901760
        %888 = vmatprep.mubr.f32.mxu0 %v887
        %v889 = vand.u32 %v275, 4294901760
        %v890 = vsub.f32 %v275, %v889
        %v891 = vand.u32 %v890, 4294901760
        %v892 = vsub.f32 %v890, %v891
        %v893 = vand.u32 %v892, 4294901760
        %894 = vmatmul.mubr.f32.gmra.mrb[0].mxu0 %v893
        %v895 = vpop.f32.mrb[0].mxu0
        %v896 = vadd.f32 0.0, %v895
        %v897 = vpop.f32.mrb[0].mxu0
        %v898 = vadd.f32 0.0, %v897
        %v899 = vand.u32 %v284, 4294901760
        %v900 = vsub.f32 %v284, %v899
        %v901 = vand.u32 %v900, 4294901760
        %v902 = vsub.f32 %v900, %v901
        %v903 = vand.u32 %v902, 4294901760
        %904 = vmatprep.mubr.f32.mxu0 %v903
        %v905 = vand.u32 %v283, 4294901760
        %v906 = vsub.f32 %v283, %v905
        %v907 = vand.u32 %v906, 4294901760
        %v908 = vsub.f32 %v906, %v907
        %v909 = vand.u32 %v908, 4294901760
        %910 = vmatmul.mubr.f32.gmra.mrb[0].mxu0 %v909
        %v911 = vpop.f32.mrb[0].mxu0
        %v912 = vadd.f32 0.0, %v911
        %v913 = vpop.f32.mrb[0].mxu0
        %v914 = vadd.f32 0.0, %v913
        %v915 = vand.u32 %v292, 4294901760
        %v916 = vsub.f32 %v292, %v915
        %v917 = vand.u32 %v916, 4294901760
        %v918 = vsub.f32 %v916, %v917
        %v919 = vand.u32 %v918, 4294901760
        %920 = vmatprep.mubr.f32.mxu0 %v919
        %v921 = vand.u32 %v291, 4294901760
        %v922 = vsub.f32 %v291, %v921
        %v923 = vand.u32 %v922, 4294901760
        %v924 = vsub.f32 %v922, %v923
        %v925 = vand.u32 %v924, 4294901760
        %926 = vmatmul.mubr.f32.gmra.mrb[0].mxu0 %v925
        %v927 = vpop.f32.mrb[0].mxu0
        %v928 = vadd.f32 0.0, %v927
        %v929 = vpop.f32.mrb[0].mxu0
        %v930 = vadd.f32 0.0, %v929
        %v931 = vand.u32 %v300, 4294901760
        %v932 = vsub.f32 %v300, %v931
        %v933 = vand.u32 %v932, 4294901760
        %v934 = vsub.f32 %v932, %v933
        %v935 = vand.u32 %v934, 4294901760
        %936 = vmatprep.mubr.f32.mxu0 %v935
        %v937 = vand.u32 %v299, 4294901760
        %v938 = vsub.f32 %v299, %v937
        %v939 = vand.u32 %v938, 4294901760
        %v940 = vsub.f32 %v938, %v939
        %v941 = vand.u32 %v940, 4294901760
        %942 = vmatmul.mubr.f32.gmra.mrb[0].mxu0 %v941
        %v943 = vpop.f32.mrb[0].mxu0
        %v944 = vadd.f32 0.0, %v943
        %v945 = vpop.f32.mrb[0].mxu0
        %v946 = vadd.f32 0.0, %v945
        %947 = vdwg.mxu0
        %v948 = vand.u32 %v308, 4294901760
        %v949 = vsub.f32 %v308, %v948
        %v950 = vand.u32 %v949, 4294901760
        %v951 = vsub.f32 %v949, %v950
        %v952 = vand.u32 %v951, 4294901760
        %953 = vmatprep.subr.mxu0 %v952
        %v954 = vand.u32 %v307, 4294901760
        %v955 = vsub.f32 %v307, %v954
        %v956 = vand.u32 %v955, 4294901760
        %v957 = vsub.f32 %v955, %v956
        %v958 = vand.u32 %v957, 4294901760
        %959 = vmatpush1.msra.mxu0 %v958
        %v960 = vand.u32 %v310, 4294901760
        %v961 = vsub.f32 %v310, %v960
        %v962 = vand.u32 %v961, 4294901760
        %v963 = vsub.f32 %v961, %v962
        %v964 = vand.u32 %v963, 4294901760
        %965 = vmatprep.subr.mxu0 %v964
        %v966 = vand.u32 %v309, 4294901760
        %v967 = vsub.f32 %v309, %v966
        %v968 = vand.u32 %v967, 4294901760
        %v969 = vsub.f32 %v967, %v968
        %v970 = vand.u32 %v969, 4294901760
        %971 = vmatpush1.msra.mxu0 %v970
        %v972 = vand.u32 %v312, 4294901760
        %v973 = vsub.f32 %v312, %v972
        %v974 = vand.u32 %v973, 4294901760
        %v975 = vsub.f32 %v973, %v974
        %v976 = vand.u32 %v975, 4294901760
        %977 = vmatprep.subr.mxu0 %v976
        %v978 = vand.u32 %v311, 4294901760
        %v979 = vsub.f32 %v311, %v978
        %v980 = vand.u32 %v979, 4294901760
        %v981 = vsub.f32 %v979, %v980
        %v982 = vand.u32 %v981, 4294901760
        %983 = vmatpush1.msra.mxu0 %v982
        %v984 = vand.u32 %v314, 4294901760
        %v985 = vsub.f32 %v314, %v984
        %v986 = vand.u32 %v985, 4294901760
        %v987 = vsub.f32 %v985, %v986
        %v988 = vand.u32 %v987, 4294901760
        %989 = vmatprep.subr.mxu0 %v988
        %v990 = vand.u32 %v313, 4294901760
        %v991 = vsub.f32 %v313, %v990
        %v992 = vand.u32 %v991, 4294901760
        %v993 = vsub.f32 %v991, %v992
        %v994 = vand.u32 %v993, 4294901760
        %995 = vmatpush1.msra.mxu0 %v994
        %v996 = vand.u32 %v316, 4294901760
        %v997 = vsub.f32 %v316, %v996
        %v998 = vand.u32 %v997, 4294901760
        %v999 = vsub.f32 %v997, %v998
        %v1000 = vand.u32 %v999, 4294901760
        %1001 = vmatprep.subr.mxu0 %v1000
        %v1002 = vand.u32 %v315, 4294901760
        %v1003 = vsub.f32 %v315, %v1002
        %v1004 = vand.u32 %v1003, 4294901760
        %v1005 = vsub.f32 %v1003, %v1004
        %v1006 = vand.u32 %v1005, 4294901760
        %1007 = vmatpush1.msra.mxu0 %v1006
        %v1008 = vand.u32 %v318, 4294901760
        %v1009 = vsub.f32 %v318, %v1008
        %v1010 = vand.u32 %v1009, 4294901760
        %v1011 = vsub.f32 %v1009, %v1010
        %v1012 = vand.u32 %v1011, 4294901760
        %1013 = vmatprep.subr.mxu0 %v1012
        %v1014 = vand.u32 %v317, 4294901760
        %v1015 = vsub.f32 %v317, %v1014
        %v1016 = vand.u32 %v1015, 4294901760
        %v1017 = vsub.f32 %v1015, %v1016
        %v1018 = vand.u32 %v1017, 4294901760
        %1019 = vmatpush1.msra.mxu0 %v1018
        %v1020 = vand.u32 %v320, 4294901760
        %v1021 = vsub.f32 %v320, %v1020
        %v1022 = vand.u32 %v1021, 4294901760
        %v1023 = vsub.f32 %v1021, %v1022
        %v1024 = vand.u32 %v1023, 4294901760
        %1025 = vmatprep.subr.mxu0 %v1024
        %v1026 = vand.u32 %v319, 4294901760
        %v1027 = vsub.f32 %v319, %v1026
        %v1028 = vand.u32 %v1027, 4294901760
        %v1029 = vsub.f32 %v1027, %v1028
        %v1030 = vand.u32 %v1029, 4294901760
        %1031 = vmatpush1.msra.mxu0 %v1030
        %v1032 = vand.u32 %v322, 4294901760
        %v1033 = vsub.f32 %v322, %v1032
        %v1034 = vand.u32 %v1033, 4294901760
        %v1035 = vsub.f32 %v1033, %v1034
        %v1036 = vand.u32 %v1035, 4294901760
        %1037 = vmatprep.subr.mxu0 %v1036
        %v1038 = vand.u32 %v321, 4294901760
        %v1039 = vsub.f32 %v321, %v1038
        %v1040 = vand.u32 %v1039, 4294901760
        %v1041 = vsub.f32 %v1039, %v1040
        %v1042 = vand.u32 %v1041, 4294901760
        %1043 = vmatpush1.msra.mxu0 %v1042
        %v1044 = vand.u32 %v324, 4294901760
        %v1045 = vsub.f32 %v324, %v1044
        %v1046 = vand.u32 %v1045, 4294901760
        %v1047 = vsub.f32 %v1045, %v1046
        %v1048 = vand.u32 %v1047, 4294901760
        %1049 = vmatprep.subr.mxu0 %v1048
        %v1050 = vand.u32 %v323, 4294901760
        %v1051 = vsub.f32 %v323, %v1050
        %v1052 = vand.u32 %v1051, 4294901760
        %v1053 = vsub.f32 %v1051, %v1052
        %v1054 = vand.u32 %v1053, 4294901760
        %1055 = vmatpush1.msra.mxu0 %v1054
        %v1056 = vand.u32 %v326, 4294901760
        %v1057 = vsub.f32 %v326, %v1056
        %v1058 = vand.u32 %v1057, 4294901760
        %v1059 = vsub.f32 %v1057, %v1058
        %v1060 = vand.u32 %v1059, 4294901760
        %1061 = vmatprep.subr.mxu0 %v1060
        %v1062 = vand.u32 %v325, 4294901760
        %v1063 = vsub.f32 %v325, %v1062
        %v1064 = vand.u32 %v1063, 4294901760
        %v1065 = vsub.f32 %v1063, %v1064
        %v1066 = vand.u32 %v1065, 4294901760
        %1067 = vmatpush1.msra.mxu0 %v1066
        %v1068 = vand.u32 %v328, 4294901760
        %v1069 = vsub.f32 %v328, %v1068
        %v1070 = vand.u32 %v1069, 4294901760
        %v1071 = vsub.f32 %v1069, %v1070
        %v1072 = vand.u32 %v1071, 4294901760
        %1073 = vmatprep.subr.mxu0 %v1072
        %v1074 = vand.u32 %v327, 4294901760
        %v1075 = vsub.f32 %v327, %v1074
        %v1076 = vand.u32 %v1075, 4294901760
        %v1077 = vsub.f32 %v1075, %v1076
        %v1078 = vand.u32 %v1077, 4294901760
        %1079 = vmatpush1.msra.mxu0 %v1078
        %v1080 = vand.u32 %v330, 4294901760
        %v1081 = vsub.f32 %v330, %v1080
        %v1082 = vand.u32 %v1081, 4294901760
        %v1083 = vsub.f32 %v1081, %v1082
        %v1084 = vand.u32 %v1083, 4294901760
        %1085 = vmatprep.subr.mxu0 %v1084
        %v1086 = vand.u32 %v329, 4294901760
        %v1087 = vsub.f32 %v329, %v1086
        %v1088 = vand.u32 %v1087, 4294901760
        %v1089 = vsub.f32 %v1087, %v1088
        %v1090 = vand.u32 %v1089, 4294901760
        %1091 = vmatpush1.msra.mxu0 %v1090
        %v1092 = vand.u32 %v332, 4294901760
        %v1093 = vsub.f32 %v332, %v1092
        %v1094 = vand.u32 %v1093, 4294901760
        %v1095 = vsub.f32 %v1093, %v1094
        %v1096 = vand.u32 %v1095, 4294901760
        %1097 = vmatprep.subr.mxu0 %v1096
        %v1098 = vand.u32 %v331, 4294901760
        %v1099 = vsub.f32 %v331, %v1098
        %v1100 = vand.u32 %v1099, 4294901760
        %v1101 = vsub.f32 %v1099, %v1100
        %v1102 = vand.u32 %v1101, 4294901760
        %1103 = vmatpush1.msra.mxu0 %v1102
        %v1104 = vand.u32 %v334, 4294901760
        %v1105 = vsub.f32 %v334, %v1104
        %v1106 = vand.u32 %v1105, 4294901760
        %v1107 = vsub.f32 %v1105, %v1106
        %v1108 = vand.u32 %v1107, 4294901760
        %1109 = vmatprep.subr.mxu0 %v1108
        %v1110 = vand.u32 %v333, 4294901760
        %v1111 = vsub.f32 %v333, %v1110
        %v1112 = vand.u32 %v1111, 4294901760
        %v1113 = vsub.f32 %v1111, %v1112
        %v1114 = vand.u32 %v1113, 4294901760
        %1115 = vmatpush1.msra.mxu0 %v1114
        %v1116 = vand.u32 %v336, 4294901760
        %v1117 = vsub.f32 %v336, %v1116
        %v1118 = vand.u32 %v1117, 4294901760
        %v1119 = vsub.f32 %v1117, %v1118
        %v1120 = vand.u32 %v1119, 4294901760
        %1121 = vmatprep.subr.mxu0 %v1120
        %v1122 = vand.u32 %v335, 4294901760
        %v1123 = vsub.f32 %v335, %v1122
        %v1124 = vand.u32 %v1123, 4294901760
        %v1125 = vsub.f32 %v1123, %v1124
        %v1126 = vand.u32 %v1125, 4294901760
        %1127 = vmatpush1.msra.mxu0 %v1126
        %v1128 = vand.u32 %v338, 4294901760
        %v1129 = vsub.f32 %v338, %v1128
        %v1130 = vand.u32 %v1129, 4294901760
        %v1131 = vsub.f32 %v1129, %v1130
        %v1132 = vand.u32 %v1131, 4294901760
        %1133 = vmatprep.subr.mxu0 %v1132
        %v1134 = vand.u32 %v337, 4294901760
        %v1135 = vsub.f32 %v337, %v1134
        %v1136 = vand.u32 %v1135, 4294901760
        %v1137 = vsub.f32 %v1135, %v1136
        %v1138 = vand.u32 %v1137, 4294901760
        %1139 = vmatpush1.msra.mxu0 %v1138
        %v1140 = vand.u32 %v340, 4294901760
        %v1141 = vsub.f32 %v340, %v1140
        %v1142 = vand.u32 %v1141, 4294901760
        %v1143 = vsub.f32 %v1141, %v1142
        %v1144 = vand.u32 %v1143, 4294901760
        %1145 = vmatprep.subr.mxu0 %v1144
        %v1146 = vand.u32 %v339, 4294901760
        %v1147 = vsub.f32 %v339, %v1146
        %v1148 = vand.u32 %v1147, 4294901760
        %v1149 = vsub.f32 %v1147, %v1148
        %v1150 = vand.u32 %v1149, 4294901760
        %1151 = vmatpush1.msra.mxu0 %v1150
        %v1152 = vand.u32 %v342, 4294901760
        %v1153 = vsub.f32 %v342, %v1152
        %v1154 = vand.u32 %v1153, 4294901760
        %v1155 = vsub.f32 %v1153, %v1154
        %v1156 = vand.u32 %v1155, 4294901760
        %1157 = vmatprep.subr.mxu0 %v1156
        %v1158 = vand.u32 %v341, 4294901760
        %v1159 = vsub.f32 %v341, %v1158
        %v1160 = vand.u32 %v1159, 4294901760
        %v1161 = vsub.f32 %v1159, %v1160
        %v1162 = vand.u32 %v1161, 4294901760
        %1163 = vmatpush1.msra.mxu0 %v1162
        %v1164 = vand.u32 %v344, 4294901760
        %v1165 = vsub.f32 %v344, %v1164
        %v1166 = vand.u32 %v1165, 4294901760
        %v1167 = vsub.f32 %v1165, %v1166
        %v1168 = vand.u32 %v1167, 4294901760
        %1169 = vmatprep.subr.mxu0 %v1168
        %v1170 = vand.u32 %v343, 4294901760
        %v1171 = vsub.f32 %v343, %v1170
        %v1172 = vand.u32 %v1171, 4294901760
        %v1173 = vsub.f32 %v1171, %v1172
        %v1174 = vand.u32 %v1173, 4294901760
        %1175 = vmatpush1.msra.mxu0 %v1174
        %v1176 = vand.u32 %v346, 4294901760
        %v1177 = vsub.f32 %v346, %v1176
        %v1178 = vand.u32 %v1177, 4294901760
        %v1179 = vsub.f32 %v1177, %v1178
        %v1180 = vand.u32 %v1179, 4294901760
        %1181 = vmatprep.subr.mxu0 %v1180
        %v1182 = vand.u32 %v345, 4294901760
        %v1183 = vsub.f32 %v345, %v1182
        %v1184 = vand.u32 %v1183, 4294901760
        %v1185 = vsub.f32 %v1183, %v1184
        %v1186 = vand.u32 %v1185, 4294901760
        %1187 = vmatpush1.msra.mxu0 %v1186
        %v1188 = vand.u32 %v348, 4294901760
        %v1189 = vsub.f32 %v348, %v1188
        %v1190 = vand.u32 %v1189, 4294901760
        %v1191 = vsub.f32 %v1189, %v1190
        %v1192 = vand.u32 %v1191, 4294901760
        %1193 = vmatprep.subr.mxu0 %v1192
        %v1194 = vand.u32 %v347, 4294901760
        %v1195 = vsub.f32 %v347, %v1194
        %v1196 = vand.u32 %v1195, 4294901760
        %v1197 = vsub.f32 %v1195, %v1196
        %v1198 = vand.u32 %v1197, 4294901760
        %1199 = vmatpush1.msra.mxu0 %v1198
        %v1200 = vand.u32 %v350, 4294901760
        %v1201 = vsub.f32 %v350, %v1200
        %v1202 = vand.u32 %v1201, 4294901760
        %v1203 = vsub.f32 %v1201, %v1202
        %v1204 = vand.u32 %v1203, 4294901760
        %1205 = vmatprep.subr.mxu0 %v1204
        %v1206 = vand.u32 %v349, 4294901760
        %v1207 = vsub.f32 %v349, %v1206
        %v1208 = vand.u32 %v1207, 4294901760
        %v1209 = vsub.f32 %v1207, %v1208
        %v1210 = vand.u32 %v1209, 4294901760
        %1211 = vmatpush1.msra.mxu0 %v1210
        %v1212 = vand.u32 %v352, 4294901760
        %v1213 = vsub.f32 %v352, %v1212
        %v1214 = vand.u32 %v1213, 4294901760
        %v1215 = vsub.f32 %v1213, %v1214
        %v1216 = vand.u32 %v1215, 4294901760
        %1217 = vmatprep.subr.mxu0 %v1216
        %v1218 = vand.u32 %v351, 4294901760
        %v1219 = vsub.f32 %v351, %v1218
        %v1220 = vand.u32 %v1219, 4294901760
        %v1221 = vsub.f32 %v1219, %v1220
        %v1222 = vand.u32 %v1221, 4294901760
        %1223 = vmatpush1.msra.mxu0 %v1222
        %v1224 = vand.u32 %v354, 4294901760
        %v1225 = vsub.f32 %v354, %v1224
        %v1226 = vand.u32 %v1225, 4294901760
        %v1227 = vsub.f32 %v1225, %v1226
        %v1228 = vand.u32 %v1227, 4294901760
        %1229 = vmatprep.subr.mxu0 %v1228
        %v1230 = vand.u32 %v353, 4294901760
        %v1231 = vsub.f32 %v353, %v1230
        %v1232 = vand.u32 %v1231, 4294901760
        %v1233 = vsub.f32 %v1231, %v1232
        %v1234 = vand.u32 %v1233, 4294901760
        %1235 = vmatpush1.msra.mxu0 %v1234
        %v1236 = vand.u32 %v356, 4294901760
        %v1237 = vsub.f32 %v356, %v1236
        %v1238 = vand.u32 %v1237, 4294901760
        %v1239 = vsub.f32 %v1237, %v1238
        %v1240 = vand.u32 %v1239, 4294901760
        %1241 = vmatprep.subr.mxu0 %v1240
        %v1242 = vand.u32 %v355, 4294901760
        %v1243 = vsub.f32 %v355, %v1242
        %v1244 = vand.u32 %v1243, 4294901760
        %v1245 = vsub.f32 %v1243, %v1244
        %v1246 = vand.u32 %v1245, 4294901760
        %1247 = vmatpush1.msra.mxu0 %v1246
        %v1248 = vand.u32 %v358, 4294901760
        %v1249 = vsub.f32 %v358, %v1248
        %v1250 = vand.u32 %v1249, 4294901760
        %v1251 = vsub.f32 %v1249, %v1250
        %v1252 = vand.u32 %v1251, 4294901760
        %1253 = vmatprep.subr.mxu0 %v1252
        %v1254 = vand.u32 %v357, 4294901760
        %v1255 = vsub.f32 %v357, %v1254
        %v1256 = vand.u32 %v1255, 4294901760
        %v1257 = vsub.f32 %v1255, %v1256
        %v1258 = vand.u32 %v1257, 4294901760
        %1259 = vmatpush1.msra.mxu0 %v1258
        %v1260 = vand.u32 %v360, 4294901760
        %v1261 = vsub.f32 %v360, %v1260
        %v1262 = vand.u32 %v1261, 4294901760
        %v1263 = vsub.f32 %v1261, %v1262
        %v1264 = vand.u32 %v1263, 4294901760
        %1265 = vmatprep.subr.mxu0 %v1264
        %v1266 = vand.u32 %v359, 4294901760
        %v1267 = vsub.f32 %v359, %v1266
        %v1268 = vand.u32 %v1267, 4294901760
        %v1269 = vsub.f32 %v1267, %v1268
        %v1270 = vand.u32 %v1269, 4294901760
        %1271 = vmatpush1.msra.mxu0 %v1270
        %v1272 = vand.u32 %v362, 4294901760
        %v1273 = vsub.f32 %v362, %v1272
        %v1274 = vand.u32 %v1273, 4294901760
        %v1275 = vsub.f32 %v1273, %v1274
        %v1276 = vand.u32 %v1275, 4294901760
        %1277 = vmatprep.subr.mxu0 %v1276
        %v1278 = vand.u32 %v361, 4294901760
        %v1279 = vsub.f32 %v361, %v1278
        %v1280 = vand.u32 %v1279, 4294901760
        %v1281 = vsub.f32 %v1279, %v1280
        %v1282 = vand.u32 %v1281, 4294901760
        %1283 = vmatpush1.msra.mxu0 %v1282
        %v1284 = vand.u32 %v364, 4294901760
        %v1285 = vsub.f32 %v364, %v1284
        %v1286 = vand.u32 %v1285, 4294901760
        %v1287 = vsub.f32 %v1285, %v1286
        %v1288 = vand.u32 %v1287, 4294901760
        %1289 = vmatprep.subr.mxu0 %v1288
        %v1290 = vand.u32 %v363, 4294901760
        %v1291 = vsub.f32 %v363, %v1290
        %v1292 = vand.u32 %v1291, 4294901760
        %v1293 = vsub.f32 %v1291, %v1292
        %v1294 = vand.u32 %v1293, 4294901760
        %1295 = vmatpush1.msra.mxu0 %v1294
        %v1296 = vand.u32 %v366, 4294901760
        %v1297 = vsub.f32 %v366, %v1296
        %v1298 = vand.u32 %v1297, 4294901760
        %v1299 = vsub.f32 %v1297, %v1298
        %v1300 = vand.u32 %v1299, 4294901760
        %1301 = vmatprep.subr.mxu0 %v1300
        %v1302 = vand.u32 %v365, 4294901760
        %v1303 = vsub.f32 %v365, %v1302
        %v1304 = vand.u32 %v1303, 4294901760
        %v1305 = vsub.f32 %v1303, %v1304
        %v1306 = vand.u32 %v1305, 4294901760
        %1307 = vmatpush1.msra.mxu0 %v1306
        %v1308 = vand.u32 %v368, 4294901760
        %v1309 = vsub.f32 %v368, %v1308
        %v1310 = vand.u32 %v1309, 4294901760
        %v1311 = vsub.f32 %v1309, %v1310
        %v1312 = vand.u32 %v1311, 4294901760
        %1313 = vmatprep.subr.mxu0 %v1312
        %v1314 = vand.u32 %v367, 4294901760
        %v1315 = vsub.f32 %v367, %v1314
        %v1316 = vand.u32 %v1315, 4294901760
        %v1317 = vsub.f32 %v1315, %v1316
        %v1318 = vand.u32 %v1317, 4294901760
        %1319 = vmatpush1.msra.mxu0 %v1318
        %v1320 = vand.u32 %v370, 4294901760
        %v1321 = vsub.f32 %v370, %v1320
        %v1322 = vand.u32 %v1321, 4294901760
        %v1323 = vsub.f32 %v1321, %v1322
        %v1324 = vand.u32 %v1323, 4294901760
        %1325 = vmatprep.subr.mxu0 %v1324
        %v1326 = vand.u32 %v369, 4294901760
        %v1327 = vsub.f32 %v369, %v1326
        %v1328 = vand.u32 %v1327, 4294901760
        %v1329 = vsub.f32 %v1327, %v1328
        %v1330 = vand.u32 %v1329, 4294901760
        %1331 = vmatpush1.msra.mxu0 %v1330
        %v1332 = vand.u32 %v180, 4294901760
        %1333 = vmatprep.mubr.f32.mxu0 %v1332
        %v1334 = vand.u32 %v179, 4294901760
        %1335 = vmatmul.mubr.f32.gmra.mrb[0].mxu0 %v1334
        %v1336 = vpop.f32.mrb[0].mxu0
        %v1337 = vadd.f32 %v704, %v1336
        %v1338 = vpop.f32.mrb[0].mxu0
        %v1339 = vadd.f32 %v706, %v1338
        %v1340 = vand.u32 %v188, 4294901760
        %1341 = vmatprep.mubr.f32.mxu0 %v1340
        %v1342 = vand.u32 %v187, 4294901760
        %1343 = vmatmul.mubr.f32.gmra.mrb[0].mxu0 %v1342
        %v1344 = vpop.f32.mrb[0].mxu0
        %v1345 = vadd.f32 %v720, %v1344
        %v1346 = vpop.f32.mrb[0].mxu0
        %v1347 = vadd.f32 %v722, %v1346
        %v1348 = vand.u32 %v196, 4294901760
        %1349 = vmatprep.mubr.f32.mxu0 %v1348
        %v1350 = vand.u32 %v195, 4294901760
        %1351 = vmatmul.mubr.f32.gmra.mrb[0].mxu0 %v1350
        %v1352 = vpop.f32.mrb[0].mxu0
        %v1353 = vadd.f32 %v736, %v1352
        %v1354 = vpop.f32.mrb[0].mxu0
        %v1355 = vadd.f32 %v738, %v1354
        %v1356 = vand.u32 %v204, 4294901760
        %1357 = vmatprep.mubr.f32.mxu0 %v1356
        %v1358 = vand.u32 %v203, 4294901760
        %1359 = vmatmul.mubr.f32.gmra.mrb[0].mxu0 %v1358
        %v1360 = vpop.f32.mrb[0].mxu0
        %v1361 = vadd.f32 %v752, %v1360
        %v1362 = vpop.f32.mrb[0].mxu0
        %v1363 = vadd.f32 %v754, %v1362
        %v1364 = vand.u32 %v212, 4294901760
        %1365 = vmatprep.mubr.f32.mxu0 %v1364
        %v1366 = vand.u32 %v211, 4294901760
        %1367 = vmatmul.mubr.f32.gmra.mrb[0].mxu0 %v1366
        %v1368 = vpop.f32.mrb[0].mxu0
        %v1369 = vadd.f32 %v768, %v1368
        %v1370 = vpop.f32.mrb[0].mxu0
        %v1371 = vadd.f32 %v770, %v1370
        %v1372 = vand.u32 %v220, 4294901760
        %1373 = vmatprep.mubr.f32.mxu0 %v1372
        %v1374 = vand.u32 %v219, 4294901760
        %1375 = vmatmul.mubr.f32.gmra.mrb[0].mxu0 %v1374
        %v1376 = vpop.f32.mrb[0].mxu0
        %v1377 = vadd.f32 %v784, %v1376
        %v1378 = vpop.f32.mrb[0].mxu0
        %v1379 = vadd.f32 %v786, %v1378
        %v1380 = vand.u32 %v228, 4294901760
        %1381 = vmatprep.mubr.f32.mxu0 %v1380
        %v1382 = vand.u32 %v227, 4294901760
        %1383 = vmatmul.mubr.f32.gmra.mrb[0].mxu0 %v1382
        %v1384 = vpop.f32.mrb[0].mxu0
        %v1385 = vadd.f32 %v800, %v1384
        %v1386 = vpop.f32.mrb[0].mxu0
        %v1387 = vadd.f32 %v802, %v1386
        %v1388 = vand.u32 %v236, 4294901760
        %1389 = vmatprep.mubr.f32.mxu0 %v1388
        %v1390 = vand.u32 %v235, 4294901760
        %1391 = vmatmul.mubr.f32.gmra.mrb[0].mxu0 %v1390
        %v1392 = vpop.f32.mrb[0].mxu0
        %v1393 = vadd.f32 %v816, %v1392
        %v1394 = vpop.f32.mrb[0].mxu0
        %v1395 = vadd.f32 %v818, %v1394
        %v1396 = vand.u32 %v244, 4294901760
        %1397 = vmatprep.mubr.f32.mxu0 %v1396
        %v1398 = vand.u32 %v243, 4294901760
        %1399 = vmatmul.mubr.f32.gmra.mrb[0].mxu0 %v1398
        %v1400 = vpop.f32.mrb[0].mxu0
        %v1401 = vadd.f32 %v832, %v1400
        %v1402 = vpop.f32.mrb[0].mxu0
        %v1403 = vadd.f32 %v834, %v1402
        %v1404 = vand.u32 %v252, 4294901760
        %1405 = vmatprep.mubr.f32.mxu0 %v1404
        %v1406 = vand.u32 %v251, 4294901760
        %1407 = vmatmul.mubr.f32.gmra.mrb[0].mxu0 %v1406
        %v1408 = vpop.f32.mrb[0].mxu0
        %v1409 = vadd.f32 %v848, %v1408
        %v1410 = vpop.f32.mrb[0].mxu0
        %v1411 = vadd.f32 %v850, %v1410
        %v1412 = vand.u32 %v260, 4294901760
        %1413 = vmatprep.mubr.f32.mxu0 %v1412
        %v1414 = vand.u32 %v259, 4294901760
        %1415 = vmatmul.mubr.f32.gmra.mrb[0].mxu0 %v1414
        %v1416 = vpop.f32.mrb[0].mxu0
        %v1417 = vadd.f32 %v864, %v1416
        %v1418 = vpop.f32.mrb[0].mxu0
        %v1419 = vadd.f32 %v866, %v1418
        %v1420 = vand.u32 %v268, 4294901760
        %1421 = vmatprep.mubr.f32.mxu0 %v1420
        %v1422 = vand.u32 %v267, 4294901760
        %1423 = vmatmul.mubr.f32.gmra.mrb[0].mxu0 %v1422
        %v1424 = vpop.f32.mrb[0].mxu0
        %v1425 = vadd.f32 %v880, %v1424
        %v1426 = vpop.f32.mrb[0].mxu0
        %v1427 = vadd.f32 %v882, %v1426
        %v1428 = vand.u32 %v276, 4294901760
        %1429 = vmatprep.mubr.f32.mxu0 %v1428
        %v1430 = vand.u32 %v275, 4294901760
        %1431 = vmatmul.mubr.f32.gmra.mrb[0].mxu0 %v1430
        %v1432 = vpop.f32.mrb[0].mxu0
        %v1433 = vadd.f32 %v896, %v1432
        %v1434 = vpop.f32.mrb[0].mxu0
        %v1435 = vadd.f32 %v898, %v1434
        %v1436 = vand.u32 %v284, 4294901760
        %1437 = vmatprep.mubr.f32.mxu0 %v1436
        %v1438 = vand.u32 %v283, 4294901760
        %1439 = vmatmul.mubr.f32.gmra.mrb[0].mxu0 %v1438
        %v1440 = vpop.f32.mrb[0].mxu0
        %v1441 = vadd.f32 %v912, %v1440
        %v1442 = vpop.f32.mrb[0].mxu0
        %v1443 = vadd.f32 %v914, %v1442
        %v1444 = vand.u32 %v292, 4294901760
        %1445 = vmatprep.mubr.f32.mxu0 %v1444
        %v1446 = vand.u32 %v291, 4294901760
        %1447 = vmatmul.mubr.f32.gmra.mrb[0].mxu0 %v1446
        %v1448 = vpop.f32.mrb[0].mxu0
        %v1449 = vadd.f32 %v928, %v1448
        %v1450 = vpop.f32.mrb[0].mxu0
        %v1451 = vadd.f32 %v930, %v1450
        %v1452 = vand.u32 %v300, 4294901760
        %1453 = vmatprep.mubr.f32.mxu0 %v1452
        %v1454 = vand.u32 %v299, 4294901760
        %1455 = vmatmul.mubr.f32.gmra.mrb[0].mxu0 %v1454
        %v1456 = vpop.f32.mrb[0].mxu0
        %v1457 = vadd.f32 %v944, %v1456
        %v1458 = vpop.f32.mrb[0].mxu0
        %v1459 = vadd.f32 %v946, %v1458
        %1460 = vdwg.mxu0
        %v1461 = vand.u32 %v308, 4294901760
        %v1462 = vsub.f32 %v308, %v1461
        %1463 = vmatprep.subr.mxu0 %v1462
        %v1464 = vand.u32 %v307, 4294901760
        %v1465 = vsub.f32 %v307, %v1464
        %1466 = vmatpush1.msra.mxu0 %v1465
        %v1467 = vand.u32 %v310, 4294901760
        %v1468 = vsub.f32 %v310, %v1467
        %1469 = vmatprep.subr.mxu0 %v1468
        %v1470 = vand.u32 %v309, 4294901760
        %v1471 = vsub.f32 %v309, %v1470
        %1472 = vmatpush1.msra.mxu0 %v1471
        %v1473 = vand.u32 %v312, 4294901760
        %v1474 = vsub.f32 %v312, %v1473
        %1475 = vmatprep.subr.mxu0 %v1474
        %v1476 = vand.u32 %v311, 4294901760
        %v1477 = vsub.f32 %v311, %v1476
        %1478 = vmatpush1.msra.mxu0 %v1477
        %v1479 = vand.u32 %v314, 4294901760
        %v1480 = vsub.f32 %v314, %v1479
        %1481 = vmatprep.subr.mxu0 %v1480
        %v1482 = vand.u32 %v313, 4294901760
        %v1483 = vsub.f32 %v313, %v1482
        %1484 = vmatpush1.msra.mxu0 %v1483
        %v1485 = vand.u32 %v316, 4294901760
        %v1486 = vsub.f32 %v316, %v1485
        %1487 = vmatprep.subr.mxu0 %v1486
        %v1488 = vand.u32 %v315, 4294901760
        %v1489 = vsub.f32 %v315, %v1488
        %1490 = vmatpush1.msra.mxu0 %v1489
        %v1491 = vand.u32 %v318, 4294901760
        %v1492 = vsub.f32 %v318, %v1491
        %1493 = vmatprep.subr.mxu0 %v1492
        %v1494 = vand.u32 %v317, 4294901760
        %v1495 = vsub.f32 %v317, %v1494
        %1496 = vmatpush1.msra.mxu0 %v1495
        %v1497 = vand.u32 %v320, 4294901760
        %v1498 = vsub.f32 %v320, %v1497
        %1499 = vmatprep.subr.mxu0 %v1498
        %v1500 = vand.u32 %v319, 4294901760
        %v1501 = vsub.f32 %v319, %v1500
        %1502 = vmatpush1.msra.mxu0 %v1501
        %v1503 = vand.u32 %v322, 4294901760
        %v1504 = vsub.f32 %v322, %v1503
        %1505 = vmatprep.subr.mxu0 %v1504
        %v1506 = vand.u32 %v321, 4294901760
        %v1507 = vsub.f32 %v321, %v1506
        %1508 = vmatpush1.msra.mxu0 %v1507
        %v1509 = vand.u32 %v324, 4294901760
        %v1510 = vsub.f32 %v324, %v1509
        %1511 = vmatprep.subr.mxu0 %v1510
        %v1512 = vand.u32 %v323, 4294901760
        %v1513 = vsub.f32 %v323, %v1512
        %1514 = vmatpush1.msra.mxu0 %v1513
        %v1515 = vand.u32 %v326, 4294901760
        %v1516 = vsub.f32 %v326, %v1515
        %1517 = vmatprep.subr.mxu0 %v1516
        %v1518 = vand.u32 %v325, 4294901760
        %v1519 = vsub.f32 %v325, %v1518
        %1520 = vmatpush1.msra.mxu0 %v1519
        %v1521 = vand.u32 %v328, 4294901760
        %v1522 = vsub.f32 %v328, %v1521
        %1523 = vmatprep.subr.mxu0 %v1522
        %v1524 = vand.u32 %v327, 4294901760
        %v1525 = vsub.f32 %v327, %v1524
        %1526 = vmatpush1.msra.mxu0 %v1525
        %v1527 = vand.u32 %v330, 4294901760
        %v1528 = vsub.f32 %v330, %v1527
        %1529 = vmatprep.subr.mxu0 %v1528
        %v1530 = vand.u32 %v329, 4294901760
        %v1531 = vsub.f32 %v329, %v1530
        %1532 = vmatpush1.msra.mxu0 %v1531
        %v1533 = vand.u32 %v332, 4294901760
        %v1534 = vsub.f32 %v332, %v1533
        %1535 = vmatprep.subr.mxu0 %v1534
        %v1536 = vand.u32 %v331, 4294901760
        %v1537 = vsub.f32 %v331, %v1536
        %1538 = vmatpush1.msra.mxu0 %v1537
        %v1539 = vand.u32 %v334, 4294901760
        %v1540 = vsub.f32 %v334, %v1539
        %1541 = vmatprep.subr.mxu0 %v1540
        %v1542 = vand.u32 %v333, 4294901760
        %v1543 = vsub.f32 %v333, %v1542
        %1544 = vmatpush1.msra.mxu0 %v1543
        %v1545 = vand.u32 %v336, 4294901760
        %v1546 = vsub.f32 %v336, %v1545
        %1547 = vmatprep.subr.mxu0 %v1546
        %v1548 = vand.u32 %v335, 4294901760
        %v1549 = vsub.f32 %v335, %v1548
        %1550 = vmatpush1.msra.mxu0 %v1549
        %v1551 = vand.u32 %v338, 4294901760
        %v1552 = vsub.f32 %v338, %v1551
        %1553 = vmatprep.subr.mxu0 %v1552
        %v1554 = vand.u32 %v337, 4294901760
        %v1555 = vsub.f32 %v337, %v1554
        %1556 = vmatpush1.msra.mxu0 %v1555
        %v1557 = vand.u32 %v340, 4294901760
        %v1558 = vsub.f32 %v340, %v1557
        %1559 = vmatprep.subr.mxu0 %v1558
        %v1560 = vand.u32 %v339, 4294901760
        %v1561 = vsub.f32 %v339, %v1560
        %1562 = vmatpush1.msra.mxu0 %v1561
        %v1563 = vand.u32 %v342, 4294901760
        %v1564 = vsub.f32 %v342, %v1563
        %1565 = vmatprep.subr.mxu0 %v1564
        %v1566 = vand.u32 %v341, 4294901760
        %v1567 = vsub.f32 %v341, %v1566
        %1568 = vmatpush1.msra.mxu0 %v1567
        %v1569 = vand.u32 %v344, 4294901760
        %v1570 = vsub.f32 %v344, %v1569
        %1571 = vmatprep.subr.mxu0 %v1570
        %v1572 = vand.u32 %v343, 4294901760
        %v1573 = vsub.f32 %v343, %v1572
        %1574 = vmatpush1.msra.mxu0 %v1573
        %v1575 = vand.u32 %v346, 4294901760
        %v1576 = vsub.f32 %v346, %v1575
        %1577 = vmatprep.subr.mxu0 %v1576
        %v1578 = vand.u32 %v345, 4294901760
        %v1579 = vsub.f32 %v345, %v1578
        %1580 = vmatpush1.msra.mxu0 %v1579
        %v1581 = vand.u32 %v348, 4294901760
        %v1582 = vsub.f32 %v348, %v1581
        %1583 = vmatprep.subr.mxu0 %v1582
        %v1584 = vand.u32 %v347, 4294901760
        %v1585 = vsub.f32 %v347, %v1584
        %1586 = vmatpush1.msra.mxu0 %v1585
        %v1587 = vand.u32 %v350, 4294901760
        %v1588 = vsub.f32 %v350, %v1587
        %1589 = vmatprep.subr.mxu0 %v1588
        %v1590 = vand.u32 %v349, 4294901760
        %v1591 = vsub.f32 %v349, %v1590
        %1592 = vmatpush1.msra.mxu0 %v1591
        %v1593 = vand.u32 %v352, 4294901760
        %v1594 = vsub.f32 %v352, %v1593
        %1595 = vmatprep.subr.mxu0 %v1594
        %v1596 = vand.u32 %v351, 4294901760
        %v1597 = vsub.f32 %v351, %v1596
        %1598 = vmatpush1.msra.mxu0 %v1597
        %v1599 = vand.u32 %v354, 4294901760
        %v1600 = vsub.f32 %v354, %v1599
        %1601 = vmatprep.subr.mxu0 %v1600
        %v1602 = vand.u32 %v353, 4294901760
        %v1603 = vsub.f32 %v353, %v1602
        %1604 = vmatpush1.msra.mxu0 %v1603
        %v1605 = vand.u32 %v356, 4294901760
        %v1606 = vsub.f32 %v356, %v1605
        %1607 = vmatprep.subr.mxu0 %v1606
        %v1608 = vand.u32 %v355, 4294901760
        %v1609 = vsub.f32 %v355, %v1608
        %1610 = vmatpush1.msra.mxu0 %v1609
        %v1611 = vand.u32 %v358, 4294901760
        %v1612 = vsub.f32 %v358, %v1611
        %1613 = vmatprep.subr.mxu0 %v1612
        %v1614 = vand.u32 %v357, 4294901760
        %v1615 = vsub.f32 %v357, %v1614
        %1616 = vmatpush1.msra.mxu0 %v1615
        %v1617 = vand.u32 %v360, 4294901760
        %v1618 = vsub.f32 %v360, %v1617
        %1619 = vmatprep.subr.mxu0 %v1618
        %v1620 = vand.u32 %v359, 4294901760
        %v1621 = vsub.f32 %v359, %v1620
        %1622 = vmatpush1.msra.mxu0 %v1621
        %v1623 = vand.u32 %v362, 4294901760
        %v1624 = vsub.f32 %v362, %v1623
        %1625 = vmatprep.subr.mxu0 %v1624
        %v1626 = vand.u32 %v361, 4294901760
        %v1627 = vsub.f32 %v361, %v1626
        %1628 = vmatpush1.msra.mxu0 %v1627
        %v1629 = vand.u32 %v364, 4294901760
        %v1630 = vsub.f32 %v364, %v1629
        %1631 = vmatprep.subr.mxu0 %v1630
        %v1632 = vand.u32 %v363, 4294901760
        %v1633 = vsub.f32 %v363, %v1632
        %1634 = vmatpush1.msra.mxu0 %v1633
        %v1635 = vand.u32 %v366, 4294901760
        %v1636 = vsub.f32 %v366, %v1635
        %1637 = vmatprep.subr.mxu0 %v1636
        %v1638 = vand.u32 %v365, 4294901760
        %v1639 = vsub.f32 %v365, %v1638
        %1640 = vmatpush1.msra.mxu0 %v1639
        %v1641 = vand.u32 %v368, 4294901760
        %v1642 = vsub.f32 %v368, %v1641
        %1643 = vmatprep.subr.mxu0 %v1642
        %v1644 = vand.u32 %v367, 4294901760
        %v1645 = vsub.f32 %v367, %v1644
        %1646 = vmatpush1.msra.mxu0 %v1645
        %v1647 = vand.u32 %v370, 4294901760
        %v1648 = vsub.f32 %v370, %v1647
        %1649 = vmatprep.subr.mxu0 %v1648
        %v1650 = vand.u32 %v369, 4294901760
        %v1651 = vsub.f32 %v369, %v1650
        %1652 = vmatpush1.msra.mxu0 %v1651
        %v1653 = vand.u32 %v180, 4294901760
        %v1654 = vsub.f32 %v180, %v1653
        %1655 = vmatprep.mubr.f32.mxu0 %v1654
        %v1656 = vand.u32 %v179, 4294901760
        %v1657 = vsub.f32 %v179, %v1656
        %1658 = vmatmul.mubr.f32.gmra.mrb[0].mxu0 %v1657
        %v1659 = vpop.f32.mrb[0].mxu0
        %v1660 = vadd.f32 %v1337, %v1659
        %v1661 = vpop.f32.mrb[0].mxu0
        %v1662 = vadd.f32 %v1339, %v1661
        %v1663 = vand.u32 %v188, 4294901760
        %v1664 = vsub.f32 %v188, %v1663
        %1665 = vmatprep.mubr.f32.mxu0 %v1664
        %v1666 = vand.u32 %v187, 4294901760
        %v1667 = vsub.f32 %v187, %v1666
        %1668 = vmatmul.mubr.f32.gmra.mrb[0].mxu0 %v1667
        %v1669 = vpop.f32.mrb[0].mxu0
        %v1670 = vadd.f32 %v1345, %v1669
        %v1671 = vpop.f32.mrb[0].mxu0
        %v1672 = vadd.f32 %v1347, %v1671
        %v1673 = vand.u32 %v196, 4294901760
        %v1674 = vsub.f32 %v196, %v1673
        %1675 = vmatprep.mubr.f32.mxu0 %v1674
        %v1676 = vand.u32 %v195, 4294901760
        %v1677 = vsub.f32 %v195, %v1676
        %1678 = vmatmul.mubr.f32.gmra.mrb[0].mxu0 %v1677
        %v1679 = vpop.f32.mrb[0].mxu0
        %v1680 = vadd.f32 %v1353, %v1679
        %v1681 = vpop.f32.mrb[0].mxu0
        %v1682 = vadd.f32 %v1355, %v1681
        %v1683 = vand.u32 %v204, 4294901760
        %v1684 = vsub.f32 %v204, %v1683
        %1685 = vmatprep.mubr.f32.mxu0 %v1684
        %v1686 = vand.u32 %v203, 4294901760
        %v1687 = vsub.f32 %v203, %v1686
        %1688 = vmatmul.mubr.f32.gmra.mrb[0].mxu0 %v1687
        %v1689 = vpop.f32.mrb[0].mxu0
        %v1690 = vadd.f32 %v1361, %v1689
        %v1691 = vpop.f32.mrb[0].mxu0
        %v1692 = vadd.f32 %v1363, %v1691
        %v1693 = vand.u32 %v212, 4294901760
        %v1694 = vsub.f32 %v212, %v1693
        %1695 = vmatprep.mubr.f32.mxu0 %v1694
        %v1696 = vand.u32 %v211, 4294901760
        %v1697 = vsub.f32 %v211, %v1696
        %1698 = vmatmul.mubr.f32.gmra.mrb[0].mxu0 %v1697
        %v1699 = vpop.f32.mrb[0].mxu0
        %v1700 = vadd.f32 %v1369, %v1699
        %v1701 = vpop.f32.mrb[0].mxu0
        %v1702 = vadd.f32 %v1371, %v1701
        %v1703 = vand.u32 %v220, 4294901760
        %v1704 = vsub.f32 %v220, %v1703
        %1705 = vmatprep.mubr.f32.mxu0 %v1704
        %v1706 = vand.u32 %v219, 4294901760
        %v1707 = vsub.f32 %v219, %v1706
        %1708 = vmatmul.mubr.f32.gmra.mrb[0].mxu0 %v1707
        %v1709 = vpop.f32.mrb[0].mxu0
        %v1710 = vadd.f32 %v1377, %v1709
        %v1711 = vpop.f32.mrb[0].mxu0
        %v1712 = vadd.f32 %v1379, %v1711
        %v1713 = vand.u32 %v228, 4294901760
        %v1714 = vsub.f32 %v228, %v1713
        %1715 = vmatprep.mubr.f32.mxu0 %v1714
        %v1716 = vand.u32 %v227, 4294901760
        %v1717 = vsub.f32 %v227, %v1716
        %1718 = vmatmul.mubr.f32.gmra.mrb[0].mxu0 %v1717
        %v1719 = vpop.f32.mrb[0].mxu0
        %v1720 = vadd.f32 %v1385, %v1719
        %v1721 = vpop.f32.mrb[0].mxu0
        %v1722 = vadd.f32 %v1387, %v1721
        %v1723 = vand.u32 %v236, 4294901760
        %v1724 = vsub.f32 %v236, %v1723
        %1725 = vmatprep.mubr.f32.mxu0 %v1724
        %v1726 = vand.u32 %v235, 4294901760
        %v1727 = vsub.f32 %v235, %v1726
        %1728 = vmatmul.mubr.f32.gmra.mrb[0].mxu0 %v1727
        %v1729 = vpop.f32.mrb[0].mxu0
        %v1730 = vadd.f32 %v1393, %v1729
        %v1731 = vpop.f32.mrb[0].mxu0
        %v1732 = vadd.f32 %v1395, %v1731
        %v1733 = vand.u32 %v244, 4294901760
        %v1734 = vsub.f32 %v244, %v1733
        %1735 = vmatprep.mubr.f32.mxu0 %v1734
        %v1736 = vand.u32 %v243, 4294901760
        %v1737 = vsub.f32 %v243, %v1736
        %1738 = vmatmul.mubr.f32.gmra.mrb[0].mxu0 %v1737
        %v1739 = vpop.f32.mrb[0].mxu0
        %v1740 = vadd.f32 %v1401, %v1739
        %v1741 = vpop.f32.mrb[0].mxu0
        %v1742 = vadd.f32 %v1403, %v1741
        %v1743 = vand.u32 %v252, 4294901760
        %v1744 = vsub.f32 %v252, %v1743
        %1745 = vmatprep.mubr.f32.mxu0 %v1744
        %v1746 = vand.u32 %v251, 4294901760
        %v1747 = vsub.f32 %v251, %v1746
        %1748 = vmatmul.mubr.f32.gmra.mrb[0].mxu0 %v1747
        %v1749 = vpop.f32.mrb[0].mxu0
        %v1750 = vadd.f32 %v1409, %v1749
        %v1751 = vpop.f32.mrb[0].mxu0
        %v1752 = vadd.f32 %v1411, %v1751
        %v1753 = vand.u32 %v260, 4294901760
        %v1754 = vsub.f32 %v260, %v1753
        %1755 = vmatprep.mubr.f32.mxu0 %v1754
        %v1756 = vand.u32 %v259, 4294901760
        %v1757 = vsub.f32 %v259, %v1756
        %1758 = vmatmul.mubr.f32.gmra.mrb[0].mxu0 %v1757
        %v1759 = vpop.f32.mrb[0].mxu0
        %v1760 = vadd.f32 %v1417, %v1759
        %v1761 = vpop.f32.mrb[0].mxu0
        %v1762 = vadd.f32 %v1419, %v1761
        %v1763 = vand.u32 %v268, 4294901760
        %v1764 = vsub.f32 %v268, %v1763
        %1765 = vmatprep.mubr.f32.mxu0 %v1764
        %v1766 = vand.u32 %v267, 4294901760
        %v1767 = vsub.f32 %v267, %v1766
        %1768 = vmatmul.mubr.f32.gmra.mrb[0].mxu0 %v1767
        %v1769 = vpop.f32.mrb[0].mxu0
        %v1770 = vadd.f32 %v1425, %v1769
        %v1771 = vpop.f32.mrb[0].mxu0
        %v1772 = vadd.f32 %v1427, %v1771
        %v1773 = vand.u32 %v276, 4294901760
        %v1774 = vsub.f32 %v276, %v1773
        %1775 = vmatprep.mubr.f32.mxu0 %v1774
        %v1776 = vand.u32 %v275, 4294901760
        %v1777 = vsub.f32 %v275, %v1776
        %1778 = vmatmul.mubr.f32.gmra.mrb[0].mxu0 %v1777
        %v1779 = vpop.f32.mrb[0].mxu0
        %v1780 = vadd.f32 %v1433, %v1779
        %v1781 = vpop.f32.mrb[0].mxu0
        %v1782 = vadd.f32 %v1435, %v1781
        %v1783 = vand.u32 %v284, 4294901760
        %v1784 = vsub.f32 %v284, %v1783
        %1785 = vmatprep.mubr.f32.mxu0 %v1784
        %v1786 = vand.u32 %v283, 4294901760
        %v1787 = vsub.f32 %v283, %v1786
        %1788 = vmatmul.mubr.f32.gmra.mrb[0].mxu0 %v1787
        %v1789 = vpop.f32.mrb[0].mxu0
        %v1790 = vadd.f32 %v1441, %v1789
        %v1791 = vpop.f32.mrb[0].mxu0
        %v1792 = vadd.f32 %v1443, %v1791
        %v1793 = vand.u32 %v292, 4294901760
        %v1794 = vsub.f32 %v292, %v1793
        %1795 = vmatprep.mubr.f32.mxu0 %v1794
        %v1796 = vand.u32 %v291, 4294901760
        %v1797 = vsub.f32 %v291, %v1796
        %1798 = vmatmul.mubr.f32.gmra.mrb[0].mxu0 %v1797
        %v1799 = vpop.f32.mrb[0].mxu0
        %v1800 = vadd.f32 %v1449, %v1799
        %v1801 = vpop.f32.mrb[0].mxu0
        %v1802 = vadd.f32 %v1451, %v1801
        %v1803 = vand.u32 %v300, 4294901760
        %v1804 = vsub.f32 %v300, %v1803
        %1805 = vmatprep.mubr.f32.mxu0 %v1804
        %v1806 = vand.u32 %v299, 4294901760
        %v1807 = vsub.f32 %v299, %v1806
        %1808 = vmatmul.mubr.f32.gmra.mrb[0].mxu0 %v1807
        %v1809 = vpop.f32.mrb[0].mxu0
        %v1810 = vadd.f32 %v1457, %v1809
        %v1811 = vpop.f32.mrb[0].mxu0
        %v1812 = vadd.f32 %v1459, %v1811
        %1813 = vdwg.mxu0
        %v1814 = vand.u32 %v308, 4294901760
        %1815 = vmatprep.subr.mxu0 %v1814
        %v1816 = vand.u32 %v307, 4294901760
        %1817 = vmatpush1.msra.mxu0 %v1816
        %v1818 = vand.u32 %v310, 4294901760
        %1819 = vmatprep.subr.mxu0 %v1818
        %v1820 = vand.u32 %v309, 4294901760
        %1821 = vmatpush1.msra.mxu0 %v1820
        %v1822 = vand.u32 %v312, 4294901760
        %1823 = vmatprep.subr.mxu0 %v1822
        %v1824 = vand.u32 %v311, 4294901760
        %1825 = vmatpush1.msra.mxu0 %v1824
        %v1826 = vand.u32 %v314, 4294901760
        %1827 = vmatprep.subr.mxu0 %v1826
        %v1828 = vand.u32 %v313, 4294901760
        %1829 = vmatpush1.msra.mxu0 %v1828
        %v1830 = vand.u32 %v316, 4294901760
        %1831 = vmatprep.subr.mxu0 %v1830
        %v1832 = vand.u32 %v315, 4294901760
        %1833 = vmatpush1.msra.mxu0 %v1832
        %v1834 = vand.u32 %v318, 4294901760
        %1835 = vmatprep.subr.mxu0 %v1834
        %v1836 = vand.u32 %v317, 4294901760
        %1837 = vmatpush1.msra.mxu0 %v1836
        %v1838 = vand.u32 %v320, 4294901760
        %1839 = vmatprep.subr.mxu0 %v1838
        %v1840 = vand.u32 %v319, 4294901760
        %1841 = vmatpush1.msra.mxu0 %v1840
        %v1842 = vand.u32 %v322, 4294901760
        %1843 = vmatprep.subr.mxu0 %v1842
        %v1844 = vand.u32 %v321, 4294901760
        %1845 = vmatpush1.msra.mxu0 %v1844
        %v1846 = vand.u32 %v324, 4294901760
        %1847 = vmatprep.subr.mxu0 %v1846
        %v1848 = vand.u32 %v323, 4294901760
        %1849 = vmatpush1.msra.mxu0 %v1848
        %v1850 = vand.u32 %v326, 4294901760
        %1851 = vmatprep.subr.mxu0 %v1850
        %v1852 = vand.u32 %v325, 4294901760
        %1853 = vmatpush1.msra.mxu0 %v1852
        %v1854 = vand.u32 %v328, 4294901760
        %1855 = vmatprep.subr.mxu0 %v1854
        %v1856 = vand.u32 %v327, 4294901760
        %1857 = vmatpush1.msra.mxu0 %v1856
        %v1858 = vand.u32 %v330, 4294901760
        %1859 = vmatprep.subr.mxu0 %v1858
        %v1860 = vand.u32 %v329, 4294901760
        %1861 = vmatpush1.msra.mxu0 %v1860
        %v1862 = vand.u32 %v332, 4294901760
        %1863 = vmatprep.subr.mxu0 %v1862
        %v1864 = vand.u32 %v331, 4294901760
        %1865 = vmatpush1.msra.mxu0 %v1864
        %v1866 = vand.u32 %v334, 4294901760
        %1867 = vmatprep.subr.mxu0 %v1866
        %v1868 = vand.u32 %v333, 4294901760
        %1869 = vmatpush1.msra.mxu0 %v1868
        %v1870 = vand.u32 %v336, 4294901760
        %1871 = vmatprep.subr.mxu0 %v1870
        %v1872 = vand.u32 %v335, 4294901760
        %1873 = vmatpush1.msra.mxu0 %v1872
        %v1874 = vand.u32 %v338, 4294901760
        %1875 = vmatprep.subr.mxu0 %v1874
        %v1876 = vand.u32 %v337, 4294901760
        %1877 = vmatpush1.msra.mxu0 %v1876
        %v1878 = vand.u32 %v340, 4294901760
        %1879 = vmatprep.subr.mxu0 %v1878
        %v1880 = vand.u32 %v339, 4294901760
        %1881 = vmatpush1.msra.mxu0 %v1880
        %v1882 = vand.u32 %v342, 4294901760
        %1883 = vmatprep.subr.mxu0 %v1882
        %v1884 = vand.u32 %v341, 4294901760
        %1885 = vmatpush1.msra.mxu0 %v1884
        %v1886 = vand.u32 %v344, 4294901760
        %1887 = vmatprep.subr.mxu0 %v1886
        %v1888 = vand.u32 %v343, 4294901760
        %1889 = vmatpush1.msra.mxu0 %v1888
        %v1890 = vand.u32 %v346, 4294901760
        %1891 = vmatprep.subr.mxu0 %v1890
        %v1892 = vand.u32 %v345, 4294901760
        %1893 = vmatpush1.msra.mxu0 %v1892
        %v1894 = vand.u32 %v348, 4294901760
        %1895 = vmatprep.subr.mxu0 %v1894
        %v1896 = vand.u32 %v347, 4294901760
        %1897 = vmatpush1.msra.mxu0 %v1896
        %v1898 = vand.u32 %v350, 4294901760
        %1899 = vmatprep.subr.mxu0 %v1898
        %v1900 = vand.u32 %v349, 4294901760
        %1901 = vmatpush1.msra.mxu0 %v1900
        %v1902 = vand.u32 %v352, 4294901760
        %1903 = vmatprep.subr.mxu0 %v1902
        %v1904 = vand.u32 %v351, 4294901760
        %1905 = vmatpush1.msra.mxu0 %v1904
        %v1906 = vand.u32 %v354, 4294901760
        %1907 = vmatprep.subr.mxu0 %v1906
        %v1908 = vand.u32 %v353, 4294901760
        %1909 = vmatpush1.msra.mxu0 %v1908
        %v1910 = vand.u32 %v356, 4294901760
        %1911 = vmatprep.subr.mxu0 %v1910
        %v1912 = vand.u32 %v355, 4294901760
        %1913 = vmatpush1.msra.mxu0 %v1912
        %v1914 = vand.u32 %v358, 4294901760
        %1915 = vmatprep.subr.mxu0 %v1914
        %v1916 = vand.u32 %v357, 4294901760
        %1917 = vmatpush1.msra.mxu0 %v1916
        %v1918 = vand.u32 %v360, 4294901760
        %1919 = vmatprep.subr.mxu0 %v1918
        %v1920 = vand.u32 %v359, 4294901760
        %1921 = vmatpush1.msra.mxu0 %v1920
        %v1922 = vand.u32 %v362, 4294901760
        %1923 = vmatprep.subr.mxu0 %v1922
        %v1924 = vand.u32 %v361, 4294901760
        %1925 = vmatpush1.msra.mxu0 %v1924
        %v1926 = vand.u32 %v364, 4294901760
        %1927 = vmatprep.subr.mxu0 %v1926
        %v1928 = vand.u32 %v363, 4294901760
        %1929 = vmatpush1.msra.mxu0 %v1928
        %v1930 = vand.u32 %v366, 4294901760
        %1931 = vmatprep.subr.mxu0 %v1930
        %v1932 = vand.u32 %v365, 4294901760
        %1933 = vmatpush1.msra.mxu0 %v1932
        %v1934 = vand.u32 %v368, 4294901760
        %1935 = vmatprep.subr.mxu0 %v1934
        %v1936 = vand.u32 %v367, 4294901760
        %1937 = vmatpush1.msra.mxu0 %v1936
        %v1938 = vand.u32 %v370, 4294901760
        %1939 = vmatprep.subr.mxu0 %v1938
        %v1940 = vand.u32 %v369, 4294901760
        %1941 = vmatpush1.msra.mxu0 %v1940
        %v1942 = vand.u32 %v180, 4294901760
        %v1943 = vsub.f32 %v180, %v1942
        %v1944 = vand.u32 %v1943, 4294901760
        %1945 = vmatprep.mubr.f32.mxu0 %v1944
        %v1946 = vand.u32 %v179, 4294901760
        %v1947 = vsub.f32 %v179, %v1946
        %v1948 = vand.u32 %v1947, 4294901760
        %1949 = vmatmul.mubr.f32.gmra.mrb[0].mxu0 %v1948
        %v1950 = vpop.f32.mrb[0].mxu0
        %v1951 = vadd.f32 %v1660, %v1950
        %v1952 = vpop.f32.mrb[0].mxu0
        %v1953 = vadd.f32 %v1662, %v1952
        %v1954 = vand.u32 %v188, 4294901760
        %v1955 = vsub.f32 %v188, %v1954
        %v1956 = vand.u32 %v1955, 4294901760
        %1957 = vmatprep.mubr.f32.mxu0 %v1956
        %v1958 = vand.u32 %v187, 4294901760
        %v1959 = vsub.f32 %v187, %v1958
        %v1960 = vand.u32 %v1959, 4294901760
        %1961 = vmatmul.mubr.f32.gmra.mrb[0].mxu0 %v1960
        %v1962 = vpop.f32.mrb[0].mxu0
        %v1963 = vadd.f32 %v1670, %v1962
        %v1964 = vpop.f32.mrb[0].mxu0
        %v1965 = vadd.f32 %v1672, %v1964
        %v1966 = vand.u32 %v196, 4294901760
        %v1967 = vsub.f32 %v196, %v1966
        %v1968 = vand.u32 %v1967, 4294901760
        %1969 = vmatprep.mubr.f32.mxu0 %v1968
        %v1970 = vand.u32 %v195, 4294901760
        %v1971 = vsub.f32 %v195, %v1970
        %v1972 = vand.u32 %v1971, 4294901760
        %1973 = vmatmul.mubr.f32.gmra.mrb[0].mxu0 %v1972
        %v1974 = vpop.f32.mrb[0].mxu0
        %v1975 = vadd.f32 %v1680, %v1974
        %v1976 = vpop.f32.mrb[0].mxu0
        %v1977 = vadd.f32 %v1682, %v1976
        %v1978 = vand.u32 %v204, 4294901760
        %v1979 = vsub.f32 %v204, %v1978
        %v1980 = vand.u32 %v1979, 4294901760
        %1981 = vmatprep.mubr.f32.mxu0 %v1980
        %v1982 = vand.u32 %v203, 4294901760
        %v1983 = vsub.f32 %v203, %v1982
        %v1984 = vand.u32 %v1983, 4294901760
        %1985 = vmatmul.mubr.f32.gmra.mrb[0].mxu0 %v1984
        %v1986 = vpop.f32.mrb[0].mxu0
        %v1987 = vadd.f32 %v1690, %v1986
        %v1988 = vpop.f32.mrb[0].mxu0
        %v1989 = vadd.f32 %v1692, %v1988
        %v1990 = vand.u32 %v212, 4294901760
        %v1991 = vsub.f32 %v212, %v1990
        %v1992 = vand.u32 %v1991, 4294901760
        %1993 = vmatprep.mubr.f32.mxu0 %v1992
        %v1994 = vand.u32 %v211, 4294901760
        %v1995 = vsub.f32 %v211, %v1994
        %v1996 = vand.u32 %v1995, 4294901760
        %1997 = vmatmul.mubr.f32.gmra.mrb[0].mxu0 %v1996
        %v1998 = vpop.f32.mrb[0].mxu0
        %v1999 = vadd.f32 %v1700, %v1998
        %v2000 = vpop.f32.mrb[0].mxu0
        %v2001 = vadd.f32 %v1702, %v2000
        %v2002 = vand.u32 %v220, 4294901760
        %v2003 = vsub.f32 %v220, %v2002
        %v2004 = vand.u32 %v2003, 4294901760
        %2005 = vmatprep.mubr.f32.mxu0 %v2004
        %v2006 = vand.u32 %v219, 4294901760
        %v2007 = vsub.f32 %v219, %v2006
        %v2008 = vand.u32 %v2007, 4294901760
        %2009 = vmatmul.mubr.f32.gmra.mrb[0].mxu0 %v2008
        %v2010 = vpop.f32.mrb[0].mxu0
        %v2011 = vadd.f32 %v1710, %v2010
        %v2012 = vpop.f32.mrb[0].mxu0
        %v2013 = vadd.f32 %v1712, %v2012
        %v2014 = vand.u32 %v228, 4294901760
        %v2015 = vsub.f32 %v228, %v2014
        %v2016 = vand.u32 %v2015, 4294901760
        %2017 = vmatprep.mubr.f32.mxu0 %v2016
        %v2018 = vand.u32 %v227, 4294901760
        %v2019 = vsub.f32 %v227, %v2018
        %v2020 = vand.u32 %v2019, 4294901760
        %2021 = vmatmul.mubr.f32.gmra.mrb[0].mxu0 %v2020
        %v2022 = vpop.f32.mrb[0].mxu0
        %v2023 = vadd.f32 %v1720, %v2022
        %v2024 = vpop.f32.mrb[0].mxu0
        %v2025 = vadd.f32 %v1722, %v2024
        %v2026 = vand.u32 %v236, 4294901760
        %v2027 = vsub.f32 %v236, %v2026
        %v2028 = vand.u32 %v2027, 4294901760
        %2029 = vmatprep.mubr.f32.mxu0 %v2028
        %v2030 = vand.u32 %v235, 4294901760
        %v2031 = vsub.f32 %v235, %v2030
        %v2032 = vand.u32 %v2031, 4294901760
        %2033 = vmatmul.mubr.f32.gmra.mrb[0].mxu0 %v2032
        %v2034 = vpop.f32.mrb[0].mxu0
        %v2035 = vadd.f32 %v1730, %v2034
        %v2036 = vpop.f32.mrb[0].mxu0
        %v2037 = vadd.f32 %v1732, %v2036
        %v2038 = vand.u32 %v244, 4294901760
        %v2039 = vsub.f32 %v244, %v2038
        %v2040 = vand.u32 %v2039, 4294901760
        %2041 = vmatprep.mubr.f32.mxu0 %v2040
        %v2042 = vand.u32 %v243, 4294901760
        %v2043 = vsub.f32 %v243, %v2042
        %v2044 = vand.u32 %v2043, 4294901760
        %2045 = vmatmul.mubr.f32.gmra.mrb[0].mxu0 %v2044
        %v2046 = vpop.f32.mrb[0].mxu0
        %v2047 = vadd.f32 %v1740, %v2046
        %v2048 = vpop.f32.mrb[0].mxu0
        %v2049 = vadd.f32 %v1742, %v2048
        %v2050 = vand.u32 %v252, 4294901760
        %v2051 = vsub.f32 %v252, %v2050
        %v2052 = vand.u32 %v2051, 4294901760
        %2053 = vmatprep.mubr.f32.mxu0 %v2052
        %v2054 = vand.u32 %v251, 4294901760
        %v2055 = vsub.f32 %v251, %v2054
        %v2056 = vand.u32 %v2055, 4294901760
        %2057 = vmatmul.mubr.f32.gmra.mrb[0].mxu0 %v2056
        %v2058 = vpop.f32.mrb[0].mxu0
        %v2059 = vadd.f32 %v1750, %v2058
        %v2060 = vpop.f32.mrb[0].mxu0
        %v2061 = vadd.f32 %v1752, %v2060
        %v2062 = vand.u32 %v260, 4294901760
        %v2063 = vsub.f32 %v260, %v2062
        %v2064 = vand.u32 %v2063, 4294901760
        %2065 = vmatprep.mubr.f32.mxu0 %v2064
        %v2066 = vand.u32 %v259, 4294901760
        %v2067 = vsub.f32 %v259, %v2066
        %v2068 = vand.u32 %v2067, 4294901760
        %2069 = vmatmul.mubr.f32.gmra.mrb[0].mxu0 %v2068
        %v2070 = vpop.f32.mrb[0].mxu0
        %v2071 = vadd.f32 %v1760, %v2070
        %v2072 = vpop.f32.mrb[0].mxu0
        %v2073 = vadd.f32 %v1762, %v2072
        %v2074 = vand.u32 %v268, 4294901760
        %v2075 = vsub.f32 %v268, %v2074
        %v2076 = vand.u32 %v2075, 4294901760
        %2077 = vmatprep.mubr.f32.mxu0 %v2076
        %v2078 = vand.u32 %v267, 4294901760
        %v2079 = vsub.f32 %v267, %v2078
        %v2080 = vand.u32 %v2079, 4294901760
        %2081 = vmatmul.mubr.f32.gmra.mrb[0].mxu0 %v2080
        %v2082 = vpop.f32.mrb[0].mxu0
        %v2083 = vadd.f32 %v1770, %v2082
        %v2084 = vpop.f32.mrb[0].mxu0
        %v2085 = vadd.f32 %v1772, %v2084
        %v2086 = vand.u32 %v276, 4294901760
        %v2087 = vsub.f32 %v276, %v2086
        %v2088 = vand.u32 %v2087, 4294901760
        %2089 = vmatprep.mubr.f32.mxu0 %v2088
        %v2090 = vand.u32 %v275, 4294901760
        %v2091 = vsub.f32 %v275, %v2090
        %v2092 = vand.u32 %v2091, 4294901760
        %2093 = vmatmul.mubr.f32.gmra.mrb[0].mxu0 %v2092
        %v2094 = vpop.f32.mrb[0].mxu0
        %v2095 = vadd.f32 %v1780, %v2094
        %v2096 = vpop.f32.mrb[0].mxu0
        %v2097 = vadd.f32 %v1782, %v2096
        %v2098 = vand.u32 %v284, 4294901760
        %v2099 = vsub.f32 %v284, %v2098
        %v2100 = vand.u32 %v2099, 4294901760
        %2101 = vmatprep.mubr.f32.mxu0 %v2100
        %v2102 = vand.u32 %v283, 4294901760
        %v2103 = vsub.f32 %v283, %v2102
        %v2104 = vand.u32 %v2103, 4294901760
        %2105 = vmatmul.mubr.f32.gmra.mrb[0].mxu0 %v2104
        %v2106 = vpop.f32.mrb[0].mxu0
        %v2107 = vadd.f32 %v1790, %v2106
        %v2108 = vpop.f32.mrb[0].mxu0
        %v2109 = vadd.f32 %v1792, %v2108
        %v2110 = vand.u32 %v292, 4294901760
        %v2111 = vsub.f32 %v292, %v2110
        %v2112 = vand.u32 %v2111, 4294901760
        %2113 = vmatprep.mubr.f32.mxu0 %v2112
        %v2114 = vand.u32 %v291, 4294901760
        %v2115 = vsub.f32 %v291, %v2114
        %v2116 = vand.u32 %v2115, 4294901760
        %2117 = vmatmul.mubr.f32.gmra.mrb[0].mxu0 %v2116
        %v2118 = vpop.f32.mrb[0].mxu0
        %v2119 = vadd.f32 %v1800, %v2118
        %v2120 = vpop.f32.mrb[0].mxu0
        %v2121 = vadd.f32 %v1802, %v2120
        %v2122 = vand.u32 %v300, 4294901760
        %v2123 = vsub.f32 %v300, %v2122
        %v2124 = vand.u32 %v2123, 4294901760
        %2125 = vmatprep.mubr.f32.mxu0 %v2124
        %v2126 = vand.u32 %v299, 4294901760
        %v2127 = vsub.f32 %v299, %v2126
        %v2128 = vand.u32 %v2127, 4294901760
        %2129 = vmatmul.mubr.f32.gmra.mrb[0].mxu0 %v2128
        %v2130 = vpop.f32.mrb[0].mxu0
        %v2131 = vadd.f32 %v1810, %v2130
        %v2132 = vpop.f32.mrb[0].mxu0
        %v2133 = vadd.f32 %v1812, %v2132
        %2134 = vdwg.mxu0
        %v2135 = vand.u32 %v308, 4294901760
        %v2136 = vsub.f32 %v308, %v2135
        %v2137 = vand.u32 %v2136, 4294901760
        %2138 = vmatprep.subr.mxu0 %v2137
        %v2139 = vand.u32 %v307, 4294901760
        %v2140 = vsub.f32 %v307, %v2139
        %v2141 = vand.u32 %v2140, 4294901760
        %2142 = vmatpush1.msra.mxu0 %v2141
        %v2143 = vand.u32 %v310, 4294901760
        %v2144 = vsub.f32 %v310, %v2143
        %v2145 = vand.u32 %v2144, 4294901760
        %2146 = vmatprep.subr.mxu0 %v2145
        %v2147 = vand.u32 %v309, 4294901760
        %v2148 = vsub.f32 %v309, %v2147
        %v2149 = vand.u32 %v2148, 4294901760
        %2150 = vmatpush1.msra.mxu0 %v2149
        %v2151 = vand.u32 %v312, 4294901760
        %v2152 = vsub.f32 %v312, %v2151
        %v2153 = vand.u32 %v2152, 4294901760
        %2154 = vmatprep.subr.mxu0 %v2153
        %v2155 = vand.u32 %v311, 4294901760
        %v2156 = vsub.f32 %v311, %v2155
        %v2157 = vand.u32 %v2156, 4294901760
        %2158 = vmatpush1.msra.mxu0 %v2157
        %v2159 = vand.u32 %v314, 4294901760
        %v2160 = vsub.f32 %v314, %v2159
        %v2161 = vand.u32 %v2160, 4294901760
        %2162 = vmatprep.subr.mxu0 %v2161
        %v2163 = vand.u32 %v313, 4294901760
        %v2164 = vsub.f32 %v313, %v2163
        %v2165 = vand.u32 %v2164, 4294901760
        %2166 = vmatpush1.msra.mxu0 %v2165
        %v2167 = vand.u32 %v316, 4294901760
        %v2168 = vsub.f32 %v316, %v2167
        %v2169 = vand.u32 %v2168, 4294901760
        %2170 = vmatprep.subr.mxu0 %v2169
        %v2171 = vand.u32 %v315, 4294901760
        %v2172 = vsub.f32 %v315, %v2171
        %v2173 = vand.u32 %v2172, 4294901760
        %2174 = vmatpush1.msra.mxu0 %v2173
        %v2175 = vand.u32 %v318, 4294901760
        %v2176 = vsub.f32 %v318, %v2175
        %v2177 = vand.u32 %v2176, 4294901760
        %2178 = vmatprep.subr.mxu0 %v2177
        %v2179 = vand.u32 %v317, 4294901760
        %v2180 = vsub.f32 %v317, %v2179
        %v2181 = vand.u32 %v2180, 4294901760
        %2182 = vmatpush1.msra.mxu0 %v2181
        %v2183 = vand.u32 %v320, 4294901760
        %v2184 = vsub.f32 %v320, %v2183
        %v2185 = vand.u32 %v2184, 4294901760
        %2186 = vmatprep.subr.mxu0 %v2185
        %v2187 = vand.u32 %v319, 4294901760
        %v2188 = vsub.f32 %v319, %v2187
        %v2189 = vand.u32 %v2188, 4294901760
        %2190 = vmatpush1.msra.mxu0 %v2189
        %v2191 = vand.u32 %v322, 4294901760
        %v2192 = vsub.f32 %v322, %v2191
        %v2193 = vand.u32 %v2192, 4294901760
        %2194 = vmatprep.subr.mxu0 %v2193
        %v2195 = vand.u32 %v321, 4294901760
        %v2196 = vsub.f32 %v321, %v2195
        %v2197 = vand.u32 %v2196, 4294901760
        %2198 = vmatpush1.msra.mxu0 %v2197
        %v2199 = vand.u32 %v324, 4294901760
        %v2200 = vsub.f32 %v324, %v2199
        %v2201 = vand.u32 %v2200, 4294901760
        %2202 = vmatprep.subr.mxu0 %v2201
        %v2203 = vand.u32 %v323, 4294901760
        %v2204 = vsub.f32 %v323, %v2203
        %v2205 = vand.u32 %v2204, 4294901760
        %2206 = vmatpush1.msra.mxu0 %v2205
        %v2207 = vand.u32 %v326, 4294901760
        %v2208 = vsub.f32 %v326, %v2207
        %v2209 = vand.u32 %v2208, 4294901760
        %2210 = vmatprep.subr.mxu0 %v2209
        %v2211 = vand.u32 %v325, 4294901760
        %v2212 = vsub.f32 %v325, %v2211
        %v2213 = vand.u32 %v2212, 4294901760
        %2214 = vmatpush1.msra.mxu0 %v2213
        %v2215 = vand.u32 %v328, 4294901760
        %v2216 = vsub.f32 %v328, %v2215
        %v2217 = vand.u32 %v2216, 4294901760
        %2218 = vmatprep.subr.mxu0 %v2217
        %v2219 = vand.u32 %v327, 4294901760
        %v2220 = vsub.f32 %v327, %v2219
        %v2221 = vand.u32 %v2220, 4294901760
        %2222 = vmatpush1.msra.mxu0 %v2221
        %v2223 = vand.u32 %v330, 4294901760
        %v2224 = vsub.f32 %v330, %v2223
        %v2225 = vand.u32 %v2224, 4294901760
        %2226 = vmatprep.subr.mxu0 %v2225
        %v2227 = vand.u32 %v329, 4294901760
        %v2228 = vsub.f32 %v329, %v2227
        %v2229 = vand.u32 %v2228, 4294901760
        %2230 = vmatpush1.msra.mxu0 %v2229
        %v2231 = vand.u32 %v332, 4294901760
        %v2232 = vsub.f32 %v332, %v2231
        %v2233 = vand.u32 %v2232, 4294901760
        %2234 = vmatprep.subr.mxu0 %v2233
        %v2235 = vand.u32 %v331, 4294901760
        %v2236 = vsub.f32 %v331, %v2235
        %v2237 = vand.u32 %v2236, 4294901760
        %2238 = vmatpush1.msra.mxu0 %v2237
        %v2239 = vand.u32 %v334, 4294901760
        %v2240 = vsub.f32 %v334, %v2239
        %v2241 = vand.u32 %v2240, 4294901760
        %2242 = vmatprep.subr.mxu0 %v2241
        %v2243 = vand.u32 %v333, 4294901760
        %v2244 = vsub.f32 %v333, %v2243
        %v2245 = vand.u32 %v2244, 4294901760
        %2246 = vmatpush1.msra.mxu0 %v2245
        %v2247 = vand.u32 %v336, 4294901760
        %v2248 = vsub.f32 %v336, %v2247
        %v2249 = vand.u32 %v2248, 4294901760
        %2250 = vmatprep.subr.mxu0 %v2249
        %v2251 = vand.u32 %v335, 4294901760
        %v2252 = vsub.f32 %v335, %v2251
        %v2253 = vand.u32 %v2252, 4294901760
        %2254 = vmatpush1.msra.mxu0 %v2253
        %v2255 = vand.u32 %v338, 4294901760
        %v2256 = vsub.f32 %v338, %v2255
        %v2257 = vand.u32 %v2256, 4294901760
        %2258 = vmatprep.subr.mxu0 %v2257
        %v2259 = vand.u32 %v337, 4294901760
        %v2260 = vsub.f32 %v337, %v2259
        %v2261 = vand.u32 %v2260, 4294901760
        %2262 = vmatpush1.msra.mxu0 %v2261
        %v2263 = vand.u32 %v340, 4294901760
        %v2264 = vsub.f32 %v340, %v2263
        %v2265 = vand.u32 %v2264, 4294901760
        %2266 = vmatprep.subr.mxu0 %v2265
        %v2267 = vand.u32 %v339, 4294901760
        %v2268 = vsub.f32 %v339, %v2267
        %v2269 = vand.u32 %v2268, 4294901760
        %2270 = vmatpush1.msra.mxu0 %v2269
        %v2271 = vand.u32 %v342, 4294901760
        %v2272 = vsub.f32 %v342, %v2271
        %v2273 = vand.u32 %v2272, 4294901760
        %2274 = vmatprep.subr.mxu0 %v2273
        %v2275 = vand.u32 %v341, 4294901760
        %v2276 = vsub.f32 %v341, %v2275
        %v2277 = vand.u32 %v2276, 4294901760
        %2278 = vmatpush1.msra.mxu0 %v2277
        %v2279 = vand.u32 %v344, 4294901760
        %v2280 = vsub.f32 %v344, %v2279
        %v2281 = vand.u32 %v2280, 4294901760
        %2282 = vmatprep.subr.mxu0 %v2281
        %v2283 = vand.u32 %v343, 4294901760
        %v2284 = vsub.f32 %v343, %v2283
        %v2285 = vand.u32 %v2284, 4294901760
        %2286 = vmatpush1.msra.mxu0 %v2285
        %v2287 = vand.u32 %v346, 4294901760
        %v2288 = vsub.f32 %v346, %v2287
        %v2289 = vand.u32 %v2288, 4294901760
        %2290 = vmatprep.subr.mxu0 %v2289
        %v2291 = vand.u32 %v345, 4294901760
        %v2292 = vsub.f32 %v345, %v2291
        %v2293 = vand.u32 %v2292, 4294901760
        %2294 = vmatpush1.msra.mxu0 %v2293
        %v2295 = vand.u32 %v348, 4294901760
        %v2296 = vsub.f32 %v348, %v2295
        %v2297 = vand.u32 %v2296, 4294901760
        %2298 = vmatprep.subr.mxu0 %v2297
        %v2299 = vand.u32 %v347, 4294901760
        %v2300 = vsub.f32 %v347, %v2299
        %v2301 = vand.u32 %v2300, 4294901760
        %2302 = vmatpush1.msra.mxu0 %v2301
        %v2303 = vand.u32 %v350, 4294901760
        %v2304 = vsub.f32 %v350, %v2303
        %v2305 = vand.u32 %v2304, 4294901760
        %2306 = vmatprep.subr.mxu0 %v2305
        %v2307 = vand.u32 %v349, 4294901760
        %v2308 = vsub.f32 %v349, %v2307
        %v2309 = vand.u32 %v2308, 4294901760
        %2310 = vmatpush1.msra.mxu0 %v2309
        %v2311 = vand.u32 %v352, 4294901760
        %v2312 = vsub.f32 %v352, %v2311
        %v2313 = vand.u32 %v2312, 4294901760
        %2314 = vmatprep.subr.mxu0 %v2313
        %v2315 = vand.u32 %v351, 4294901760
        %v2316 = vsub.f32 %v351, %v2315
        %v2317 = vand.u32 %v2316, 4294901760
        %2318 = vmatpush1.msra.mxu0 %v2317
        %v2319 = vand.u32 %v354, 4294901760
        %v2320 = vsub.f32 %v354, %v2319
        %v2321 = vand.u32 %v2320, 4294901760
        %2322 = vmatprep.subr.mxu0 %v2321
        %v2323 = vand.u32 %v353, 4294901760
        %v2324 = vsub.f32 %v353, %v2323
        %v2325 = vand.u32 %v2324, 4294901760
        %2326 = vmatpush1.msra.mxu0 %v2325
        %v2327 = vand.u32 %v356, 4294901760
        %v2328 = vsub.f32 %v356, %v2327
        %v2329 = vand.u32 %v2328, 4294901760
        %2330 = vmatprep.subr.mxu0 %v2329
        %v2331 = vand.u32 %v355, 4294901760
        %v2332 = vsub.f32 %v355, %v2331
        %v2333 = vand.u32 %v2332, 4294901760
        %2334 = vmatpush1.msra.mxu0 %v2333
        %v2335 = vand.u32 %v358, 4294901760
        %v2336 = vsub.f32 %v358, %v2335
        %v2337 = vand.u32 %v2336, 4294901760
        %2338 = vmatprep.subr.mxu0 %v2337
        %v2339 = vand.u32 %v357, 4294901760
        %v2340 = vsub.f32 %v357, %v2339
        %v2341 = vand.u32 %v2340, 4294901760
        %2342 = vmatpush1.msra.mxu0 %v2341
        %v2343 = vand.u32 %v360, 4294901760
        %v2344 = vsub.f32 %v360, %v2343
        %v2345 = vand.u32 %v2344, 4294901760
        %2346 = vmatprep.subr.mxu0 %v2345
        %v2347 = vand.u32 %v359, 4294901760
        %v2348 = vsub.f32 %v359, %v2347
        %v2349 = vand.u32 %v2348, 4294901760
        %2350 = vmatpush1.msra.mxu0 %v2349
        %v2351 = vand.u32 %v362, 4294901760
        %v2352 = vsub.f32 %v362, %v2351
        %v2353 = vand.u32 %v2352, 4294901760
        %2354 = vmatprep.subr.mxu0 %v2353
        %v2355 = vand.u32 %v361, 4294901760
        %v2356 = vsub.f32 %v361, %v2355
        %v2357 = vand.u32 %v2356, 4294901760
        %2358 = vmatpush1.msra.mxu0 %v2357
        %v2359 = vand.u32 %v364, 4294901760
        %v2360 = vsub.f32 %v364, %v2359
        %v2361 = vand.u32 %v2360, 4294901760
        %2362 = vmatprep.subr.mxu0 %v2361
        %v2363 = vand.u32 %v363, 4294901760
        %v2364 = vsub.f32 %v363, %v2363
        %v2365 = vand.u32 %v2364, 4294901760
        %2366 = vmatpush1.msra.mxu0 %v2365
        %v2367 = vand.u32 %v366, 4294901760
        %v2368 = vsub.f32 %v366, %v2367
        %v2369 = vand.u32 %v2368, 4294901760
        %2370 = vmatprep.subr.mxu0 %v2369
        %v2371 = vand.u32 %v365, 4294901760
        %v2372 = vsub.f32 %v365, %v2371
        %v2373 = vand.u32 %v2372, 4294901760
        %2374 = vmatpush1.msra.mxu0 %v2373
        %v2375 = vand.u32 %v368, 4294901760
        %v2376 = vsub.f32 %v368, %v2375
        %v2377 = vand.u32 %v2376, 4294901760
        %2378 = vmatprep.subr.mxu0 %v2377
        %v2379 = vand.u32 %v367, 4294901760
        %v2380 = vsub.f32 %v367, %v2379
        %v2381 = vand.u32 %v2380, 4294901760
        %2382 = vmatpush1.msra.mxu0 %v2381
        %v2383 = vand.u32 %v370, 4294901760
        %v2384 = vsub.f32 %v370, %v2383
        %v2385 = vand.u32 %v2384, 4294901760
        %2386 = vmatprep.subr.mxu0 %v2385
        %v2387 = vand.u32 %v369, 4294901760
        %v2388 = vsub.f32 %v369, %v2387
        %v2389 = vand.u32 %v2388, 4294901760
        %2390 = vmatpush1.msra.mxu0 %v2389
        %v2391 = vand.u32 %v180, 4294901760
        %2392 = vmatprep.mubr.f32.mxu0 %v2391
        %v2393 = vand.u32 %v179, 4294901760
        %2394 = vmatmul.mubr.f32.gmra.mrb[0].mxu0 %v2393
        %v2395 = vpop.f32.mrb[0].mxu0
        %v2396 = vadd.f32 %v1951, %v2395
        %v2397 = vpop.f32.mrb[0].mxu0
        %v2398 = vadd.f32 %v1953, %v2397
        %v2399 = vand.u32 %v188, 4294901760
        %2400 = vmatprep.mubr.f32.mxu0 %v2399
        %v2401 = vand.u32 %v187, 4294901760
        %2402 = vmatmul.mubr.f32.gmra.mrb[0].mxu0 %v2401
        %v2403 = vpop.f32.mrb[0].mxu0
        %v2404 = vadd.f32 %v1963, %v2403
        %v2405 = vpop.f32.mrb[0].mxu0
        %v2406 = vadd.f32 %v1965, %v2405
        %v2407 = vand.u32 %v196, 4294901760
        %2408 = vmatprep.mubr.f32.mxu0 %v2407
        %v2409 = vand.u32 %v195, 4294901760
        %2410 = vmatmul.mubr.f32.gmra.mrb[0].mxu0 %v2409
        %v2411 = vpop.f32.mrb[0].mxu0
        %v2412 = vadd.f32 %v1975, %v2411
        %v2413 = vpop.f32.mrb[0].mxu0
        %v2414 = vadd.f32 %v1977, %v2413
        %v2415 = vand.u32 %v204, 4294901760
        %2416 = vmatprep.mubr.f32.mxu0 %v2415
        %v2417 = vand.u32 %v203, 4294901760
        %2418 = vmatmul.mubr.f32.gmra.mrb[0].mxu0 %v2417
        %v2419 = vpop.f32.mrb[0].mxu0
        %v2420 = vadd.f32 %v1987, %v2419
        %v2421 = vpop.f32.mrb[0].mxu0
        %v2422 = vadd.f32 %v1989, %v2421
        %v2423 = vand.u32 %v212, 4294901760
        %2424 = vmatprep.mubr.f32.mxu0 %v2423
        %v2425 = vand.u32 %v211, 4294901760
        %2426 = vmatmul.mubr.f32.gmra.mrb[0].mxu0 %v2425
        %v2427 = vpop.f32.mrb[0].mxu0
        %v2428 = vadd.f32 %v1999, %v2427
        %v2429 = vpop.f32.mrb[0].mxu0
        %v2430 = vadd.f32 %v2001, %v2429
        %v2431 = vand.u32 %v220, 4294901760
        %2432 = vmatprep.mubr.f32.mxu0 %v2431
        %v2433 = vand.u32 %v219, 4294901760
        %2434 = vmatmul.mubr.f32.gmra.mrb[0].mxu0 %v2433
        %v2435 = vpop.f32.mrb[0].mxu0
        %v2436 = vadd.f32 %v2011, %v2435
        %v2437 = vpop.f32.mrb[0].mxu0
        %v2438 = vadd.f32 %v2013, %v2437
        %v2439 = vand.u32 %v228, 4294901760
        %2440 = vmatprep.mubr.f32.mxu0 %v2439
        %v2441 = vand.u32 %v227, 4294901760
        %2442 = vmatmul.mubr.f32.gmra.mrb[0].mxu0 %v2441
        %v2443 = vpop.f32.mrb[0].mxu0
        %v2444 = vadd.f32 %v2023, %v2443
        %v2445 = vpop.f32.mrb[0].mxu0
        %v2446 = vadd.f32 %v2025, %v2445
        %v2447 = vand.u32 %v236, 4294901760
        %2448 = vmatprep.mubr.f32.mxu0 %v2447
        %v2449 = vand.u32 %v235, 4294901760
        %2450 = vmatmul.mubr.f32.gmra.mrb[0].mxu0 %v2449
        %v2451 = vpop.f32.mrb[0].mxu0
        %v2452 = vadd.f32 %v2035, %v2451
        %v2453 = vpop.f32.mrb[0].mxu0
        %v2454 = vadd.f32 %v2037, %v2453
        %v2455 = vand.u32 %v244, 4294901760
        %2456 = vmatprep.mubr.f32.mxu0 %v2455
        %v2457 = vand.u32 %v243, 4294901760
        %2458 = vmatmul.mubr.f32.gmra.mrb[0].mxu0 %v2457
        %v2459 = vpop.f32.mrb[0].mxu0
        %v2460 = vadd.f32 %v2047, %v2459
        %v2461 = vpop.f32.mrb[0].mxu0
        %v2462 = vadd.f32 %v2049, %v2461
        %v2463 = vand.u32 %v252, 4294901760
        %2464 = vmatprep.mubr.f32.mxu0 %v2463
        %v2465 = vand.u32 %v251, 4294901760
        %2466 = vmatmul.mubr.f32.gmra.mrb[0].mxu0 %v2465
        %v2467 = vpop.f32.mrb[0].mxu0
        %v2468 = vadd.f32 %v2059, %v2467
        %v2469 = vpop.f32.mrb[0].mxu0
        %v2470 = vadd.f32 %v2061, %v2469
        %v2471 = vand.u32 %v260, 4294901760
        %2472 = vmatprep.mubr.f32.mxu0 %v2471
        %v2473 = vand.u32 %v259, 4294901760
        %2474 = vmatmul.mubr.f32.gmra.mrb[0].mxu0 %v2473
        %v2475 = vpop.f32.mrb[0].mxu0
        %v2476 = vadd.f32 %v2071, %v2475
        %v2477 = vpop.f32.mrb[0].mxu0
        %v2478 = vadd.f32 %v2073, %v2477
        %v2479 = vand.u32 %v268, 4294901760
        %2480 = vmatprep.mubr.f32.mxu0 %v2479
        %v2481 = vand.u32 %v267, 4294901760
        %2482 = vmatmul.mubr.f32.gmra.mrb[0].mxu0 %v2481
        %v2483 = vpop.f32.mrb[0].mxu0
        %v2484 = vadd.f32 %v2083, %v2483
        %v2485 = vpop.f32.mrb[0].mxu0
        %v2486 = vadd.f32 %v2085, %v2485
        %v2487 = vand.u32 %v276, 4294901760
        %2488 = vmatprep.mubr.f32.mxu0 %v2487
        %v2489 = vand.u32 %v275, 4294901760
        %2490 = vmatmul.mubr.f32.gmra.mrb[0].mxu0 %v2489
        %v2491 = vpop.f32.mrb[0].mxu0
        %v2492 = vadd.f32 %v2095, %v2491
        %v2493 = vpop.f32.mrb[0].mxu0
        %v2494 = vadd.f32 %v2097, %v2493
        %v2495 = vand.u32 %v284, 4294901760
        %2496 = vmatprep.mubr.f32.mxu0 %v2495
        %v2497 = vand.u32 %v283, 4294901760
        %2498 = vmatmul.mubr.f32.gmra.mrb[0].mxu0 %v2497
        %v2499 = vpop.f32.mrb[0].mxu0
        %v2500 = vadd.f32 %v2107, %v2499
        %v2501 = vpop.f32.mrb[0].mxu0
        %v2502 = vadd.f32 %v2109, %v2501
        %v2503 = vand.u32 %v292, 4294901760
        %2504 = vmatprep.mubr.f32.mxu0 %v2503
        %v2505 = vand.u32 %v291, 4294901760
        %2506 = vmatmul.mubr.f32.gmra.mrb[0].mxu0 %v2505
        %v2507 = vpop.f32.mrb[0].mxu0
        %v2508 = vadd.f32 %v2119, %v2507
        %v2509 = vpop.f32.mrb[0].mxu0
        %v2510 = vadd.f32 %v2121, %v2509
        %v2511 = vand.u32 %v300, 4294901760
        %2512 = vmatprep.mubr.f32.mxu0 %v2511
        %v2513 = vand.u32 %v299, 4294901760
        %2514 = vmatmul.mubr.f32.gmra.mrb[0].mxu0 %v2513
        %v2515 = vpop.f32.mrb[0].mxu0
        %v2516 = vadd.f32 %v2131, %v2515
        %v2517 = vpop.f32.mrb[0].mxu0
        %v2518 = vadd.f32 %v2133, %v2517
        %2519 = vdwg.mxu0
        %v2520 = vand.u32 %v308, 4294901760
        %2521 = vmatprep.subr.mxu0 %v2520
        %v2522 = vand.u32 %v307, 4294901760
        %2523 = vmatpush1.msra.mxu0 %v2522
        %v2524 = vand.u32 %v310, 4294901760
        %2525 = vmatprep.subr.mxu0 %v2524
        %v2526 = vand.u32 %v309, 4294901760
        %2527 = vmatpush1.msra.mxu0 %v2526
        %v2528 = vand.u32 %v312, 4294901760
        %2529 = vmatprep.subr.mxu0 %v2528
        %v2530 = vand.u32 %v311, 4294901760
        %2531 = vmatpush1.msra.mxu0 %v2530
        %v2532 = vand.u32 %v314, 4294901760
        %2533 = vmatprep.subr.mxu0 %v2532
        %v2534 = vand.u32 %v313, 4294901760
        %2535 = vmatpush1.msra.mxu0 %v2534
        %v2536 = vand.u32 %v316, 4294901760
        %2537 = vmatprep.subr.mxu0 %v2536
        %v2538 = vand.u32 %v315, 4294901760
        %2539 = vmatpush1.msra.mxu0 %v2538
        %v2540 = vand.u32 %v318, 4294901760
        %2541 = vmatprep.subr.mxu0 %v2540
        %v2542 = vand.u32 %v317, 4294901760
        %2543 = vmatpush1.msra.mxu0 %v2542
        %v2544 = vand.u32 %v320, 4294901760
        %2545 = vmatprep.subr.mxu0 %v2544
        %v2546 = vand.u32 %v319, 4294901760
        %2547 = vmatpush1.msra.mxu0 %v2546
        %v2548 = vand.u32 %v322, 4294901760
        %2549 = vmatprep.subr.mxu0 %v2548
        %v2550 = vand.u32 %v321, 4294901760
        %2551 = vmatpush1.msra.mxu0 %v2550
        %v2552 = vand.u32 %v324, 4294901760
        %2553 = vmatprep.subr.mxu0 %v2552
        %v2554 = vand.u32 %v323, 4294901760
        %2555 = vmatpush1.msra.mxu0 %v2554
        %v2556 = vand.u32 %v326, 4294901760
        %2557 = vmatprep.subr.mxu0 %v2556
        %v2558 = vand.u32 %v325, 4294901760
        %2559 = vmatpush1.msra.mxu0 %v2558
        %v2560 = vand.u32 %v328, 4294901760
        %2561 = vmatprep.subr.mxu0 %v2560
        %v2562 = vand.u32 %v327, 4294901760
        %2563 = vmatpush1.msra.mxu0 %v2562
        %v2564 = vand.u32 %v330, 4294901760
        %2565 = vmatprep.subr.mxu0 %v2564
        %v2566 = vand.u32 %v329, 4294901760
        %2567 = vmatpush1.msra.mxu0 %v2566
        %v2568 = vand.u32 %v332, 4294901760
        %2569 = vmatprep.subr.mxu0 %v2568
        %v2570 = vand.u32 %v331, 4294901760
        %2571 = vmatpush1.msra.mxu0 %v2570
        %v2572 = vand.u32 %v334, 4294901760
        %2573 = vmatprep.subr.mxu0 %v2572
        %v2574 = vand.u32 %v333, 4294901760
        %2575 = vmatpush1.msra.mxu0 %v2574
        %v2576 = vand.u32 %v336, 4294901760
        %2577 = vmatprep.subr.mxu0 %v2576
        %v2578 = vand.u32 %v335, 4294901760
        %2579 = vmatpush1.msra.mxu0 %v2578
        %v2580 = vand.u32 %v338, 4294901760
        %2581 = vmatprep.subr.mxu0 %v2580
        %v2582 = vand.u32 %v337, 4294901760
        %2583 = vmatpush1.msra.mxu0 %v2582
        %v2584 = vand.u32 %v340, 4294901760
        %2585 = vmatprep.subr.mxu0 %v2584
        %v2586 = vand.u32 %v339, 4294901760
        %2587 = vmatpush1.msra.mxu0 %v2586
        %v2588 = vand.u32 %v342, 4294901760
        %2589 = vmatprep.subr.mxu0 %v2588
        %v2590 = vand.u32 %v341, 4294901760
        %2591 = vmatpush1.msra.mxu0 %v2590
        %v2592 = vand.u32 %v344, 4294901760
        %2593 = vmatprep.subr.mxu0 %v2592
        %v2594 = vand.u32 %v343, 4294901760
        %2595 = vmatpush1.msra.mxu0 %v2594
        %v2596 = vand.u32 %v346, 4294901760
        %2597 = vmatprep.subr.mxu0 %v2596
        %v2598 = vand.u32 %v345, 4294901760
        %2599 = vmatpush1.msra.mxu0 %v2598
        %v2600 = vand.u32 %v348, 4294901760
        %2601 = vmatprep.subr.mxu0 %v2600
        %v2602 = vand.u32 %v347, 4294901760
        %2603 = vmatpush1.msra.mxu0 %v2602
        %v2604 = vand.u32 %v350, 4294901760
        %2605 = vmatprep.subr.mxu0 %v2604
        %v2606 = vand.u32 %v349, 4294901760
        %2607 = vmatpush1.msra.mxu0 %v2606
        %v2608 = vand.u32 %v352, 4294901760
        %2609 = vmatprep.subr.mxu0 %v2608
        %v2610 = vand.u32 %v351, 4294901760
        %2611 = vmatpush1.msra.mxu0 %v2610
        %v2612 = vand.u32 %v354, 4294901760
        %2613 = vmatprep.subr.mxu0 %v2612
        %v2614 = vand.u32 %v353, 4294901760
        %2615 = vmatpush1.msra.mxu0 %v2614
        %v2616 = vand.u32 %v356, 4294901760
        %2617 = vmatprep.subr.mxu0 %v2616
        %v2618 = vand.u32 %v355, 4294901760
        %2619 = vmatpush1.msra.mxu0 %v2618
        %v2620 = vand.u32 %v358, 4294901760
        %2621 = vmatprep.subr.mxu0 %v2620
        %v2622 = vand.u32 %v357, 4294901760
        %2623 = vmatpush1.msra.mxu0 %v2622
        %v2624 = vand.u32 %v360, 4294901760
        %2625 = vmatprep.subr.mxu0 %v2624
        %v2626 = vand.u32 %v359, 4294901760
        %2627 = vmatpush1.msra.mxu0 %v2626
        %v2628 = vand.u32 %v362, 4294901760
        %2629 = vmatprep.subr.mxu0 %v2628
        %v2630 = vand.u32 %v361, 4294901760
        %2631 = vmatpush1.msra.mxu0 %v2630
        %v2632 = vand.u32 %v364, 4294901760
        %2633 = vmatprep.subr.mxu0 %v2632
        %v2634 = vand.u32 %v363, 4294901760
        %2635 = vmatpush1.msra.mxu0 %v2634
        %v2636 = vand.u32 %v366, 4294901760
        %2637 = vmatprep.subr.mxu0 %v2636
        %v2638 = vand.u32 %v365, 4294901760
        %2639 = vmatpush1.msra.mxu0 %v2638
        %v2640 = vand.u32 %v368, 4294901760
        %2641 = vmatprep.subr.mxu0 %v2640
        %v2642 = vand.u32 %v367, 4294901760
        %2643 = vmatpush1.msra.mxu0 %v2642
        %v2644 = vand.u32 %v370, 4294901760
        %2645 = vmatprep.subr.mxu0 %v2644
        %v2646 = vand.u32 %v369, 4294901760
        %2647 = vmatpush1.msra.mxu0 %v2646
        %v2648 = vand.u32 %v180, 4294901760
        %2649 = vmatprep.mubr.f32.mxu0 %v2648
        %v2650 = vand.u32 %v179, 4294901760
        %2651 = vmatmul.mubr.f32.gmra.mrb[0].mxu0 %v2650
        %v2652 = vpop.f32.mrb[0].mxu0
        %v2653 = vadd.f32 %v2396, %v2652
        %v2654 = vpop.f32.mrb[0].mxu0
        %v2655 = vadd.f32 %v2398, %v2654
        %v2656 = vand.u32 %v188, 4294901760
        %2657 = vmatprep.mubr.f32.mxu0 %v2656
        %v2658 = vand.u32 %v187, 4294901760
        %2659 = vmatmul.mubr.f32.gmra.mrb[0].mxu0 %v2658
        %v2660 = vpop.f32.mrb[0].mxu0
        %v2661 = vadd.f32 %v2404, %v2660
        %v2662 = vpop.f32.mrb[0].mxu0
        %v2663 = vadd.f32 %v2406, %v2662
        %v2664 = vand.u32 %v196, 4294901760
        %2665 = vmatprep.mubr.f32.mxu0 %v2664
        %v2666 = vand.u32 %v195, 4294901760
        %2667 = vmatmul.mubr.f32.gmra.mrb[0].mxu0 %v2666
        %v2668 = vpop.f32.mrb[0].mxu0
        %v2669 = vadd.f32 %v2412, %v2668
        %v2670 = vpop.f32.mrb[0].mxu0
        %v2671 = vadd.f32 %v2414, %v2670
        %v2672 = vand.u32 %v204, 4294901760
        %2673 = vmatprep.mubr.f32.mxu0 %v2672
        %v2674 = vand.u32 %v203, 4294901760
        %2675 = vmatmul.mubr.f32.gmra.mrb[0].mxu0 %v2674
        %v2676 = vpop.f32.mrb[0].mxu0
        %v2677 = vadd.f32 %v2420, %v2676
        %v2678 = vpop.f32.mrb[0].mxu0
        %v2679 = vadd.f32 %v2422, %v2678
        %v2680 = vand.u32 %v212, 4294901760
        %2681 = vmatprep.mubr.f32.mxu0 %v2680
        %v2682 = vand.u32 %v211, 4294901760
        %2683 = vmatmul.mubr.f32.gmra.mrb[0].mxu0 %v2682
        %v2684 = vpop.f32.mrb[0].mxu0
        %v2685 = vadd.f32 %v2428, %v2684
        %v2686 = vpop.f32.mrb[0].mxu0
        %v2687 = vadd.f32 %v2430, %v2686
        %v2688 = vand.u32 %v220, 4294901760
        %2689 = vmatprep.mubr.f32.mxu0 %v2688
        %v2690 = vand.u32 %v219, 4294901760
        %2691 = vmatmul.mubr.f32.gmra.mrb[0].mxu0 %v2690
        %v2692 = vpop.f32.mrb[0].mxu0
        %v2693 = vadd.f32 %v2436, %v2692
        %v2694 = vpop.f32.mrb[0].mxu0
        %v2695 = vadd.f32 %v2438, %v2694
        %v2696 = vand.u32 %v228, 4294901760
        %2697 = vmatprep.mubr.f32.mxu0 %v2696
        %v2698 = vand.u32 %v227, 4294901760
        %2699 = vmatmul.mubr.f32.gmra.mrb[0].mxu0 %v2698
        %v2700 = vpop.f32.mrb[0].mxu0
        %v2701 = vadd.f32 %v2444, %v2700
        %v2702 = vpop.f32.mrb[0].mxu0
        %v2703 = vadd.f32 %v2446, %v2702
        %v2704 = vand.u32 %v236, 4294901760
        %2705 = vmatprep.mubr.f32.mxu0 %v2704
        %v2706 = vand.u32 %v235, 4294901760
        %2707 = vmatmul.mubr.f32.gmra.mrb[0].mxu0 %v2706
        %v2708 = vpop.f32.mrb[0].mxu0
        %v2709 = vadd.f32 %v2452, %v2708
        %v2710 = vpop.f32.mrb[0].mxu0
        %v2711 = vadd.f32 %v2454, %v2710
        %v2712 = vand.u32 %v244, 4294901760
        %2713 = vmatprep.mubr.f32.mxu0 %v2712
        %v2714 = vand.u32 %v243, 4294901760
        %2715 = vmatmul.mubr.f32.gmra.mrb[0].mxu0 %v2714
        %v2716 = vpop.f32.mrb[0].mxu0
        %v2717 = vadd.f32 %v2460, %v2716
        %v2718 = vpop.f32.mrb[0].mxu0
        %v2719 = vadd.f32 %v2462, %v2718
        %v2720 = vand.u32 %v252, 4294901760
        %2721 = vmatprep.mubr.f32.mxu0 %v2720
        %v2722 = vand.u32 %v251, 4294901760
        %2723 = vmatmul.mubr.f32.gmra.mrb[0].mxu0 %v2722
        %v2724 = vpop.f32.mrb[0].mxu0
        %v2725 = vadd.f32 %v2468, %v2724
        %v2726 = vpop.f32.mrb[0].mxu0
        %v2727 = vadd.f32 %v2470, %v2726
        %v2728 = vand.u32 %v260, 4294901760
        %2729 = vmatprep.mubr.f32.mxu0 %v2728
        %v2730 = vand.u32 %v259, 4294901760
        %2731 = vmatmul.mubr.f32.gmra.mrb[0].mxu0 %v2730
        %v2732 = vpop.f32.mrb[0].mxu0
        %v2733 = vadd.f32 %v2476, %v2732
        %v2734 = vpop.f32.mrb[0].mxu0
        %v2735 = vadd.f32 %v2478, %v2734
        %v2736 = vand.u32 %v268, 4294901760
        %2737 = vmatprep.mubr.f32.mxu0 %v2736
        %v2738 = vand.u32 %v267, 4294901760
        %2739 = vmatmul.mubr.f32.gmra.mrb[0].mxu0 %v2738
        %v2740 = vpop.f32.mrb[0].mxu0
        %v2741 = vadd.f32 %v2484, %v2740
        %v2742 = vpop.f32.mrb[0].mxu0
        %v2743 = vadd.f32 %v2486, %v2742
        %v2744 = vand.u32 %v276, 4294901760
        %2745 = vmatprep.mubr.f32.mxu0 %v2744
        %v2746 = vand.u32 %v275, 4294901760
        %2747 = vmatmul.mubr.f32.gmra.mrb[0].mxu0 %v2746
        %v2748 = vpop.f32.mrb[0].mxu0
        %v2749 = vadd.f32 %v2492, %v2748
        %v2750 = vpop.f32.mrb[0].mxu0
        %v2751 = vadd.f32 %v2494, %v2750
        %v2752 = vand.u32 %v284, 4294901760
        %2753 = vmatprep.mubr.f32.mxu0 %v2752
        %v2754 = vand.u32 %v283, 4294901760
        %2755 = vmatmul.mubr.f32.gmra.mrb[0].mxu0 %v2754
        %v2756 = vpop.f32.mrb[0].mxu0
        %v2757 = vadd.f32 %v2500, %v2756
        %v2758 = vpop.f32.mrb[0].mxu0
        %v2759 = vadd.f32 %v2502, %v2758
        %v2760 = vand.u32 %v292, 4294901760
        %2761 = vmatprep.mubr.f32.mxu0 %v2760
        %v2762 = vand.u32 %v291, 4294901760
        %2763 = vmatmul.mubr.f32.gmra.mrb[0].mxu0 %v2762
        %v2764 = vpop.f32.mrb[0].mxu0
        %v2765 = vadd.f32 %v2508, %v2764
        %v2766 = vpop.f32.mrb[0].mxu0
        %v2767 = vadd.f32 %v2510, %v2766
        %v2768 = vand.u32 %v300, 4294901760
        %2769 = vmatprep.mubr.f32.mxu0 %v2768
        %v2770 = vand.u32 %v299, 4294901760
        %2771 = vmatmul.mubr.f32.gmra.mrb[0].mxu0 %v2770
        %v2772 = vpop.f32.mrb[0].mxu0
        %v2773 = vadd.f32 %v2516, %v2772
        %v2774 = vpop.f32.mrb[0].mxu0
        %v2775 = vadd.f32 %v2518, %v2774
        %2776 = vdwg.mxu0
        %v2777 = vand.u32 %v372, 4294901760
        %2778 = vmatprep.subr.mxu0 %v2777
        %v2779 = vand.u32 %v371, 4294901760
        %2780 = vmatpush1.msra.mxu0 %v2779
        %v2781 = vand.u32 %v374, 4294901760
        %2782 = vmatprep.subr.mxu0 %v2781
        %v2783 = vand.u32 %v373, 4294901760
        %2784 = vmatpush1.msra.mxu0 %v2783
        %v2785 = vand.u32 %v376, 4294901760
        %2786 = vmatprep.subr.mxu0 %v2785
        %v2787 = vand.u32 %v375, 4294901760
        %2788 = vmatpush1.msra.mxu0 %v2787
        %v2789 = vand.u32 %v378, 4294901760
        %2790 = vmatprep.subr.mxu0 %v2789
        %v2791 = vand.u32 %v377, 4294901760
        %2792 = vmatpush1.msra.mxu0 %v2791
        %v2793 = vand.u32 %v380, 4294901760
        %2794 = vmatprep.subr.mxu0 %v2793
        %v2795 = vand.u32 %v379, 4294901760
        %2796 = vmatpush1.msra.mxu0 %v2795
        %v2797 = vand.u32 %v382, 4294901760
        %2798 = vmatprep.subr.mxu0 %v2797
        %v2799 = vand.u32 %v381, 4294901760
        %2800 = vmatpush1.msra.mxu0 %v2799
        %v2801 = vand.u32 %v384, 4294901760
        %2802 = vmatprep.subr.mxu0 %v2801
        %v2803 = vand.u32 %v383, 4294901760
        %2804 = vmatpush1.msra.mxu0 %v2803
        %v2805 = vand.u32 %v386, 4294901760
        %2806 = vmatprep.subr.mxu0 %v2805
        %v2807 = vand.u32 %v385, 4294901760
        %2808 = vmatpush1.msra.mxu0 %v2807
        %v2809 = vand.u32 %v388, 4294901760
        %2810 = vmatprep.subr.mxu0 %v2809
        %v2811 = vand.u32 %v387, 4294901760
        %2812 = vmatpush1.msra.mxu0 %v2811
        %v2813 = vand.u32 %v390, 4294901760
        %2814 = vmatprep.subr.mxu0 %v2813
        %v2815 = vand.u32 %v389, 4294901760
        %2816 = vmatpush1.msra.mxu0 %v2815
        %v2817 = vand.u32 %v392, 4294901760
        %2818 = vmatprep.subr.mxu0 %v2817
        %v2819 = vand.u32 %v391, 4294901760
        %2820 = vmatpush1.msra.mxu0 %v2819
        %v2821 = vand.u32 %v394, 4294901760
        %2822 = vmatprep.subr.mxu0 %v2821
        %v2823 = vand.u32 %v393, 4294901760
        %2824 = vmatpush1.msra.mxu0 %v2823
        %v2825 = vand.u32 %v396, 4294901760
        %2826 = vmatprep.subr.mxu0 %v2825
        %v2827 = vand.u32 %v395, 4294901760
        %2828 = vmatpush1.msra.mxu0 %v2827
        %v2829 = vand.u32 %v398, 4294901760
        %2830 = vmatprep.subr.mxu0 %v2829
        %v2831 = vand.u32 %v397, 4294901760
        %2832 = vmatpush1.msra.mxu0 %v2831
        %v2833 = vand.u32 %v400, 4294901760
        %2834 = vmatprep.subr.mxu0 %v2833
        %v2835 = vand.u32 %v399, 4294901760
        %2836 = vmatpush1.msra.mxu0 %v2835
        %v2837 = vand.u32 %v402, 4294901760
        %2838 = vmatprep.subr.mxu0 %v2837
        %v2839 = vand.u32 %v401, 4294901760
        %2840 = vmatpush1.msra.mxu0 %v2839
        %v2841 = vand.u32 %v404, 4294901760
        %2842 = vmatprep.subr.mxu0 %v2841
        %v2843 = vand.u32 %v403, 4294901760
        %2844 = vmatpush1.msra.mxu0 %v2843
        %v2845 = vand.u32 %v406, 4294901760
        %2846 = vmatprep.subr.mxu0 %v2845
        %v2847 = vand.u32 %v405, 4294901760
        %2848 = vmatpush1.msra.mxu0 %v2847
        %v2849 = vand.u32 %v408, 4294901760
        %2850 = vmatprep.subr.mxu0 %v2849
        %v2851 = vand.u32 %v407, 4294901760
        %2852 = vmatpush1.msra.mxu0 %v2851
        %v2853 = vand.u32 %v410, 4294901760
        %2854 = vmatprep.subr.mxu0 %v2853
        %v2855 = vand.u32 %v409, 4294901760
        %2856 = vmatpush1.msra.mxu0 %v2855
        %v2857 = vand.u32 %v412, 4294901760
        %2858 = vmatprep.subr.mxu0 %v2857
        %v2859 = vand.u32 %v411, 4294901760
        %2860 = vmatpush1.msra.mxu0 %v2859
        %v2861 = vand.u32 %v414, 4294901760
        %2862 = vmatprep.subr.mxu0 %v2861
        %v2863 = vand.u32 %v413, 4294901760
        %2864 = vmatpush1.msra.mxu0 %v2863
        %v2865 = vand.u32 %v416, 4294901760
        %2866 = vmatprep.subr.mxu0 %v2865
        %v2867 = vand.u32 %v415, 4294901760
        %2868 = vmatpush1.msra.mxu0 %v2867
        %v2869 = vand.u32 %v418, 4294901760
        %2870 = vmatprep.subr.mxu0 %v2869
        %v2871 = vand.u32 %v417, 4294901760
        %2872 = vmatpush1.msra.mxu0 %v2871
        %v2873 = vand.u32 %v420, 4294901760
        %2874 = vmatprep.subr.mxu0 %v2873
        %v2875 = vand.u32 %v419, 4294901760
        %2876 = vmatpush1.msra.mxu0 %v2875
        %v2877 = vand.u32 %v422, 4294901760
        %2878 = vmatprep.subr.mxu0 %v2877
        %v2879 = vand.u32 %v421, 4294901760
        %2880 = vmatpush1.msra.mxu0 %v2879
        %v2881 = vand.u32 %v424, 4294901760
        %2882 = vmatprep.subr.mxu0 %v2881
        %v2883 = vand.u32 %v423, 4294901760
        %2884 = vmatpush1.msra.mxu0 %v2883
        %v2885 = vand.u32 %v426, 4294901760
        %2886 = vmatprep.subr.mxu0 %v2885
        %v2887 = vand.u32 %v425, 4294901760
        %2888 = vmatpush1.msra.mxu0 %v2887
        %v2889 = vand.u32 %v428, 4294901760
        %2890 = vmatprep.subr.mxu0 %v2889
        %v2891 = vand.u32 %v427, 4294901760
        %2892 = vmatpush1.msra.mxu0 %v2891
        %v2893 = vand.u32 %v430, 4294901760
        %2894 = vmatprep.subr.mxu0 %v2893
        %v2895 = vand.u32 %v429, 4294901760
        %2896 = vmatpush1.msra.mxu0 %v2895
        %v2897 = vand.u32 %v432, 4294901760
        %2898 = vmatprep.subr.mxu0 %v2897
        %v2899 = vand.u32 %v431, 4294901760
        %2900 = vmatpush1.msra.mxu0 %v2899
        %v2901 = vand.u32 %v434, 4294901760
        %2902 = vmatprep.subr.mxu0 %v2901
        %v2903 = vand.u32 %v433, 4294901760
        %2904 = vmatpush1.msra.mxu0 %v2903
        %v2905 = vand.u32 %v182, 4294901760
        %v2906 = vsub.f32 %v182, %v2905
        %v2907 = vand.u32 %v2906, 4294901760
        %v2908 = vsub.f32 %v2906, %v2907
        %v2909 = vand.u32 %v2908, 4294901760
        %2910 = vmatprep.mubr.f32.mxu0 %v2909
        %v2911 = vand.u32 %v181, 4294901760
        %v2912 = vsub.f32 %v181, %v2911
        %v2913 = vand.u32 %v2912, 4294901760
        %v2914 = vsub.f32 %v2912, %v2913
        %v2915 = vand.u32 %v2914, 4294901760
        %2916 = vmatmul.mubr.f32.gmra.mrb[0].mxu0 %v2915
        %v2917 = vpop.f32.mrb[0].mxu0
        %v2918 = vadd.f32 %v2653, %v2917
        %v2919 = vpop.f32.mrb[0].mxu0
        %v2920 = vadd.f32 %v2655, %v2919
        %v2921 = vand.u32 %v190, 4294901760
        %v2922 = vsub.f32 %v190, %v2921
        %v2923 = vand.u32 %v2922, 4294901760
        %v2924 = vsub.f32 %v2922, %v2923
        %v2925 = vand.u32 %v2924, 4294901760
        %2926 = vmatprep.mubr.f32.mxu0 %v2925
        %v2927 = vand.u32 %v189, 4294901760
        %v2928 = vsub.f32 %v189, %v2927
        %v2929 = vand.u32 %v2928, 4294901760
        %v2930 = vsub.f32 %v2928, %v2929
        %v2931 = vand.u32 %v2930, 4294901760
        %2932 = vmatmul.mubr.f32.gmra.mrb[0].mxu0 %v2931
        %v2933 = vpop.f32.mrb[0].mxu0
        %v2934 = vadd.f32 %v2661, %v2933
        %v2935 = vpop.f32.mrb[0].mxu0
        %v2936 = vadd.f32 %v2663, %v2935
        %v2937 = vand.u32 %v198, 4294901760
        %v2938 = vsub.f32 %v198, %v2937
        %v2939 = vand.u32 %v2938, 4294901760
        %v2940 = vsub.f32 %v2938, %v2939
        %v2941 = vand.u32 %v2940, 4294901760
        %2942 = vmatprep.mubr.f32.mxu0 %v2941
        %v2943 = vand.u32 %v197, 4294901760
        %v2944 = vsub.f32 %v197, %v2943
        %v2945 = vand.u32 %v2944, 4294901760
        %v2946 = vsub.f32 %v2944, %v2945
        %v2947 = vand.u32 %v2946, 4294901760
        %2948 = vmatmul.mubr.f32.gmra.mrb[0].mxu0 %v2947
        %v2949 = vpop.f32.mrb[0].mxu0
        %v2950 = vadd.f32 %v2669, %v2949
        %v2951 = vpop.f32.mrb[0].mxu0
        %v2952 = vadd.f32 %v2671, %v2951
        %v2953 = vand.u32 %v206, 4294901760
        %v2954 = vsub.f32 %v206, %v2953
        %v2955 = vand.u32 %v2954, 4294901760
        %v2956 = vsub.f32 %v2954, %v2955
        %v2957 = vand.u32 %v2956, 4294901760
        %2958 = vmatprep.mubr.f32.mxu0 %v2957
        %v2959 = vand.u32 %v205, 4294901760
        %v2960 = vsub.f32 %v205, %v2959
        %v2961 = vand.u32 %v2960, 4294901760
        %v2962 = vsub.f32 %v2960, %v2961
        %v2963 = vand.u32 %v2962, 4294901760
        %2964 = vmatmul.mubr.f32.gmra.mrb[0].mxu0 %v2963
        %v2965 = vpop.f32.mrb[0].mxu0
        %v2966 = vadd.f32 %v2677, %v2965
        %v2967 = vpop.f32.mrb[0].mxu0
        %v2968 = vadd.f32 %v2679, %v2967
        %v2969 = vand.u32 %v214, 4294901760
        %v2970 = vsub.f32 %v214, %v2969
        %v2971 = vand.u32 %v2970, 4294901760
        %v2972 = vsub.f32 %v2970, %v2971
        %v2973 = vand.u32 %v2972, 4294901760
        %2974 = vmatprep.mubr.f32.mxu0 %v2973
        %v2975 = vand.u32 %v213, 4294901760
        %v2976 = vsub.f32 %v213, %v2975
        %v2977 = vand.u32 %v2976, 4294901760
        %v2978 = vsub.f32 %v2976, %v2977
        %v2979 = vand.u32 %v2978, 4294901760
        %2980 = vmatmul.mubr.f32.gmra.mrb[0].mxu0 %v2979
        %v2981 = vpop.f32.mrb[0].mxu0
        %v2982 = vadd.f32 %v2685, %v2981
        %v2983 = vpop.f32.mrb[0].mxu0
        %v2984 = vadd.f32 %v2687, %v2983
        %v2985 = vand.u32 %v222, 4294901760
        %v2986 = vsub.f32 %v222, %v2985
        %v2987 = vand.u32 %v2986, 4294901760
        %v2988 = vsub.f32 %v2986, %v2987
        %v2989 = vand.u32 %v2988, 4294901760
        %2990 = vmatprep.mubr.f32.mxu0 %v2989
        %v2991 = vand.u32 %v221, 4294901760
        %v2992 = vsub.f32 %v221, %v2991
        %v2993 = vand.u32 %v2992, 4294901760
        %v2994 = vsub.f32 %v2992, %v2993
        %v2995 = vand.u32 %v2994, 4294901760
        %2996 = vmatmul.mubr.f32.gmra.mrb[0].mxu0 %v2995
        %v2997 = vpop.f32.mrb[0].mxu0
        %v2998 = vadd.f32 %v2693, %v2997
        %v2999 = vpop.f32.mrb[0].mxu0
        %v3000 = vadd.f32 %v2695, %v2999
        %v3001 = vand.u32 %v230, 4294901760
        %v3002 = vsub.f32 %v230, %v3001
        %v3003 = vand.u32 %v3002, 4294901760
        %v3004 = vsub.f32 %v3002, %v3003
        %v3005 = vand.u32 %v3004, 4294901760
        %3006 = vmatprep.mubr.f32.mxu0 %v3005
        %v3007 = vand.u32 %v229, 4294901760
        %v3008 = vsub.f32 %v229, %v3007
        %v3009 = vand.u32 %v3008, 4294901760
        %v3010 = vsub.f32 %v3008, %v3009
        %v3011 = vand.u32 %v3010, 4294901760
        %3012 = vmatmul.mubr.f32.gmra.mrb[0].mxu0 %v3011
        %v3013 = vpop.f32.mrb[0].mxu0
        %v3014 = vadd.f32 %v2701, %v3013
        %v3015 = vpop.f32.mrb[0].mxu0
        %v3016 = vadd.f32 %v2703, %v3015
        %v3017 = vand.u32 %v238, 4294901760
        %v3018 = vsub.f32 %v238, %v3017
        %v3019 = vand.u32 %v3018, 4294901760
        %v3020 = vsub.f32 %v3018, %v3019
        %v3021 = vand.u32 %v3020, 4294901760
        %3022 = vmatprep.mubr.f32.mxu0 %v3021
        %v3023 = vand.u32 %v237, 4294901760
        %v3024 = vsub.f32 %v237, %v3023
        %v3025 = vand.u32 %v3024, 4294901760
        %v3026 = vsub.f32 %v3024, %v3025
        %v3027 = vand.u32 %v3026, 4294901760
        %3028 = vmatmul.mubr.f32.gmra.mrb[0].mxu0 %v3027
        %v3029 = vpop.f32.mrb[0].mxu0
        %v3030 = vadd.f32 %v2709, %v3029
        %v3031 = vpop.f32.mrb[0].mxu0
        %v3032 = vadd.f32 %v2711, %v3031
        %v3033 = vand.u32 %v246, 4294901760
        %v3034 = vsub.f32 %v246, %v3033
        %v3035 = vand.u32 %v3034, 4294901760
        %v3036 = vsub.f32 %v3034, %v3035
        %v3037 = vand.u32 %v3036, 4294901760
        %3038 = vmatprep.mubr.f32.mxu0 %v3037
        %v3039 = vand.u32 %v245, 4294901760
        %v3040 = vsub.f32 %v245, %v3039
        %v3041 = vand.u32 %v3040, 4294901760
        %v3042 = vsub.f32 %v3040, %v3041
        %v3043 = vand.u32 %v3042, 4294901760
        %3044 = vmatmul.mubr.f32.gmra.mrb[0].mxu0 %v3043
        %v3045 = vpop.f32.mrb[0].mxu0
        %v3046 = vadd.f32 %v2717, %v3045
        %v3047 = vpop.f32.mrb[0].mxu0
        %v3048 = vadd.f32 %v2719, %v3047
        %v3049 = vand.u32 %v254, 4294901760
        %v3050 = vsub.f32 %v254, %v3049
        %v3051 = vand.u32 %v3050, 4294901760
        %v3052 = vsub.f32 %v3050, %v3051
        %v3053 = vand.u32 %v3052, 4294901760
        %3054 = vmatprep.mubr.f32.mxu0 %v3053
        %v3055 = vand.u32 %v253, 4294901760
        %v3056 = vsub.f32 %v253, %v3055
        %v3057 = vand.u32 %v3056, 4294901760
        %v3058 = vsub.f32 %v3056, %v3057
        %v3059 = vand.u32 %v3058, 4294901760
        %3060 = vmatmul.mubr.f32.gmra.mrb[0].mxu0 %v3059
        %v3061 = vpop.f32.mrb[0].mxu0
        %v3062 = vadd.f32 %v2725, %v3061
        %v3063 = vpop.f32.mrb[0].mxu0
        %v3064 = vadd.f32 %v2727, %v3063
        %v3065 = vand.u32 %v262, 4294901760
        %v3066 = vsub.f32 %v262, %v3065
        %v3067 = vand.u32 %v3066, 4294901760
        %v3068 = vsub.f32 %v3066, %v3067
        %v3069 = vand.u32 %v3068, 4294901760
        %3070 = vmatprep.mubr.f32.mxu0 %v3069
        %v3071 = vand.u32 %v261, 4294901760
        %v3072 = vsub.f32 %v261, %v3071
        %v3073 = vand.u32 %v3072, 4294901760
        %v3074 = vsub.f32 %v3072, %v3073
        %v3075 = vand.u32 %v3074, 4294901760
        %3076 = vmatmul.mubr.f32.gmra.mrb[0].mxu0 %v3075
        %v3077 = vpop.f32.mrb[0].mxu0
        %v3078 = vadd.f32 %v2733, %v3077
        %v3079 = vpop.f32.mrb[0].mxu0
        %v3080 = vadd.f32 %v2735, %v3079
        %v3081 = vand.u32 %v270, 4294901760
        %v3082 = vsub.f32 %v270, %v3081
        %v3083 = vand.u32 %v3082, 4294901760
        %v3084 = vsub.f32 %v3082, %v3083
        %v3085 = vand.u32 %v3084, 4294901760
        %3086 = vmatprep.mubr.f32.mxu0 %v3085
        %v3087 = vand.u32 %v269, 4294901760
        %v3088 = vsub.f32 %v269, %v3087
        %v3089 = vand.u32 %v3088, 4294901760
        %v3090 = vsub.f32 %v3088, %v3089
        %v3091 = vand.u32 %v3090, 4294901760
        %3092 = vmatmul.mubr.f32.gmra.mrb[0].mxu0 %v3091
        %v3093 = vpop.f32.mrb[0].mxu0
        %v3094 = vadd.f32 %v2741, %v3093
        %v3095 = vpop.f32.mrb[0].mxu0
        %v3096 = vadd.f32 %v2743, %v3095
        %v3097 = vand.u32 %v278, 4294901760
        %v3098 = vsub.f32 %v278, %v3097
        %v3099 = vand.u32 %v3098, 4294901760
        %v3100 = vsub.f32 %v3098, %v3099
        %v3101 = vand.u32 %v3100, 4294901760
        %3102 = vmatprep.mubr.f32.mxu0 %v3101
        %v3103 = vand.u32 %v277, 4294901760
        %v3104 = vsub.f32 %v277, %v3103
        %v3105 = vand.u32 %v3104, 4294901760
        %v3106 = vsub.f32 %v3104, %v3105
        %v3107 = vand.u32 %v3106, 4294901760
        %3108 = vmatmul.mubr.f32.gmra.mrb[0].mxu0 %v3107
        %v3109 = vpop.f32.mrb[0].mxu0
        %v3110 = vadd.f32 %v2749, %v3109
        %v3111 = vpop.f32.mrb[0].mxu0
        %v3112 = vadd.f32 %v2751, %v3111
        %v3113 = vand.u32 %v286, 4294901760
        %v3114 = vsub.f32 %v286, %v3113
        %v3115 = vand.u32 %v3114, 4294901760
        %v3116 = vsub.f32 %v3114, %v3115
        %v3117 = vand.u32 %v3116, 4294901760
        %3118 = vmatprep.mubr.f32.mxu0 %v3117
        %v3119 = vand.u32 %v285, 4294901760
        %v3120 = vsub.f32 %v285, %v3119
        %v3121 = vand.u32 %v3120, 4294901760
        %v3122 = vsub.f32 %v3120, %v3121
        %v3123 = vand.u32 %v3122, 4294901760
        %3124 = vmatmul.mubr.f32.gmra.mrb[0].mxu0 %v3123
        %v3125 = vpop.f32.mrb[0].mxu0
        %v3126 = vadd.f32 %v2757, %v3125
        %v3127 = vpop.f32.mrb[0].mxu0
        %v3128 = vadd.f32 %v2759, %v3127
        %v3129 = vand.u32 %v294, 4294901760
        %v3130 = vsub.f32 %v294, %v3129
        %v3131 = vand.u32 %v3130, 4294901760
        %v3132 = vsub.f32 %v3130, %v3131
        %v3133 = vand.u32 %v3132, 4294901760
        %3134 = vmatprep.mubr.f32.mxu0 %v3133
        %v3135 = vand.u32 %v293, 4294901760
        %v3136 = vsub.f32 %v293, %v3135
        %v3137 = vand.u32 %v3136, 4294901760
        %v3138 = vsub.f32 %v3136, %v3137
        %v3139 = vand.u32 %v3138, 4294901760
        %3140 = vmatmul.mubr.f32.gmra.mrb[0].mxu0 %v3139
        %v3141 = vpop.f32.mrb[0].mxu0
        %v3142 = vadd.f32 %v2765, %v3141
        %v3143 = vpop.f32.mrb[0].mxu0
        %v3144 = vadd.f32 %v2767, %v3143
        %v3145 = vand.u32 %v302, 4294901760
        %v3146 = vsub.f32 %v302, %v3145
        %v3147 = vand.u32 %v3146, 4294901760
        %v3148 = vsub.f32 %v3146, %v3147
        %v3149 = vand.u32 %v3148, 4294901760
        %3150 = vmatprep.mubr.f32.mxu0 %v3149
        %v3151 = vand.u32 %v301, 4294901760
        %v3152 = vsub.f32 %v301, %v3151
        %v3153 = vand.u32 %v3152, 4294901760
        %v3154 = vsub.f32 %v3152, %v3153
        %v3155 = vand.u32 %v3154, 4294901760
        %3156 = vmatmul.mubr.f32.gmra.mrb[0].mxu0 %v3155
        %v3157 = vpop.f32.mrb[0].mxu0
        %v3158 = vadd.f32 %v2773, %v3157
        %v3159 = vpop.f32.mrb[0].mxu0
        %v3160 = vadd.f32 %v2775, %v3159
        %3161 = vdwg.mxu0
        %v3162 = vand.u32 %v372, 4294901760
        %v3163 = vsub.f32 %v372, %v3162
        %v3164 = vand.u32 %v3163, 4294901760
        %v3165 = vsub.f32 %v3163, %v3164
        %v3166 = vand.u32 %v3165, 4294901760
        %3167 = vmatprep.subr.mxu0 %v3166
        %v3168 = vand.u32 %v371, 4294901760
        %v3169 = vsub.f32 %v371, %v3168
        %v3170 = vand.u32 %v3169, 4294901760
        %v3171 = vsub.f32 %v3169, %v3170
        %v3172 = vand.u32 %v3171, 4294901760
        %3173 = vmatpush1.msra.mxu0 %v3172
        %v3174 = vand.u32 %v374, 4294901760
        %v3175 = vsub.f32 %v374, %v3174
        %v3176 = vand.u32 %v3175, 4294901760
        %v3177 = vsub.f32 %v3175, %v3176
        %v3178 = vand.u32 %v3177, 4294901760
        %3179 = vmatprep.subr.mxu0 %v3178
        %v3180 = vand.u32 %v373, 4294901760
        %v3181 = vsub.f32 %v373, %v3180
        %v3182 = vand.u32 %v3181, 4294901760
        %v3183 = vsub.f32 %v3181, %v3182
        %v3184 = vand.u32 %v3183, 4294901760
        %3185 = vmatpush1.msra.mxu0 %v3184
        %v3186 = vand.u32 %v376, 4294901760
        %v3187 = vsub.f32 %v376, %v3186
        %v3188 = vand.u32 %v3187, 4294901760
        %v3189 = vsub.f32 %v3187, %v3188
        %v3190 = vand.u32 %v3189, 4294901760
        %3191 = vmatprep.subr.mxu0 %v3190
        %v3192 = vand.u32 %v375, 4294901760
        %v3193 = vsub.f32 %v375, %v3192
        %v3194 = vand.u32 %v3193, 4294901760
        %v3195 = vsub.f32 %v3193, %v3194
        %v3196 = vand.u32 %v3195, 4294901760
        %3197 = vmatpush1.msra.mxu0 %v3196
        %v3198 = vand.u32 %v378, 4294901760
        %v3199 = vsub.f32 %v378, %v3198
        %v3200 = vand.u32 %v3199, 4294901760
        %v3201 = vsub.f32 %v3199, %v3200
        %v3202 = vand.u32 %v3201, 4294901760
        %3203 = vmatprep.subr.mxu0 %v3202
        %v3204 = vand.u32 %v377, 4294901760
        %v3205 = vsub.f32 %v377, %v3204
        %v3206 = vand.u32 %v3205, 4294901760
        %v3207 = vsub.f32 %v3205, %v3206
        %v3208 = vand.u32 %v3207, 4294901760
        %3209 = vmatpush1.msra.mxu0 %v3208
        %v3210 = vand.u32 %v380, 4294901760
        %v3211 = vsub.f32 %v380, %v3210
        %v3212 = vand.u32 %v3211, 4294901760
        %v3213 = vsub.f32 %v3211, %v3212
        %v3214 = vand.u32 %v3213, 4294901760
        %3215 = vmatprep.subr.mxu0 %v3214
        %v3216 = vand.u32 %v379, 4294901760
        %v3217 = vsub.f32 %v379, %v3216
        %v3218 = vand.u32 %v3217, 4294901760
        %v3219 = vsub.f32 %v3217, %v3218
        %v3220 = vand.u32 %v3219, 4294901760
        %3221 = vmatpush1.msra.mxu0 %v3220
        %v3222 = vand.u32 %v382, 4294901760
        %v3223 = vsub.f32 %v382, %v3222
        %v3224 = vand.u32 %v3223, 4294901760
        %v3225 = vsub.f32 %v3223, %v3224
        %v3226 = vand.u32 %v3225, 4294901760
        %3227 = vmatprep.subr.mxu0 %v3226
        %v3228 = vand.u32 %v381, 4294901760
        %v3229 = vsub.f32 %v381, %v3228
        %v3230 = vand.u32 %v3229, 4294901760
        %v3231 = vsub.f32 %v3229, %v3230
        %v3232 = vand.u32 %v3231, 4294901760
        %3233 = vmatpush1.msra.mxu0 %v3232
        %v3234 = vand.u32 %v384, 4294901760
        %v3235 = vsub.f32 %v384, %v3234
        %v3236 = vand.u32 %v3235, 4294901760
        %v3237 = vsub.f32 %v3235, %v3236
        %v3238 = vand.u32 %v3237, 4294901760
        %3239 = vmatprep.subr.mxu0 %v3238
        %v3240 = vand.u32 %v383, 4294901760
        %v3241 = vsub.f32 %v383, %v3240
        %v3242 = vand.u32 %v3241, 4294901760
        %v3243 = vsub.f32 %v3241, %v3242
        %v3244 = vand.u32 %v3243, 4294901760
        %3245 = vmatpush1.msra.mxu0 %v3244
        %v3246 = vand.u32 %v386, 4294901760
        %v3247 = vsub.f32 %v386, %v3246
        %v3248 = vand.u32 %v3247, 4294901760
        %v3249 = vsub.f32 %v3247, %v3248
        %v3250 = vand.u32 %v3249, 4294901760
        %3251 = vmatprep.subr.mxu0 %v3250
        %v3252 = vand.u32 %v385, 4294901760
        %v3253 = vsub.f32 %v385, %v3252
        %v3254 = vand.u32 %v3253, 4294901760
        %v3255 = vsub.f32 %v3253, %v3254
        %v3256 = vand.u32 %v3255, 4294901760
        %3257 = vmatpush1.msra.mxu0 %v3256
        %v3258 = vand.u32 %v388, 4294901760
        %v3259 = vsub.f32 %v388, %v3258
        %v3260 = vand.u32 %v3259, 4294901760
        %v3261 = vsub.f32 %v3259, %v3260
        %v3262 = vand.u32 %v3261, 4294901760
        %3263 = vmatprep.subr.mxu0 %v3262
        %v3264 = vand.u32 %v387, 4294901760
        %v3265 = vsub.f32 %v387, %v3264
        %v3266 = vand.u32 %v3265, 4294901760
        %v3267 = vsub.f32 %v3265, %v3266
        %v3268 = vand.u32 %v3267, 4294901760
        %3269 = vmatpush1.msra.mxu0 %v3268
        %v3270 = vand.u32 %v390, 4294901760
        %v3271 = vsub.f32 %v390, %v3270
        %v3272 = vand.u32 %v3271, 4294901760
        %v3273 = vsub.f32 %v3271, %v3272
        %v3274 = vand.u32 %v3273, 4294901760
        %3275 = vmatprep.subr.mxu0 %v3274
        %v3276 = vand.u32 %v389, 4294901760
        %v3277 = vsub.f32 %v389, %v3276
        %v3278 = vand.u32 %v3277, 4294901760
        %v3279 = vsub.f32 %v3277, %v3278
        %v3280 = vand.u32 %v3279, 4294901760
        %3281 = vmatpush1.msra.mxu0 %v3280
        %v3282 = vand.u32 %v392, 4294901760
        %v3283 = vsub.f32 %v392, %v3282
        %v3284 = vand.u32 %v3283, 4294901760
        %v3285 = vsub.f32 %v3283, %v3284
        %v3286 = vand.u32 %v3285, 4294901760
        %3287 = vmatprep.subr.mxu0 %v3286
        %v3288 = vand.u32 %v391, 4294901760
        %v3289 = vsub.f32 %v391, %v3288
        %v3290 = vand.u32 %v3289, 4294901760
        %v3291 = vsub.f32 %v3289, %v3290
        %v3292 = vand.u32 %v3291, 4294901760
        %3293 = vmatpush1.msra.mxu0 %v3292
        %v3294 = vand.u32 %v394, 4294901760
        %v3295 = vsub.f32 %v394, %v3294
        %v3296 = vand.u32 %v3295, 4294901760
        %v3297 = vsub.f32 %v3295, %v3296
        %v3298 = vand.u32 %v3297, 4294901760
        %3299 = vmatprep.subr.mxu0 %v3298
        %v3300 = vand.u32 %v393, 4294901760
        %v3301 = vsub.f32 %v393, %v3300
        %v3302 = vand.u32 %v3301, 4294901760
        %v3303 = vsub.f32 %v3301, %v3302
        %v3304 = vand.u32 %v3303, 4294901760
        %3305 = vmatpush1.msra.mxu0 %v3304
        %v3306 = vand.u32 %v396, 4294901760
        %v3307 = vsub.f32 %v396, %v3306
        %v3308 = vand.u32 %v3307, 4294901760
        %v3309 = vsub.f32 %v3307, %v3308
        %v3310 = vand.u32 %v3309, 4294901760
        %3311 = vmatprep.subr.mxu0 %v3310
        %v3312 = vand.u32 %v395, 4294901760
        %v3313 = vsub.f32 %v395, %v3312
        %v3314 = vand.u32 %v3313, 4294901760
        %v3315 = vsub.f32 %v3313, %v3314
        %v3316 = vand.u32 %v3315, 4294901760
        %3317 = vmatpush1.msra.mxu0 %v3316
        %v3318 = vand.u32 %v398, 4294901760
        %v3319 = vsub.f32 %v398, %v3318
        %v3320 = vand.u32 %v3319, 4294901760
        %v3321 = vsub.f32 %v3319, %v3320
        %v3322 = vand.u32 %v3321, 4294901760
        %3323 = vmatprep.subr.mxu0 %v3322
        %v3324 = vand.u32 %v397, 4294901760
        %v3325 = vsub.f32 %v397, %v3324
        %v3326 = vand.u32 %v3325, 4294901760
        %v3327 = vsub.f32 %v3325, %v3326
        %v3328 = vand.u32 %v3327, 4294901760
        %3329 = vmatpush1.msra.mxu0 %v3328
        %v3330 = vand.u32 %v400, 4294901760
        %v3331 = vsub.f32 %v400, %v3330
        %v3332 = vand.u32 %v3331, 4294901760
        %v3333 = vsub.f32 %v3331, %v3332
        %v3334 = vand.u32 %v3333, 4294901760
        %3335 = vmatprep.subr.mxu0 %v3334
        %v3336 = vand.u32 %v399, 4294901760
        %v3337 = vsub.f32 %v399, %v3336
        %v3338 = vand.u32 %v3337, 4294901760
        %v3339 = vsub.f32 %v3337, %v3338
        %v3340 = vand.u32 %v3339, 4294901760
        %3341 = vmatpush1.msra.mxu0 %v3340
        %v3342 = vand.u32 %v402, 4294901760
        %v3343 = vsub.f32 %v402, %v3342
        %v3344 = vand.u32 %v3343, 4294901760
        %v3345 = vsub.f32 %v3343, %v3344
        %v3346 = vand.u32 %v3345, 4294901760
        %3347 = vmatprep.subr.mxu0 %v3346
        %v3348 = vand.u32 %v401, 4294901760
        %v3349 = vsub.f32 %v401, %v3348
        %v3350 = vand.u32 %v3349, 4294901760
        %v3351 = vsub.f32 %v3349, %v3350
        %v3352 = vand.u32 %v3351, 4294901760
        %3353 = vmatpush1.msra.mxu0 %v3352
        %v3354 = vand.u32 %v404, 4294901760
        %v3355 = vsub.f32 %v404, %v3354
        %v3356 = vand.u32 %v3355, 4294901760
        %v3357 = vsub.f32 %v3355, %v3356
        %v3358 = vand.u32 %v3357, 4294901760
        %3359 = vmatprep.subr.mxu0 %v3358
        %v3360 = vand.u32 %v403, 4294901760
        %v3361 = vsub.f32 %v403, %v3360
        %v3362 = vand.u32 %v3361, 4294901760
        %v3363 = vsub.f32 %v3361, %v3362
        %v3364 = vand.u32 %v3363, 4294901760
        %3365 = vmatpush1.msra.mxu0 %v3364
        %v3366 = vand.u32 %v406, 4294901760
        %v3367 = vsub.f32 %v406, %v3366
        %v3368 = vand.u32 %v3367, 4294901760
        %v3369 = vsub.f32 %v3367, %v3368
        %v3370 = vand.u32 %v3369, 4294901760
        %3371 = vmatprep.subr.mxu0 %v3370
        %v3372 = vand.u32 %v405, 4294901760
        %v3373 = vsub.f32 %v405, %v3372
        %v3374 = vand.u32 %v3373, 4294901760
        %v3375 = vsub.f32 %v3373, %v3374
        %v3376 = vand.u32 %v3375, 4294901760
        %3377 = vmatpush1.msra.mxu0 %v3376
        %v3378 = vand.u32 %v408, 4294901760
        %v3379 = vsub.f32 %v408, %v3378
        %v3380 = vand.u32 %v3379, 4294901760
        %v3381 = vsub.f32 %v3379, %v3380
        %v3382 = vand.u32 %v3381, 4294901760
        %3383 = vmatprep.subr.mxu0 %v3382
        %v3384 = vand.u32 %v407, 4294901760
        %v3385 = vsub.f32 %v407, %v3384
        %v3386 = vand.u32 %v3385, 4294901760
        %v3387 = vsub.f32 %v3385, %v3386
        %v3388 = vand.u32 %v3387, 4294901760
        %3389 = vmatpush1.msra.mxu0 %v3388
        %v3390 = vand.u32 %v410, 4294901760
        %v3391 = vsub.f32 %v410, %v3390
        %v3392 = vand.u32 %v3391, 4294901760
        %v3393 = vsub.f32 %v3391, %v3392
        %v3394 = vand.u32 %v3393, 4294901760
        %3395 = vmatprep.subr.mxu0 %v3394
        %v3396 = vand.u32 %v409, 4294901760
        %v3397 = vsub.f32 %v409, %v3396
        %v3398 = vand.u32 %v3397, 4294901760
        %v3399 = vsub.f32 %v3397, %v3398
        %v3400 = vand.u32 %v3399, 4294901760
        %3401 = vmatpush1.msra.mxu0 %v3400
        %v3402 = vand.u32 %v412, 4294901760
        %v3403 = vsub.f32 %v412, %v3402
        %v3404 = vand.u32 %v3403, 4294901760
        %v3405 = vsub.f32 %v3403, %v3404
        %v3406 = vand.u32 %v3405, 4294901760
        %3407 = vmatprep.subr.mxu0 %v3406
        %v3408 = vand.u32 %v411, 4294901760
        %v3409 = vsub.f32 %v411, %v3408
        %v3410 = vand.u32 %v3409, 4294901760
        %v3411 = vsub.f32 %v3409, %v3410
        %v3412 = vand.u32 %v3411, 4294901760
        %3413 = vmatpush1.msra.mxu0 %v3412
        %v3414 = vand.u32 %v414, 4294901760
        %v3415 = vsub.f32 %v414, %v3414
        %v3416 = vand.u32 %v3415, 4294901760
        %v3417 = vsub.f32 %v3415, %v3416
        %v3418 = vand.u32 %v3417, 4294901760
        %3419 = vmatprep.subr.mxu0 %v3418
        %v3420 = vand.u32 %v413, 4294901760
        %v3421 = vsub.f32 %v413, %v3420
        %v3422 = vand.u32 %v3421, 4294901760
        %v3423 = vsub.f32 %v3421, %v3422
        %v3424 = vand.u32 %v3423, 4294901760
        %3425 = vmatpush1.msra.mxu0 %v3424
        %v3426 = vand.u32 %v416, 4294901760
        %v3427 = vsub.f32 %v416, %v3426
        %v3428 = vand.u32 %v3427, 4294901760
        %v3429 = vsub.f32 %v3427, %v3428
        %v3430 = vand.u32 %v3429, 4294901760
        %3431 = vmatprep.subr.mxu0 %v3430
        %v3432 = vand.u32 %v415, 4294901760
        %v3433 = vsub.f32 %v415, %v3432
        %v3434 = vand.u32 %v3433, 4294901760
        %v3435 = vsub.f32 %v3433, %v3434
        %v3436 = vand.u32 %v3435, 4294901760
        %3437 = vmatpush1.msra.mxu0 %v3436
        %v3438 = vand.u32 %v418, 4294901760
        %v3439 = vsub.f32 %v418, %v3438
        %v3440 = vand.u32 %v3439, 4294901760
        %v3441 = vsub.f32 %v3439, %v3440
        %v3442 = vand.u32 %v3441, 4294901760
        %3443 = vmatprep.subr.mxu0 %v3442
        %v3444 = vand.u32 %v417, 4294901760
        %v3445 = vsub.f32 %v417, %v3444
        %v3446 = vand.u32 %v3445, 4294901760
        %v3447 = vsub.f32 %v3445, %v3446
        %v3448 = vand.u32 %v3447, 4294901760
        %3449 = vmatpush1.msra.mxu0 %v3448
        %v3450 = vand.u32 %v420, 4294901760
        %v3451 = vsub.f32 %v420, %v3450
        %v3452 = vand.u32 %v3451, 4294901760
        %v3453 = vsub.f32 %v3451, %v3452
        %v3454 = vand.u32 %v3453, 4294901760
        %3455 = vmatprep.subr.mxu0 %v3454
        %v3456 = vand.u32 %v419, 4294901760
        %v3457 = vsub.f32 %v419, %v3456
        %v3458 = vand.u32 %v3457, 4294901760
        %v3459 = vsub.f32 %v3457, %v3458
        %v3460 = vand.u32 %v3459, 4294901760
        %3461 = vmatpush1.msra.mxu0 %v3460
        %v3462 = vand.u32 %v422, 4294901760
        %v3463 = vsub.f32 %v422, %v3462
        %v3464 = vand.u32 %v3463, 4294901760
        %v3465 = vsub.f32 %v3463, %v3464
        %v3466 = vand.u32 %v3465, 4294901760
        %3467 = vmatprep.subr.mxu0 %v3466
        %v3468 = vand.u32 %v421, 4294901760
        %v3469 = vsub.f32 %v421, %v3468
        %v3470 = vand.u32 %v3469, 4294901760
        %v3471 = vsub.f32 %v3469, %v3470
        %v3472 = vand.u32 %v3471, 4294901760
        %3473 = vmatpush1.msra.mxu0 %v3472
        %v3474 = vand.u32 %v424, 4294901760
        %v3475 = vsub.f32 %v424, %v3474
        %v3476 = vand.u32 %v3475, 4294901760
        %v3477 = vsub.f32 %v3475, %v3476
        %v3478 = vand.u32 %v3477, 4294901760
        %3479 = vmatprep.subr.mxu0 %v3478
        %v3480 = vand.u32 %v423, 4294901760
        %v3481 = vsub.f32 %v423, %v3480
        %v3482 = vand.u32 %v3481, 4294901760
        %v3483 = vsub.f32 %v3481, %v3482
        %v3484 = vand.u32 %v3483, 4294901760
        %3485 = vmatpush1.msra.mxu0 %v3484
        %v3486 = vand.u32 %v426, 4294901760
        %v3487 = vsub.f32 %v426, %v3486
        %v3488 = vand.u32 %v3487, 4294901760
        %v3489 = vsub.f32 %v3487, %v3488
        %v3490 = vand.u32 %v3489, 4294901760
        %3491 = vmatprep.subr.mxu0 %v3490
        %v3492 = vand.u32 %v425, 4294901760
        %v3493 = vsub.f32 %v425, %v3492
        %v3494 = vand.u32 %v3493, 4294901760
        %v3495 = vsub.f32 %v3493, %v3494
        %v3496 = vand.u32 %v3495, 4294901760
        %3497 = vmatpush1.msra.mxu0 %v3496
        %v3498 = vand.u32 %v428, 4294901760
        %v3499 = vsub.f32 %v428, %v3498
        %v3500 = vand.u32 %v3499, 4294901760
        %v3501 = vsub.f32 %v3499, %v3500
        %v3502 = vand.u32 %v3501, 4294901760
        %3503 = vmatprep.subr.mxu0 %v3502
        %v3504 = vand.u32 %v427, 4294901760
        %v3505 = vsub.f32 %v427, %v3504
        %v3506 = vand.u32 %v3505, 4294901760
        %v3507 = vsub.f32 %v3505, %v3506
        %v3508 = vand.u32 %v3507, 4294901760
        %3509 = vmatpush1.msra.mxu0 %v3508
        %v3510 = vand.u32 %v430, 4294901760
        %v3511 = vsub.f32 %v430, %v3510
        %v3512 = vand.u32 %v3511, 4294901760
        %v3513 = vsub.f32 %v3511, %v3512
        %v3514 = vand.u32 %v3513, 4294901760
        %3515 = vmatprep.subr.mxu0 %v3514
        %v3516 = vand.u32 %v429, 4294901760
        %v3517 = vsub.f32 %v429, %v3516
        %v3518 = vand.u32 %v3517, 4294901760
        %v3519 = vsub.f32 %v3517, %v3518
        %v3520 = vand.u32 %v3519, 4294901760
        %3521 = vmatpush1.msra.mxu0 %v3520
        %v3522 = vand.u32 %v432, 4294901760
        %v3523 = vsub.f32 %v432, %v3522
        %v3524 = vand.u32 %v3523, 4294901760
        %v3525 = vsub.f32 %v3523, %v3524
        %v3526 = vand.u32 %v3525, 4294901760
        %3527 = vmatprep.subr.mxu0 %v3526
        %v3528 = vand.u32 %v431, 4294901760
        %v3529 = vsub.f32 %v431, %v3528
        %v3530 = vand.u32 %v3529, 4294901760
        %v3531 = vsub.f32 %v3529, %v3530
        %v3532 = vand.u32 %v3531, 4294901760
        %3533 = vmatpush1.msra.mxu0 %v3532
        %v3534 = vand.u32 %v434, 4294901760
        %v3535 = vsub.f32 %v434, %v3534
        %v3536 = vand.u32 %v3535, 4294901760
        %v3537 = vsub.f32 %v3535, %v3536
        %v3538 = vand.u32 %v3537, 4294901760
        %3539 = vmatprep.subr.mxu0 %v3538
        %v3540 = vand.u32 %v433, 4294901760
        %v3541 = vsub.f32 %v433, %v3540
        %v3542 = vand.u32 %v3541, 4294901760
        %v3543 = vsub.f32 %v3541, %v3542
        %v3544 = vand.u32 %v3543, 4294901760
        %3545 = vmatpush1.msra.mxu0 %v3544
        %v3546 = vand.u32 %v182, 4294901760
        %3547 = vmatprep.mubr.f32.mxu0 %v3546
        %v3548 = vand.u32 %v181, 4294901760
        %3549 = vmatmul.mubr.f32.gmra.mrb[0].mxu0 %v3548
        %v3550 = vpop.f32.mrb[0].mxu0
        %v3551 = vadd.f32 %v2918, %v3550
        %v3552 = vpop.f32.mrb[0].mxu0
        %v3553 = vadd.f32 %v2920, %v3552
        %v3554 = vand.u32 %v190, 4294901760
        %3555 = vmatprep.mubr.f32.mxu0 %v3554
        %v3556 = vand.u32 %v189, 4294901760
        %3557 = vmatmul.mubr.f32.gmra.mrb[0].mxu0 %v3556
        %v3558 = vpop.f32.mrb[0].mxu0
        %v3559 = vadd.f32 %v2934, %v3558
        %v3560 = vpop.f32.mrb[0].mxu0
        %v3561 = vadd.f32 %v2936, %v3560
        %v3562 = vand.u32 %v198, 4294901760
        %3563 = vmatprep.mubr.f32.mxu0 %v3562
        %v3564 = vand.u32 %v197, 4294901760
        %3565 = vmatmul.mubr.f32.gmra.mrb[0].mxu0 %v3564
        %v3566 = vpop.f32.mrb[0].mxu0
        %v3567 = vadd.f32 %v2950, %v3566
        %v3568 = vpop.f32.mrb[0].mxu0
        %v3569 = vadd.f32 %v2952, %v3568
        %v3570 = vand.u32 %v206, 4294901760
        %3571 = vmatprep.mubr.f32.mxu0 %v3570
        %v3572 = vand.u32 %v205, 4294901760
        %3573 = vmatmul.mubr.f32.gmra.mrb[0].mxu0 %v3572
        %v3574 = vpop.f32.mrb[0].mxu0
        %v3575 = vadd.f32 %v2966, %v3574
        %v3576 = vpop.f32.mrb[0].mxu0
        %v3577 = vadd.f32 %v2968, %v3576
        %v3578 = vand.u32 %v214, 4294901760
        %3579 = vmatprep.mubr.f32.mxu0 %v3578
        %v3580 = vand.u32 %v213, 4294901760
        %3581 = vmatmul.mubr.f32.gmra.mrb[0].mxu0 %v3580
        %v3582 = vpop.f32.mrb[0].mxu0
        %v3583 = vadd.f32 %v2982, %v3582
        %v3584 = vpop.f32.mrb[0].mxu0
        %v3585 = vadd.f32 %v2984, %v3584
        %v3586 = vand.u32 %v222, 4294901760
        %3587 = vmatprep.mubr.f32.mxu0 %v3586
        %v3588 = vand.u32 %v221, 4294901760
        %3589 = vmatmul.mubr.f32.gmra.mrb[0].mxu0 %v3588
        %v3590 = vpop.f32.mrb[0].mxu0
        %v3591 = vadd.f32 %v2998, %v3590
        %v3592 = vpop.f32.mrb[0].mxu0
        %v3593 = vadd.f32 %v3000, %v3592
        %v3594 = vand.u32 %v230, 4294901760
        %3595 = vmatprep.mubr.f32.mxu0 %v3594
        %v3596 = vand.u32 %v229, 4294901760
        %3597 = vmatmul.mubr.f32.gmra.mrb[0].mxu0 %v3596
        %v3598 = vpop.f32.mrb[0].mxu0
        %v3599 = vadd.f32 %v3014, %v3598
        %v3600 = vpop.f32.mrb[0].mxu0
        %v3601 = vadd.f32 %v3016, %v3600
        %v3602 = vand.u32 %v238, 4294901760
        %3603 = vmatprep.mubr.f32.mxu0 %v3602
        %v3604 = vand.u32 %v237, 4294901760
        %3605 = vmatmul.mubr.f32.gmra.mrb[0].mxu0 %v3604
        %v3606 = vpop.f32.mrb[0].mxu0
        %v3607 = vadd.f32 %v3030, %v3606
        %v3608 = vpop.f32.mrb[0].mxu0
        %v3609 = vadd.f32 %v3032, %v3608
        %v3610 = vand.u32 %v246, 4294901760
        %3611 = vmatprep.mubr.f32.mxu0 %v3610
        %v3612 = vand.u32 %v245, 4294901760
        %3613 = vmatmul.mubr.f32.gmra.mrb[0].mxu0 %v3612
        %v3614 = vpop.f32.mrb[0].mxu0
        %v3615 = vadd.f32 %v3046, %v3614
        %v3616 = vpop.f32.mrb[0].mxu0
        %v3617 = vadd.f32 %v3048, %v3616
        %v3618 = vand.u32 %v254, 4294901760
        %3619 = vmatprep.mubr.f32.mxu0 %v3618
        %v3620 = vand.u32 %v253, 4294901760
        %3621 = vmatmul.mubr.f32.gmra.mrb[0].mxu0 %v3620
        %v3622 = vpop.f32.mrb[0].mxu0
        %v3623 = vadd.f32 %v3062, %v3622
        %v3624 = vpop.f32.mrb[0].mxu0
        %v3625 = vadd.f32 %v3064, %v3624
        %v3626 = vand.u32 %v262, 4294901760
        %3627 = vmatprep.mubr.f32.mxu0 %v3626
        %v3628 = vand.u32 %v261, 4294901760
        %3629 = vmatmul.mubr.f32.gmra.mrb[0].mxu0 %v3628
        %v3630 = vpop.f32.mrb[0].mxu0
        %v3631 = vadd.f32 %v3078, %v3630
        %v3632 = vpop.f32.mrb[0].mxu0
        %v3633 = vadd.f32 %v3080, %v3632
        %v3634 = vand.u32 %v270, 4294901760
        %3635 = vmatprep.mubr.f32.mxu0 %v3634
        %v3636 = vand.u32 %v269, 4294901760
        %3637 = vmatmul.mubr.f32.gmra.mrb[0].mxu0 %v3636
        %v3638 = vpop.f32.mrb[0].mxu0
        %v3639 = vadd.f32 %v3094, %v3638
        %v3640 = vpop.f32.mrb[0].mxu0
        %v3641 = vadd.f32 %v3096, %v3640
        %v3642 = vand.u32 %v278, 4294901760
        %3643 = vmatprep.mubr.f32.mxu0 %v3642
        %v3644 = vand.u32 %v277, 4294901760
        %3645 = vmatmul.mubr.f32.gmra.mrb[0].mxu0 %v3644
        %v3646 = vpop.f32.mrb[0].mxu0
        %v3647 = vadd.f32 %v3110, %v3646
        %v3648 = vpop.f32.mrb[0].mxu0
        %v3649 = vadd.f32 %v3112, %v3648
        %v3650 = vand.u32 %v286, 4294901760
        %3651 = vmatprep.mubr.f32.mxu0 %v3650
        %v3652 = vand.u32 %v285, 4294901760
        %3653 = vmatmul.mubr.f32.gmra.mrb[0].mxu0 %v3652
        %v3654 = vpop.f32.mrb[0].mxu0
        %v3655 = vadd.f32 %v3126, %v3654
        %v3656 = vpop.f32.mrb[0].mxu0
        %v3657 = vadd.f32 %v3128, %v3656
        %v3658 = vand.u32 %v294, 4294901760
        %3659 = vmatprep.mubr.f32.mxu0 %v3658
        %v3660 = vand.u32 %v293, 4294901760
        %3661 = vmatmul.mubr.f32.gmra.mrb[0].mxu0 %v3660
        %v3662 = vpop.f32.mrb[0].mxu0
        %v3663 = vadd.f32 %v3142, %v3662
        %v3664 = vpop.f32.mrb[0].mxu0
        %v3665 = vadd.f32 %v3144, %v3664
        %v3666 = vand.u32 %v302, 4294901760
        %3667 = vmatprep.mubr.f32.mxu0 %v3666
        %v3668 = vand.u32 %v301, 4294901760
        %3669 = vmatmul.mubr.f32.gmra.mrb[0].mxu0 %v3668
        %v3670 = vpop.f32.mrb[0].mxu0
        %v3671 = vadd.f32 %v3158, %v3670
        %v3672 = vpop.f32.mrb[0].mxu0
        %v3673 = vadd.f32 %v3160, %v3672
        %3674 = vdwg.mxu0
        %v3675 = vand.u32 %v372, 4294901760
        %v3676 = vsub.f32 %v372, %v3675
        %3677 = vmatprep.subr.mxu0 %v3676
        %v3678 = vand.u32 %v371, 4294901760
        %v3679 = vsub.f32 %v371, %v3678
        %3680 = vmatpush1.msra.mxu0 %v3679
        %v3681 = vand.u32 %v374, 4294901760
        %v3682 = vsub.f32 %v374, %v3681
        %3683 = vmatprep.subr.mxu0 %v3682
        %v3684 = vand.u32 %v373, 4294901760
        %v3685 = vsub.f32 %v373, %v3684
        %3686 = vmatpush1.msra.mxu0 %v3685
        %v3687 = vand.u32 %v376, 4294901760
        %v3688 = vsub.f32 %v376, %v3687
        %3689 = vmatprep.subr.mxu0 %v3688
        %v3690 = vand.u32 %v375, 4294901760
        %v3691 = vsub.f32 %v375, %v3690
        %3692 = vmatpush1.msra.mxu0 %v3691
        %v3693 = vand.u32 %v378, 4294901760
        %v3694 = vsub.f32 %v378, %v3693
        %3695 = vmatprep.subr.mxu0 %v3694
        %v3696 = vand.u32 %v377, 4294901760
        %v3697 = vsub.f32 %v377, %v3696
        %3698 = vmatpush1.msra.mxu0 %v3697
        %v3699 = vand.u32 %v380, 4294901760
        %v3700 = vsub.f32 %v380, %v3699
        %3701 = vmatprep.subr.mxu0 %v3700
        %v3702 = vand.u32 %v379, 4294901760
        %v3703 = vsub.f32 %v379, %v3702
        %3704 = vmatpush1.msra.mxu0 %v3703
        %v3705 = vand.u32 %v382, 4294901760
        %v3706 = vsub.f32 %v382, %v3705
        %3707 = vmatprep.subr.mxu0 %v3706
        %v3708 = vand.u32 %v381, 4294901760
        %v3709 = vsub.f32 %v381, %v3708
        %3710 = vmatpush1.msra.mxu0 %v3709
        %v3711 = vand.u32 %v384, 4294901760
        %v3712 = vsub.f32 %v384, %v3711
        %3713 = vmatprep.subr.mxu0 %v3712
        %v3714 = vand.u32 %v383, 4294901760
        %v3715 = vsub.f32 %v383, %v3714
        %3716 = vmatpush1.msra.mxu0 %v3715
        %v3717 = vand.u32 %v386, 4294901760
        %v3718 = vsub.f32 %v386, %v3717
        %3719 = vmatprep.subr.mxu0 %v3718
        %v3720 = vand.u32 %v385, 4294901760
        %v3721 = vsub.f32 %v385, %v3720
        %3722 = vmatpush1.msra.mxu0 %v3721
        %v3723 = vand.u32 %v388, 4294901760
        %v3724 = vsub.f32 %v388, %v3723
        %3725 = vmatprep.subr.mxu0 %v3724
        %v3726 = vand.u32 %v387, 4294901760
        %v3727 = vsub.f32 %v387, %v3726
        %3728 = vmatpush1.msra.mxu0 %v3727
        %v3729 = vand.u32 %v390, 4294901760
        %v3730 = vsub.f32 %v390, %v3729
        %3731 = vmatprep.subr.mxu0 %v3730
        %v3732 = vand.u32 %v389, 4294901760
        %v3733 = vsub.f32 %v389, %v3732
        %3734 = vmatpush1.msra.mxu0 %v3733
        %v3735 = vand.u32 %v392, 4294901760
        %v3736 = vsub.f32 %v392, %v3735
        %3737 = vmatprep.subr.mxu0 %v3736
        %v3738 = vand.u32 %v391, 4294901760
        %v3739 = vsub.f32 %v391, %v3738
        %3740 = vmatpush1.msra.mxu0 %v3739
        %v3741 = vand.u32 %v394, 4294901760
        %v3742 = vsub.f32 %v394, %v3741
        %3743 = vmatprep.subr.mxu0 %v3742
        %v3744 = vand.u32 %v393, 4294901760
        %v3745 = vsub.f32 %v393, %v3744
        %3746 = vmatpush1.msra.mxu0 %v3745
        %v3747 = vand.u32 %v396, 4294901760
        %v3748 = vsub.f32 %v396, %v3747
        %3749 = vmatprep.subr.mxu0 %v3748
        %v3750 = vand.u32 %v395, 4294901760
        %v3751 = vsub.f32 %v395, %v3750
        %3752 = vmatpush1.msra.mxu0 %v3751
        %v3753 = vand.u32 %v398, 4294901760
        %v3754 = vsub.f32 %v398, %v3753
        %3755 = vmatprep.subr.mxu0 %v3754
        %v3756 = vand.u32 %v397, 4294901760
        %v3757 = vsub.f32 %v397, %v3756
        %3758 = vmatpush1.msra.mxu0 %v3757
        %v3759 = vand.u32 %v400, 4294901760
        %v3760 = vsub.f32 %v400, %v3759
        %3761 = vmatprep.subr.mxu0 %v3760
        %v3762 = vand.u32 %v399, 4294901760
        %v3763 = vsub.f32 %v399, %v3762
        %3764 = vmatpush1.msra.mxu0 %v3763
        %v3765 = vand.u32 %v402, 4294901760
        %v3766 = vsub.f32 %v402, %v3765
        %3767 = vmatprep.subr.mxu0 %v3766
        %v3768 = vand.u32 %v401, 4294901760
        %v3769 = vsub.f32 %v401, %v3768
        %3770 = vmatpush1.msra.mxu0 %v3769
        %v3771 = vand.u32 %v404, 4294901760
        %v3772 = vsub.f32 %v404, %v3771
        %3773 = vmatprep.subr.mxu0 %v3772
        %v3774 = vand.u32 %v403, 4294901760
        %v3775 = vsub.f32 %v403, %v3774
        %3776 = vmatpush1.msra.mxu0 %v3775
        %v3777 = vand.u32 %v406, 4294901760
        %v3778 = vsub.f32 %v406, %v3777
        %3779 = vmatprep.subr.mxu0 %v3778
        %v3780 = vand.u32 %v405, 4294901760
        %v3781 = vsub.f32 %v405, %v3780
        %3782 = vmatpush1.msra.mxu0 %v3781
        %v3783 = vand.u32 %v408, 4294901760
        %v3784 = vsub.f32 %v408, %v3783
        %3785 = vmatprep.subr.mxu0 %v3784
        %v3786 = vand.u32 %v407, 4294901760
        %v3787 = vsub.f32 %v407, %v3786
        %3788 = vmatpush1.msra.mxu0 %v3787
        %v3789 = vand.u32 %v410, 4294901760
        %v3790 = vsub.f32 %v410, %v3789
        %3791 = vmatprep.subr.mxu0 %v3790
        %v3792 = vand.u32 %v409, 4294901760
        %v3793 = vsub.f32 %v409, %v3792
        %3794 = vmatpush1.msra.mxu0 %v3793
        %v3795 = vand.u32 %v412, 4294901760
        %v3796 = vsub.f32 %v412, %v3795
        %3797 = vmatprep.subr.mxu0 %v3796
        %v3798 = vand.u32 %v411, 4294901760
        %v3799 = vsub.f32 %v411, %v3798
        %3800 = vmatpush1.msra.mxu0 %v3799
        %v3801 = vand.u32 %v414, 4294901760
        %v3802 = vsub.f32 %v414, %v3801
        %3803 = vmatprep.subr.mxu0 %v3802
        %v3804 = vand.u32 %v413, 4294901760
        %v3805 = vsub.f32 %v413, %v3804
        %3806 = vmatpush1.msra.mxu0 %v3805
        %v3807 = vand.u32 %v416, 4294901760
        %v3808 = vsub.f32 %v416, %v3807
        %3809 = vmatprep.subr.mxu0 %v3808
        %v3810 = vand.u32 %v415, 4294901760
        %v3811 = vsub.f32 %v415, %v3810
        %3812 = vmatpush1.msra.mxu0 %v3811
        %v3813 = vand.u32 %v418, 4294901760
        %v3814 = vsub.f32 %v418, %v3813
        %3815 = vmatprep.subr.mxu0 %v3814
        %v3816 = vand.u32 %v417, 4294901760
        %v3817 = vsub.f32 %v417, %v3816
        %3818 = vmatpush1.msra.mxu0 %v3817
        %v3819 = vand.u32 %v420, 4294901760
        %v3820 = vsub.f32 %v420, %v3819
        %3821 = vmatprep.subr.mxu0 %v3820
        %v3822 = vand.u32 %v419, 4294901760
        %v3823 = vsub.f32 %v419, %v3822
        %3824 = vmatpush1.msra.mxu0 %v3823
        %v3825 = vand.u32 %v422, 4294901760
        %v3826 = vsub.f32 %v422, %v3825
        %3827 = vmatprep.subr.mxu0 %v3826
        %v3828 = vand.u32 %v421, 4294901760
        %v3829 = vsub.f32 %v421, %v3828
        %3830 = vmatpush1.msra.mxu0 %v3829
        %v3831 = vand.u32 %v424, 4294901760
        %v3832 = vsub.f32 %v424, %v3831
        %3833 = vmatprep.subr.mxu0 %v3832
        %v3834 = vand.u32 %v423, 4294901760
        %v3835 = vsub.f32 %v423, %v3834
        %3836 = vmatpush1.msra.mxu0 %v3835
        %v3837 = vand.u32 %v426, 4294901760
        %v3838 = vsub.f32 %v426, %v3837
        %3839 = vmatprep.subr.mxu0 %v3838
        %v3840 = vand.u32 %v425, 4294901760
        %v3841 = vsub.f32 %v425, %v3840
        %3842 = vmatpush1.msra.mxu0 %v3841
        %v3843 = vand.u32 %v428, 4294901760
        %v3844 = vsub.f32 %v428, %v3843
        %3845 = vmatprep.subr.mxu0 %v3844
        %v3846 = vand.u32 %v427, 4294901760
        %v3847 = vsub.f32 %v427, %v3846
        %3848 = vmatpush1.msra.mxu0 %v3847
        %v3849 = vand.u32 %v430, 4294901760
        %v3850 = vsub.f32 %v430, %v3849
        %3851 = vmatprep.subr.mxu0 %v3850
        %v3852 = vand.u32 %v429, 4294901760
        %v3853 = vsub.f32 %v429, %v3852
        %3854 = vmatpush1.msra.mxu0 %v3853
        %v3855 = vand.u32 %v432, 4294901760
        %v3856 = vsub.f32 %v432, %v3855
        %3857 = vmatprep.subr.mxu0 %v3856
        %v3858 = vand.u32 %v431, 4294901760
        %v3859 = vsub.f32 %v431, %v3858
        %3860 = vmatpush1.msra.mxu0 %v3859
        %v3861 = vand.u32 %v434, 4294901760
        %v3862 = vsub.f32 %v434, %v3861
        %3863 = vmatprep.subr.mxu0 %v3862
        %v3864 = vand.u32 %v433, 4294901760
        %v3865 = vsub.f32 %v433, %v3864
        %3866 = vmatpush1.msra.mxu0 %v3865
        %v3867 = vand.u32 %v182, 4294901760
        %v3868 = vsub.f32 %v182, %v3867
        %3869 = vmatprep.mubr.f32.mxu0 %v3868
        %v3870 = vand.u32 %v181, 4294901760
        %v3871 = vsub.f32 %v181, %v3870
        %3872 = vmatmul.mubr.f32.gmra.mrb[0].mxu0 %v3871
        %v3873 = vpop.f32.mrb[0].mxu0
        %v3874 = vadd.f32 %v3551, %v3873
        %v3875 = vpop.f32.mrb[0].mxu0
        %v3876 = vadd.f32 %v3553, %v3875
        %v3877 = vand.u32 %v190, 4294901760
        %v3878 = vsub.f32 %v190, %v3877
        %3879 = vmatprep.mubr.f32.mxu0 %v3878
        %v3880 = vand.u32 %v189, 4294901760
        %v3881 = vsub.f32 %v189, %v3880
        %3882 = vmatmul.mubr.f32.gmra.mrb[0].mxu0 %v3881
        %v3883 = vpop.f32.mrb[0].mxu0
        %v3884 = vadd.f32 %v3559, %v3883
        %v3885 = vpop.f32.mrb[0].mxu0
        %v3886 = vadd.f32 %v3561, %v3885
        %v3887 = vand.u32 %v198, 4294901760
        %v3888 = vsub.f32 %v198, %v3887
        %3889 = vmatprep.mubr.f32.mxu0 %v3888
        %v3890 = vand.u32 %v197, 4294901760
        %v3891 = vsub.f32 %v197, %v3890
        %3892 = vmatmul.mubr.f32.gmra.mrb[0].mxu0 %v3891
        %v3893 = vpop.f32.mrb[0].mxu0
        %v3894 = vadd.f32 %v3567, %v3893
        %v3895 = vpop.f32.mrb[0].mxu0
        %v3896 = vadd.f32 %v3569, %v3895
        %v3897 = vand.u32 %v206, 4294901760
        %v3898 = vsub.f32 %v206, %v3897
        %3899 = vmatprep.mubr.f32.mxu0 %v3898
        %v3900 = vand.u32 %v205, 4294901760
        %v3901 = vsub.f32 %v205, %v3900
        %3902 = vmatmul.mubr.f32.gmra.mrb[0].mxu0 %v3901
        %v3903 = vpop.f32.mrb[0].mxu0
        %v3904 = vadd.f32 %v3575, %v3903
        %v3905 = vpop.f32.mrb[0].mxu0
        %v3906 = vadd.f32 %v3577, %v3905
        %v3907 = vand.u32 %v214, 4294901760
        %v3908 = vsub.f32 %v214, %v3907
        %3909 = vmatprep.mubr.f32.mxu0 %v3908
        %v3910 = vand.u32 %v213, 4294901760
        %v3911 = vsub.f32 %v213, %v3910
        %3912 = vmatmul.mubr.f32.gmra.mrb[0].mxu0 %v3911
        %v3913 = vpop.f32.mrb[0].mxu0
        %v3914 = vadd.f32 %v3583, %v3913
        %v3915 = vpop.f32.mrb[0].mxu0
        %v3916 = vadd.f32 %v3585, %v3915
        %v3917 = vand.u32 %v222, 4294901760
        %v3918 = vsub.f32 %v222, %v3917
        %3919 = vmatprep.mubr.f32.mxu0 %v3918
        %v3920 = vand.u32 %v221, 4294901760
        %v3921 = vsub.f32 %v221, %v3920
        %3922 = vmatmul.mubr.f32.gmra.mrb[0].mxu0 %v3921
        %v3923 = vpop.f32.mrb[0].mxu0
        %v3924 = vadd.f32 %v3591, %v3923
        %v3925 = vpop.f32.mrb[0].mxu0
        %v3926 = vadd.f32 %v3593, %v3925
        %v3927 = vand.u32 %v230, 4294901760
        %v3928 = vsub.f32 %v230, %v3927
        %3929 = vmatprep.mubr.f32.mxu0 %v3928
        %v3930 = vand.u32 %v229, 4294901760
        %v3931 = vsub.f32 %v229, %v3930
        %3932 = vmatmul.mubr.f32.gmra.mrb[0].mxu0 %v3931
        %v3933 = vpop.f32.mrb[0].mxu0
        %v3934 = vadd.f32 %v3599, %v3933
        %v3935 = vpop.f32.mrb[0].mxu0
        %v3936 = vadd.f32 %v3601, %v3935
        %v3937 = vand.u32 %v238, 4294901760
        %v3938 = vsub.f32 %v238, %v3937
        %3939 = vmatprep.mubr.f32.mxu0 %v3938
        %v3940 = vand.u32 %v237, 4294901760
        %v3941 = vsub.f32 %v237, %v3940
        %3942 = vmatmul.mubr.f32.gmra.mrb[0].mxu0 %v3941
        %v3943 = vpop.f32.mrb[0].mxu0
        %v3944 = vadd.f32 %v3607, %v3943
        %v3945 = vpop.f32.mrb[0].mxu0
        %v3946 = vadd.f32 %v3609, %v3945
        %v3947 = vand.u32 %v246, 4294901760
        %v3948 = vsub.f32 %v246, %v3947
        %3949 = vmatprep.mubr.f32.mxu0 %v3948
        %v3950 = vand.u32 %v245, 4294901760
        %v3951 = vsub.f32 %v245, %v3950
        %3952 = vmatmul.mubr.f32.gmra.mrb[0].mxu0 %v3951
        %v3953 = vpop.f32.mrb[0].mxu0
        %v3954 = vadd.f32 %v3615, %v3953
        %v3955 = vpop.f32.mrb[0].mxu0
        %v3956 = vadd.f32 %v3617, %v3955
        %v3957 = vand.u32 %v254, 4294901760
        %v3958 = vsub.f32 %v254, %v3957
        %3959 = vmatprep.mubr.f32.mxu0 %v3958
        %v3960 = vand.u32 %v253, 4294901760
        %v3961 = vsub.f32 %v253, %v3960
        %3962 = vmatmul.mubr.f32.gmra.mrb[0].mxu0 %v3961
        %v3963 = vpop.f32.mrb[0].mxu0
        %v3964 = vadd.f32 %v3623, %v3963
        %v3965 = vpop.f32.mrb[0].mxu0
        %v3966 = vadd.f32 %v3625, %v3965
        %v3967 = vand.u32 %v262, 4294901760
        %v3968 = vsub.f32 %v262, %v3967
        %3969 = vmatprep.mubr.f32.mxu0 %v3968
        %v3970 = vand.u32 %v261, 4294901760
        %v3971 = vsub.f32 %v261, %v3970
        %3972 = vmatmul.mubr.f32.gmra.mrb[0].mxu0 %v3971
        %v3973 = vpop.f32.mrb[0].mxu0
        %v3974 = vadd.f32 %v3631, %v3973
        %v3975 = vpop.f32.mrb[0].mxu0
        %v3976 = vadd.f32 %v3633, %v3975
        %v3977 = vand.u32 %v270, 4294901760
        %v3978 = vsub.f32 %v270, %v3977
        %3979 = vmatprep.mubr.f32.mxu0 %v3978
        %v3980 = vand.u32 %v269, 4294901760
        %v3981 = vsub.f32 %v269, %v3980
        %3982 = vmatmul.mubr.f32.gmra.mrb[0].mxu0 %v3981
        %v3983 = vpop.f32.mrb[0].mxu0
        %v3984 = vadd.f32 %v3639, %v3983
        %v3985 = vpop.f32.mrb[0].mxu0
        %v3986 = vadd.f32 %v3641, %v3985
        %v3987 = vand.u32 %v278, 4294901760
        %v3988 = vsub.f32 %v278, %v3987
        %3989 = vmatprep.mubr.f32.mxu0 %v3988
        %v3990 = vand.u32 %v277, 4294901760
        %v3991 = vsub.f32 %v277, %v3990
        %3992 = vmatmul.mubr.f32.gmra.mrb[0].mxu0 %v3991
        %v3993 = vpop.f32.mrb[0].mxu0
        %v3994 = vadd.f32 %v3647, %v3993
        %v3995 = vpop.f32.mrb[0].mxu0
        %v3996 = vadd.f32 %v3649, %v3995
        %v3997 = vand.u32 %v286, 4294901760
        %v3998 = vsub.f32 %v286, %v3997
        %3999 = vmatprep.mubr.f32.mxu0 %v3998
        %v4000 = vand.u32 %v285, 4294901760
        %v4001 = vsub.f32 %v285, %v4000
        %4002 = vmatmul.mubr.f32.gmra.mrb[0].mxu0 %v4001
        %v4003 = vpop.f32.mrb[0].mxu0
        %v4004 = vadd.f32 %v3655, %v4003
        %v4005 = vpop.f32.mrb[0].mxu0
        %v4006 = vadd.f32 %v3657, %v4005
        %v4007 = vand.u32 %v294, 4294901760
        %v4008 = vsub.f32 %v294, %v4007
        %4009 = vmatprep.mubr.f32.mxu0 %v4008
        %v4010 = vand.u32 %v293, 4294901760
        %v4011 = vsub.f32 %v293, %v4010
        %4012 = vmatmul.mubr.f32.gmra.mrb[0].mxu0 %v4011
        %v4013 = vpop.f32.mrb[0].mxu0
        %v4014 = vadd.f32 %v3663, %v4013
        %v4015 = vpop.f32.mrb[0].mxu0
        %v4016 = vadd.f32 %v3665, %v4015
        %v4017 = vand.u32 %v302, 4294901760
        %v4018 = vsub.f32 %v302, %v4017
        %4019 = vmatprep.mubr.f32.mxu0 %v4018
        %v4020 = vand.u32 %v301, 4294901760
        %v4021 = vsub.f32 %v301, %v4020
        %4022 = vmatmul.mubr.f32.gmra.mrb[0].mxu0 %v4021
        %v4023 = vpop.f32.mrb[0].mxu0
        %v4024 = vadd.f32 %v3671, %v4023
        %v4025 = vpop.f32.mrb[0].mxu0
        %v4026 = vadd.f32 %v3673, %v4025
        %4027 = vdwg.mxu0
        %v4028 = vand.u32 %v372, 4294901760
        %4029 = vmatprep.subr.mxu0 %v4028
        %v4030 = vand.u32 %v371, 4294901760
        %4031 = vmatpush1.msra.mxu0 %v4030
        %v4032 = vand.u32 %v374, 4294901760
        %4033 = vmatprep.subr.mxu0 %v4032
        %v4034 = vand.u32 %v373, 4294901760
        %4035 = vmatpush1.msra.mxu0 %v4034
        %v4036 = vand.u32 %v376, 4294901760
        %4037 = vmatprep.subr.mxu0 %v4036
        %v4038 = vand.u32 %v375, 4294901760
        %4039 = vmatpush1.msra.mxu0 %v4038
        %v4040 = vand.u32 %v378, 4294901760
        %4041 = vmatprep.subr.mxu0 %v4040
        %v4042 = vand.u32 %v377, 4294901760
        %4043 = vmatpush1.msra.mxu0 %v4042
        %v4044 = vand.u32 %v380, 4294901760
        %4045 = vmatprep.subr.mxu0 %v4044
        %v4046 = vand.u32 %v379, 4294901760
        %4047 = vmatpush1.msra.mxu0 %v4046
        %v4048 = vand.u32 %v382, 4294901760
        %4049 = vmatprep.subr.mxu0 %v4048
        %v4050 = vand.u32 %v381, 4294901760
        %4051 = vmatpush1.msra.mxu0 %v4050
        %v4052 = vand.u32 %v384, 4294901760
        %4053 = vmatprep.subr.mxu0 %v4052
        %v4054 = vand.u32 %v383, 4294901760
        %4055 = vmatpush1.msra.mxu0 %v4054
        %v4056 = vand.u32 %v386, 4294901760
        %4057 = vmatprep.subr.mxu0 %v4056
        %v4058 = vand.u32 %v385, 4294901760
        %4059 = vmatpush1.msra.mxu0 %v4058
        %v4060 = vand.u32 %v388, 4294901760
        %4061 = vmatprep.subr.mxu0 %v4060
        %v4062 = vand.u32 %v387, 4294901760
        %4063 = vmatpush1.msra.mxu0 %v4062
        %v4064 = vand.u32 %v390, 4294901760
        %4065 = vmatprep.subr.mxu0 %v4064
        %v4066 = vand.u32 %v389, 4294901760
        %4067 = vmatpush1.msra.mxu0 %v4066
        %v4068 = vand.u32 %v392, 4294901760
        %4069 = vmatprep.subr.mxu0 %v4068
        %v4070 = vand.u32 %v391, 4294901760
        %4071 = vmatpush1.msra.mxu0 %v4070
        %v4072 = vand.u32 %v394, 4294901760
        %4073 = vmatprep.subr.mxu0 %v4072
        %v4074 = vand.u32 %v393, 4294901760
        %4075 = vmatpush1.msra.mxu0 %v4074
        %v4076 = vand.u32 %v396, 4294901760
        %4077 = vmatprep.subr.mxu0 %v4076
        %v4078 = vand.u32 %v395, 4294901760
        %4079 = vmatpush1.msra.mxu0 %v4078
        %v4080 = vand.u32 %v398, 4294901760
        %4081 = vmatprep.subr.mxu0 %v4080
        %v4082 = vand.u32 %v397, 4294901760
        %4083 = vmatpush1.msra.mxu0 %v4082
        %v4084 = vand.u32 %v400, 4294901760
        %4085 = vmatprep.subr.mxu0 %v4084
        %v4086 = vand.u32 %v399, 4294901760
        %4087 = vmatpush1.msra.mxu0 %v4086
        %v4088 = vand.u32 %v402, 4294901760
        %4089 = vmatprep.subr.mxu0 %v4088
        %v4090 = vand.u32 %v401, 4294901760
        %4091 = vmatpush1.msra.mxu0 %v4090
        %v4092 = vand.u32 %v404, 4294901760
        %4093 = vmatprep.subr.mxu0 %v4092
        %v4094 = vand.u32 %v403, 4294901760
        %4095 = vmatpush1.msra.mxu0 %v4094
        %v4096 = vand.u32 %v406, 4294901760
        %4097 = vmatprep.subr.mxu0 %v4096
        %v4098 = vand.u32 %v405, 4294901760
        %4099 = vmatpush1.msra.mxu0 %v4098
        %v4100 = vand.u32 %v408, 4294901760
        %4101 = vmatprep.subr.mxu0 %v4100
        %v4102 = vand.u32 %v407, 4294901760
        %4103 = vmatpush1.msra.mxu0 %v4102
        %v4104 = vand.u32 %v410, 4294901760
        %4105 = vmatprep.subr.mxu0 %v4104
        %v4106 = vand.u32 %v409, 4294901760
        %4107 = vmatpush1.msra.mxu0 %v4106
        %v4108 = vand.u32 %v412, 4294901760
        %4109 = vmatprep.subr.mxu0 %v4108
        %v4110 = vand.u32 %v411, 4294901760
        %4111 = vmatpush1.msra.mxu0 %v4110
        %v4112 = vand.u32 %v414, 4294901760
        %4113 = vmatprep.subr.mxu0 %v4112
        %v4114 = vand.u32 %v413, 4294901760
        %4115 = vmatpush1.msra.mxu0 %v4114
        %v4116 = vand.u32 %v416, 4294901760
        %4117 = vmatprep.subr.mxu0 %v4116
        %v4118 = vand.u32 %v415, 4294901760
        %4119 = vmatpush1.msra.mxu0 %v4118
        %v4120 = vand.u32 %v418, 4294901760
        %4121 = vmatprep.subr.mxu0 %v4120
        %v4122 = vand.u32 %v417, 4294901760
        %4123 = vmatpush1.msra.mxu0 %v4122
        %v4124 = vand.u32 %v420, 4294901760
        %4125 = vmatprep.subr.mxu0 %v4124
        %v4126 = vand.u32 %v419, 4294901760
        %4127 = vmatpush1.msra.mxu0 %v4126
        %v4128 = vand.u32 %v422, 4294901760
        %4129 = vmatprep.subr.mxu0 %v4128
        %v4130 = vand.u32 %v421, 4294901760
        %4131 = vmatpush1.msra.mxu0 %v4130
        %v4132 = vand.u32 %v424, 4294901760
        %4133 = vmatprep.subr.mxu0 %v4132
        %v4134 = vand.u32 %v423, 4294901760
        %4135 = vmatpush1.msra.mxu0 %v4134
        %v4136 = vand.u32 %v426, 4294901760
        %4137 = vmatprep.subr.mxu0 %v4136
        %v4138 = vand.u32 %v425, 4294901760
        %4139 = vmatpush1.msra.mxu0 %v4138
        %v4140 = vand.u32 %v428, 4294901760
        %4141 = vmatprep.subr.mxu0 %v4140
        %v4142 = vand.u32 %v427, 4294901760
        %4143 = vmatpush1.msra.mxu0 %v4142
        %v4144 = vand.u32 %v430, 4294901760
        %4145 = vmatprep.subr.mxu0 %v4144
        %v4146 = vand.u32 %v429, 4294901760
        %4147 = vmatpush1.msra.mxu0 %v4146
        %v4148 = vand.u32 %v432, 4294901760
        %4149 = vmatprep.subr.mxu0 %v4148
        %v4150 = vand.u32 %v431, 4294901760
        %4151 = vmatpush1.msra.mxu0 %v4150
        %v4152 = vand.u32 %v434, 4294901760
        %4153 = vmatprep.subr.mxu0 %v4152
        %v4154 = vand.u32 %v433, 4294901760
        %4155 = vmatpush1.msra.mxu0 %v4154
        %v4156 = vand.u32 %v182, 4294901760
        %v4157 = vsub.f32 %v182, %v4156
        %v4158 = vand.u32 %v4157, 4294901760
        %4159 = vmatprep.mubr.f32.mxu0 %v4158
        %v4160 = vand.u32 %v181, 4294901760
        %v4161 = vsub.f32 %v181, %v4160
        %v4162 = vand.u32 %v4161, 4294901760
        %4163 = vmatmul.mubr.f32.gmra.mrb[0].mxu0 %v4162
        %v4164 = vpop.f32.mrb[0].mxu0
        %v4165 = vadd.f32 %v3874, %v4164
        %v4166 = vpop.f32.mrb[0].mxu0
        %v4167 = vadd.f32 %v3876, %v4166
        %v4168 = vand.u32 %v190, 4294901760
        %v4169 = vsub.f32 %v190, %v4168
        %v4170 = vand.u32 %v4169, 4294901760
        %4171 = vmatprep.mubr.f32.mxu0 %v4170
        %v4172 = vand.u32 %v189, 4294901760
        %v4173 = vsub.f32 %v189, %v4172
        %v4174 = vand.u32 %v4173, 4294901760
        %4175 = vmatmul.mubr.f32.gmra.mrb[0].mxu0 %v4174
        %v4176 = vpop.f32.mrb[0].mxu0
        %v4177 = vadd.f32 %v3884, %v4176
        %v4178 = vpop.f32.mrb[0].mxu0
        %v4179 = vadd.f32 %v3886, %v4178
        %v4180 = vand.u32 %v198, 4294901760
        %v4181 = vsub.f32 %v198, %v4180
        %v4182 = vand.u32 %v4181, 4294901760
        %4183 = vmatprep.mubr.f32.mxu0 %v4182
        %v4184 = vand.u32 %v197, 4294901760
        %v4185 = vsub.f32 %v197, %v4184
        %v4186 = vand.u32 %v4185, 4294901760
        %4187 = vmatmul.mubr.f32.gmra.mrb[0].mxu0 %v4186
        %v4188 = vpop.f32.mrb[0].mxu0
        %v4189 = vadd.f32 %v3894, %v4188
        %v4190 = vpop.f32.mrb[0].mxu0
        %v4191 = vadd.f32 %v3896, %v4190
        %v4192 = vand.u32 %v206, 4294901760
        %v4193 = vsub.f32 %v206, %v4192
        %v4194 = vand.u32 %v4193, 4294901760
        %4195 = vmatprep.mubr.f32.mxu0 %v4194
        %v4196 = vand.u32 %v205, 4294901760
        %v4197 = vsub.f32 %v205, %v4196
        %v4198 = vand.u32 %v4197, 4294901760
        %4199 = vmatmul.mubr.f32.gmra.mrb[0].mxu0 %v4198
        %v4200 = vpop.f32.mrb[0].mxu0
        %v4201 = vadd.f32 %v3904, %v4200
        %v4202 = vpop.f32.mrb[0].mxu0
        %v4203 = vadd.f32 %v3906, %v4202
        %v4204 = vand.u32 %v214, 4294901760
        %v4205 = vsub.f32 %v214, %v4204
        %v4206 = vand.u32 %v4205, 4294901760
        %4207 = vmatprep.mubr.f32.mxu0 %v4206
        %v4208 = vand.u32 %v213, 4294901760
        %v4209 = vsub.f32 %v213, %v4208
        %v4210 = vand.u32 %v4209, 4294901760
        %4211 = vmatmul.mubr.f32.gmra.mrb[0].mxu0 %v4210
        %v4212 = vpop.f32.mrb[0].mxu0
        %v4213 = vadd.f32 %v3914, %v4212
        %v4214 = vpop.f32.mrb[0].mxu0
        %v4215 = vadd.f32 %v3916, %v4214
        %v4216 = vand.u32 %v222, 4294901760
        %v4217 = vsub.f32 %v222, %v4216
        %v4218 = vand.u32 %v4217, 4294901760
        %4219 = vmatprep.mubr.f32.mxu0 %v4218
        %v4220 = vand.u32 %v221, 4294901760
        %v4221 = vsub.f32 %v221, %v4220
        %v4222 = vand.u32 %v4221, 4294901760
        %4223 = vmatmul.mubr.f32.gmra.mrb[0].mxu0 %v4222
        %v4224 = vpop.f32.mrb[0].mxu0
        %v4225 = vadd.f32 %v3924, %v4224
        %v4226 = vpop.f32.mrb[0].mxu0
        %v4227 = vadd.f32 %v3926, %v4226
        %v4228 = vand.u32 %v230, 4294901760
        %v4229 = vsub.f32 %v230, %v4228
        %v4230 = vand.u32 %v4229, 4294901760
        %4231 = vmatprep.mubr.f32.mxu0 %v4230
        %v4232 = vand.u32 %v229, 4294901760
        %v4233 = vsub.f32 %v229, %v4232
        %v4234 = vand.u32 %v4233, 4294901760
        %4235 = vmatmul.mubr.f32.gmra.mrb[0].mxu0 %v4234
        %v4236 = vpop.f32.mrb[0].mxu0
        %v4237 = vadd.f32 %v3934, %v4236
        %v4238 = vpop.f32.mrb[0].mxu0
        %v4239 = vadd.f32 %v3936, %v4238
        %v4240 = vand.u32 %v238, 4294901760
        %v4241 = vsub.f32 %v238, %v4240
        %v4242 = vand.u32 %v4241, 4294901760
        %4243 = vmatprep.mubr.f32.mxu0 %v4242
        %v4244 = vand.u32 %v237, 4294901760
        %v4245 = vsub.f32 %v237, %v4244
        %v4246 = vand.u32 %v4245, 4294901760
        %4247 = vmatmul.mubr.f32.gmra.mrb[0].mxu0 %v4246
        %v4248 = vpop.f32.mrb[0].mxu0
        %v4249 = vadd.f32 %v3944, %v4248
        %v4250 = vpop.f32.mrb[0].mxu0
        %v4251 = vadd.f32 %v3946, %v4250
        %v4252 = vand.u32 %v246, 4294901760
        %v4253 = vsub.f32 %v246, %v4252
        %v4254 = vand.u32 %v4253, 4294901760
        %4255 = vmatprep.mubr.f32.mxu0 %v4254
        %v4256 = vand.u32 %v245, 4294901760
        %v4257 = vsub.f32 %v245, %v4256
        %v4258 = vand.u32 %v4257, 4294901760
        %4259 = vmatmul.mubr.f32.gmra.mrb[0].mxu0 %v4258
        %v4260 = vpop.f32.mrb[0].mxu0
        %v4261 = vadd.f32 %v3954, %v4260
        %v4262 = vpop.f32.mrb[0].mxu0
        %v4263 = vadd.f32 %v3956, %v4262
        %v4264 = vand.u32 %v254, 4294901760
        %v4265 = vsub.f32 %v254, %v4264
        %v4266 = vand.u32 %v4265, 4294901760
        %4267 = vmatprep.mubr.f32.mxu0 %v4266
        %v4268 = vand.u32 %v253, 4294901760
        %v4269 = vsub.f32 %v253, %v4268
        %v4270 = vand.u32 %v4269, 4294901760
        %4271 = vmatmul.mubr.f32.gmra.mrb[0].mxu0 %v4270
        %v4272 = vpop.f32.mrb[0].mxu0
        %v4273 = vadd.f32 %v3964, %v4272
        %v4274 = vpop.f32.mrb[0].mxu0
        %v4275 = vadd.f32 %v3966, %v4274
        %v4276 = vand.u32 %v262, 4294901760
        %v4277 = vsub.f32 %v262, %v4276
        %v4278 = vand.u32 %v4277, 4294901760
        %4279 = vmatprep.mubr.f32.mxu0 %v4278
        %v4280 = vand.u32 %v261, 4294901760
        %v4281 = vsub.f32 %v261, %v4280
        %v4282 = vand.u32 %v4281, 4294901760
        %4283 = vmatmul.mubr.f32.gmra.mrb[0].mxu0 %v4282
        %v4284 = vpop.f32.mrb[0].mxu0
        %v4285 = vadd.f32 %v3974, %v4284
        %v4286 = vpop.f32.mrb[0].mxu0
        %v4287 = vadd.f32 %v3976, %v4286
        %v4288 = vand.u32 %v270, 4294901760
        %v4289 = vsub.f32 %v270, %v4288
        %v4290 = vand.u32 %v4289, 4294901760
        %4291 = vmatprep.mubr.f32.mxu0 %v4290
        %v4292 = vand.u32 %v269, 4294901760
        %v4293 = vsub.f32 %v269, %v4292
        %v4294 = vand.u32 %v4293, 4294901760
        %4295 = vmatmul.mubr.f32.gmra.mrb[0].mxu0 %v4294
        %v4296 = vpop.f32.mrb[0].mxu0
        %v4297 = vadd.f32 %v3984, %v4296
        %v4298 = vpop.f32.mrb[0].mxu0
        %v4299 = vadd.f32 %v3986, %v4298
        %v4300 = vand.u32 %v278, 4294901760
        %v4301 = vsub.f32 %v278, %v4300
        %v4302 = vand.u32 %v4301, 4294901760
        %4303 = vmatprep.mubr.f32.mxu0 %v4302
        %v4304 = vand.u32 %v277, 4294901760
        %v4305 = vsub.f32 %v277, %v4304
        %v4306 = vand.u32 %v4305, 4294901760
        %4307 = vmatmul.mubr.f32.gmra.mrb[0].mxu0 %v4306
        %v4308 = vpop.f32.mrb[0].mxu0
        %v4309 = vadd.f32 %v3994, %v4308
        %v4310 = vpop.f32.mrb[0].mxu0
        %v4311 = vadd.f32 %v3996, %v4310
        %v4312 = vand.u32 %v286, 4294901760
        %v4313 = vsub.f32 %v286, %v4312
        %v4314 = vand.u32 %v4313, 4294901760
        %4315 = vmatprep.mubr.f32.mxu0 %v4314
        %v4316 = vand.u32 %v285, 4294901760
        %v4317 = vsub.f32 %v285, %v4316
        %v4318 = vand.u32 %v4317, 4294901760
        %4319 = vmatmul.mubr.f32.gmra.mrb[0].mxu0 %v4318
        %v4320 = vpop.f32.mrb[0].mxu0
        %v4321 = vadd.f32 %v4004, %v4320
        %v4322 = vpop.f32.mrb[0].mxu0
        %v4323 = vadd.f32 %v4006, %v4322
        %v4324 = vand.u32 %v294, 4294901760
        %v4325 = vsub.f32 %v294, %v4324
        %v4326 = vand.u32 %v4325, 4294901760
        %4327 = vmatprep.mubr.f32.mxu0 %v4326
        %v4328 = vand.u32 %v293, 4294901760
        %v4329 = vsub.f32 %v293, %v4328
        %v4330 = vand.u32 %v4329, 4294901760
        %4331 = vmatmul.mubr.f32.gmra.mrb[0].mxu0 %v4330
        %v4332 = vpop.f32.mrb[0].mxu0
        %v4333 = vadd.f32 %v4014, %v4332
        %v4334 = vpop.f32.mrb[0].mxu0
        %v4335 = vadd.f32 %v4016, %v4334
        %v4336 = vand.u32 %v302, 4294901760
        %v4337 = vsub.f32 %v302, %v4336
        %v4338 = vand.u32 %v4337, 4294901760
        %4339 = vmatprep.mubr.f32.mxu0 %v4338
        %v4340 = vand.u32 %v301, 4294901760
        %v4341 = vsub.f32 %v301, %v4340
        %v4342 = vand.u32 %v4341, 4294901760
        %4343 = vmatmul.mubr.f32.gmra.mrb[0].mxu0 %v4342
        %v4344 = vpop.f32.mrb[0].mxu0
        %v4345 = vadd.f32 %v4024, %v4344
        %v4346 = vpop.f32.mrb[0].mxu0
        %v4347 = vadd.f32 %v4026, %v4346
        %4348 = vdwg.mxu0
        %v4349 = vand.u32 %v372, 4294901760
        %v4350 = vsub.f32 %v372, %v4349
        %v4351 = vand.u32 %v4350, 4294901760
        %4352 = vmatprep.subr.mxu0 %v4351
        %v4353 = vand.u32 %v371, 4294901760
        %v4354 = vsub.f32 %v371, %v4353
        %v4355 = vand.u32 %v4354, 4294901760
        %4356 = vmatpush1.msra.mxu0 %v4355
        %v4357 = vand.u32 %v374, 4294901760
        %v4358 = vsub.f32 %v374, %v4357
        %v4359 = vand.u32 %v4358, 4294901760
        %4360 = vmatprep.subr.mxu0 %v4359
        %v4361 = vand.u32 %v373, 4294901760
        %v4362 = vsub.f32 %v373, %v4361
        %v4363 = vand.u32 %v4362, 4294901760
        %4364 = vmatpush1.msra.mxu0 %v4363
        %v4365 = vand.u32 %v376, 4294901760
        %v4366 = vsub.f32 %v376, %v4365
        %v4367 = vand.u32 %v4366, 4294901760
        %4368 = vmatprep.subr.mxu0 %v4367
        %v4369 = vand.u32 %v375, 4294901760
        %v4370 = vsub.f32 %v375, %v4369
        %v4371 = vand.u32 %v4370, 4294901760
        %4372 = vmatpush1.msra.mxu0 %v4371
        %v4373 = vand.u32 %v378, 4294901760
        %v4374 = vsub.f32 %v378, %v4373
        %v4375 = vand.u32 %v4374, 4294901760
        %4376 = vmatprep.subr.mxu0 %v4375
        %v4377 = vand.u32 %v377, 4294901760
        %v4378 = vsub.f32 %v377, %v4377
        %v4379 = vand.u32 %v4378, 4294901760
        %4380 = vmatpush1.msra.mxu0 %v4379
        %v4381 = vand.u32 %v380, 4294901760
        %v4382 = vsub.f32 %v380, %v4381
        %v4383 = vand.u32 %v4382, 4294901760
        %4384 = vmatprep.subr.mxu0 %v4383
        %v4385 = vand.u32 %v379, 4294901760
        %v4386 = vsub.f32 %v379, %v4385
        %v4387 = vand.u32 %v4386, 4294901760
        %4388 = vmatpush1.msra.mxu0 %v4387
        %v4389 = vand.u32 %v382, 4294901760
        %v4390 = vsub.f32 %v382, %v4389
        %v4391 = vand.u32 %v4390, 4294901760
        %4392 = vmatprep.subr.mxu0 %v4391
        %v4393 = vand.u32 %v381, 4294901760
        %v4394 = vsub.f32 %v381, %v4393
        %v4395 = vand.u32 %v4394, 4294901760
        %4396 = vmatpush1.msra.mxu0 %v4395
        %v4397 = vand.u32 %v384, 4294901760
        %v4398 = vsub.f32 %v384, %v4397
        %v4399 = vand.u32 %v4398, 4294901760
        %4400 = vmatprep.subr.mxu0 %v4399
        %v4401 = vand.u32 %v383, 4294901760
        %v4402 = vsub.f32 %v383, %v4401
        %v4403 = vand.u32 %v4402, 4294901760
        %4404 = vmatpush1.msra.mxu0 %v4403
        %v4405 = vand.u32 %v386, 4294901760
        %v4406 = vsub.f32 %v386, %v4405
        %v4407 = vand.u32 %v4406, 4294901760
        %4408 = vmatprep.subr.mxu0 %v4407
        %v4409 = vand.u32 %v385, 4294901760
        %v4410 = vsub.f32 %v385, %v4409
        %v4411 = vand.u32 %v4410, 4294901760
        %4412 = vmatpush1.msra.mxu0 %v4411
        %v4413 = vand.u32 %v388, 4294901760
        %v4414 = vsub.f32 %v388, %v4413
        %v4415 = vand.u32 %v4414, 4294901760
        %4416 = vmatprep.subr.mxu0 %v4415
        %v4417 = vand.u32 %v387, 4294901760
        %v4418 = vsub.f32 %v387, %v4417
        %v4419 = vand.u32 %v4418, 4294901760
        %4420 = vmatpush1.msra.mxu0 %v4419
        %v4421 = vand.u32 %v390, 4294901760
        %v4422 = vsub.f32 %v390, %v4421
        %v4423 = vand.u32 %v4422, 4294901760
        %4424 = vmatprep.subr.mxu0 %v4423
        %v4425 = vand.u32 %v389, 4294901760
        %v4426 = vsub.f32 %v389, %v4425
        %v4427 = vand.u32 %v4426, 4294901760
        %4428 = vmatpush1.msra.mxu0 %v4427
        %v4429 = vand.u32 %v392, 4294901760
        %v4430 = vsub.f32 %v392, %v4429
        %v4431 = vand.u32 %v4430, 4294901760
        %4432 = vmatprep.subr.mxu0 %v4431
        %v4433 = vand.u32 %v391, 4294901760
        %v4434 = vsub.f32 %v391, %v4433
        %v4435 = vand.u32 %v4434, 4294901760
        %4436 = vmatpush1.msra.mxu0 %v4435
        %v4437 = vand.u32 %v394, 4294901760
        %v4438 = vsub.f32 %v394, %v4437
        %v4439 = vand.u32 %v4438, 4294901760
        %4440 = vmatprep.subr.mxu0 %v4439
        %v4441 = vand.u32 %v393, 4294901760
        %v4442 = vsub.f32 %v393, %v4441
        %v4443 = vand.u32 %v4442, 4294901760
        %4444 = vmatpush1.msra.mxu0 %v4443
        %v4445 = vand.u32 %v396, 4294901760
        %v4446 = vsub.f32 %v396, %v4445
        %v4447 = vand.u32 %v4446, 4294901760
        %4448 = vmatprep.subr.mxu0 %v4447
        %v4449 = vand.u32 %v395, 4294901760
        %v4450 = vsub.f32 %v395, %v4449
        %v4451 = vand.u32 %v4450, 4294901760
        %4452 = vmatpush1.msra.mxu0 %v4451
        %v4453 = vand.u32 %v398, 4294901760
        %v4454 = vsub.f32 %v398, %v4453
        %v4455 = vand.u32 %v4454, 4294901760
        %4456 = vmatprep.subr.mxu0 %v4455
        %v4457 = vand.u32 %v397, 4294901760
        %v4458 = vsub.f32 %v397, %v4457
        %v4459 = vand.u32 %v4458, 4294901760
        %4460 = vmatpush1.msra.mxu0 %v4459
        %v4461 = vand.u32 %v400, 4294901760
        %v4462 = vsub.f32 %v400, %v4461
        %v4463 = vand.u32 %v4462, 4294901760
        %4464 = vmatprep.subr.mxu0 %v4463
        %v4465 = vand.u32 %v399, 4294901760
        %v4466 = vsub.f32 %v399, %v4465
        %v4467 = vand.u32 %v4466, 4294901760
        %4468 = vmatpush1.msra.mxu0 %v4467
        %v4469 = vand.u32 %v402, 4294901760
        %v4470 = vsub.f32 %v402, %v4469
        %v4471 = vand.u32 %v4470, 4294901760
        %4472 = vmatprep.subr.mxu0 %v4471
        %v4473 = vand.u32 %v401, 4294901760
        %v4474 = vsub.f32 %v401, %v4473
        %v4475 = vand.u32 %v4474, 4294901760
        %4476 = vmatpush1.msra.mxu0 %v4475
        %v4477 = vand.u32 %v404, 4294901760
        %v4478 = vsub.f32 %v404, %v4477
        %v4479 = vand.u32 %v4478, 4294901760
        %4480 = vmatprep.subr.mxu0 %v4479
        %v4481 = vand.u32 %v403, 4294901760
        %v4482 = vsub.f32 %v403, %v4481
        %v4483 = vand.u32 %v4482, 4294901760
        %4484 = vmatpush1.msra.mxu0 %v4483
        %v4485 = vand.u32 %v406, 4294901760
        %v4486 = vsub.f32 %v406, %v4485
        %v4487 = vand.u32 %v4486, 4294901760
        %4488 = vmatprep.subr.mxu0 %v4487
        %v4489 = vand.u32 %v405, 4294901760
        %v4490 = vsub.f32 %v405, %v4489
        %v4491 = vand.u32 %v4490, 4294901760
        %4492 = vmatpush1.msra.mxu0 %v4491
        %v4493 = vand.u32 %v408, 4294901760
        %v4494 = vsub.f32 %v408, %v4493
        %v4495 = vand.u32 %v4494, 4294901760
        %4496 = vmatprep.subr.mxu0 %v4495
        %v4497 = vand.u32 %v407, 4294901760
        %v4498 = vsub.f32 %v407, %v4497
        %v4499 = vand.u32 %v4498, 4294901760
        %4500 = vmatpush1.msra.mxu0 %v4499
        %v4501 = vand.u32 %v410, 4294901760
        %v4502 = vsub.f32 %v410, %v4501
        %v4503 = vand.u32 %v4502, 4294901760
        %4504 = vmatprep.subr.mxu0 %v4503
        %v4505 = vand.u32 %v409, 4294901760
        %v4506 = vsub.f32 %v409, %v4505
        %v4507 = vand.u32 %v4506, 4294901760
        %4508 = vmatpush1.msra.mxu0 %v4507
        %v4509 = vand.u32 %v412, 4294901760
        %v4510 = vsub.f32 %v412, %v4509
        %v4511 = vand.u32 %v4510, 4294901760
        %4512 = vmatprep.subr.mxu0 %v4511
        %v4513 = vand.u32 %v411, 4294901760
        %v4514 = vsub.f32 %v411, %v4513
        %v4515 = vand.u32 %v4514, 4294901760
        %4516 = vmatpush1.msra.mxu0 %v4515
        %v4517 = vand.u32 %v414, 4294901760
        %v4518 = vsub.f32 %v414, %v4517
        %v4519 = vand.u32 %v4518, 4294901760
        %4520 = vmatprep.subr.mxu0 %v4519
        %v4521 = vand.u32 %v413, 4294901760
        %v4522 = vsub.f32 %v413, %v4521
        %v4523 = vand.u32 %v4522, 4294901760
        %4524 = vmatpush1.msra.mxu0 %v4523
        %v4525 = vand.u32 %v416, 4294901760
        %v4526 = vsub.f32 %v416, %v4525
        %v4527 = vand.u32 %v4526, 4294901760
        %4528 = vmatprep.subr.mxu0 %v4527
        %v4529 = vand.u32 %v415, 4294901760
        %v4530 = vsub.f32 %v415, %v4529
        %v4531 = vand.u32 %v4530, 4294901760
        %4532 = vmatpush1.msra.mxu0 %v4531
        %v4533 = vand.u32 %v418, 4294901760
        %v4534 = vsub.f32 %v418, %v4533
        %v4535 = vand.u32 %v4534, 4294901760
        %4536 = vmatprep.subr.mxu0 %v4535
        %v4537 = vand.u32 %v417, 4294901760
        %v4538 = vsub.f32 %v417, %v4537
        %v4539 = vand.u32 %v4538, 4294901760
        %4540 = vmatpush1.msra.mxu0 %v4539
        %v4541 = vand.u32 %v420, 4294901760
        %v4542 = vsub.f32 %v420, %v4541
        %v4543 = vand.u32 %v4542, 4294901760
        %4544 = vmatprep.subr.mxu0 %v4543
        %v4545 = vand.u32 %v419, 4294901760
        %v4546 = vsub.f32 %v419, %v4545
        %v4547 = vand.u32 %v4546, 4294901760
        %4548 = vmatpush1.msra.mxu0 %v4547
        %v4549 = vand.u32 %v422, 4294901760
        %v4550 = vsub.f32 %v422, %v4549
        %v4551 = vand.u32 %v4550, 4294901760
        %4552 = vmatprep.subr.mxu0 %v4551
        %v4553 = vand.u32 %v421, 4294901760
        %v4554 = vsub.f32 %v421, %v4553
        %v4555 = vand.u32 %v4554, 4294901760
        %4556 = vmatpush1.msra.mxu0 %v4555
        %v4557 = vand.u32 %v424, 4294901760
        %v4558 = vsub.f32 %v424, %v4557
        %v4559 = vand.u32 %v4558, 4294901760
        %4560 = vmatprep.subr.mxu0 %v4559
        %v4561 = vand.u32 %v423, 4294901760
        %v4562 = vsub.f32 %v423, %v4561
        %v4563 = vand.u32 %v4562, 4294901760
        %4564 = vmatpush1.msra.mxu0 %v4563
        %v4565 = vand.u32 %v426, 4294901760
        %v4566 = vsub.f32 %v426, %v4565
        %v4567 = vand.u32 %v4566, 4294901760
        %4568 = vmatprep.subr.mxu0 %v4567
        %v4569 = vand.u32 %v425, 4294901760
        %v4570 = vsub.f32 %v425, %v4569
        %v4571 = vand.u32 %v4570, 4294901760
        %4572 = vmatpush1.msra.mxu0 %v4571
        %v4573 = vand.u32 %v428, 4294901760
        %v4574 = vsub.f32 %v428, %v4573
        %v4575 = vand.u32 %v4574, 4294901760
        %4576 = vmatprep.subr.mxu0 %v4575
        %v4577 = vand.u32 %v427, 4294901760
        %v4578 = vsub.f32 %v427, %v4577
        %v4579 = vand.u32 %v4578, 4294901760
        %4580 = vmatpush1.msra.mxu0 %v4579
        %v4581 = vand.u32 %v430, 4294901760
        %v4582 = vsub.f32 %v430, %v4581
        %v4583 = vand.u32 %v4582, 4294901760
        %4584 = vmatprep.subr.mxu0 %v4583
        %v4585 = vand.u32 %v429, 4294901760
        %v4586 = vsub.f32 %v429, %v4585
        %v4587 = vand.u32 %v4586, 4294901760
        %4588 = vmatpush1.msra.mxu0 %v4587
        %v4589 = vand.u32 %v432, 4294901760
        %v4590 = vsub.f32 %v432, %v4589
        %v4591 = vand.u32 %v4590, 4294901760
        %4592 = vmatprep.subr.mxu0 %v4591
        %v4593 = vand.u32 %v431, 4294901760
        %v4594 = vsub.f32 %v431, %v4593
        %v4595 = vand.u32 %v4594, 4294901760
        %4596 = vmatpush1.msra.mxu0 %v4595
        %v4597 = vand.u32 %v434, 4294901760
        %v4598 = vsub.f32 %v434, %v4597
        %v4599 = vand.u32 %v4598, 4294901760
        %4600 = vmatprep.subr.mxu0 %v4599
        %v4601 = vand.u32 %v433, 4294901760
        %v4602 = vsub.f32 %v433, %v4601
        %v4603 = vand.u32 %v4602, 4294901760
        %4604 = vmatpush1.msra.mxu0 %v4603
        %v4605 = vand.u32 %v182, 4294901760
        %4606 = vmatprep.mubr.f32.mxu0 %v4605
        %v4607 = vand.u32 %v181, 4294901760
        %4608 = vmatmul.mubr.f32.gmra.mrb[0].mxu0 %v4607
        %v4609 = vpop.f32.mrb[0].mxu0
        %v4610 = vadd.f32 %v4165, %v4609
        %v4611 = vpop.f32.mrb[0].mxu0
        %v4612 = vadd.f32 %v4167, %v4611
        %v4613 = vand.u32 %v190, 4294901760
        %4614 = vmatprep.mubr.f32.mxu0 %v4613
        %v4615 = vand.u32 %v189, 4294901760
        %4616 = vmatmul.mubr.f32.gmra.mrb[0].mxu0 %v4615
        %v4617 = vpop.f32.mrb[0].mxu0
        %v4618 = vadd.f32 %v4177, %v4617
        %v4619 = vpop.f32.mrb[0].mxu0
        %v4620 = vadd.f32 %v4179, %v4619
        %v4621 = vand.u32 %v198, 4294901760
        %4622 = vmatprep.mubr.f32.mxu0 %v4621
        %v4623 = vand.u32 %v197, 4294901760
        %4624 = vmatmul.mubr.f32.gmra.mrb[0].mxu0 %v4623
        %v4625 = vpop.f32.mrb[0].mxu0
        %v4626 = vadd.f32 %v4189, %v4625
        %v4627 = vpop.f32.mrb[0].mxu0
        %v4628 = vadd.f32 %v4191, %v4627
        %v4629 = vand.u32 %v206, 4294901760
        %4630 = vmatprep.mubr.f32.mxu0 %v4629
        %v4631 = vand.u32 %v205, 4294901760
        %4632 = vmatmul.mubr.f32.gmra.mrb[0].mxu0 %v4631
        %v4633 = vpop.f32.mrb[0].mxu0
        %v4634 = vadd.f32 %v4201, %v4633
        %v4635 = vpop.f32.mrb[0].mxu0
        %v4636 = vadd.f32 %v4203, %v4635
        %v4637 = vand.u32 %v214, 4294901760
        %4638 = vmatprep.mubr.f32.mxu0 %v4637
        %v4639 = vand.u32 %v213, 4294901760
        %4640 = vmatmul.mubr.f32.gmra.mrb[0].mxu0 %v4639
        %v4641 = vpop.f32.mrb[0].mxu0
        %v4642 = vadd.f32 %v4213, %v4641
        %v4643 = vpop.f32.mrb[0].mxu0
        %v4644 = vadd.f32 %v4215, %v4643
        %v4645 = vand.u32 %v222, 4294901760
        %4646 = vmatprep.mubr.f32.mxu0 %v4645
        %v4647 = vand.u32 %v221, 4294901760
        %4648 = vmatmul.mubr.f32.gmra.mrb[0].mxu0 %v4647
        %v4649 = vpop.f32.mrb[0].mxu0
        %v4650 = vadd.f32 %v4225, %v4649
        %v4651 = vpop.f32.mrb[0].mxu0
        %v4652 = vadd.f32 %v4227, %v4651
        %v4653 = vand.u32 %v230, 4294901760
        %4654 = vmatprep.mubr.f32.mxu0 %v4653
        %v4655 = vand.u32 %v229, 4294901760
        %4656 = vmatmul.mubr.f32.gmra.mrb[0].mxu0 %v4655
        %v4657 = vpop.f32.mrb[0].mxu0
        %v4658 = vadd.f32 %v4237, %v4657
        %v4659 = vpop.f32.mrb[0].mxu0
        %v4660 = vadd.f32 %v4239, %v4659
        %v4661 = vand.u32 %v238, 4294901760
        %4662 = vmatprep.mubr.f32.mxu0 %v4661
        %v4663 = vand.u32 %v237, 4294901760
        %4664 = vmatmul.mubr.f32.gmra.mrb[0].mxu0 %v4663
        %v4665 = vpop.f32.mrb[0].mxu0
        %v4666 = vadd.f32 %v4249, %v4665
        %v4667 = vpop.f32.mrb[0].mxu0
        %v4668 = vadd.f32 %v4251, %v4667
        %v4669 = vand.u32 %v246, 4294901760
        %4670 = vmatprep.mubr.f32.mxu0 %v4669
        %v4671 = vand.u32 %v245, 4294901760
        %4672 = vmatmul.mubr.f32.gmra.mrb[0].mxu0 %v4671
        %v4673 = vpop.f32.mrb[0].mxu0
        %v4674 = vadd.f32 %v4261, %v4673
        %v4675 = vpop.f32.mrb[0].mxu0
        %v4676 = vadd.f32 %v4263, %v4675
        %v4677 = vand.u32 %v254, 4294901760
        %4678 = vmatprep.mubr.f32.mxu0 %v4677
        %v4679 = vand.u32 %v253, 4294901760
        %4680 = vmatmul.mubr.f32.gmra.mrb[0].mxu0 %v4679
        %v4681 = vpop.f32.mrb[0].mxu0
        %v4682 = vadd.f32 %v4273, %v4681
        %v4683 = vpop.f32.mrb[0].mxu0
        %v4684 = vadd.f32 %v4275, %v4683
        %v4685 = vand.u32 %v262, 4294901760
        %4686 = vmatprep.mubr.f32.mxu0 %v4685
        %v4687 = vand.u32 %v261, 4294901760
        %4688 = vmatmul.mubr.f32.gmra.mrb[0].mxu0 %v4687
        %v4689 = vpop.f32.mrb[0].mxu0
        %v4690 = vadd.f32 %v4285, %v4689
        %v4691 = vpop.f32.mrb[0].mxu0
        %v4692 = vadd.f32 %v4287, %v4691
        %v4693 = vand.u32 %v270, 4294901760
        %4694 = vmatprep.mubr.f32.mxu0 %v4693
        %v4695 = vand.u32 %v269, 4294901760
        %4696 = vmatmul.mubr.f32.gmra.mrb[0].mxu0 %v4695
        %v4697 = vpop.f32.mrb[0].mxu0
        %v4698 = vadd.f32 %v4297, %v4697
        %v4699 = vpop.f32.mrb[0].mxu0
        %v4700 = vadd.f32 %v4299, %v4699
        %v4701 = vand.u32 %v278, 4294901760
        %4702 = vmatprep.mubr.f32.mxu0 %v4701
        %v4703 = vand.u32 %v277, 4294901760
        %4704 = vmatmul.mubr.f32.gmra.mrb[0].mxu0 %v4703
        %v4705 = vpop.f32.mrb[0].mxu0
        %v4706 = vadd.f32 %v4309, %v4705
        %v4707 = vpop.f32.mrb[0].mxu0
        %v4708 = vadd.f32 %v4311, %v4707
        %v4709 = vand.u32 %v286, 4294901760
        %4710 = vmatprep.mubr.f32.mxu0 %v4709
        %v4711 = vand.u32 %v285, 4294901760
        %4712 = vmatmul.mubr.f32.gmra.mrb[0].mxu0 %v4711
        %v4713 = vpop.f32.mrb[0].mxu0
        %v4714 = vadd.f32 %v4321, %v4713
        %v4715 = vpop.f32.mrb[0].mxu0
        %v4716 = vadd.f32 %v4323, %v4715
        %v4717 = vand.u32 %v294, 4294901760
        %4718 = vmatprep.mubr.f32.mxu0 %v4717
        %v4719 = vand.u32 %v293, 4294901760
        %4720 = vmatmul.mubr.f32.gmra.mrb[0].mxu0 %v4719
        %v4721 = vpop.f32.mrb[0].mxu0
        %v4722 = vadd.f32 %v4333, %v4721
        %v4723 = vpop.f32.mrb[0].mxu0
        %v4724 = vadd.f32 %v4335, %v4723
        %v4725 = vand.u32 %v302, 4294901760
        %4726 = vmatprep.mubr.f32.mxu0 %v4725
        %v4727 = vand.u32 %v301, 4294901760
        %4728 = vmatmul.mubr.f32.gmra.mrb[0].mxu0 %v4727
        %v4729 = vpop.f32.mrb[0].mxu0
        %v4730 = vadd.f32 %v4345, %v4729
        %v4731 = vpop.f32.mrb[0].mxu0
        %v4732 = vadd.f32 %v4347, %v4731
        %4733 = vdwg.mxu0
        %v4734 = vand.u32 %v372, 4294901760
        %4735 = vmatprep.subr.mxu0 %v4734
        %v4736 = vand.u32 %v371, 4294901760
        %4737 = vmatpush1.msra.mxu0 %v4736
        %v4738 = vand.u32 %v374, 4294901760
        %4739 = vmatprep.subr.mxu0 %v4738
        %v4740 = vand.u32 %v373, 4294901760
        %4741 = vmatpush1.msra.mxu0 %v4740
        %v4742 = vand.u32 %v376, 4294901760
        %4743 = vmatprep.subr.mxu0 %v4742
        %v4744 = vand.u32 %v375, 4294901760
        %4745 = vmatpush1.msra.mxu0 %v4744
        %v4746 = vand.u32 %v378, 4294901760
        %4747 = vmatprep.subr.mxu0 %v4746
        %v4748 = vand.u32 %v377, 4294901760
        %4749 = vmatpush1.msra.mxu0 %v4748
        %v4750 = vand.u32 %v380, 4294901760
        %4751 = vmatprep.subr.mxu0 %v4750
        %v4752 = vand.u32 %v379, 4294901760
        %4753 = vmatpush1.msra.mxu0 %v4752
        %v4754 = vand.u32 %v382, 4294901760
        %4755 = vmatprep.subr.mxu0 %v4754
        %v4756 = vand.u32 %v381, 4294901760
        %4757 = vmatpush1.msra.mxu0 %v4756
        %v4758 = vand.u32 %v384, 4294901760
        %4759 = vmatprep.subr.mxu0 %v4758
        %v4760 = vand.u32 %v383, 4294901760
        %4761 = vmatpush1.msra.mxu0 %v4760
        %v4762 = vand.u32 %v386, 4294901760
        %4763 = vmatprep.subr.mxu0 %v4762
        %v4764 = vand.u32 %v385, 4294901760
        %4765 = vmatpush1.msra.mxu0 %v4764
        %v4766 = vand.u32 %v388, 4294901760
        %4767 = vmatprep.subr.mxu0 %v4766
        %v4768 = vand.u32 %v387, 4294901760
        %4769 = vmatpush1.msra.mxu0 %v4768
        %v4770 = vand.u32 %v390, 4294901760
        %4771 = vmatprep.subr.mxu0 %v4770
        %v4772 = vand.u32 %v389, 4294901760
        %4773 = vmatpush1.msra.mxu0 %v4772
        %v4774 = vand.u32 %v392, 4294901760
        %4775 = vmatprep.subr.mxu0 %v4774
        %v4776 = vand.u32 %v391, 4294901760
        %4777 = vmatpush1.msra.mxu0 %v4776
        %v4778 = vand.u32 %v394, 4294901760
        %4779 = vmatprep.subr.mxu0 %v4778
        %v4780 = vand.u32 %v393, 4294901760
        %4781 = vmatpush1.msra.mxu0 %v4780
        %v4782 = vand.u32 %v396, 4294901760
        %4783 = vmatprep.subr.mxu0 %v4782
        %v4784 = vand.u32 %v395, 4294901760
        %4785 = vmatpush1.msra.mxu0 %v4784
        %v4786 = vand.u32 %v398, 4294901760
        %4787 = vmatprep.subr.mxu0 %v4786
        %v4788 = vand.u32 %v397, 4294901760
        %4789 = vmatpush1.msra.mxu0 %v4788
        %v4790 = vand.u32 %v400, 4294901760
        %4791 = vmatprep.subr.mxu0 %v4790
        %v4792 = vand.u32 %v399, 4294901760
        %4793 = vmatpush1.msra.mxu0 %v4792
        %v4794 = vand.u32 %v402, 4294901760
        %4795 = vmatprep.subr.mxu0 %v4794
        %v4796 = vand.u32 %v401, 4294901760
        %4797 = vmatpush1.msra.mxu0 %v4796
        %v4798 = vand.u32 %v404, 4294901760
        %4799 = vmatprep.subr.mxu0 %v4798
        %v4800 = vand.u32 %v403, 4294901760
        %4801 = vmatpush1.msra.mxu0 %v4800
        %v4802 = vand.u32 %v406, 4294901760
        %4803 = vmatprep.subr.mxu0 %v4802
        %v4804 = vand.u32 %v405, 4294901760
        %4805 = vmatpush1.msra.mxu0 %v4804
        %v4806 = vand.u32 %v408, 4294901760
        %4807 = vmatprep.subr.mxu0 %v4806
        %v4808 = vand.u32 %v407, 4294901760
        %4809 = vmatpush1.msra.mxu0 %v4808
        %v4810 = vand.u32 %v410, 4294901760
        %4811 = vmatprep.subr.mxu0 %v4810
        %v4812 = vand.u32 %v409, 4294901760
        %4813 = vmatpush1.msra.mxu0 %v4812
        %v4814 = vand.u32 %v412, 4294901760
        %4815 = vmatprep.subr.mxu0 %v4814
        %v4816 = vand.u32 %v411, 4294901760
        %4817 = vmatpush1.msra.mxu0 %v4816
        %v4818 = vand.u32 %v414, 4294901760
        %4819 = vmatprep.subr.mxu0 %v4818
        %v4820 = vand.u32 %v413, 4294901760
        %4821 = vmatpush1.msra.mxu0 %v4820
        %v4822 = vand.u32 %v416, 4294901760
        %4823 = vmatprep.subr.mxu0 %v4822
        %v4824 = vand.u32 %v415, 4294901760
        %4825 = vmatpush1.msra.mxu0 %v4824
        %v4826 = vand.u32 %v418, 4294901760
        %4827 = vmatprep.subr.mxu0 %v4826
        %v4828 = vand.u32 %v417, 4294901760
        %4829 = vmatpush1.msra.mxu0 %v4828
        %v4830 = vand.u32 %v420, 4294901760
        %4831 = vmatprep.subr.mxu0 %v4830
        %v4832 = vand.u32 %v419, 4294901760
        %4833 = vmatpush1.msra.mxu0 %v4832
        %v4834 = vand.u32 %v422, 4294901760
        %4835 = vmatprep.subr.mxu0 %v4834
        %v4836 = vand.u32 %v421, 4294901760
        %4837 = vmatpush1.msra.mxu0 %v4836
        %v4838 = vand.u32 %v424, 4294901760
        %4839 = vmatprep.subr.mxu0 %v4838
        %v4840 = vand.u32 %v423, 4294901760
        %4841 = vmatpush1.msra.mxu0 %v4840
        %v4842 = vand.u32 %v426, 4294901760
        %4843 = vmatprep.subr.mxu0 %v4842
        %v4844 = vand.u32 %v425, 4294901760
        %4845 = vmatpush1.msra.mxu0 %v4844
        %v4846 = vand.u32 %v428, 4294901760
        %4847 = vmatprep.subr.mxu0 %v4846
        %v4848 = vand.u32 %v427, 4294901760
        %4849 = vmatpush1.msra.mxu0 %v4848
        %v4850 = vand.u32 %v430, 4294901760
        %4851 = vmatprep.subr.mxu0 %v4850
        %v4852 = vand.u32 %v429, 4294901760
        %4853 = vmatpush1.msra.mxu0 %v4852
        %v4854 = vand.u32 %v432, 4294901760
        %4855 = vmatprep.subr.mxu0 %v4854
        %v4856 = vand.u32 %v431, 4294901760
        %4857 = vmatpush1.msra.mxu0 %v4856
        %v4858 = vand.u32 %v434, 4294901760
        %4859 = vmatprep.subr.mxu0 %v4858
        %v4860 = vand.u32 %v433, 4294901760
        %4861 = vmatpush1.msra.mxu0 %v4860
        %v4862 = vand.u32 %v182, 4294901760
        %4863 = vmatprep.mubr.f32.mxu0 %v4862
        %v4864 = vand.u32 %v181, 4294901760
        %4865 = vmatmul.mubr.f32.gmra.mrb[0].mxu0 %v4864
        %v4866 = vpop.f32.mrb[0].mxu0
        %v4867 = vadd.f32 %v4610, %v4866
        %v4868 = vpop.f32.mrb[0].mxu0
        %v4869 = vadd.f32 %v4612, %v4868
        %v4870 = vand.u32 %v190, 4294901760
        %4871 = vmatprep.mubr.f32.mxu0 %v4870
        %v4872 = vand.u32 %v189, 4294901760
        %4873 = vmatmul.mubr.f32.gmra.mrb[0].mxu0 %v4872
        %v4874 = vpop.f32.mrb[0].mxu0
        %v4875 = vadd.f32 %v4618, %v4874
        %v4876 = vpop.f32.mrb[0].mxu0
        %v4877 = vadd.f32 %v4620, %v4876
        %v4878 = vand.u32 %v198, 4294901760
        %4879 = vmatprep.mubr.f32.mxu0 %v4878
        %v4880 = vand.u32 %v197, 4294901760
        %4881 = vmatmul.mubr.f32.gmra.mrb[0].mxu0 %v4880
        %v4882 = vpop.f32.mrb[0].mxu0
        %v4883 = vadd.f32 %v4626, %v4882
        %v4884 = vpop.f32.mrb[0].mxu0
        %v4885 = vadd.f32 %v4628, %v4884
        %v4886 = vand.u32 %v206, 4294901760
        %4887 = vmatprep.mubr.f32.mxu0 %v4886
        %v4888 = vand.u32 %v205, 4294901760
        %4889 = vmatmul.mubr.f32.gmra.mrb[0].mxu0 %v4888
        %v4890 = vpop.f32.mrb[0].mxu0
        %v4891 = vadd.f32 %v4634, %v4890
        %v4892 = vpop.f32.mrb[0].mxu0
        %v4893 = vadd.f32 %v4636, %v4892
        %v4894 = vand.u32 %v214, 4294901760
        %4895 = vmatprep.mubr.f32.mxu0 %v4894
        %v4896 = vand.u32 %v213, 4294901760
        %4897 = vmatmul.mubr.f32.gmra.mrb[0].mxu0 %v4896
        %v4898 = vpop.f32.mrb[0].mxu0
        %v4899 = vadd.f32 %v4642, %v4898
        %v4900 = vpop.f32.mrb[0].mxu0
        %v4901 = vadd.f32 %v4644, %v4900
        %v4902 = vand.u32 %v222, 4294901760
        %4903 = vmatprep.mubr.f32.mxu0 %v4902
        %v4904 = vand.u32 %v221, 4294901760
        %4905 = vmatmul.mubr.f32.gmra.mrb[0].mxu0 %v4904
        %v4906 = vpop.f32.mrb[0].mxu0
        %v4907 = vadd.f32 %v4650, %v4906
        %v4908 = vpop.f32.mrb[0].mxu0
        %v4909 = vadd.f32 %v4652, %v4908
        %v4910 = vand.u32 %v230, 4294901760
        %4911 = vmatprep.mubr.f32.mxu0 %v4910
        %v4912 = vand.u32 %v229, 4294901760
        %4913 = vmatmul.mubr.f32.gmra.mrb[0].mxu0 %v4912
        %v4914 = vpop.f32.mrb[0].mxu0
        %v4915 = vadd.f32 %v4658, %v4914
        %v4916 = vpop.f32.mrb[0].mxu0
        %v4917 = vadd.f32 %v4660, %v4916
        %v4918 = vand.u32 %v238, 4294901760
        %4919 = vmatprep.mubr.f32.mxu0 %v4918
        %v4920 = vand.u32 %v237, 4294901760
        %4921 = vmatmul.mubr.f32.gmra.mrb[0].mxu0 %v4920
        %v4922 = vpop.f32.mrb[0].mxu0
        %v4923 = vadd.f32 %v4666, %v4922
        %v4924 = vpop.f32.mrb[0].mxu0
        %v4925 = vadd.f32 %v4668, %v4924
        %v4926 = vand.u32 %v246, 4294901760
        %4927 = vmatprep.mubr.f32.mxu0 %v4926
        %v4928 = vand.u32 %v245, 4294901760
        %4929 = vmatmul.mubr.f32.gmra.mrb[0].mxu0 %v4928
        %v4930 = vpop.f32.mrb[0].mxu0
        %v4931 = vadd.f32 %v4674, %v4930
        %v4932 = vpop.f32.mrb[0].mxu0
        %v4933 = vadd.f32 %v4676, %v4932
        %v4934 = vand.u32 %v254, 4294901760
        %4935 = vmatprep.mubr.f32.mxu0 %v4934
        %v4936 = vand.u32 %v253, 4294901760
        %4937 = vmatmul.mubr.f32.gmra.mrb[0].mxu0 %v4936
        %v4938 = vpop.f32.mrb[0].mxu0
        %v4939 = vadd.f32 %v4682, %v4938
        %v4940 = vpop.f32.mrb[0].mxu0
        %v4941 = vadd.f32 %v4684, %v4940
        %v4942 = vand.u32 %v262, 4294901760
        %4943 = vmatprep.mubr.f32.mxu0 %v4942
        %v4944 = vand.u32 %v261, 4294901760
        %4945 = vmatmul.mubr.f32.gmra.mrb[0].mxu0 %v4944
        %v4946 = vpop.f32.mrb[0].mxu0
        %v4947 = vadd.f32 %v4690, %v4946
        %v4948 = vpop.f32.mrb[0].mxu0
        %v4949 = vadd.f32 %v4692, %v4948
        %v4950 = vand.u32 %v270, 4294901760
        %4951 = vmatprep.mubr.f32.mxu0 %v4950
        %v4952 = vand.u32 %v269, 4294901760
        %4953 = vmatmul.mubr.f32.gmra.mrb[0].mxu0 %v4952
        %v4954 = vpop.f32.mrb[0].mxu0
        %v4955 = vadd.f32 %v4698, %v4954
        %v4956 = vpop.f32.mrb[0].mxu0
        %v4957 = vadd.f32 %v4700, %v4956
        %v4958 = vand.u32 %v278, 4294901760
        %4959 = vmatprep.mubr.f32.mxu0 %v4958
        %v4960 = vand.u32 %v277, 4294901760
        %4961 = vmatmul.mubr.f32.gmra.mrb[0].mxu0 %v4960
        %v4962 = vpop.f32.mrb[0].mxu0
        %v4963 = vadd.f32 %v4706, %v4962
        %v4964 = vpop.f32.mrb[0].mxu0
        %v4965 = vadd.f32 %v4708, %v4964
        %v4966 = vand.u32 %v286, 4294901760
        %4967 = vmatprep.mubr.f32.mxu0 %v4966
        %v4968 = vand.u32 %v285, 4294901760
        %4969 = vmatmul.mubr.f32.gmra.mrb[0].mxu0 %v4968
        %v4970 = vpop.f32.mrb[0].mxu0
        %v4971 = vadd.f32 %v4714, %v4970
        %v4972 = vpop.f32.mrb[0].mxu0
        %v4973 = vadd.f32 %v4716, %v4972
        %v4974 = vand.u32 %v294, 4294901760
        %4975 = vmatprep.mubr.f32.mxu0 %v4974
        %v4976 = vand.u32 %v293, 4294901760
        %4977 = vmatmul.mubr.f32.gmra.mrb[0].mxu0 %v4976
        %v4978 = vpop.f32.mrb[0].mxu0
        %v4979 = vadd.f32 %v4722, %v4978
        %v4980 = vpop.f32.mrb[0].mxu0
        %v4981 = vadd.f32 %v4724, %v4980
        %v4982 = vand.u32 %v302, 4294901760
        %4983 = vmatprep.mubr.f32.mxu0 %v4982
        %v4984 = vand.u32 %v301, 4294901760
        %4985 = vmatmul.mubr.f32.gmra.mrb[0].mxu0 %v4984
        %v4986 = vpop.f32.mrb[0].mxu0
        %v4987 = vadd.f32 %v4730, %v4986
        %v4988 = vpop.f32.mrb[0].mxu0
        %v4989 = vadd.f32 %v4732, %v4988
        %4990 = vdwg.mxu0
        %v4991 = vand.u32 %v436, 4294901760
        %4992 = vmatprep.subr.mxu0 %v4991
        %v4993 = vand.u32 %v435, 4294901760
        %4994 = vmatpush1.msra.mxu0 %v4993
        %v4995 = vand.u32 %v438, 4294901760
        %4996 = vmatprep.subr.mxu0 %v4995
        %v4997 = vand.u32 %v437, 4294901760
        %4998 = vmatpush1.msra.mxu0 %v4997
        %v4999 = vand.u32 %v440, 4294901760
        %5000 = vmatprep.subr.mxu0 %v4999
        %v5001 = vand.u32 %v439, 4294901760
        %5002 = vmatpush1.msra.mxu0 %v5001
        %v5003 = vand.u32 %v442, 4294901760
        %5004 = vmatprep.subr.mxu0 %v5003
        %v5005 = vand.u32 %v441, 4294901760
        %5006 = vmatpush1.msra.mxu0 %v5005
        %v5007 = vand.u32 %v444, 4294901760
        %5008 = vmatprep.subr.mxu0 %v5007
        %v5009 = vand.u32 %v443, 4294901760
        %5010 = vmatpush1.msra.mxu0 %v5009
        %v5011 = vand.u32 %v446, 4294901760
        %5012 = vmatprep.subr.mxu0 %v5011
        %v5013 = vand.u32 %v445, 4294901760
        %5014 = vmatpush1.msra.mxu0 %v5013
        %v5015 = vand.u32 %v448, 4294901760
        %5016 = vmatprep.subr.mxu0 %v5015
        %v5017 = vand.u32 %v447, 4294901760
        %5018 = vmatpush1.msra.mxu0 %v5017
        %v5019 = vand.u32 %v450, 4294901760
        %5020 = vmatprep.subr.mxu0 %v5019
        %v5021 = vand.u32 %v449, 4294901760
        %5022 = vmatpush1.msra.mxu0 %v5021
        %v5023 = vand.u32 %v452, 4294901760
        %5024 = vmatprep.subr.mxu0 %v5023
        %v5025 = vand.u32 %v451, 4294901760
        %5026 = vmatpush1.msra.mxu0 %v5025
        %v5027 = vand.u32 %v454, 4294901760
        %5028 = vmatprep.subr.mxu0 %v5027
        %v5029 = vand.u32 %v453, 4294901760
        %5030 = vmatpush1.msra.mxu0 %v5029
        %v5031 = vand.u32 %v456, 4294901760
        %5032 = vmatprep.subr.mxu0 %v5031
        %v5033 = vand.u32 %v455, 4294901760
        %5034 = vmatpush1.msra.mxu0 %v5033
        %v5035 = vand.u32 %v458, 4294901760
        %5036 = vmatprep.subr.mxu0 %v5035
        %v5037 = vand.u32 %v457, 4294901760
        %5038 = vmatpush1.msra.mxu0 %v5037
        %v5039 = vand.u32 %v460, 4294901760
        %5040 = vmatprep.subr.mxu0 %v5039
        %v5041 = vand.u32 %v459, 4294901760
        %5042 = vmatpush1.msra.mxu0 %v5041
        %v5043 = vand.u32 %v462, 4294901760
        %5044 = vmatprep.subr.mxu0 %v5043
        %v5045 = vand.u32 %v461, 4294901760
        %5046 = vmatpush1.msra.mxu0 %v5045
        %v5047 = vand.u32 %v464, 4294901760
        %5048 = vmatprep.subr.mxu0 %v5047
        %v5049 = vand.u32 %v463, 4294901760
        %5050 = vmatpush1.msra.mxu0 %v5049
        %v5051 = vand.u32 %v466, 4294901760
        %5052 = vmatprep.subr.mxu0 %v5051
        %v5053 = vand.u32 %v465, 4294901760
        %5054 = vmatpush1.msra.mxu0 %v5053
        %v5055 = vand.u32 %v468, 4294901760
        %5056 = vmatprep.subr.mxu0 %v5055
        %v5057 = vand.u32 %v467, 4294901760
        %5058 = vmatpush1.msra.mxu0 %v5057
        %v5059 = vand.u32 %v470, 4294901760
        %5060 = vmatprep.subr.mxu0 %v5059
        %v5061 = vand.u32 %v469, 4294901760
        %5062 = vmatpush1.msra.mxu0 %v5061
        %v5063 = vand.u32 %v472, 4294901760
        %5064 = vmatprep.subr.mxu0 %v5063
        %v5065 = vand.u32 %v471, 4294901760
        %5066 = vmatpush1.msra.mxu0 %v5065
        %v5067 = vand.u32 %v474, 4294901760
        %5068 = vmatprep.subr.mxu0 %v5067
        %v5069 = vand.u32 %v473, 4294901760
        %5070 = vmatpush1.msra.mxu0 %v5069
        %v5071 = vand.u32 %v476, 4294901760
        %5072 = vmatprep.subr.mxu0 %v5071
        %v5073 = vand.u32 %v475, 4294901760
        %5074 = vmatpush1.msra.mxu0 %v5073
        %v5075 = vand.u32 %v478, 4294901760
        %5076 = vmatprep.subr.mxu0 %v5075
        %v5077 = vand.u32 %v477, 4294901760
        %5078 = vmatpush1.msra.mxu0 %v5077
        %v5079 = vand.u32 %v480, 4294901760
        %5080 = vmatprep.subr.mxu0 %v5079
        %v5081 = vand.u32 %v479, 4294901760
        %5082 = vmatpush1.msra.mxu0 %v5081
        %v5083 = vand.u32 %v482, 4294901760
        %5084 = vmatprep.subr.mxu0 %v5083
        %v5085 = vand.u32 %v481, 4294901760
        %5086 = vmatpush1.msra.mxu0 %v5085
        %v5087 = vand.u32 %v484, 4294901760
        %5088 = vmatprep.subr.mxu0 %v5087
        %v5089 = vand.u32 %v483, 4294901760
        %5090 = vmatpush1.msra.mxu0 %v5089
        %v5091 = vand.u32 %v486, 4294901760
        %5092 = vmatprep.subr.mxu0 %v5091
        %v5093 = vand.u32 %v485, 4294901760
        %5094 = vmatpush1.msra.mxu0 %v5093
        %v5095 = vand.u32 %v488, 4294901760
        %5096 = vmatprep.subr.mxu0 %v5095
        %v5097 = vand.u32 %v487, 4294901760
        %5098 = vmatpush1.msra.mxu0 %v5097
        %v5099 = vand.u32 %v490, 4294901760
        %5100 = vmatprep.subr.mxu0 %v5099
        %v5101 = vand.u32 %v489, 4294901760
        %5102 = vmatpush1.msra.mxu0 %v5101
        %v5103 = vand.u32 %v492, 4294901760
        %5104 = vmatprep.subr.mxu0 %v5103
        %v5105 = vand.u32 %v491, 4294901760
        %5106 = vmatpush1.msra.mxu0 %v5105
        %v5107 = vand.u32 %v494, 4294901760
        %5108 = vmatprep.subr.mxu0 %v5107
        %v5109 = vand.u32 %v493, 4294901760
        %5110 = vmatpush1.msra.mxu0 %v5109
        %v5111 = vand.u32 %v496, 4294901760
        %5112 = vmatprep.subr.mxu0 %v5111
        %v5113 = vand.u32 %v495, 4294901760
        %5114 = vmatpush1.msra.mxu0 %v5113
        %v5115 = vand.u32 %v498, 4294901760
        %5116 = vmatprep.subr.mxu0 %v5115
        %v5117 = vand.u32 %v497, 4294901760
        %5118 = vmatpush1.msra.mxu0 %v5117
        %v5119 = vand.u32 %v184, 4294901760
        %v5120 = vsub.f32 %v184, %v5119
        %v5121 = vand.u32 %v5120, 4294901760
        %v5122 = vsub.f32 %v5120, %v5121
        %v5123 = vand.u32 %v5122, 4294901760
        %5124 = vmatprep.mubr.f32.mxu0 %v5123
        %v5125 = vand.u32 %v183, 4294901760
        %v5126 = vsub.f32 %v183, %v5125
        %v5127 = vand.u32 %v5126, 4294901760
        %v5128 = vsub.f32 %v5126, %v5127
        %v5129 = vand.u32 %v5128, 4294901760
        %5130 = vmatmul.mubr.f32.gmra.mrb[0].mxu0 %v5129
        %v5131 = vpop.f32.mrb[0].mxu0
        %v5132 = vadd.f32 %v4867, %v5131
        %v5133 = vpop.f32.mrb[0].mxu0
        %v5134 = vadd.f32 %v4869, %v5133
        %v5135 = vand.u32 %v192, 4294901760
        %v5136 = vsub.f32 %v192, %v5135
        %v5137 = vand.u32 %v5136, 4294901760
        %v5138 = vsub.f32 %v5136, %v5137
        %v5139 = vand.u32 %v5138, 4294901760
        %5140 = vmatprep.mubr.f32.mxu0 %v5139
        %v5141 = vand.u32 %v191, 4294901760
        %v5142 = vsub.f32 %v191, %v5141
        %v5143 = vand.u32 %v5142, 4294901760
        %v5144 = vsub.f32 %v5142, %v5143
        %v5145 = vand.u32 %v5144, 4294901760
        %5146 = vmatmul.mubr.f32.gmra.mrb[0].mxu0 %v5145
        %v5147 = vpop.f32.mrb[0].mxu0
        %v5148 = vadd.f32 %v4875, %v5147
        %v5149 = vpop.f32.mrb[0].mxu0
        %v5150 = vadd.f32 %v4877, %v5149
        %v5151 = vand.u32 %v200, 4294901760
        %v5152 = vsub.f32 %v200, %v5151
        %v5153 = vand.u32 %v5152, 4294901760
        %v5154 = vsub.f32 %v5152, %v5153
        %v5155 = vand.u32 %v5154, 4294901760
        %5156 = vmatprep.mubr.f32.mxu0 %v5155
        %v5157 = vand.u32 %v199, 4294901760
        %v5158 = vsub.f32 %v199, %v5157
        %v5159 = vand.u32 %v5158, 4294901760
        %v5160 = vsub.f32 %v5158, %v5159
        %v5161 = vand.u32 %v5160, 4294901760
        %5162 = vmatmul.mubr.f32.gmra.mrb[0].mxu0 %v5161
        %v5163 = vpop.f32.mrb[0].mxu0
        %v5164 = vadd.f32 %v4883, %v5163
        %v5165 = vpop.f32.mrb[0].mxu0
        %v5166 = vadd.f32 %v4885, %v5165
        %v5167 = vand.u32 %v208, 4294901760
        %v5168 = vsub.f32 %v208, %v5167
        %v5169 = vand.u32 %v5168, 4294901760
        %v5170 = vsub.f32 %v5168, %v5169
        %v5171 = vand.u32 %v5170, 4294901760
        %5172 = vmatprep.mubr.f32.mxu0 %v5171
        %v5173 = vand.u32 %v207, 4294901760
        %v5174 = vsub.f32 %v207, %v5173
        %v5175 = vand.u32 %v5174, 4294901760
        %v5176 = vsub.f32 %v5174, %v5175
        %v5177 = vand.u32 %v5176, 4294901760
        %5178 = vmatmul.mubr.f32.gmra.mrb[0].mxu0 %v5177
        %v5179 = vpop.f32.mrb[0].mxu0
        %v5180 = vadd.f32 %v4891, %v5179
        %v5181 = vpop.f32.mrb[0].mxu0
        %v5182 = vadd.f32 %v4893, %v5181
        %v5183 = vand.u32 %v216, 4294901760
        %v5184 = vsub.f32 %v216, %v5183
        %v5185 = vand.u32 %v5184, 4294901760
        %v5186 = vsub.f32 %v5184, %v5185
        %v5187 = vand.u32 %v5186, 4294901760
        %5188 = vmatprep.mubr.f32.mxu0 %v5187
        %v5189 = vand.u32 %v215, 4294901760
        %v5190 = vsub.f32 %v215, %v5189
        %v5191 = vand.u32 %v5190, 4294901760
        %v5192 = vsub.f32 %v5190, %v5191
        %v5193 = vand.u32 %v5192, 4294901760
        %5194 = vmatmul.mubr.f32.gmra.mrb[0].mxu0 %v5193
        %v5195 = vpop.f32.mrb[0].mxu0
        %v5196 = vadd.f32 %v4899, %v5195
        %v5197 = vpop.f32.mrb[0].mxu0
        %v5198 = vadd.f32 %v4901, %v5197
        %v5199 = vand.u32 %v224, 4294901760
        %v5200 = vsub.f32 %v224, %v5199
        %v5201 = vand.u32 %v5200, 4294901760
        %v5202 = vsub.f32 %v5200, %v5201
        %v5203 = vand.u32 %v5202, 4294901760
        %5204 = vmatprep.mubr.f32.mxu0 %v5203
        %v5205 = vand.u32 %v223, 4294901760
        %v5206 = vsub.f32 %v223, %v5205
        %v5207 = vand.u32 %v5206, 4294901760
        %v5208 = vsub.f32 %v5206, %v5207
        %v5209 = vand.u32 %v5208, 4294901760
        %5210 = vmatmul.mubr.f32.gmra.mrb[0].mxu0 %v5209
        %v5211 = vpop.f32.mrb[0].mxu0
        %v5212 = vadd.f32 %v4907, %v5211
        %v5213 = vpop.f32.mrb[0].mxu0
        %v5214 = vadd.f32 %v4909, %v5213
        %v5215 = vand.u32 %v232, 4294901760
        %v5216 = vsub.f32 %v232, %v5215
        %v5217 = vand.u32 %v5216, 4294901760
        %v5218 = vsub.f32 %v5216, %v5217
        %v5219 = vand.u32 %v5218, 4294901760
        %5220 = vmatprep.mubr.f32.mxu0 %v5219
        %v5221 = vand.u32 %v231, 4294901760
        %v5222 = vsub.f32 %v231, %v5221
        %v5223 = vand.u32 %v5222, 4294901760
        %v5224 = vsub.f32 %v5222, %v5223
        %v5225 = vand.u32 %v5224, 4294901760
        %5226 = vmatmul.mubr.f32.gmra.mrb[0].mxu0 %v5225
        %v5227 = vpop.f32.mrb[0].mxu0
        %v5228 = vadd.f32 %v4915, %v5227
        %v5229 = vpop.f32.mrb[0].mxu0
        %v5230 = vadd.f32 %v4917, %v5229
        %v5231 = vand.u32 %v240, 4294901760
        %v5232 = vsub.f32 %v240, %v5231
        %v5233 = vand.u32 %v5232, 4294901760
        %v5234 = vsub.f32 %v5232, %v5233
        %v5235 = vand.u32 %v5234, 4294901760
        %5236 = vmatprep.mubr.f32.mxu0 %v5235
        %v5237 = vand.u32 %v239, 4294901760
        %v5238 = vsub.f32 %v239, %v5237
        %v5239 = vand.u32 %v5238, 4294901760
        %v5240 = vsub.f32 %v5238, %v5239
        %v5241 = vand.u32 %v5240, 4294901760
        %5242 = vmatmul.mubr.f32.gmra.mrb[0].mxu0 %v5241
        %v5243 = vpop.f32.mrb[0].mxu0
        %v5244 = vadd.f32 %v4923, %v5243
        %v5245 = vpop.f32.mrb[0].mxu0
        %v5246 = vadd.f32 %v4925, %v5245
        %v5247 = vand.u32 %v248, 4294901760
        %v5248 = vsub.f32 %v248, %v5247
        %v5249 = vand.u32 %v5248, 4294901760
        %v5250 = vsub.f32 %v5248, %v5249
        %v5251 = vand.u32 %v5250, 4294901760
        %5252 = vmatprep.mubr.f32.mxu0 %v5251
        %v5253 = vand.u32 %v247, 4294901760
        %v5254 = vsub.f32 %v247, %v5253
        %v5255 = vand.u32 %v5254, 4294901760
        %v5256 = vsub.f32 %v5254, %v5255
        %v5257 = vand.u32 %v5256, 4294901760
        %5258 = vmatmul.mubr.f32.gmra.mrb[0].mxu0 %v5257
        %v5259 = vpop.f32.mrb[0].mxu0
        %v5260 = vadd.f32 %v4931, %v5259
        %v5261 = vpop.f32.mrb[0].mxu0
        %v5262 = vadd.f32 %v4933, %v5261
        %v5263 = vand.u32 %v256, 4294901760
        %v5264 = vsub.f32 %v256, %v5263
        %v5265 = vand.u32 %v5264, 4294901760
        %v5266 = vsub.f32 %v5264, %v5265
        %v5267 = vand.u32 %v5266, 4294901760
        %5268 = vmatprep.mubr.f32.mxu0 %v5267
        %v5269 = vand.u32 %v255, 4294901760
        %v5270 = vsub.f32 %v255, %v5269
        %v5271 = vand.u32 %v5270, 4294901760
        %v5272 = vsub.f32 %v5270, %v5271
        %v5273 = vand.u32 %v5272, 4294901760
        %5274 = vmatmul.mubr.f32.gmra.mrb[0].mxu0 %v5273
        %v5275 = vpop.f32.mrb[0].mxu0
        %v5276 = vadd.f32 %v4939, %v5275
        %v5277 = vpop.f32.mrb[0].mxu0
        %v5278 = vadd.f32 %v4941, %v5277
        %v5279 = vand.u32 %v264, 4294901760
        %v5280 = vsub.f32 %v264, %v5279
        %v5281 = vand.u32 %v5280, 4294901760
        %v5282 = vsub.f32 %v5280, %v5281
        %v5283 = vand.u32 %v5282, 4294901760
        %5284 = vmatprep.mubr.f32.mxu0 %v5283
        %v5285 = vand.u32 %v263, 4294901760
        %v5286 = vsub.f32 %v263, %v5285
        %v5287 = vand.u32 %v5286, 4294901760
        %v5288 = vsub.f32 %v5286, %v5287
        %v5289 = vand.u32 %v5288, 4294901760
        %5290 = vmatmul.mubr.f32.gmra.mrb[0].mxu0 %v5289
        %v5291 = vpop.f32.mrb[0].mxu0
        %v5292 = vadd.f32 %v4947, %v5291
        %v5293 = vpop.f32.mrb[0].mxu0
        %v5294 = vadd.f32 %v4949, %v5293
        %v5295 = vand.u32 %v272, 4294901760
        %v5296 = vsub.f32 %v272, %v5295
        %v5297 = vand.u32 %v5296, 4294901760
        %v5298 = vsub.f32 %v5296, %v5297
        %v5299 = vand.u32 %v5298, 4294901760
        %5300 = vmatprep.mubr.f32.mxu0 %v5299
        %v5301 = vand.u32 %v271, 4294901760
        %v5302 = vsub.f32 %v271, %v5301
        %v5303 = vand.u32 %v5302, 4294901760
        %v5304 = vsub.f32 %v5302, %v5303
        %v5305 = vand.u32 %v5304, 4294901760
        %5306 = vmatmul.mubr.f32.gmra.mrb[0].mxu0 %v5305
        %v5307 = vpop.f32.mrb[0].mxu0
        %v5308 = vadd.f32 %v4955, %v5307
        %v5309 = vpop.f32.mrb[0].mxu0
        %v5310 = vadd.f32 %v4957, %v5309
        %v5311 = vand.u32 %v280, 4294901760
        %v5312 = vsub.f32 %v280, %v5311
        %v5313 = vand.u32 %v5312, 4294901760
        %v5314 = vsub.f32 %v5312, %v5313
        %v5315 = vand.u32 %v5314, 4294901760
        %5316 = vmatprep.mubr.f32.mxu0 %v5315
        %v5317 = vand.u32 %v279, 4294901760
        %v5318 = vsub.f32 %v279, %v5317
        %v5319 = vand.u32 %v5318, 4294901760
        %v5320 = vsub.f32 %v5318, %v5319
        %v5321 = vand.u32 %v5320, 4294901760
        %5322 = vmatmul.mubr.f32.gmra.mrb[0].mxu0 %v5321
        %v5323 = vpop.f32.mrb[0].mxu0
        %v5324 = vadd.f32 %v4963, %v5323
        %v5325 = vpop.f32.mrb[0].mxu0
        %v5326 = vadd.f32 %v4965, %v5325
        %v5327 = vand.u32 %v288, 4294901760
        %v5328 = vsub.f32 %v288, %v5327
        %v5329 = vand.u32 %v5328, 4294901760
        %v5330 = vsub.f32 %v5328, %v5329
        %v5331 = vand.u32 %v5330, 4294901760
        %5332 = vmatprep.mubr.f32.mxu0 %v5331
        %v5333 = vand.u32 %v287, 4294901760
        %v5334 = vsub.f32 %v287, %v5333
        %v5335 = vand.u32 %v5334, 4294901760
        %v5336 = vsub.f32 %v5334, %v5335
        %v5337 = vand.u32 %v5336, 4294901760
        %5338 = vmatmul.mubr.f32.gmra.mrb[0].mxu0 %v5337
        %v5339 = vpop.f32.mrb[0].mxu0
        %v5340 = vadd.f32 %v4971, %v5339
        %v5341 = vpop.f32.mrb[0].mxu0
        %v5342 = vadd.f32 %v4973, %v5341
        %v5343 = vand.u32 %v296, 4294901760
        %v5344 = vsub.f32 %v296, %v5343
        %v5345 = vand.u32 %v5344, 4294901760
        %v5346 = vsub.f32 %v5344, %v5345
        %v5347 = vand.u32 %v5346, 4294901760
        %5348 = vmatprep.mubr.f32.mxu0 %v5347
        %v5349 = vand.u32 %v295, 4294901760
        %v5350 = vsub.f32 %v295, %v5349
        %v5351 = vand.u32 %v5350, 4294901760
        %v5352 = vsub.f32 %v5350, %v5351
        %v5353 = vand.u32 %v5352, 4294901760
        %5354 = vmatmul.mubr.f32.gmra.mrb[0].mxu0 %v5353
        %v5355 = vpop.f32.mrb[0].mxu0
        %v5356 = vadd.f32 %v4979, %v5355
        %v5357 = vpop.f32.mrb[0].mxu0
        %v5358 = vadd.f32 %v4981, %v5357
        %v5359 = vand.u32 %v304, 4294901760
        %v5360 = vsub.f32 %v304, %v5359
        %v5361 = vand.u32 %v5360, 4294901760
        %v5362 = vsub.f32 %v5360, %v5361
        %v5363 = vand.u32 %v5362, 4294901760
        %5364 = vmatprep.mubr.f32.mxu0 %v5363
        %v5365 = vand.u32 %v303, 4294901760
        %v5366 = vsub.f32 %v303, %v5365
        %v5367 = vand.u32 %v5366, 4294901760
        %v5368 = vsub.f32 %v5366, %v5367
        %v5369 = vand.u32 %v5368, 4294901760
        %5370 = vmatmul.mubr.f32.gmra.mrb[0].mxu0 %v5369
        %v5371 = vpop.f32.mrb[0].mxu0
        %v5372 = vadd.f32 %v4987, %v5371
        %v5373 = vpop.f32.mrb[0].mxu0
        %v5374 = vadd.f32 %v4989, %v5373
        %5375 = vdwg.mxu0
        %v5376 = vand.u32 %v436, 4294901760
        %v5377 = vsub.f32 %v436, %v5376
        %v5378 = vand.u32 %v5377, 4294901760
        %v5379 = vsub.f32 %v5377, %v5378
        %v5380 = vand.u32 %v5379, 4294901760
        %5381 = vmatprep.subr.mxu0 %v5380
        %v5382 = vand.u32 %v435, 4294901760
        %v5383 = vsub.f32 %v435, %v5382
        %v5384 = vand.u32 %v5383, 4294901760
        %v5385 = vsub.f32 %v5383, %v5384
        %v5386 = vand.u32 %v5385, 4294901760
        %5387 = vmatpush1.msra.mxu0 %v5386
        %v5388 = vand.u32 %v438, 4294901760
        %v5389 = vsub.f32 %v438, %v5388
        %v5390 = vand.u32 %v5389, 4294901760
        %v5391 = vsub.f32 %v5389, %v5390
        %v5392 = vand.u32 %v5391, 4294901760
        %5393 = vmatprep.subr.mxu0 %v5392
        %v5394 = vand.u32 %v437, 4294901760
        %v5395 = vsub.f32 %v437, %v5394
        %v5396 = vand.u32 %v5395, 4294901760
        %v5397 = vsub.f32 %v5395, %v5396
        %v5398 = vand.u32 %v5397, 4294901760
        %5399 = vmatpush1.msra.mxu0 %v5398
        %v5400 = vand.u32 %v440, 4294901760
        %v5401 = vsub.f32 %v440, %v5400
        %v5402 = vand.u32 %v5401, 4294901760
        %v5403 = vsub.f32 %v5401, %v5402
        %v5404 = vand.u32 %v5403, 4294901760
        %5405 = vmatprep.subr.mxu0 %v5404
        %v5406 = vand.u32 %v439, 4294901760
        %v5407 = vsub.f32 %v439, %v5406
        %v5408 = vand.u32 %v5407, 4294901760
        %v5409 = vsub.f32 %v5407, %v5408
        %v5410 = vand.u32 %v5409, 4294901760
        %5411 = vmatpush1.msra.mxu0 %v5410
        %v5412 = vand.u32 %v442, 4294901760
        %v5413 = vsub.f32 %v442, %v5412
        %v5414 = vand.u32 %v5413, 4294901760
        %v5415 = vsub.f32 %v5413, %v5414
        %v5416 = vand.u32 %v5415, 4294901760
        %5417 = vmatprep.subr.mxu0 %v5416
        %v5418 = vand.u32 %v441, 4294901760
        %v5419 = vsub.f32 %v441, %v5418
        %v5420 = vand.u32 %v5419, 4294901760
        %v5421 = vsub.f32 %v5419, %v5420
        %v5422 = vand.u32 %v5421, 4294901760
        %5423 = vmatpush1.msra.mxu0 %v5422
        %v5424 = vand.u32 %v444, 4294901760
        %v5425 = vsub.f32 %v444, %v5424
        %v5426 = vand.u32 %v5425, 4294901760
        %v5427 = vsub.f32 %v5425, %v5426
        %v5428 = vand.u32 %v5427, 4294901760
        %5429 = vmatprep.subr.mxu0 %v5428
        %v5430 = vand.u32 %v443, 4294901760
        %v5431 = vsub.f32 %v443, %v5430
        %v5432 = vand.u32 %v5431, 4294901760
        %v5433 = vsub.f32 %v5431, %v5432
        %v5434 = vand.u32 %v5433, 4294901760
        %5435 = vmatpush1.msra.mxu0 %v5434
        %v5436 = vand.u32 %v446, 4294901760
        %v5437 = vsub.f32 %v446, %v5436
        %v5438 = vand.u32 %v5437, 4294901760
        %v5439 = vsub.f32 %v5437, %v5438
        %v5440 = vand.u32 %v5439, 4294901760
        %5441 = vmatprep.subr.mxu0 %v5440
        %v5442 = vand.u32 %v445, 4294901760
        %v5443 = vsub.f32 %v445, %v5442
        %v5444 = vand.u32 %v5443, 4294901760
        %v5445 = vsub.f32 %v5443, %v5444
        %v5446 = vand.u32 %v5445, 4294901760
        %5447 = vmatpush1.msra.mxu0 %v5446
        %v5448 = vand.u32 %v448, 4294901760
        %v5449 = vsub.f32 %v448, %v5448
        %v5450 = vand.u32 %v5449, 4294901760
        %v5451 = vsub.f32 %v5449, %v5450
        %v5452 = vand.u32 %v5451, 4294901760
        %5453 = vmatprep.subr.mxu0 %v5452
        %v5454 = vand.u32 %v447, 4294901760
        %v5455 = vsub.f32 %v447, %v5454
        %v5456 = vand.u32 %v5455, 4294901760
        %v5457 = vsub.f32 %v5455, %v5456
        %v5458 = vand.u32 %v5457, 4294901760
        %5459 = vmatpush1.msra.mxu0 %v5458
        %v5460 = vand.u32 %v450, 4294901760
        %v5461 = vsub.f32 %v450, %v5460
        %v5462 = vand.u32 %v5461, 4294901760
        %v5463 = vsub.f32 %v5461, %v5462
        %v5464 = vand.u32 %v5463, 4294901760
        %5465 = vmatprep.subr.mxu0 %v5464
        %v5466 = vand.u32 %v449, 4294901760
        %v5467 = vsub.f32 %v449, %v5466
        %v5468 = vand.u32 %v5467, 4294901760
        %v5469 = vsub.f32 %v5467, %v5468
        %v5470 = vand.u32 %v5469, 4294901760
        %5471 = vmatpush1.msra.mxu0 %v5470
        %v5472 = vand.u32 %v452, 4294901760
        %v5473 = vsub.f32 %v452, %v5472
        %v5474 = vand.u32 %v5473, 4294901760
        %v5475 = vsub.f32 %v5473, %v5474
        %v5476 = vand.u32 %v5475, 4294901760
        %5477 = vmatprep.subr.mxu0 %v5476
        %v5478 = vand.u32 %v451, 4294901760
        %v5479 = vsub.f32 %v451, %v5478
        %v5480 = vand.u32 %v5479, 4294901760
        %v5481 = vsub.f32 %v5479, %v5480
        %v5482 = vand.u32 %v5481, 4294901760
        %5483 = vmatpush1.msra.mxu0 %v5482
        %v5484 = vand.u32 %v454, 4294901760
        %v5485 = vsub.f32 %v454, %v5484
        %v5486 = vand.u32 %v5485, 4294901760
        %v5487 = vsub.f32 %v5485, %v5486
        %v5488 = vand.u32 %v5487, 4294901760
        %5489 = vmatprep.subr.mxu0 %v5488
        %v5490 = vand.u32 %v453, 4294901760
        %v5491 = vsub.f32 %v453, %v5490
        %v5492 = vand.u32 %v5491, 4294901760
        %v5493 = vsub.f32 %v5491, %v5492
        %v5494 = vand.u32 %v5493, 4294901760
        %5495 = vmatpush1.msra.mxu0 %v5494
        %v5496 = vand.u32 %v456, 4294901760
        %v5497 = vsub.f32 %v456, %v5496
        %v5498 = vand.u32 %v5497, 4294901760
        %v5499 = vsub.f32 %v5497, %v5498
        %v5500 = vand.u32 %v5499, 4294901760
        %5501 = vmatprep.subr.mxu0 %v5500
        %v5502 = vand.u32 %v455, 4294901760
        %v5503 = vsub.f32 %v455, %v5502
        %v5504 = vand.u32 %v5503, 4294901760
        %v5505 = vsub.f32 %v5503, %v5504
        %v5506 = vand.u32 %v5505, 4294901760
        %5507 = vmatpush1.msra.mxu0 %v5506
        %v5508 = vand.u32 %v458, 4294901760
        %v5509 = vsub.f32 %v458, %v5508
        %v5510 = vand.u32 %v5509, 4294901760
        %v5511 = vsub.f32 %v5509, %v5510
        %v5512 = vand.u32 %v5511, 4294901760
        %5513 = vmatprep.subr.mxu0 %v5512
        %v5514 = vand.u32 %v457, 4294901760
        %v5515 = vsub.f32 %v457, %v5514
        %v5516 = vand.u32 %v5515, 4294901760
        %v5517 = vsub.f32 %v5515, %v5516
        %v5518 = vand.u32 %v5517, 4294901760
        %5519 = vmatpush1.msra.mxu0 %v5518
        %v5520 = vand.u32 %v460, 4294901760
        %v5521 = vsub.f32 %v460, %v5520
        %v5522 = vand.u32 %v5521, 4294901760
        %v5523 = vsub.f32 %v5521, %v5522
        %v5524 = vand.u32 %v5523, 4294901760
        %5525 = vmatprep.subr.mxu0 %v5524
        %v5526 = vand.u32 %v459, 4294901760
        %v5527 = vsub.f32 %v459, %v5526
        %v5528 = vand.u32 %v5527, 4294901760
        %v5529 = vsub.f32 %v5527, %v5528
        %v5530 = vand.u32 %v5529, 4294901760
        %5531 = vmatpush1.msra.mxu0 %v5530
        %v5532 = vand.u32 %v462, 4294901760
        %v5533 = vsub.f32 %v462, %v5532
        %v5534 = vand.u32 %v5533, 4294901760
        %v5535 = vsub.f32 %v5533, %v5534
        %v5536 = vand.u32 %v5535, 4294901760
        %5537 = vmatprep.subr.mxu0 %v5536
        %v5538 = vand.u32 %v461, 4294901760
        %v5539 = vsub.f32 %v461, %v5538
        %v5540 = vand.u32 %v5539, 4294901760
        %v5541 = vsub.f32 %v5539, %v5540
        %v5542 = vand.u32 %v5541, 4294901760
        %5543 = vmatpush1.msra.mxu0 %v5542
        %v5544 = vand.u32 %v464, 4294901760
        %v5545 = vsub.f32 %v464, %v5544
        %v5546 = vand.u32 %v5545, 4294901760
        %v5547 = vsub.f32 %v5545, %v5546
        %v5548 = vand.u32 %v5547, 4294901760
        %5549 = vmatprep.subr.mxu0 %v5548
        %v5550 = vand.u32 %v463, 4294901760
        %v5551 = vsub.f32 %v463, %v5550
        %v5552 = vand.u32 %v5551, 4294901760
        %v5553 = vsub.f32 %v5551, %v5552
        %v5554 = vand.u32 %v5553, 4294901760
        %5555 = vmatpush1.msra.mxu0 %v5554
        %v5556 = vand.u32 %v466, 4294901760
        %v5557 = vsub.f32 %v466, %v5556
        %v5558 = vand.u32 %v5557, 4294901760
        %v5559 = vsub.f32 %v5557, %v5558
        %v5560 = vand.u32 %v5559, 4294901760
        %5561 = vmatprep.subr.mxu0 %v5560
        %v5562 = vand.u32 %v465, 4294901760
        %v5563 = vsub.f32 %v465, %v5562
        %v5564 = vand.u32 %v5563, 4294901760
        %v5565 = vsub.f32 %v5563, %v5564
        %v5566 = vand.u32 %v5565, 4294901760
        %5567 = vmatpush1.msra.mxu0 %v5566
        %v5568 = vand.u32 %v468, 4294901760
        %v5569 = vsub.f32 %v468, %v5568
        %v5570 = vand.u32 %v5569, 4294901760
        %v5571 = vsub.f32 %v5569, %v5570
        %v5572 = vand.u32 %v5571, 4294901760
        %5573 = vmatprep.subr.mxu0 %v5572
        %v5574 = vand.u32 %v467, 4294901760
        %v5575 = vsub.f32 %v467, %v5574
        %v5576 = vand.u32 %v5575, 4294901760
        %v5577 = vsub.f32 %v5575, %v5576
        %v5578 = vand.u32 %v5577, 4294901760
        %5579 = vmatpush1.msra.mxu0 %v5578
        %v5580 = vand.u32 %v470, 4294901760
        %v5581 = vsub.f32 %v470, %v5580
        %v5582 = vand.u32 %v5581, 4294901760
        %v5583 = vsub.f32 %v5581, %v5582
        %v5584 = vand.u32 %v5583, 4294901760
        %5585 = vmatprep.subr.mxu0 %v5584
        %v5586 = vand.u32 %v469, 4294901760
        %v5587 = vsub.f32 %v469, %v5586
        %v5588 = vand.u32 %v5587, 4294901760
        %v5589 = vsub.f32 %v5587, %v5588
        %v5590 = vand.u32 %v5589, 4294901760
        %5591 = vmatpush1.msra.mxu0 %v5590
        %v5592 = vand.u32 %v472, 4294901760
        %v5593 = vsub.f32 %v472, %v5592
        %v5594 = vand.u32 %v5593, 4294901760
        %v5595 = vsub.f32 %v5593, %v5594
        %v5596 = vand.u32 %v5595, 4294901760
        %5597 = vmatprep.subr.mxu0 %v5596
        %v5598 = vand.u32 %v471, 4294901760
        %v5599 = vsub.f32 %v471, %v5598
        %v5600 = vand.u32 %v5599, 4294901760
        %v5601 = vsub.f32 %v5599, %v5600
        %v5602 = vand.u32 %v5601, 4294901760
        %5603 = vmatpush1.msra.mxu0 %v5602
        %v5604 = vand.u32 %v474, 4294901760
        %v5605 = vsub.f32 %v474, %v5604
        %v5606 = vand.u32 %v5605, 4294901760
        %v5607 = vsub.f32 %v5605, %v5606
        %v5608 = vand.u32 %v5607, 4294901760
        %5609 = vmatprep.subr.mxu0 %v5608
        %v5610 = vand.u32 %v473, 4294901760
        %v5611 = vsub.f32 %v473, %v5610
        %v5612 = vand.u32 %v5611, 4294901760
        %v5613 = vsub.f32 %v5611, %v5612
        %v5614 = vand.u32 %v5613, 4294901760
        %5615 = vmatpush1.msra.mxu0 %v5614
        %v5616 = vand.u32 %v476, 4294901760
        %v5617 = vsub.f32 %v476, %v5616
        %v5618 = vand.u32 %v5617, 4294901760
        %v5619 = vsub.f32 %v5617, %v5618
        %v5620 = vand.u32 %v5619, 4294901760
        %5621 = vmatprep.subr.mxu0 %v5620
        %v5622 = vand.u32 %v475, 4294901760
        %v5623 = vsub.f32 %v475, %v5622
        %v5624 = vand.u32 %v5623, 4294901760
        %v5625 = vsub.f32 %v5623, %v5624
        %v5626 = vand.u32 %v5625, 4294901760
        %5627 = vmatpush1.msra.mxu0 %v5626
        %v5628 = vand.u32 %v478, 4294901760
        %v5629 = vsub.f32 %v478, %v5628
        %v5630 = vand.u32 %v5629, 4294901760
        %v5631 = vsub.f32 %v5629, %v5630
        %v5632 = vand.u32 %v5631, 4294901760
        %5633 = vmatprep.subr.mxu0 %v5632
        %v5634 = vand.u32 %v477, 4294901760
        %v5635 = vsub.f32 %v477, %v5634
        %v5636 = vand.u32 %v5635, 4294901760
        %v5637 = vsub.f32 %v5635, %v5636
        %v5638 = vand.u32 %v5637, 4294901760
        %5639 = vmatpush1.msra.mxu0 %v5638
        %v5640 = vand.u32 %v480, 4294901760
        %v5641 = vsub.f32 %v480, %v5640
        %v5642 = vand.u32 %v5641, 4294901760
        %v5643 = vsub.f32 %v5641, %v5642
        %v5644 = vand.u32 %v5643, 4294901760
        %5645 = vmatprep.subr.mxu0 %v5644
        %v5646 = vand.u32 %v479, 4294901760
        %v5647 = vsub.f32 %v479, %v5646
        %v5648 = vand.u32 %v5647, 4294901760
        %v5649 = vsub.f32 %v5647, %v5648
        %v5650 = vand.u32 %v5649, 4294901760
        %5651 = vmatpush1.msra.mxu0 %v5650
        %v5652 = vand.u32 %v482, 4294901760
        %v5653 = vsub.f32 %v482, %v5652
        %v5654 = vand.u32 %v5653, 4294901760
        %v5655 = vsub.f32 %v5653, %v5654
        %v5656 = vand.u32 %v5655, 4294901760
        %5657 = vmatprep.subr.mxu0 %v5656
        %v5658 = vand.u32 %v481, 4294901760
        %v5659 = vsub.f32 %v481, %v5658
        %v5660 = vand.u32 %v5659, 4294901760
        %v5661 = vsub.f32 %v5659, %v5660
        %v5662 = vand.u32 %v5661, 4294901760
        %5663 = vmatpush1.msra.mxu0 %v5662
        %v5664 = vand.u32 %v484, 4294901760
        %v5665 = vsub.f32 %v484, %v5664
        %v5666 = vand.u32 %v5665, 4294901760
        %v5667 = vsub.f32 %v5665, %v5666
        %v5668 = vand.u32 %v5667, 4294901760
        %5669 = vmatprep.subr.mxu0 %v5668
        %v5670 = vand.u32 %v483, 4294901760
        %v5671 = vsub.f32 %v483, %v5670
        %v5672 = vand.u32 %v5671, 4294901760
        %v5673 = vsub.f32 %v5671, %v5672
        %v5674 = vand.u32 %v5673, 4294901760
        %5675 = vmatpush1.msra.mxu0 %v5674
        %v5676 = vand.u32 %v486, 4294901760
        %v5677 = vsub.f32 %v486, %v5676
        %v5678 = vand.u32 %v5677, 4294901760
        %v5679 = vsub.f32 %v5677, %v5678
        %v5680 = vand.u32 %v5679, 4294901760
        %5681 = vmatprep.subr.mxu0 %v5680
        %v5682 = vand.u32 %v485, 4294901760
        %v5683 = vsub.f32 %v485, %v5682
        %v5684 = vand.u32 %v5683, 4294901760
        %v5685 = vsub.f32 %v5683, %v5684
        %v5686 = vand.u32 %v5685, 4294901760
        %5687 = vmatpush1.msra.mxu0 %v5686
        %v5688 = vand.u32 %v488, 4294901760
        %v5689 = vsub.f32 %v488, %v5688
        %v5690 = vand.u32 %v5689, 4294901760
        %v5691 = vsub.f32 %v5689, %v5690
        %v5692 = vand.u32 %v5691, 4294901760
        %5693 = vmatprep.subr.mxu0 %v5692
        %v5694 = vand.u32 %v487, 4294901760
        %v5695 = vsub.f32 %v487, %v5694
        %v5696 = vand.u32 %v5695, 4294901760
        %v5697 = vsub.f32 %v5695, %v5696
        %v5698 = vand.u32 %v5697, 4294901760
        %5699 = vmatpush1.msra.mxu0 %v5698
        %v5700 = vand.u32 %v490, 4294901760
        %v5701 = vsub.f32 %v490, %v5700
        %v5702 = vand.u32 %v5701, 4294901760
        %v5703 = vsub.f32 %v5701, %v5702
        %v5704 = vand.u32 %v5703, 4294901760
        %5705 = vmatprep.subr.mxu0 %v5704
        %v5706 = vand.u32 %v489, 4294901760
        %v5707 = vsub.f32 %v489, %v5706
        %v5708 = vand.u32 %v5707, 4294901760
        %v5709 = vsub.f32 %v5707, %v5708
        %v5710 = vand.u32 %v5709, 4294901760
        %5711 = vmatpush1.msra.mxu0 %v5710
        %v5712 = vand.u32 %v492, 4294901760
        %v5713 = vsub.f32 %v492, %v5712
        %v5714 = vand.u32 %v5713, 4294901760
        %v5715 = vsub.f32 %v5713, %v5714
        %v5716 = vand.u32 %v5715, 4294901760
        %5717 = vmatprep.subr.mxu0 %v5716
        %v5718 = vand.u32 %v491, 4294901760
        %v5719 = vsub.f32 %v491, %v5718
        %v5720 = vand.u32 %v5719, 4294901760
        %v5721 = vsub.f32 %v5719, %v5720
        %v5722 = vand.u32 %v5721, 4294901760
        %5723 = vmatpush1.msra.mxu0 %v5722
        %v5724 = vand.u32 %v494, 4294901760
        %v5725 = vsub.f32 %v494, %v5724
        %v5726 = vand.u32 %v5725, 4294901760
        %v5727 = vsub.f32 %v5725, %v5726
        %v5728 = vand.u32 %v5727, 4294901760
        %5729 = vmatprep.subr.mxu0 %v5728
        %v5730 = vand.u32 %v493, 4294901760
        %v5731 = vsub.f32 %v493, %v5730
        %v5732 = vand.u32 %v5731, 4294901760
        %v5733 = vsub.f32 %v5731, %v5732
        %v5734 = vand.u32 %v5733, 4294901760
        %5735 = vmatpush1.msra.mxu0 %v5734
        %v5736 = vand.u32 %v496, 4294901760
        %v5737 = vsub.f32 %v496, %v5736
        %v5738 = vand.u32 %v5737, 4294901760
        %v5739 = vsub.f32 %v5737, %v5738
        %v5740 = vand.u32 %v5739, 4294901760
        %5741 = vmatprep.subr.mxu0 %v5740
        %v5742 = vand.u32 %v495, 4294901760
        %v5743 = vsub.f32 %v495, %v5742
        %v5744 = vand.u32 %v5743, 4294901760
        %v5745 = vsub.f32 %v5743, %v5744
        %v5746 = vand.u32 %v5745, 4294901760
        %5747 = vmatpush1.msra.mxu0 %v5746
        %v5748 = vand.u32 %v498, 4294901760
        %v5749 = vsub.f32 %v498, %v5748
        %v5750 = vand.u32 %v5749, 4294901760
        %v5751 = vsub.f32 %v5749, %v5750
        %v5752 = vand.u32 %v5751, 4294901760
        %5753 = vmatprep.subr.mxu0 %v5752
        %v5754 = vand.u32 %v497, 4294901760
        %v5755 = vsub.f32 %v497, %v5754
        %v5756 = vand.u32 %v5755, 4294901760
        %v5757 = vsub.f32 %v5755, %v5756
        %v5758 = vand.u32 %v5757, 4294901760
        %5759 = vmatpush1.msra.mxu0 %v5758
        %v5760 = vand.u32 %v184, 4294901760
        %5761 = vmatprep.mubr.f32.mxu0 %v5760
        %v5762 = vand.u32 %v183, 4294901760
        %5763 = vmatmul.mubr.f32.gmra.mrb[0].mxu0 %v5762
        %v5764 = vpop.f32.mrb[0].mxu0
        %v5765 = vadd.f32 %v5132, %v5764
        %v5766 = vpop.f32.mrb[0].mxu0
        %v5767 = vadd.f32 %v5134, %v5766
        %v5768 = vand.u32 %v192, 4294901760
        %5769 = vmatprep.mubr.f32.mxu0 %v5768
        %v5770 = vand.u32 %v191, 4294901760
        %5771 = vmatmul.mubr.f32.gmra.mrb[0].mxu0 %v5770
        %v5772 = vpop.f32.mrb[0].mxu0
        %v5773 = vadd.f32 %v5148, %v5772
        %v5774 = vpop.f32.mrb[0].mxu0
        %v5775 = vadd.f32 %v5150, %v5774
        %v5776 = vand.u32 %v200, 4294901760
        %5777 = vmatprep.mubr.f32.mxu0 %v5776
        %v5778 = vand.u32 %v199, 4294901760
        %5779 = vmatmul.mubr.f32.gmra.mrb[0].mxu0 %v5778
        %v5780 = vpop.f32.mrb[0].mxu0
        %v5781 = vadd.f32 %v5164, %v5780
        %v5782 = vpop.f32.mrb[0].mxu0
        %v5783 = vadd.f32 %v5166, %v5782
        %v5784 = vand.u32 %v208, 4294901760
        %5785 = vmatprep.mubr.f32.mxu0 %v5784
        %v5786 = vand.u32 %v207, 4294901760
        %5787 = vmatmul.mubr.f32.gmra.mrb[0].mxu0 %v5786
        %v5788 = vpop.f32.mrb[0].mxu0
        %v5789 = vadd.f32 %v5180, %v5788
        %v5790 = vpop.f32.mrb[0].mxu0
        %v5791 = vadd.f32 %v5182, %v5790
        %v5792 = vand.u32 %v216, 4294901760
        %5793 = vmatprep.mubr.f32.mxu0 %v5792
        %v5794 = vand.u32 %v215, 4294901760
        %5795 = vmatmul.mubr.f32.gmra.mrb[0].mxu0 %v5794
        %v5796 = vpop.f32.mrb[0].mxu0
        %v5797 = vadd.f32 %v5196, %v5796
        %v5798 = vpop.f32.mrb[0].mxu0
        %v5799 = vadd.f32 %v5198, %v5798
        %v5800 = vand.u32 %v224, 4294901760
        %5801 = vmatprep.mubr.f32.mxu0 %v5800
        %v5802 = vand.u32 %v223, 4294901760
        %5803 = vmatmul.mubr.f32.gmra.mrb[0].mxu0 %v5802
        %v5804 = vpop.f32.mrb[0].mxu0
        %v5805 = vadd.f32 %v5212, %v5804
        %v5806 = vpop.f32.mrb[0].mxu0
        %v5807 = vadd.f32 %v5214, %v5806
        %v5808 = vand.u32 %v232, 4294901760
        %5809 = vmatprep.mubr.f32.mxu0 %v5808
        %v5810 = vand.u32 %v231, 4294901760
        %5811 = vmatmul.mubr.f32.gmra.mrb[0].mxu0 %v5810
        %v5812 = vpop.f32.mrb[0].mxu0
        %v5813 = vadd.f32 %v5228, %v5812
        %v5814 = vpop.f32.mrb[0].mxu0
        %v5815 = vadd.f32 %v5230, %v5814
        %v5816 = vand.u32 %v240, 4294901760
        %5817 = vmatprep.mubr.f32.mxu0 %v5816
        %v5818 = vand.u32 %v239, 4294901760
        %5819 = vmatmul.mubr.f32.gmra.mrb[0].mxu0 %v5818
        %v5820 = vpop.f32.mrb[0].mxu0
        %v5821 = vadd.f32 %v5244, %v5820
        %v5822 = vpop.f32.mrb[0].mxu0
        %v5823 = vadd.f32 %v5246, %v5822
        %v5824 = vand.u32 %v248, 4294901760
        %5825 = vmatprep.mubr.f32.mxu0 %v5824
        %v5826 = vand.u32 %v247, 4294901760
        %5827 = vmatmul.mubr.f32.gmra.mrb[0].mxu0 %v5826
        %v5828 = vpop.f32.mrb[0].mxu0
        %v5829 = vadd.f32 %v5260, %v5828
        %v5830 = vpop.f32.mrb[0].mxu0
        %v5831 = vadd.f32 %v5262, %v5830
        %v5832 = vand.u32 %v256, 4294901760
        %5833 = vmatprep.mubr.f32.mxu0 %v5832
        %v5834 = vand.u32 %v255, 4294901760
        %5835 = vmatmul.mubr.f32.gmra.mrb[0].mxu0 %v5834
        %v5836 = vpop.f32.mrb[0].mxu0
        %v5837 = vadd.f32 %v5276, %v5836
        %v5838 = vpop.f32.mrb[0].mxu0
        %v5839 = vadd.f32 %v5278, %v5838
        %v5840 = vand.u32 %v264, 4294901760
        %5841 = vmatprep.mubr.f32.mxu0 %v5840
        %v5842 = vand.u32 %v263, 4294901760
        %5843 = vmatmul.mubr.f32.gmra.mrb[0].mxu0 %v5842
        %v5844 = vpop.f32.mrb[0].mxu0
        %v5845 = vadd.f32 %v5292, %v5844
        %v5846 = vpop.f32.mrb[0].mxu0
        %v5847 = vadd.f32 %v5294, %v5846
        %v5848 = vand.u32 %v272, 4294901760
        %5849 = vmatprep.mubr.f32.mxu0 %v5848
        %v5850 = vand.u32 %v271, 4294901760
        %5851 = vmatmul.mubr.f32.gmra.mrb[0].mxu0 %v5850
        %v5852 = vpop.f32.mrb[0].mxu0
        %v5853 = vadd.f32 %v5308, %v5852
        %v5854 = vpop.f32.mrb[0].mxu0
        %v5855 = vadd.f32 %v5310, %v5854
        %v5856 = vand.u32 %v280, 4294901760
        %5857 = vmatprep.mubr.f32.mxu0 %v5856
        %v5858 = vand.u32 %v279, 4294901760
        %5859 = vmatmul.mubr.f32.gmra.mrb[0].mxu0 %v5858
        %v5860 = vpop.f32.mrb[0].mxu0
        %v5861 = vadd.f32 %v5324, %v5860
        %v5862 = vpop.f32.mrb[0].mxu0
        %v5863 = vadd.f32 %v5326, %v5862
        %v5864 = vand.u32 %v288, 4294901760
        %5865 = vmatprep.mubr.f32.mxu0 %v5864
        %v5866 = vand.u32 %v287, 4294901760
        %5867 = vmatmul.mubr.f32.gmra.mrb[0].mxu0 %v5866
        %v5868 = vpop.f32.mrb[0].mxu0
        %v5869 = vadd.f32 %v5340, %v5868
        %v5870 = vpop.f32.mrb[0].mxu0
        %v5871 = vadd.f32 %v5342, %v5870
        %v5872 = vand.u32 %v296, 4294901760
        %5873 = vmatprep.mubr.f32.mxu0 %v5872
        %v5874 = vand.u32 %v295, 4294901760
        %5875 = vmatmul.mubr.f32.gmra.mrb[0].mxu0 %v5874
        %v5876 = vpop.f32.mrb[0].mxu0
        %v5877 = vadd.f32 %v5356, %v5876
        %v5878 = vpop.f32.mrb[0].mxu0
        %v5879 = vadd.f32 %v5358, %v5878
        %v5880 = vand.u32 %v304, 4294901760
        %5881 = vmatprep.mubr.f32.mxu0 %v5880
        %v5882 = vand.u32 %v303, 4294901760
        %5883 = vmatmul.mubr.f32.gmra.mrb[0].mxu0 %v5882
        %v5884 = vpop.f32.mrb[0].mxu0
        %v5885 = vadd.f32 %v5372, %v5884
        %v5886 = vpop.f32.mrb[0].mxu0
        %v5887 = vadd.f32 %v5374, %v5886
        %5888 = vdwg.mxu0
        %v5889 = vand.u32 %v436, 4294901760
        %v5890 = vsub.f32 %v436, %v5889
        %5891 = vmatprep.subr.mxu0 %v5890
        %v5892 = vand.u32 %v435, 4294901760
        %v5893 = vsub.f32 %v435, %v5892
        %5894 = vmatpush1.msra.mxu0 %v5893
        %v5895 = vand.u32 %v438, 4294901760
        %v5896 = vsub.f32 %v438, %v5895
        %5897 = vmatprep.subr.mxu0 %v5896
        %v5898 = vand.u32 %v437, 4294901760
        %v5899 = vsub.f32 %v437, %v5898
        %5900 = vmatpush1.msra.mxu0 %v5899
        %v5901 = vand.u32 %v440, 4294901760
        %v5902 = vsub.f32 %v440, %v5901
        %5903 = vmatprep.subr.mxu0 %v5902
        %v5904 = vand.u32 %v439, 4294901760
        %v5905 = vsub.f32 %v439, %v5904
        %5906 = vmatpush1.msra.mxu0 %v5905
        %v5907 = vand.u32 %v442, 4294901760
        %v5908 = vsub.f32 %v442, %v5907
        %5909 = vmatprep.subr.mxu0 %v5908
        %v5910 = vand.u32 %v441, 4294901760
        %v5911 = vsub.f32 %v441, %v5910
        %5912 = vmatpush1.msra.mxu0 %v5911
        %v5913 = vand.u32 %v444, 4294901760
        %v5914 = vsub.f32 %v444, %v5913
        %5915 = vmatprep.subr.mxu0 %v5914
        %v5916 = vand.u32 %v443, 4294901760
        %v5917 = vsub.f32 %v443, %v5916
        %5918 = vmatpush1.msra.mxu0 %v5917
        %v5919 = vand.u32 %v446, 4294901760
        %v5920 = vsub.f32 %v446, %v5919
        %5921 = vmatprep.subr.mxu0 %v5920
        %v5922 = vand.u32 %v445, 4294901760
        %v5923 = vsub.f32 %v445, %v5922
        %5924 = vmatpush1.msra.mxu0 %v5923
        %v5925 = vand.u32 %v448, 4294901760
        %v5926 = vsub.f32 %v448, %v5925
        %5927 = vmatprep.subr.mxu0 %v5926
        %v5928 = vand.u32 %v447, 4294901760
        %v5929 = vsub.f32 %v447, %v5928
        %5930 = vmatpush1.msra.mxu0 %v5929
        %v5931 = vand.u32 %v450, 4294901760
        %v5932 = vsub.f32 %v450, %v5931
        %5933 = vmatprep.subr.mxu0 %v5932
        %v5934 = vand.u32 %v449, 4294901760
        %v5935 = vsub.f32 %v449, %v5934
        %5936 = vmatpush1.msra.mxu0 %v5935
        %v5937 = vand.u32 %v452, 4294901760
        %v5938 = vsub.f32 %v452, %v5937
        %5939 = vmatprep.subr.mxu0 %v5938
        %v5940 = vand.u32 %v451, 4294901760
        %v5941 = vsub.f32 %v451, %v5940
        %5942 = vmatpush1.msra.mxu0 %v5941
        %v5943 = vand.u32 %v454, 4294901760
        %v5944 = vsub.f32 %v454, %v5943
        %5945 = vmatprep.subr.mxu0 %v5944
        %v5946 = vand.u32 %v453, 4294901760
        %v5947 = vsub.f32 %v453, %v5946
        %5948 = vmatpush1.msra.mxu0 %v5947
        %v5949 = vand.u32 %v456, 4294901760
        %v5950 = vsub.f32 %v456, %v5949
        %5951 = vmatprep.subr.mxu0 %v5950
        %v5952 = vand.u32 %v455, 4294901760
        %v5953 = vsub.f32 %v455, %v5952
        %5954 = vmatpush1.msra.mxu0 %v5953
        %v5955 = vand.u32 %v458, 4294901760
        %v5956 = vsub.f32 %v458, %v5955
        %5957 = vmatprep.subr.mxu0 %v5956
        %v5958 = vand.u32 %v457, 4294901760
        %v5959 = vsub.f32 %v457, %v5958
        %5960 = vmatpush1.msra.mxu0 %v5959
        %v5961 = vand.u32 %v460, 4294901760
        %v5962 = vsub.f32 %v460, %v5961
        %5963 = vmatprep.subr.mxu0 %v5962
        %v5964 = vand.u32 %v459, 4294901760
        %v5965 = vsub.f32 %v459, %v5964
        %5966 = vmatpush1.msra.mxu0 %v5965
        %v5967 = vand.u32 %v462, 4294901760
        %v5968 = vsub.f32 %v462, %v5967
        %5969 = vmatprep.subr.mxu0 %v5968
        %v5970 = vand.u32 %v461, 4294901760
        %v5971 = vsub.f32 %v461, %v5970
        %5972 = vmatpush1.msra.mxu0 %v5971
        %v5973 = vand.u32 %v464, 4294901760
        %v5974 = vsub.f32 %v464, %v5973
        %5975 = vmatprep.subr.mxu0 %v5974
        %v5976 = vand.u32 %v463, 4294901760
        %v5977 = vsub.f32 %v463, %v5976
        %5978 = vmatpush1.msra.mxu0 %v5977
        %v5979 = vand.u32 %v466, 4294901760
        %v5980 = vsub.f32 %v466, %v5979
        %5981 = vmatprep.subr.mxu0 %v5980
        %v5982 = vand.u32 %v465, 4294901760
        %v5983 = vsub.f32 %v465, %v5982
        %5984 = vmatpush1.msra.mxu0 %v5983
        %v5985 = vand.u32 %v468, 4294901760
        %v5986 = vsub.f32 %v468, %v5985
        %5987 = vmatprep.subr.mxu0 %v5986
        %v5988 = vand.u32 %v467, 4294901760
        %v5989 = vsub.f32 %v467, %v5988
        %5990 = vmatpush1.msra.mxu0 %v5989
        %v5991 = vand.u32 %v470, 4294901760
        %v5992 = vsub.f32 %v470, %v5991
        %5993 = vmatprep.subr.mxu0 %v5992
        %v5994 = vand.u32 %v469, 4294901760
        %v5995 = vsub.f32 %v469, %v5994
        %5996 = vmatpush1.msra.mxu0 %v5995
        %v5997 = vand.u32 %v472, 4294901760
        %v5998 = vsub.f32 %v472, %v5997
        %5999 = vmatprep.subr.mxu0 %v5998
        %v6000 = vand.u32 %v471, 4294901760
        %v6001 = vsub.f32 %v471, %v6000
        %6002 = vmatpush1.msra.mxu0 %v6001
        %v6003 = vand.u32 %v474, 4294901760
        %v6004 = vsub.f32 %v474, %v6003
        %6005 = vmatprep.subr.mxu0 %v6004
        %v6006 = vand.u32 %v473, 4294901760
        %v6007 = vsub.f32 %v473, %v6006
        %6008 = vmatpush1.msra.mxu0 %v6007
        %v6009 = vand.u32 %v476, 4294901760
        %v6010 = vsub.f32 %v476, %v6009
        %6011 = vmatprep.subr.mxu0 %v6010
        %v6012 = vand.u32 %v475, 4294901760
        %v6013 = vsub.f32 %v475, %v6012
        %6014 = vmatpush1.msra.mxu0 %v6013
        %v6015 = vand.u32 %v478, 4294901760
        %v6016 = vsub.f32 %v478, %v6015
        %6017 = vmatprep.subr.mxu0 %v6016
        %v6018 = vand.u32 %v477, 4294901760
        %v6019 = vsub.f32 %v477, %v6018
        %6020 = vmatpush1.msra.mxu0 %v6019
        %v6021 = vand.u32 %v480, 4294901760
        %v6022 = vsub.f32 %v480, %v6021
        %6023 = vmatprep.subr.mxu0 %v6022
        %v6024 = vand.u32 %v479, 4294901760
        %v6025 = vsub.f32 %v479, %v6024
        %6026 = vmatpush1.msra.mxu0 %v6025
        %v6027 = vand.u32 %v482, 4294901760
        %v6028 = vsub.f32 %v482, %v6027
        %6029 = vmatprep.subr.mxu0 %v6028
        %v6030 = vand.u32 %v481, 4294901760
        %v6031 = vsub.f32 %v481, %v6030
        %6032 = vmatpush1.msra.mxu0 %v6031
        %v6033 = vand.u32 %v484, 4294901760
        %v6034 = vsub.f32 %v484, %v6033
        %6035 = vmatprep.subr.mxu0 %v6034
        %v6036 = vand.u32 %v483, 4294901760
        %v6037 = vsub.f32 %v483, %v6036
        %6038 = vmatpush1.msra.mxu0 %v6037
        %v6039 = vand.u32 %v486, 4294901760
        %v6040 = vsub.f32 %v486, %v6039
        %6041 = vmatprep.subr.mxu0 %v6040
        %v6042 = vand.u32 %v485, 4294901760
        %v6043 = vsub.f32 %v485, %v6042
        %6044 = vmatpush1.msra.mxu0 %v6043
        %v6045 = vand.u32 %v488, 4294901760
        %v6046 = vsub.f32 %v488, %v6045
        %6047 = vmatprep.subr.mxu0 %v6046
        %v6048 = vand.u32 %v487, 4294901760
        %v6049 = vsub.f32 %v487, %v6048
        %6050 = vmatpush1.msra.mxu0 %v6049
        %v6051 = vand.u32 %v490, 4294901760
        %v6052 = vsub.f32 %v490, %v6051
        %6053 = vmatprep.subr.mxu0 %v6052
        %v6054 = vand.u32 %v489, 4294901760
        %v6055 = vsub.f32 %v489, %v6054
        %6056 = vmatpush1.msra.mxu0 %v6055
        %v6057 = vand.u32 %v492, 4294901760
        %v6058 = vsub.f32 %v492, %v6057
        %6059 = vmatprep.subr.mxu0 %v6058
        %v6060 = vand.u32 %v491, 4294901760
        %v6061 = vsub.f32 %v491, %v6060
        %6062 = vmatpush1.msra.mxu0 %v6061
        %v6063 = vand.u32 %v494, 4294901760
        %v6064 = vsub.f32 %v494, %v6063
        %6065 = vmatprep.subr.mxu0 %v6064
        %v6066 = vand.u32 %v493, 4294901760
        %v6067 = vsub.f32 %v493, %v6066
        %6068 = vmatpush1.msra.mxu0 %v6067
        %v6069 = vand.u32 %v496, 4294901760
        %v6070 = vsub.f32 %v496, %v6069
        %6071 = vmatprep.subr.mxu0 %v6070
        %v6072 = vand.u32 %v495, 4294901760
        %v6073 = vsub.f32 %v495, %v6072
        %6074 = vmatpush1.msra.mxu0 %v6073
        %v6075 = vand.u32 %v498, 4294901760
        %v6076 = vsub.f32 %v498, %v6075
        %6077 = vmatprep.subr.mxu0 %v6076
        %v6078 = vand.u32 %v497, 4294901760
        %v6079 = vsub.f32 %v497, %v6078
        %6080 = vmatpush1.msra.mxu0 %v6079
        %v6081 = vand.u32 %v184, 4294901760
        %v6082 = vsub.f32 %v184, %v6081
        %6083 = vmatprep.mubr.f32.mxu0 %v6082
        %v6084 = vand.u32 %v183, 4294901760
        %v6085 = vsub.f32 %v183, %v6084
        %6086 = vmatmul.mubr.f32.gmra.mrb[0].mxu0 %v6085
        %v6087 = vpop.f32.mrb[0].mxu0
        %v6088 = vadd.f32 %v5765, %v6087
        %v6089 = vpop.f32.mrb[0].mxu0
        %v6090 = vadd.f32 %v5767, %v6089
        %v6091 = vand.u32 %v192, 4294901760
        %v6092 = vsub.f32 %v192, %v6091
        %6093 = vmatprep.mubr.f32.mxu0 %v6092
        %v6094 = vand.u32 %v191, 4294901760
        %v6095 = vsub.f32 %v191, %v6094
        %6096 = vmatmul.mubr.f32.gmra.mrb[0].mxu0 %v6095
        %v6097 = vpop.f32.mrb[0].mxu0
        %v6098 = vadd.f32 %v5773, %v6097
        %v6099 = vpop.f32.mrb[0].mxu0
        %v6100 = vadd.f32 %v5775, %v6099
        %v6101 = vand.u32 %v200, 4294901760
        %v6102 = vsub.f32 %v200, %v6101
        %6103 = vmatprep.mubr.f32.mxu0 %v6102
        %v6104 = vand.u32 %v199, 4294901760
        %v6105 = vsub.f32 %v199, %v6104
        %6106 = vmatmul.mubr.f32.gmra.mrb[0].mxu0 %v6105
        %v6107 = vpop.f32.mrb[0].mxu0
        %v6108 = vadd.f32 %v5781, %v6107
        %v6109 = vpop.f32.mrb[0].mxu0
        %v6110 = vadd.f32 %v5783, %v6109
        %v6111 = vand.u32 %v208, 4294901760
        %v6112 = vsub.f32 %v208, %v6111
        %6113 = vmatprep.mubr.f32.mxu0 %v6112
        %v6114 = vand.u32 %v207, 4294901760
        %v6115 = vsub.f32 %v207, %v6114
        %6116 = vmatmul.mubr.f32.gmra.mrb[0].mxu0 %v6115
        %v6117 = vpop.f32.mrb[0].mxu0
        %v6118 = vadd.f32 %v5789, %v6117
        %v6119 = vpop.f32.mrb[0].mxu0
        %v6120 = vadd.f32 %v5791, %v6119
        %v6121 = vand.u32 %v216, 4294901760
        %v6122 = vsub.f32 %v216, %v6121
        %6123 = vmatprep.mubr.f32.mxu0 %v6122
        %v6124 = vand.u32 %v215, 4294901760
        %v6125 = vsub.f32 %v215, %v6124
        %6126 = vmatmul.mubr.f32.gmra.mrb[0].mxu0 %v6125
        %v6127 = vpop.f32.mrb[0].mxu0
        %v6128 = vadd.f32 %v5797, %v6127
        %v6129 = vpop.f32.mrb[0].mxu0
        %v6130 = vadd.f32 %v5799, %v6129
        %v6131 = vand.u32 %v224, 4294901760
        %v6132 = vsub.f32 %v224, %v6131
        %6133 = vmatprep.mubr.f32.mxu0 %v6132
        %v6134 = vand.u32 %v223, 4294901760
        %v6135 = vsub.f32 %v223, %v6134
        %6136 = vmatmul.mubr.f32.gmra.mrb[0].mxu0 %v6135
        %v6137 = vpop.f32.mrb[0].mxu0
        %v6138 = vadd.f32 %v5805, %v6137
        %v6139 = vpop.f32.mrb[0].mxu0
        %v6140 = vadd.f32 %v5807, %v6139
        %v6141 = vand.u32 %v232, 4294901760
        %v6142 = vsub.f32 %v232, %v6141
        %6143 = vmatprep.mubr.f32.mxu0 %v6142
        %v6144 = vand.u32 %v231, 4294901760
        %v6145 = vsub.f32 %v231, %v6144
        %6146 = vmatmul.mubr.f32.gmra.mrb[0].mxu0 %v6145
        %v6147 = vpop.f32.mrb[0].mxu0
        %v6148 = vadd.f32 %v5813, %v6147
        %v6149 = vpop.f32.mrb[0].mxu0
        %v6150 = vadd.f32 %v5815, %v6149
        %v6151 = vand.u32 %v240, 4294901760
        %v6152 = vsub.f32 %v240, %v6151
        %6153 = vmatprep.mubr.f32.mxu0 %v6152
        %v6154 = vand.u32 %v239, 4294901760
        %v6155 = vsub.f32 %v239, %v6154
        %6156 = vmatmul.mubr.f32.gmra.mrb[0].mxu0 %v6155
        %v6157 = vpop.f32.mrb[0].mxu0
        %v6158 = vadd.f32 %v5821, %v6157
        %v6159 = vpop.f32.mrb[0].mxu0
        %v6160 = vadd.f32 %v5823, %v6159
        %v6161 = vand.u32 %v248, 4294901760
        %v6162 = vsub.f32 %v248, %v6161
        %6163 = vmatprep.mubr.f32.mxu0 %v6162
        %v6164 = vand.u32 %v247, 4294901760
        %v6165 = vsub.f32 %v247, %v6164
        %6166 = vmatmul.mubr.f32.gmra.mrb[0].mxu0 %v6165
        %v6167 = vpop.f32.mrb[0].mxu0
        %v6168 = vadd.f32 %v5829, %v6167
        %v6169 = vpop.f32.mrb[0].mxu0
        %v6170 = vadd.f32 %v5831, %v6169
        %v6171 = vand.u32 %v256, 4294901760
        %v6172 = vsub.f32 %v256, %v6171
        %6173 = vmatprep.mubr.f32.mxu0 %v6172
        %v6174 = vand.u32 %v255, 4294901760
        %v6175 = vsub.f32 %v255, %v6174
        %6176 = vmatmul.mubr.f32.gmra.mrb[0].mxu0 %v6175
        %v6177 = vpop.f32.mrb[0].mxu0
        %v6178 = vadd.f32 %v5837, %v6177
        %v6179 = vpop.f32.mrb[0].mxu0
        %v6180 = vadd.f32 %v5839, %v6179
        %v6181 = vand.u32 %v264, 4294901760
        %v6182 = vsub.f32 %v264, %v6181
        %6183 = vmatprep.mubr.f32.mxu0 %v6182
        %v6184 = vand.u32 %v263, 4294901760
        %v6185 = vsub.f32 %v263, %v6184
        %6186 = vmatmul.mubr.f32.gmra.mrb[0].mxu0 %v6185
        %v6187 = vpop.f32.mrb[0].mxu0
        %v6188 = vadd.f32 %v5845, %v6187
        %v6189 = vpop.f32.mrb[0].mxu0
        %v6190 = vadd.f32 %v5847, %v6189
        %v6191 = vand.u32 %v272, 4294901760
        %v6192 = vsub.f32 %v272, %v6191
        %6193 = vmatprep.mubr.f32.mxu0 %v6192
        %v6194 = vand.u32 %v271, 4294901760
        %v6195 = vsub.f32 %v271, %v6194
        %6196 = vmatmul.mubr.f32.gmra.mrb[0].mxu0 %v6195
        %v6197 = vpop.f32.mrb[0].mxu0
        %v6198 = vadd.f32 %v5853, %v6197
        %v6199 = vpop.f32.mrb[0].mxu0
        %v6200 = vadd.f32 %v5855, %v6199
        %v6201 = vand.u32 %v280, 4294901760
        %v6202 = vsub.f32 %v280, %v6201
        %6203 = vmatprep.mubr.f32.mxu0 %v6202
        %v6204 = vand.u32 %v279, 4294901760
        %v6205 = vsub.f32 %v279, %v6204
        %6206 = vmatmul.mubr.f32.gmra.mrb[0].mxu0 %v6205
        %v6207 = vpop.f32.mrb[0].mxu0
        %v6208 = vadd.f32 %v5861, %v6207
        %v6209 = vpop.f32.mrb[0].mxu0
        %v6210 = vadd.f32 %v5863, %v6209
        %v6211 = vand.u32 %v288, 4294901760
        %v6212 = vsub.f32 %v288, %v6211
        %6213 = vmatprep.mubr.f32.mxu0 %v6212
        %v6214 = vand.u32 %v287, 4294901760
        %v6215 = vsub.f32 %v287, %v6214
        %6216 = vmatmul.mubr.f32.gmra.mrb[0].mxu0 %v6215
        %v6217 = vpop.f32.mrb[0].mxu0
        %v6218 = vadd.f32 %v5869, %v6217
        %v6219 = vpop.f32.mrb[0].mxu0
        %v6220 = vadd.f32 %v5871, %v6219
        %v6221 = vand.u32 %v296, 4294901760
        %v6222 = vsub.f32 %v296, %v6221
        %6223 = vmatprep.mubr.f32.mxu0 %v6222
        %v6224 = vand.u32 %v295, 4294901760
        %v6225 = vsub.f32 %v295, %v6224
        %6226 = vmatmul.mubr.f32.gmra.mrb[0].mxu0 %v6225
        %v6227 = vpop.f32.mrb[0].mxu0
        %v6228 = vadd.f32 %v5877, %v6227
        %v6229 = vpop.f32.mrb[0].mxu0
        %v6230 = vadd.f32 %v5879, %v6229
        %v6231 = vand.u32 %v304, 4294901760
        %v6232 = vsub.f32 %v304, %v6231
        %6233 = vmatprep.mubr.f32.mxu0 %v6232
        %v6234 = vand.u32 %v303, 4294901760
        %v6235 = vsub.f32 %v303, %v6234
        %6236 = vmatmul.mubr.f32.gmra.mrb[0].mxu0 %v6235
        %v6237 = vpop.f32.mrb[0].mxu0
        %v6238 = vadd.f32 %v5885, %v6237
        %v6239 = vpop.f32.mrb[0].mxu0
        %v6240 = vadd.f32 %v5887, %v6239
        %6241 = vdwg.mxu0
        %v6242 = vand.u32 %v436, 4294901760
        %6243 = vmatprep.subr.mxu0 %v6242
        %v6244 = vand.u32 %v435, 4294901760
        %6245 = vmatpush1.msra.mxu0 %v6244
        %v6246 = vand.u32 %v438, 4294901760
        %6247 = vmatprep.subr.mxu0 %v6246
        %v6248 = vand.u32 %v437, 4294901760
        %6249 = vmatpush1.msra.mxu0 %v6248
        %v6250 = vand.u32 %v440, 4294901760
        %6251 = vmatprep.subr.mxu0 %v6250
        %v6252 = vand.u32 %v439, 4294901760
        %6253 = vmatpush1.msra.mxu0 %v6252
        %v6254 = vand.u32 %v442, 4294901760
        %6255 = vmatprep.subr.mxu0 %v6254
        %v6256 = vand.u32 %v441, 4294901760
        %6257 = vmatpush1.msra.mxu0 %v6256
        %v6258 = vand.u32 %v444, 4294901760
        %6259 = vmatprep.subr.mxu0 %v6258
        %v6260 = vand.u32 %v443, 4294901760
        %6261 = vmatpush1.msra.mxu0 %v6260
        %v6262 = vand.u32 %v446, 4294901760
        %6263 = vmatprep.subr.mxu0 %v6262
        %v6264 = vand.u32 %v445, 4294901760
        %6265 = vmatpush1.msra.mxu0 %v6264
        %v6266 = vand.u32 %v448, 4294901760
        %6267 = vmatprep.subr.mxu0 %v6266
        %v6268 = vand.u32 %v447, 4294901760
        %6269 = vmatpush1.msra.mxu0 %v6268
        %v6270 = vand.u32 %v450, 4294901760
        %6271 = vmatprep.subr.mxu0 %v6270
        %v6272 = vand.u32 %v449, 4294901760
        %6273 = vmatpush1.msra.mxu0 %v6272
        %v6274 = vand.u32 %v452, 4294901760
        %6275 = vmatprep.subr.mxu0 %v6274
        %v6276 = vand.u32 %v451, 4294901760
        %6277 = vmatpush1.msra.mxu0 %v6276
        %v6278 = vand.u32 %v454, 4294901760
        %6279 = vmatprep.subr.mxu0 %v6278
        %v6280 = vand.u32 %v453, 4294901760
        %6281 = vmatpush1.msra.mxu0 %v6280
        %v6282 = vand.u32 %v456, 4294901760
        %6283 = vmatprep.subr.mxu0 %v6282
        %v6284 = vand.u32 %v455, 4294901760
        %6285 = vmatpush1.msra.mxu0 %v6284
        %v6286 = vand.u32 %v458, 4294901760
        %6287 = vmatprep.subr.mxu0 %v6286
        %v6288 = vand.u32 %v457, 4294901760
        %6289 = vmatpush1.msra.mxu0 %v6288
        %v6290 = vand.u32 %v460, 4294901760
        %6291 = vmatprep.subr.mxu0 %v6290
        %v6292 = vand.u32 %v459, 4294901760
        %6293 = vmatpush1.msra.mxu0 %v6292
        %v6294 = vand.u32 %v462, 4294901760
        %6295 = vmatprep.subr.mxu0 %v6294
        %v6296 = vand.u32 %v461, 4294901760
        %6297 = vmatpush1.msra.mxu0 %v6296
        %v6298 = vand.u32 %v464, 4294901760
        %6299 = vmatprep.subr.mxu0 %v6298
        %v6300 = vand.u32 %v463, 4294901760
        %6301 = vmatpush1.msra.mxu0 %v6300
        %v6302 = vand.u32 %v466, 4294901760
        %6303 = vmatprep.subr.mxu0 %v6302
        %v6304 = vand.u32 %v465, 4294901760
        %6305 = vmatpush1.msra.mxu0 %v6304
        %v6306 = vand.u32 %v468, 4294901760
        %6307 = vmatprep.subr.mxu0 %v6306
        %v6308 = vand.u32 %v467, 4294901760
        %6309 = vmatpush1.msra.mxu0 %v6308
        %v6310 = vand.u32 %v470, 4294901760
        %6311 = vmatprep.subr.mxu0 %v6310
        %v6312 = vand.u32 %v469, 4294901760
        %6313 = vmatpush1.msra.mxu0 %v6312
        %v6314 = vand.u32 %v472, 4294901760
        %6315 = vmatprep.subr.mxu0 %v6314
        %v6316 = vand.u32 %v471, 4294901760
        %6317 = vmatpush1.msra.mxu0 %v6316
        %v6318 = vand.u32 %v474, 4294901760
        %6319 = vmatprep.subr.mxu0 %v6318
        %v6320 = vand.u32 %v473, 4294901760
        %6321 = vmatpush1.msra.mxu0 %v6320
        %v6322 = vand.u32 %v476, 4294901760
        %6323 = vmatprep.subr.mxu0 %v6322
        %v6324 = vand.u32 %v475, 4294901760
        %6325 = vmatpush1.msra.mxu0 %v6324
        %v6326 = vand.u32 %v478, 4294901760
        %6327 = vmatprep.subr.mxu0 %v6326
        %v6328 = vand.u32 %v477, 4294901760
        %6329 = vmatpush1.msra.mxu0 %v6328
        %v6330 = vand.u32 %v480, 4294901760
        %6331 = vmatprep.subr.mxu0 %v6330
        %v6332 = vand.u32 %v479, 4294901760
        %6333 = vmatpush1.msra.mxu0 %v6332
        %v6334 = vand.u32 %v482, 4294901760
        %6335 = vmatprep.subr.mxu0 %v6334
        %v6336 = vand.u32 %v481, 4294901760
        %6337 = vmatpush1.msra.mxu0 %v6336
        %v6338 = vand.u32 %v484, 4294901760
        %6339 = vmatprep.subr.mxu0 %v6338
        %v6340 = vand.u32 %v483, 4294901760
        %6341 = vmatpush1.msra.mxu0 %v6340
        %v6342 = vand.u32 %v486, 4294901760
        %6343 = vmatprep.subr.mxu0 %v6342
        %v6344 = vand.u32 %v485, 4294901760
        %6345 = vmatpush1.msra.mxu0 %v6344
        %v6346 = vand.u32 %v488, 4294901760
        %6347 = vmatprep.subr.mxu0 %v6346
        %v6348 = vand.u32 %v487, 4294901760
        %6349 = vmatpush1.msra.mxu0 %v6348
        %v6350 = vand.u32 %v490, 4294901760
        %6351 = vmatprep.subr.mxu0 %v6350
        %v6352 = vand.u32 %v489, 4294901760
        %6353 = vmatpush1.msra.mxu0 %v6352
        %v6354 = vand.u32 %v492, 4294901760
        %6355 = vmatprep.subr.mxu0 %v6354
        %v6356 = vand.u32 %v491, 4294901760
        %6357 = vmatpush1.msra.mxu0 %v6356
        %v6358 = vand.u32 %v494, 4294901760
        %6359 = vmatprep.subr.mxu0 %v6358
        %v6360 = vand.u32 %v493, 4294901760
        %6361 = vmatpush1.msra.mxu0 %v6360
        %v6362 = vand.u32 %v496, 4294901760
        %6363 = vmatprep.subr.mxu0 %v6362
        %v6364 = vand.u32 %v495, 4294901760
        %6365 = vmatpush1.msra.mxu0 %v6364
        %v6366 = vand.u32 %v498, 4294901760
        %6367 = vmatprep.subr.mxu0 %v6366
        %v6368 = vand.u32 %v497, 4294901760
        %6369 = vmatpush1.msra.mxu0 %v6368
        %v6370 = vand.u32 %v184, 4294901760
        %v6371 = vsub.f32 %v184, %v6370
        %v6372 = vand.u32 %v6371, 4294901760
        %6373 = vmatprep.mubr.f32.mxu0 %v6372
        %v6374 = vand.u32 %v183, 4294901760
        %v6375 = vsub.f32 %v183, %v6374
        %v6376 = vand.u32 %v6375, 4294901760
        %6377 = vmatmul.mubr.f32.gmra.mrb[0].mxu0 %v6376
        %v6378 = vpop.f32.mrb[0].mxu0
        %v6379 = vadd.f32 %v6088, %v6378
        %v6380 = vpop.f32.mrb[0].mxu0
        %v6381 = vadd.f32 %v6090, %v6380
        %v6382 = vand.u32 %v192, 4294901760
        %v6383 = vsub.f32 %v192, %v6382
        %v6384 = vand.u32 %v6383, 4294901760
        %6385 = vmatprep.mubr.f32.mxu0 %v6384
        %v6386 = vand.u32 %v191, 4294901760
        %v6387 = vsub.f32 %v191, %v6386
        %v6388 = vand.u32 %v6387, 4294901760
        %6389 = vmatmul.mubr.f32.gmra.mrb[0].mxu0 %v6388
        %v6390 = vpop.f32.mrb[0].mxu0
        %v6391 = vadd.f32 %v6098, %v6390
        %v6392 = vpop.f32.mrb[0].mxu0
        %v6393 = vadd.f32 %v6100, %v6392
        %v6394 = vand.u32 %v200, 4294901760
        %v6395 = vsub.f32 %v200, %v6394
        %v6396 = vand.u32 %v6395, 4294901760
        %6397 = vmatprep.mubr.f32.mxu0 %v6396
        %v6398 = vand.u32 %v199, 4294901760
        %v6399 = vsub.f32 %v199, %v6398
        %v6400 = vand.u32 %v6399, 4294901760
        %6401 = vmatmul.mubr.f32.gmra.mrb[0].mxu0 %v6400
        %v6402 = vpop.f32.mrb[0].mxu0
        %v6403 = vadd.f32 %v6108, %v6402
        %v6404 = vpop.f32.mrb[0].mxu0
        %v6405 = vadd.f32 %v6110, %v6404
        %v6406 = vand.u32 %v208, 4294901760
        %v6407 = vsub.f32 %v208, %v6406
        %v6408 = vand.u32 %v6407, 4294901760
        %6409 = vmatprep.mubr.f32.mxu0 %v6408
        %v6410 = vand.u32 %v207, 4294901760
        %v6411 = vsub.f32 %v207, %v6410
        %v6412 = vand.u32 %v6411, 4294901760
        %6413 = vmatmul.mubr.f32.gmra.mrb[0].mxu0 %v6412
        %v6414 = vpop.f32.mrb[0].mxu0
        %v6415 = vadd.f32 %v6118, %v6414
        %v6416 = vpop.f32.mrb[0].mxu0
        %v6417 = vadd.f32 %v6120, %v6416
        %v6418 = vand.u32 %v216, 4294901760
        %v6419 = vsub.f32 %v216, %v6418
        %v6420 = vand.u32 %v6419, 4294901760
        %6421 = vmatprep.mubr.f32.mxu0 %v6420
        %v6422 = vand.u32 %v215, 4294901760
        %v6423 = vsub.f32 %v215, %v6422
        %v6424 = vand.u32 %v6423, 4294901760
        %6425 = vmatmul.mubr.f32.gmra.mrb[0].mxu0 %v6424
        %v6426 = vpop.f32.mrb[0].mxu0
        %v6427 = vadd.f32 %v6128, %v6426
        %v6428 = vpop.f32.mrb[0].mxu0
        %v6429 = vadd.f32 %v6130, %v6428
        %v6430 = vand.u32 %v224, 4294901760
        %v6431 = vsub.f32 %v224, %v6430
        %v6432 = vand.u32 %v6431, 4294901760
        %6433 = vmatprep.mubr.f32.mxu0 %v6432
        %v6434 = vand.u32 %v223, 4294901760
        %v6435 = vsub.f32 %v223, %v6434
        %v6436 = vand.u32 %v6435, 4294901760
        %6437 = vmatmul.mubr.f32.gmra.mrb[0].mxu0 %v6436
        %v6438 = vpop.f32.mrb[0].mxu0
        %v6439 = vadd.f32 %v6138, %v6438
        %v6440 = vpop.f32.mrb[0].mxu0
        %v6441 = vadd.f32 %v6140, %v6440
        %v6442 = vand.u32 %v232, 4294901760
        %v6443 = vsub.f32 %v232, %v6442
        %v6444 = vand.u32 %v6443, 4294901760
        %6445 = vmatprep.mubr.f32.mxu0 %v6444
        %v6446 = vand.u32 %v231, 4294901760
        %v6447 = vsub.f32 %v231, %v6446
        %v6448 = vand.u32 %v6447, 4294901760
        %6449 = vmatmul.mubr.f32.gmra.mrb[0].mxu0 %v6448
        %v6450 = vpop.f32.mrb[0].mxu0
        %v6451 = vadd.f32 %v6148, %v6450
        %v6452 = vpop.f32.mrb[0].mxu0
        %v6453 = vadd.f32 %v6150, %v6452
        %v6454 = vand.u32 %v240, 4294901760
        %v6455 = vsub.f32 %v240, %v6454
        %v6456 = vand.u32 %v6455, 4294901760
        %6457 = vmatprep.mubr.f32.mxu0 %v6456
        %v6458 = vand.u32 %v239, 4294901760
        %v6459 = vsub.f32 %v239, %v6458
        %v6460 = vand.u32 %v6459, 4294901760
        %6461 = vmatmul.mubr.f32.gmra.mrb[0].mxu0 %v6460
        %v6462 = vpop.f32.mrb[0].mxu0
        %v6463 = vadd.f32 %v6158, %v6462
        %v6464 = vpop.f32.mrb[0].mxu0
        %v6465 = vadd.f32 %v6160, %v6464
        %v6466 = vand.u32 %v248, 4294901760
        %v6467 = vsub.f32 %v248, %v6466
        %v6468 = vand.u32 %v6467, 4294901760
        %6469 = vmatprep.mubr.f32.mxu0 %v6468
        %v6470 = vand.u32 %v247, 4294901760
        %v6471 = vsub.f32 %v247, %v6470
        %v6472 = vand.u32 %v6471, 4294901760
        %6473 = vmatmul.mubr.f32.gmra.mrb[0].mxu0 %v6472
        %v6474 = vpop.f32.mrb[0].mxu0
        %v6475 = vadd.f32 %v6168, %v6474
        %v6476 = vpop.f32.mrb[0].mxu0
        %v6477 = vadd.f32 %v6170, %v6476
        %v6478 = vand.u32 %v256, 4294901760
        %v6479 = vsub.f32 %v256, %v6478
        %v6480 = vand.u32 %v6479, 4294901760
        %6481 = vmatprep.mubr.f32.mxu0 %v6480
        %v6482 = vand.u32 %v255, 4294901760
        %v6483 = vsub.f32 %v255, %v6482
        %v6484 = vand.u32 %v6483, 4294901760
        %6485 = vmatmul.mubr.f32.gmra.mrb[0].mxu0 %v6484
        %v6486 = vpop.f32.mrb[0].mxu0
        %v6487 = vadd.f32 %v6178, %v6486
        %v6488 = vpop.f32.mrb[0].mxu0
        %v6489 = vadd.f32 %v6180, %v6488
        %v6490 = vand.u32 %v264, 4294901760
        %v6491 = vsub.f32 %v264, %v6490
        %v6492 = vand.u32 %v6491, 4294901760
        %6493 = vmatprep.mubr.f32.mxu0 %v6492
        %v6494 = vand.u32 %v263, 4294901760
        %v6495 = vsub.f32 %v263, %v6494
        %v6496 = vand.u32 %v6495, 4294901760
        %6497 = vmatmul.mubr.f32.gmra.mrb[0].mxu0 %v6496
        %v6498 = vpop.f32.mrb[0].mxu0
        %v6499 = vadd.f32 %v6188, %v6498
        %v6500 = vpop.f32.mrb[0].mxu0
        %v6501 = vadd.f32 %v6190, %v6500
        %v6502 = vand.u32 %v272, 4294901760
        %v6503 = vsub.f32 %v272, %v6502
        %v6504 = vand.u32 %v6503, 4294901760
        %6505 = vmatprep.mubr.f32.mxu0 %v6504
        %v6506 = vand.u32 %v271, 4294901760
        %v6507 = vsub.f32 %v271, %v6506
        %v6508 = vand.u32 %v6507, 4294901760
        %6509 = vmatmul.mubr.f32.gmra.mrb[0].mxu0 %v6508
        %v6510 = vpop.f32.mrb[0].mxu0
        %v6511 = vadd.f32 %v6198, %v6510
        %v6512 = vpop.f32.mrb[0].mxu0
        %v6513 = vadd.f32 %v6200, %v6512
        %v6514 = vand.u32 %v280, 4294901760
        %v6515 = vsub.f32 %v280, %v6514
        %v6516 = vand.u32 %v6515, 4294901760
        %6517 = vmatprep.mubr.f32.mxu0 %v6516
        %v6518 = vand.u32 %v279, 4294901760
        %v6519 = vsub.f32 %v279, %v6518
        %v6520 = vand.u32 %v6519, 4294901760
        %6521 = vmatmul.mubr.f32.gmra.mrb[0].mxu0 %v6520
        %v6522 = vpop.f32.mrb[0].mxu0
        %v6523 = vadd.f32 %v6208, %v6522
        %v6524 = vpop.f32.mrb[0].mxu0
        %v6525 = vadd.f32 %v6210, %v6524
        %v6526 = vand.u32 %v288, 4294901760
        %v6527 = vsub.f32 %v288, %v6526
        %v6528 = vand.u32 %v6527, 4294901760
        %6529 = vmatprep.mubr.f32.mxu0 %v6528
        %v6530 = vand.u32 %v287, 4294901760
        %v6531 = vsub.f32 %v287, %v6530
        %v6532 = vand.u32 %v6531, 4294901760
        %6533 = vmatmul.mubr.f32.gmra.mrb[0].mxu0 %v6532
        %v6534 = vpop.f32.mrb[0].mxu0
        %v6535 = vadd.f32 %v6218, %v6534
        %v6536 = vpop.f32.mrb[0].mxu0
        %v6537 = vadd.f32 %v6220, %v6536
        %v6538 = vand.u32 %v296, 4294901760
        %v6539 = vsub.f32 %v296, %v6538
        %v6540 = vand.u32 %v6539, 4294901760
        %6541 = vmatprep.mubr.f32.mxu0 %v6540
        %v6542 = vand.u32 %v295, 4294901760
        %v6543 = vsub.f32 %v295, %v6542
        %v6544 = vand.u32 %v6543, 4294901760
        %6545 = vmatmul.mubr.f32.gmra.mrb[0].mxu0 %v6544
        %v6546 = vpop.f32.mrb[0].mxu0
        %v6547 = vadd.f32 %v6228, %v6546
        %v6548 = vpop.f32.mrb[0].mxu0
        %v6549 = vadd.f32 %v6230, %v6548
        %v6550 = vand.u32 %v304, 4294901760
        %v6551 = vsub.f32 %v304, %v6550
        %v6552 = vand.u32 %v6551, 4294901760
        %6553 = vmatprep.mubr.f32.mxu0 %v6552
        %v6554 = vand.u32 %v303, 4294901760
        %v6555 = vsub.f32 %v303, %v6554
        %v6556 = vand.u32 %v6555, 4294901760
        %6557 = vmatmul.mubr.f32.gmra.mrb[0].mxu0 %v6556
        %v6558 = vpop.f32.mrb[0].mxu0
        %v6559 = vadd.f32 %v6238, %v6558
        %v6560 = vpop.f32.mrb[0].mxu0
        %v6561 = vadd.f32 %v6240, %v6560
        %6562 = vdwg.mxu0
        %v6563 = vand.u32 %v436, 4294901760
        %v6564 = vsub.f32 %v436, %v6563
        %v6565 = vand.u32 %v6564, 4294901760
        %6566 = vmatprep.subr.mxu0 %v6565
        %v6567 = vand.u32 %v435, 4294901760
        %v6568 = vsub.f32 %v435, %v6567
        %v6569 = vand.u32 %v6568, 4294901760
        %6570 = vmatpush1.msra.mxu0 %v6569
        %v6571 = vand.u32 %v438, 4294901760
        %v6572 = vsub.f32 %v438, %v6571
        %v6573 = vand.u32 %v6572, 4294901760
        %6574 = vmatprep.subr.mxu0 %v6573
        %v6575 = vand.u32 %v437, 4294901760
        %v6576 = vsub.f32 %v437, %v6575
        %v6577 = vand.u32 %v6576, 4294901760
        %6578 = vmatpush1.msra.mxu0 %v6577
        %v6579 = vand.u32 %v440, 4294901760
        %v6580 = vsub.f32 %v440, %v6579
        %v6581 = vand.u32 %v6580, 4294901760
        %6582 = vmatprep.subr.mxu0 %v6581
        %v6583 = vand.u32 %v439, 4294901760
        %v6584 = vsub.f32 %v439, %v6583
        %v6585 = vand.u32 %v6584, 4294901760
        %6586 = vmatpush1.msra.mxu0 %v6585
        %v6587 = vand.u32 %v442, 4294901760
        %v6588 = vsub.f32 %v442, %v6587
        %v6589 = vand.u32 %v6588, 4294901760
        %6590 = vmatprep.subr.mxu0 %v6589
        %v6591 = vand.u32 %v441, 4294901760
        %v6592 = vsub.f32 %v441, %v6591
        %v6593 = vand.u32 %v6592, 4294901760
        %6594 = vmatpush1.msra.mxu0 %v6593
        %v6595 = vand.u32 %v444, 4294901760
        %v6596 = vsub.f32 %v444, %v6595
        %v6597 = vand.u32 %v6596, 4294901760
        %6598 = vmatprep.subr.mxu0 %v6597
        %v6599 = vand.u32 %v443, 4294901760
        %v6600 = vsub.f32 %v443, %v6599
        %v6601 = vand.u32 %v6600, 4294901760
        %6602 = vmatpush1.msra.mxu0 %v6601
        %v6603 = vand.u32 %v446, 4294901760
        %v6604 = vsub.f32 %v446, %v6603
        %v6605 = vand.u32 %v6604, 4294901760
        %6606 = vmatprep.subr.mxu0 %v6605
        %v6607 = vand.u32 %v445, 4294901760
        %v6608 = vsub.f32 %v445, %v6607
        %v6609 = vand.u32 %v6608, 4294901760
        %6610 = vmatpush1.msra.mxu0 %v6609
        %v6611 = vand.u32 %v448, 4294901760
        %v6612 = vsub.f32 %v448, %v6611
        %v6613 = vand.u32 %v6612, 4294901760
        %6614 = vmatprep.subr.mxu0 %v6613
        %v6615 = vand.u32 %v447, 4294901760
        %v6616 = vsub.f32 %v447, %v6615
        %v6617 = vand.u32 %v6616, 4294901760
        %6618 = vmatpush1.msra.mxu0 %v6617
        %v6619 = vand.u32 %v450, 4294901760
        %v6620 = vsub.f32 %v450, %v6619
        %v6621 = vand.u32 %v6620, 4294901760
        %6622 = vmatprep.subr.mxu0 %v6621
        %v6623 = vand.u32 %v449, 4294901760
        %v6624 = vsub.f32 %v449, %v6623
        %v6625 = vand.u32 %v6624, 4294901760
        %6626 = vmatpush1.msra.mxu0 %v6625
        %v6627 = vand.u32 %v452, 4294901760
        %v6628 = vsub.f32 %v452, %v6627
        %v6629 = vand.u32 %v6628, 4294901760
        %6630 = vmatprep.subr.mxu0 %v6629
        %v6631 = vand.u32 %v451, 4294901760
        %v6632 = vsub.f32 %v451, %v6631
        %v6633 = vand.u32 %v6632, 4294901760
        %6634 = vmatpush1.msra.mxu0 %v6633
        %v6635 = vand.u32 %v454, 4294901760
        %v6636 = vsub.f32 %v454, %v6635
        %v6637 = vand.u32 %v6636, 4294901760
        %6638 = vmatprep.subr.mxu0 %v6637
        %v6639 = vand.u32 %v453, 4294901760
        %v6640 = vsub.f32 %v453, %v6639
        %v6641 = vand.u32 %v6640, 4294901760
        %6642 = vmatpush1.msra.mxu0 %v6641
        %v6643 = vand.u32 %v456, 4294901760
        %v6644 = vsub.f32 %v456, %v6643
        %v6645 = vand.u32 %v6644, 4294901760
        %6646 = vmatprep.subr.mxu0 %v6645
        %v6647 = vand.u32 %v455, 4294901760
        %v6648 = vsub.f32 %v455, %v6647
        %v6649 = vand.u32 %v6648, 4294901760
        %6650 = vmatpush1.msra.mxu0 %v6649
        %v6651 = vand.u32 %v458, 4294901760
        %v6652 = vsub.f32 %v458, %v6651
        %v6653 = vand.u32 %v6652, 4294901760
        %6654 = vmatprep.subr.mxu0 %v6653
        %v6655 = vand.u32 %v457, 4294901760
        %v6656 = vsub.f32 %v457, %v6655
        %v6657 = vand.u32 %v6656, 4294901760
        %6658 = vmatpush1.msra.mxu0 %v6657
        %v6659 = vand.u32 %v460, 4294901760
        %v6660 = vsub.f32 %v460, %v6659
        %v6661 = vand.u32 %v6660, 4294901760
        %6662 = vmatprep.subr.mxu0 %v6661
        %v6663 = vand.u32 %v459, 4294901760
        %v6664 = vsub.f32 %v459, %v6663
        %v6665 = vand.u32 %v6664, 4294901760
        %6666 = vmatpush1.msra.mxu0 %v6665
        %v6667 = vand.u32 %v462, 4294901760
        %v6668 = vsub.f32 %v462, %v6667
        %v6669 = vand.u32 %v6668, 4294901760
        %6670 = vmatprep.subr.mxu0 %v6669
        %v6671 = vand.u32 %v461, 4294901760
        %v6672 = vsub.f32 %v461, %v6671
        %v6673 = vand.u32 %v6672, 4294901760
        %6674 = vmatpush1.msra.mxu0 %v6673
        %v6675 = vand.u32 %v464, 4294901760
        %v6676 = vsub.f32 %v464, %v6675
        %v6677 = vand.u32 %v6676, 4294901760
        %6678 = vmatprep.subr.mxu0 %v6677
        %v6679 = vand.u32 %v463, 4294901760
        %v6680 = vsub.f32 %v463, %v6679
        %v6681 = vand.u32 %v6680, 4294901760
        %6682 = vmatpush1.msra.mxu0 %v6681
        %v6683 = vand.u32 %v466, 4294901760
        %v6684 = vsub.f32 %v466, %v6683
        %v6685 = vand.u32 %v6684, 4294901760
        %6686 = vmatprep.subr.mxu0 %v6685
        %v6687 = vand.u32 %v465, 4294901760
        %v6688 = vsub.f32 %v465, %v6687
        %v6689 = vand.u32 %v6688, 4294901760
        %6690 = vmatpush1.msra.mxu0 %v6689
        %v6691 = vand.u32 %v468, 4294901760
        %v6692 = vsub.f32 %v468, %v6691
        %v6693 = vand.u32 %v6692, 4294901760
        %6694 = vmatprep.subr.mxu0 %v6693
        %v6695 = vand.u32 %v467, 4294901760
        %v6696 = vsub.f32 %v467, %v6695
        %v6697 = vand.u32 %v6696, 4294901760
        %6698 = vmatpush1.msra.mxu0 %v6697
        %v6699 = vand.u32 %v470, 4294901760
        %v6700 = vsub.f32 %v470, %v6699
        %v6701 = vand.u32 %v6700, 4294901760
        %6702 = vmatprep.subr.mxu0 %v6701
        %v6703 = vand.u32 %v469, 4294901760
        %v6704 = vsub.f32 %v469, %v6703
        %v6705 = vand.u32 %v6704, 4294901760
        %6706 = vmatpush1.msra.mxu0 %v6705
        %v6707 = vand.u32 %v472, 4294901760
        %v6708 = vsub.f32 %v472, %v6707
        %v6709 = vand.u32 %v6708, 4294901760
        %6710 = vmatprep.subr.mxu0 %v6709
        %v6711 = vand.u32 %v471, 4294901760
        %v6712 = vsub.f32 %v471, %v6711
        %v6713 = vand.u32 %v6712, 4294901760
        %6714 = vmatpush1.msra.mxu0 %v6713
        %v6715 = vand.u32 %v474, 4294901760
        %v6716 = vsub.f32 %v474, %v6715
        %v6717 = vand.u32 %v6716, 4294901760
        %6718 = vmatprep.subr.mxu0 %v6717
        %v6719 = vand.u32 %v473, 4294901760
        %v6720 = vsub.f32 %v473, %v6719
        %v6721 = vand.u32 %v6720, 4294901760
        %6722 = vmatpush1.msra.mxu0 %v6721
        %v6723 = vand.u32 %v476, 4294901760
        %v6724 = vsub.f32 %v476, %v6723
        %v6725 = vand.u32 %v6724, 4294901760
        %6726 = vmatprep.subr.mxu0 %v6725
        %v6727 = vand.u32 %v475, 4294901760
        %v6728 = vsub.f32 %v475, %v6727
        %v6729 = vand.u32 %v6728, 4294901760
        %6730 = vmatpush1.msra.mxu0 %v6729
        %v6731 = vand.u32 %v478, 4294901760
        %v6732 = vsub.f32 %v478, %v6731
        %v6733 = vand.u32 %v6732, 4294901760
        %6734 = vmatprep.subr.mxu0 %v6733
        %v6735 = vand.u32 %v477, 4294901760
        %v6736 = vsub.f32 %v477, %v6735
        %v6737 = vand.u32 %v6736, 4294901760
        %6738 = vmatpush1.msra.mxu0 %v6737
        %v6739 = vand.u32 %v480, 4294901760
        %v6740 = vsub.f32 %v480, %v6739
        %v6741 = vand.u32 %v6740, 4294901760
        %6742 = vmatprep.subr.mxu0 %v6741
        %v6743 = vand.u32 %v479, 4294901760
        %v6744 = vsub.f32 %v479, %v6743
        %v6745 = vand.u32 %v6744, 4294901760
        %6746 = vmatpush1.msra.mxu0 %v6745
        %v6747 = vand.u32 %v482, 4294901760
        %v6748 = vsub.f32 %v482, %v6747
        %v6749 = vand.u32 %v6748, 4294901760
        %6750 = vmatprep.subr.mxu0 %v6749
        %v6751 = vand.u32 %v481, 4294901760
        %v6752 = vsub.f32 %v481, %v6751
        %v6753 = vand.u32 %v6752, 4294901760
        %6754 = vmatpush1.msra.mxu0 %v6753
        %v6755 = vand.u32 %v484, 4294901760
        %v6756 = vsub.f32 %v484, %v6755
        %v6757 = vand.u32 %v6756, 4294901760
        %6758 = vmatprep.subr.mxu0 %v6757
        %v6759 = vand.u32 %v483, 4294901760
        %v6760 = vsub.f32 %v483, %v6759
        %v6761 = vand.u32 %v6760, 4294901760
        %6762 = vmatpush1.msra.mxu0 %v6761
        %v6763 = vand.u32 %v486, 4294901760
        %v6764 = vsub.f32 %v486, %v6763
        %v6765 = vand.u32 %v6764, 4294901760
        %6766 = vmatprep.subr.mxu0 %v6765
        %v6767 = vand.u32 %v485, 4294901760
        %v6768 = vsub.f32 %v485, %v6767
        %v6769 = vand.u32 %v6768, 4294901760
        %6770 = vmatpush1.msra.mxu0 %v6769
        %v6771 = vand.u32 %v488, 4294901760
        %v6772 = vsub.f32 %v488, %v6771
        %v6773 = vand.u32 %v6772, 4294901760
        %6774 = vmatprep.subr.mxu0 %v6773
        %v6775 = vand.u32 %v487, 4294901760
        %v6776 = vsub.f32 %v487, %v6775
        %v6777 = vand.u32 %v6776, 4294901760
        %6778 = vmatpush1.msra.mxu0 %v6777
        %v6779 = vand.u32 %v490, 4294901760
        %v6780 = vsub.f32 %v490, %v6779
        %v6781 = vand.u32 %v6780, 4294901760
        %6782 = vmatprep.subr.mxu0 %v6781
        %v6783 = vand.u32 %v489, 4294901760
        %v6784 = vsub.f32 %v489, %v6783
        %v6785 = vand.u32 %v6784, 4294901760
        %6786 = vmatpush1.msra.mxu0 %v6785
        %v6787 = vand.u32 %v492, 4294901760
        %v6788 = vsub.f32 %v492, %v6787
        %v6789 = vand.u32 %v6788, 4294901760
        %6790 = vmatprep.subr.mxu0 %v6789
        %v6791 = vand.u32 %v491, 4294901760
        %v6792 = vsub.f32 %v491, %v6791
        %v6793 = vand.u32 %v6792, 4294901760
        %6794 = vmatpush1.msra.mxu0 %v6793
        %v6795 = vand.u32 %v494, 4294901760
        %v6796 = vsub.f32 %v494, %v6795
        %v6797 = vand.u32 %v6796, 4294901760
        %6798 = vmatprep.subr.mxu0 %v6797
        %v6799 = vand.u32 %v493, 4294901760
        %v6800 = vsub.f32 %v493, %v6799
        %v6801 = vand.u32 %v6800, 4294901760
        %6802 = vmatpush1.msra.mxu0 %v6801
        %v6803 = vand.u32 %v496, 4294901760
        %v6804 = vsub.f32 %v496, %v6803
        %v6805 = vand.u32 %v6804, 4294901760
        %6806 = vmatprep.subr.mxu0 %v6805
        %v6807 = vand.u32 %v495, 4294901760
        %v6808 = vsub.f32 %v495, %v6807
        %v6809 = vand.u32 %v6808, 4294901760
        %6810 = vmatpush1.msra.mxu0 %v6809
        %v6811 = vand.u32 %v498, 4294901760
        %v6812 = vsub.f32 %v498, %v6811
        %v6813 = vand.u32 %v6812, 4294901760
        %6814 = vmatprep.subr.mxu0 %v6813
        %v6815 = vand.u32 %v497, 4294901760
        %v6816 = vsub.f32 %v497, %v6815
        %v6817 = vand.u32 %v6816, 4294901760
        %6818 = vmatpush1.msra.mxu0 %v6817
        %v6819 = vand.u32 %v184, 4294901760
        %6820 = vmatprep.mubr.f32.mxu0 %v6819
        %v6821 = vand.u32 %v183, 4294901760
        %6822 = vmatmul.mubr.f32.gmra.mrb[0].mxu0 %v6821
        %v6823 = vpop.f32.mrb[0].mxu0
        %v6824 = vadd.f32 %v6379, %v6823
        %v6825 = vpop.f32.mrb[0].mxu0
        %v6826 = vadd.f32 %v6381, %v6825
        %v6827 = vand.u32 %v192, 4294901760
        %6828 = vmatprep.mubr.f32.mxu0 %v6827
        %v6829 = vand.u32 %v191, 4294901760
        %6830 = vmatmul.mubr.f32.gmra.mrb[0].mxu0 %v6829
        %v6831 = vpop.f32.mrb[0].mxu0
        %v6832 = vadd.f32 %v6391, %v6831
        %v6833 = vpop.f32.mrb[0].mxu0
        %v6834 = vadd.f32 %v6393, %v6833
        %v6835 = vand.u32 %v200, 4294901760
        %6836 = vmatprep.mubr.f32.mxu0 %v6835
        %v6837 = vand.u32 %v199, 4294901760
        %6838 = vmatmul.mubr.f32.gmra.mrb[0].mxu0 %v6837
        %v6839 = vpop.f32.mrb[0].mxu0
        %v6840 = vadd.f32 %v6403, %v6839
        %v6841 = vpop.f32.mrb[0].mxu0
        %v6842 = vadd.f32 %v6405, %v6841
        %v6843 = vand.u32 %v208, 4294901760
        %6844 = vmatprep.mubr.f32.mxu0 %v6843
        %v6845 = vand.u32 %v207, 4294901760
        %6846 = vmatmul.mubr.f32.gmra.mrb[0].mxu0 %v6845
        %v6847 = vpop.f32.mrb[0].mxu0
        %v6848 = vadd.f32 %v6415, %v6847
        %v6849 = vpop.f32.mrb[0].mxu0
        %v6850 = vadd.f32 %v6417, %v6849
        %v6851 = vand.u32 %v216, 4294901760
        %6852 = vmatprep.mubr.f32.mxu0 %v6851
        %v6853 = vand.u32 %v215, 4294901760
        %6854 = vmatmul.mubr.f32.gmra.mrb[0].mxu0 %v6853
        %v6855 = vpop.f32.mrb[0].mxu0
        %v6856 = vadd.f32 %v6427, %v6855
        %v6857 = vpop.f32.mrb[0].mxu0
        %v6858 = vadd.f32 %v6429, %v6857
        %v6859 = vand.u32 %v224, 4294901760
        %6860 = vmatprep.mubr.f32.mxu0 %v6859
        %v6861 = vand.u32 %v223, 4294901760
        %6862 = vmatmul.mubr.f32.gmra.mrb[0].mxu0 %v6861
        %v6863 = vpop.f32.mrb[0].mxu0
        %v6864 = vadd.f32 %v6439, %v6863
        %v6865 = vpop.f32.mrb[0].mxu0
        %v6866 = vadd.f32 %v6441, %v6865
        %v6867 = vand.u32 %v232, 4294901760
        %6868 = vmatprep.mubr.f32.mxu0 %v6867
        %v6869 = vand.u32 %v231, 4294901760
        %6870 = vmatmul.mubr.f32.gmra.mrb[0].mxu0 %v6869
        %v6871 = vpop.f32.mrb[0].mxu0
        %v6872 = vadd.f32 %v6451, %v6871
        %v6873 = vpop.f32.mrb[0].mxu0
        %v6874 = vadd.f32 %v6453, %v6873
        %v6875 = vand.u32 %v240, 4294901760
        %6876 = vmatprep.mubr.f32.mxu0 %v6875
        %v6877 = vand.u32 %v239, 4294901760
        %6878 = vmatmul.mubr.f32.gmra.mrb[0].mxu0 %v6877
        %v6879 = vpop.f32.mrb[0].mxu0
        %v6880 = vadd.f32 %v6463, %v6879
        %v6881 = vpop.f32.mrb[0].mxu0
        %v6882 = vadd.f32 %v6465, %v6881
        %v6883 = vand.u32 %v248, 4294901760
        %6884 = vmatprep.mubr.f32.mxu0 %v6883
        %v6885 = vand.u32 %v247, 4294901760
        %6886 = vmatmul.mubr.f32.gmra.mrb[0].mxu0 %v6885
        %v6887 = vpop.f32.mrb[0].mxu0
        %v6888 = vadd.f32 %v6475, %v6887
        %v6889 = vpop.f32.mrb[0].mxu0
        %v6890 = vadd.f32 %v6477, %v6889
        %v6891 = vand.u32 %v256, 4294901760
        %6892 = vmatprep.mubr.f32.mxu0 %v6891
        %v6893 = vand.u32 %v255, 4294901760
        %6894 = vmatmul.mubr.f32.gmra.mrb[0].mxu0 %v6893
        %v6895 = vpop.f32.mrb[0].mxu0
        %v6896 = vadd.f32 %v6487, %v6895
        %v6897 = vpop.f32.mrb[0].mxu0
        %v6898 = vadd.f32 %v6489, %v6897
        %v6899 = vand.u32 %v264, 4294901760
        %6900 = vmatprep.mubr.f32.mxu0 %v6899
        %v6901 = vand.u32 %v263, 4294901760
        %6902 = vmatmul.mubr.f32.gmra.mrb[0].mxu0 %v6901
        %v6903 = vpop.f32.mrb[0].mxu0
        %v6904 = vadd.f32 %v6499, %v6903
        %v6905 = vpop.f32.mrb[0].mxu0
        %v6906 = vadd.f32 %v6501, %v6905
        %v6907 = vand.u32 %v272, 4294901760
        %6908 = vmatprep.mubr.f32.mxu0 %v6907
        %v6909 = vand.u32 %v271, 4294901760
        %6910 = vmatmul.mubr.f32.gmra.mrb[0].mxu0 %v6909
        %v6911 = vpop.f32.mrb[0].mxu0
        %v6912 = vadd.f32 %v6511, %v6911
        %v6913 = vpop.f32.mrb[0].mxu0
        %v6914 = vadd.f32 %v6513, %v6913
        %v6915 = vand.u32 %v280, 4294901760
        %6916 = vmatprep.mubr.f32.mxu0 %v6915
        %v6917 = vand.u32 %v279, 4294901760
        %6918 = vmatmul.mubr.f32.gmra.mrb[0].mxu0 %v6917
        %v6919 = vpop.f32.mrb[0].mxu0
        %v6920 = vadd.f32 %v6523, %v6919
        %v6921 = vpop.f32.mrb[0].mxu0
        %v6922 = vadd.f32 %v6525, %v6921
        %v6923 = vand.u32 %v288, 4294901760
        %6924 = vmatprep.mubr.f32.mxu0 %v6923
        %v6925 = vand.u32 %v287, 4294901760
        %6926 = vmatmul.mubr.f32.gmra.mrb[0].mxu0 %v6925
        %v6927 = vpop.f32.mrb[0].mxu0
        %v6928 = vadd.f32 %v6535, %v6927
        %v6929 = vpop.f32.mrb[0].mxu0
        %v6930 = vadd.f32 %v6537, %v6929
        %v6931 = vand.u32 %v296, 4294901760
        %6932 = vmatprep.mubr.f32.mxu0 %v6931
        %v6933 = vand.u32 %v295, 4294901760
        %6934 = vmatmul.mubr.f32.gmra.mrb[0].mxu0 %v6933
        %v6935 = vpop.f32.mrb[0].mxu0
        %v6936 = vadd.f32 %v6547, %v6935
        %v6937 = vpop.f32.mrb[0].mxu0
        %v6938 = vadd.f32 %v6549, %v6937
        %v6939 = vand.u32 %v304, 4294901760
        %6940 = vmatprep.mubr.f32.mxu0 %v6939
        %v6941 = vand.u32 %v303, 4294901760
        %6942 = vmatmul.mubr.f32.gmra.mrb[0].mxu0 %v6941
        %v6943 = vpop.f32.mrb[0].mxu0
        %v6944 = vadd.f32 %v6559, %v6943
        %v6945 = vpop.f32.mrb[0].mxu0
        %v6946 = vadd.f32 %v6561, %v6945
        %6947 = vdwg.mxu0
        %v6948 = vand.u32 %v436, 4294901760
        %6949 = vmatprep.subr.mxu0 %v6948
        %v6950 = vand.u32 %v435, 4294901760
        %6951 = vmatpush1.msra.mxu0 %v6950
        %v6952 = vand.u32 %v438, 4294901760
        %6953 = vmatprep.subr.mxu0 %v6952
        %v6954 = vand.u32 %v437, 4294901760
        %6955 = vmatpush1.msra.mxu0 %v6954
        %v6956 = vand.u32 %v440, 4294901760
        %6957 = vmatprep.subr.mxu0 %v6956
        %v6958 = vand.u32 %v439, 4294901760
        %6959 = vmatpush1.msra.mxu0 %v6958
        %v6960 = vand.u32 %v442, 4294901760
        %6961 = vmatprep.subr.mxu0 %v6960
        %v6962 = vand.u32 %v441, 4294901760
        %6963 = vmatpush1.msra.mxu0 %v6962
        %v6964 = vand.u32 %v444, 4294901760
        %6965 = vmatprep.subr.mxu0 %v6964
        %v6966 = vand.u32 %v443, 4294901760
        %6967 = vmatpush1.msra.mxu0 %v6966
        %v6968 = vand.u32 %v446, 4294901760
        %6969 = vmatprep.subr.mxu0 %v6968
        %v6970 = vand.u32 %v445, 4294901760
        %6971 = vmatpush1.msra.mxu0 %v6970
        %v6972 = vand.u32 %v448, 4294901760
        %6973 = vmatprep.subr.mxu0 %v6972
        %v6974 = vand.u32 %v447, 4294901760
        %6975 = vmatpush1.msra.mxu0 %v6974
        %v6976 = vand.u32 %v450, 4294901760
        %6977 = vmatprep.subr.mxu0 %v6976
        %v6978 = vand.u32 %v449, 4294901760
        %6979 = vmatpush1.msra.mxu0 %v6978
        %v6980 = vand.u32 %v452, 4294901760
        %6981 = vmatprep.subr.mxu0 %v6980
        %v6982 = vand.u32 %v451, 4294901760
        %6983 = vmatpush1.msra.mxu0 %v6982
        %v6984 = vand.u32 %v454, 4294901760
        %6985 = vmatprep.subr.mxu0 %v6984
        %v6986 = vand.u32 %v453, 4294901760
        %6987 = vmatpush1.msra.mxu0 %v6986
        %v6988 = vand.u32 %v456, 4294901760
        %6989 = vmatprep.subr.mxu0 %v6988
        %v6990 = vand.u32 %v455, 4294901760
        %6991 = vmatpush1.msra.mxu0 %v6990
        %v6992 = vand.u32 %v458, 4294901760
        %6993 = vmatprep.subr.mxu0 %v6992
        %v6994 = vand.u32 %v457, 4294901760
        %6995 = vmatpush1.msra.mxu0 %v6994
        %v6996 = vand.u32 %v460, 4294901760
        %6997 = vmatprep.subr.mxu0 %v6996
        %v6998 = vand.u32 %v459, 4294901760
        %6999 = vmatpush1.msra.mxu0 %v6998
        %v7000 = vand.u32 %v462, 4294901760
        %7001 = vmatprep.subr.mxu0 %v7000
        %v7002 = vand.u32 %v461, 4294901760
        %7003 = vmatpush1.msra.mxu0 %v7002
        %v7004 = vand.u32 %v464, 4294901760
        %7005 = vmatprep.subr.mxu0 %v7004
        %v7006 = vand.u32 %v463, 4294901760
        %7007 = vmatpush1.msra.mxu0 %v7006
        %v7008 = vand.u32 %v466, 4294901760
        %7009 = vmatprep.subr.mxu0 %v7008
        %v7010 = vand.u32 %v465, 4294901760
        %7011 = vmatpush1.msra.mxu0 %v7010
        %v7012 = vand.u32 %v468, 4294901760
        %7013 = vmatprep.subr.mxu0 %v7012
        %v7014 = vand.u32 %v467, 4294901760
        %7015 = vmatpush1.msra.mxu0 %v7014
        %v7016 = vand.u32 %v470, 4294901760
        %7017 = vmatprep.subr.mxu0 %v7016
        %v7018 = vand.u32 %v469, 4294901760
        %7019 = vmatpush1.msra.mxu0 %v7018
        %v7020 = vand.u32 %v472, 4294901760
        %7021 = vmatprep.subr.mxu0 %v7020
        %v7022 = vand.u32 %v471, 4294901760
        %7023 = vmatpush1.msra.mxu0 %v7022
        %v7024 = vand.u32 %v474, 4294901760
        %7025 = vmatprep.subr.mxu0 %v7024
        %v7026 = vand.u32 %v473, 4294901760
        %7027 = vmatpush1.msra.mxu0 %v7026
        %v7028 = vand.u32 %v476, 4294901760
        %7029 = vmatprep.subr.mxu0 %v7028
        %v7030 = vand.u32 %v475, 4294901760
        %7031 = vmatpush1.msra.mxu0 %v7030
        %v7032 = vand.u32 %v478, 4294901760
        %7033 = vmatprep.subr.mxu0 %v7032
        %v7034 = vand.u32 %v477, 4294901760
        %7035 = vmatpush1.msra.mxu0 %v7034
        %v7036 = vand.u32 %v480, 4294901760
        %7037 = vmatprep.subr.mxu0 %v7036
        %v7038 = vand.u32 %v479, 4294901760
        %7039 = vmatpush1.msra.mxu0 %v7038
        %v7040 = vand.u32 %v482, 4294901760
        %7041 = vmatprep.subr.mxu0 %v7040
        %v7042 = vand.u32 %v481, 4294901760
        %7043 = vmatpush1.msra.mxu0 %v7042
        %v7044 = vand.u32 %v484, 4294901760
        %7045 = vmatprep.subr.mxu0 %v7044
        %v7046 = vand.u32 %v483, 4294901760
        %7047 = vmatpush1.msra.mxu0 %v7046
        %v7048 = vand.u32 %v486, 4294901760
        %7049 = vmatprep.subr.mxu0 %v7048
        %v7050 = vand.u32 %v485, 4294901760
        %7051 = vmatpush1.msra.mxu0 %v7050
        %v7052 = vand.u32 %v488, 4294901760
        %7053 = vmatprep.subr.mxu0 %v7052
        %v7054 = vand.u32 %v487, 4294901760
        %7055 = vmatpush1.msra.mxu0 %v7054
        %v7056 = vand.u32 %v490, 4294901760
        %7057 = vmatprep.subr.mxu0 %v7056
        %v7058 = vand.u32 %v489, 4294901760
        %7059 = vmatpush1.msra.mxu0 %v7058
        %v7060 = vand.u32 %v492, 4294901760
        %7061 = vmatprep.subr.mxu0 %v7060
        %v7062 = vand.u32 %v491, 4294901760
        %7063 = vmatpush1.msra.mxu0 %v7062
        %v7064 = vand.u32 %v494, 4294901760
        %7065 = vmatprep.subr.mxu0 %v7064
        %v7066 = vand.u32 %v493, 4294901760
        %7067 = vmatpush1.msra.mxu0 %v7066
        %v7068 = vand.u32 %v496, 4294901760
        %7069 = vmatprep.subr.mxu0 %v7068
        %v7070 = vand.u32 %v495, 4294901760
        %7071 = vmatpush1.msra.mxu0 %v7070
        %v7072 = vand.u32 %v498, 4294901760
        %7073 = vmatprep.subr.mxu0 %v7072
        %v7074 = vand.u32 %v497, 4294901760
        %7075 = vmatpush1.msra.mxu0 %v7074
        %v7076 = vand.u32 %v184, 4294901760
        %7077 = vmatprep.mubr.f32.mxu0 %v7076
        %v7078 = vand.u32 %v183, 4294901760
        %7079 = vmatmul.mubr.f32.gmra.mrb[0].mxu0 %v7078
        %v7080 = vpop.f32.mrb[0].mxu0
        %v7081 = vadd.f32 %v6824, %v7080
        %v7082 = vpop.f32.mrb[0].mxu0
        %v7083 = vadd.f32 %v6826, %v7082
        %v7084 = vand.u32 %v192, 4294901760
        %7085 = vmatprep.mubr.f32.mxu0 %v7084
        %v7086 = vand.u32 %v191, 4294901760
        %7087 = vmatmul.mubr.f32.gmra.mrb[0].mxu0 %v7086
        %v7088 = vpop.f32.mrb[0].mxu0
        %v7089 = vadd.f32 %v6832, %v7088
        %v7090 = vpop.f32.mrb[0].mxu0
        %v7091 = vadd.f32 %v6834, %v7090
        %v7092 = vand.u32 %v200, 4294901760
        %7093 = vmatprep.mubr.f32.mxu0 %v7092
        %v7094 = vand.u32 %v199, 4294901760
        %7095 = vmatmul.mubr.f32.gmra.mrb[0].mxu0 %v7094
        %v7096 = vpop.f32.mrb[0].mxu0
        %v7097 = vadd.f32 %v6840, %v7096
        %v7098 = vpop.f32.mrb[0].mxu0
        %v7099 = vadd.f32 %v6842, %v7098
        %v7100 = vand.u32 %v208, 4294901760
        %7101 = vmatprep.mubr.f32.mxu0 %v7100
        %v7102 = vand.u32 %v207, 4294901760
        %7103 = vmatmul.mubr.f32.gmra.mrb[0].mxu0 %v7102
        %v7104 = vpop.f32.mrb[0].mxu0
        %v7105 = vadd.f32 %v6848, %v7104
        %v7106 = vpop.f32.mrb[0].mxu0
        %v7107 = vadd.f32 %v6850, %v7106
        %v7108 = vand.u32 %v216, 4294901760
        %7109 = vmatprep.mubr.f32.mxu0 %v7108
        %v7110 = vand.u32 %v215, 4294901760
        %7111 = vmatmul.mubr.f32.gmra.mrb[0].mxu0 %v7110
        %v7112 = vpop.f32.mrb[0].mxu0
        %v7113 = vadd.f32 %v6856, %v7112
        %v7114 = vpop.f32.mrb[0].mxu0
        %v7115 = vadd.f32 %v6858, %v7114
        %v7116 = vand.u32 %v224, 4294901760
        %7117 = vmatprep.mubr.f32.mxu0 %v7116
        %v7118 = vand.u32 %v223, 4294901760
        %7119 = vmatmul.mubr.f32.gmra.mrb[0].mxu0 %v7118
        %v7120 = vpop.f32.mrb[0].mxu0
        %v7121 = vadd.f32 %v6864, %v7120
        %v7122 = vpop.f32.mrb[0].mxu0
        %v7123 = vadd.f32 %v6866, %v7122
        %v7124 = vand.u32 %v232, 4294901760
        %7125 = vmatprep.mubr.f32.mxu0 %v7124
        %v7126 = vand.u32 %v231, 4294901760
        %7127 = vmatmul.mubr.f32.gmra.mrb[0].mxu0 %v7126
        %v7128 = vpop.f32.mrb[0].mxu0
        %v7129 = vadd.f32 %v6872, %v7128
        %v7130 = vpop.f32.mrb[0].mxu0
        %v7131 = vadd.f32 %v6874, %v7130
        %v7132 = vand.u32 %v240, 4294901760
        %7133 = vmatprep.mubr.f32.mxu0 %v7132
        %v7134 = vand.u32 %v239, 4294901760
        %7135 = vmatmul.mubr.f32.gmra.mrb[0].mxu0 %v7134
        %v7136 = vpop.f32.mrb[0].mxu0
        %v7137 = vadd.f32 %v6880, %v7136
        %v7138 = vpop.f32.mrb[0].mxu0
        %v7139 = vadd.f32 %v6882, %v7138
        %v7140 = vand.u32 %v248, 4294901760
        %7141 = vmatprep.mubr.f32.mxu0 %v7140
        %v7142 = vand.u32 %v247, 4294901760
        %7143 = vmatmul.mubr.f32.gmra.mrb[0].mxu0 %v7142
        %v7144 = vpop.f32.mrb[0].mxu0
        %v7145 = vadd.f32 %v6888, %v7144
        %v7146 = vpop.f32.mrb[0].mxu0
        %v7147 = vadd.f32 %v6890, %v7146
        %v7148 = vand.u32 %v256, 4294901760
        %7149 = vmatprep.mubr.f32.mxu0 %v7148
        %v7150 = vand.u32 %v255, 4294901760
        %7151 = vmatmul.mubr.f32.gmra.mrb[0].mxu0 %v7150
        %v7152 = vpop.f32.mrb[0].mxu0
        %v7153 = vadd.f32 %v6896, %v7152
        %v7154 = vpop.f32.mrb[0].mxu0
        %v7155 = vadd.f32 %v6898, %v7154
        %v7156 = vand.u32 %v264, 4294901760
        %7157 = vmatprep.mubr.f32.mxu0 %v7156
        %v7158 = vand.u32 %v263, 4294901760
        %7159 = vmatmul.mubr.f32.gmra.mrb[0].mxu0 %v7158
        %v7160 = vpop.f32.mrb[0].mxu0
        %v7161 = vadd.f32 %v6904, %v7160
        %v7162 = vpop.f32.mrb[0].mxu0
        %v7163 = vadd.f32 %v6906, %v7162
        %v7164 = vand.u32 %v272, 4294901760
        %7165 = vmatprep.mubr.f32.mxu0 %v7164
        %v7166 = vand.u32 %v271, 4294901760
        %7167 = vmatmul.mubr.f32.gmra.mrb[0].mxu0 %v7166
        %v7168 = vpop.f32.mrb[0].mxu0
        %v7169 = vadd.f32 %v6912, %v7168
        %v7170 = vpop.f32.mrb[0].mxu0
        %v7171 = vadd.f32 %v6914, %v7170
        %v7172 = vand.u32 %v280, 4294901760
        %7173 = vmatprep.mubr.f32.mxu0 %v7172
        %v7174 = vand.u32 %v279, 4294901760
        %7175 = vmatmul.mubr.f32.gmra.mrb[0].mxu0 %v7174
        %v7176 = vpop.f32.mrb[0].mxu0
        %v7177 = vadd.f32 %v6920, %v7176
        %v7178 = vpop.f32.mrb[0].mxu0
        %v7179 = vadd.f32 %v6922, %v7178
        %v7180 = vand.u32 %v288, 4294901760
        %7181 = vmatprep.mubr.f32.mxu0 %v7180
        %v7182 = vand.u32 %v287, 4294901760
        %7183 = vmatmul.mubr.f32.gmra.mrb[0].mxu0 %v7182
        %v7184 = vpop.f32.mrb[0].mxu0
        %v7185 = vadd.f32 %v6928, %v7184
        %v7186 = vpop.f32.mrb[0].mxu0
        %v7187 = vadd.f32 %v6930, %v7186
        %v7188 = vand.u32 %v296, 4294901760
        %7189 = vmatprep.mubr.f32.mxu0 %v7188
        %v7190 = vand.u32 %v295, 4294901760
        %7191 = vmatmul.mubr.f32.gmra.mrb[0].mxu0 %v7190
        %v7192 = vpop.f32.mrb[0].mxu0
        %v7193 = vadd.f32 %v6936, %v7192
        %v7194 = vpop.f32.mrb[0].mxu0
        %v7195 = vadd.f32 %v6938, %v7194
        %v7196 = vand.u32 %v304, 4294901760
        %7197 = vmatprep.mubr.f32.mxu0 %v7196
        %v7198 = vand.u32 %v303, 4294901760
        %7199 = vmatmul.mubr.f32.gmra.mrb[0].mxu0 %v7198
        %v7200 = vpop.f32.mrb[0].mxu0
        %v7201 = vadd.f32 %v6944, %v7200
        %v7202 = vpop.f32.mrb[0].mxu0
        %v7203 = vadd.f32 %v6946, %v7202
        %7204 = vdwg.mxu0
        %v7205 = vand.u32 %v500, 4294901760
        %7206 = vmatprep.subr.mxu0 %v7205
        %v7207 = vand.u32 %v499, 4294901760
        %7208 = vmatpush1.msra.mxu0 %v7207
        %v7209 = vand.u32 %v502, 4294901760
        %7210 = vmatprep.subr.mxu0 %v7209
        %v7211 = vand.u32 %v501, 4294901760
        %7212 = vmatpush1.msra.mxu0 %v7211
        %v7213 = vand.u32 %v504, 4294901760
        %7214 = vmatprep.subr.mxu0 %v7213
        %v7215 = vand.u32 %v503, 4294901760
        %7216 = vmatpush1.msra.mxu0 %v7215
        %v7217 = vand.u32 %v506, 4294901760
        %7218 = vmatprep.subr.mxu0 %v7217
        %v7219 = vand.u32 %v505, 4294901760
        %7220 = vmatpush1.msra.mxu0 %v7219
        %v7221 = vand.u32 %v508, 4294901760
        %7222 = vmatprep.subr.mxu0 %v7221
        %v7223 = vand.u32 %v507, 4294901760
        %7224 = vmatpush1.msra.mxu0 %v7223
        %v7225 = vand.u32 %v510, 4294901760
        %7226 = vmatprep.subr.mxu0 %v7225
        %v7227 = vand.u32 %v509, 4294901760
        %7228 = vmatpush1.msra.mxu0 %v7227
        %v7229 = vand.u32 %v512, 4294901760
        %7230 = vmatprep.subr.mxu0 %v7229
        %v7231 = vand.u32 %v511, 4294901760
        %7232 = vmatpush1.msra.mxu0 %v7231
        %v7233 = vand.u32 %v514, 4294901760
        %7234 = vmatprep.subr.mxu0 %v7233
        %v7235 = vand.u32 %v513, 4294901760
        %7236 = vmatpush1.msra.mxu0 %v7235
        %v7237 = vand.u32 %v516, 4294901760
        %7238 = vmatprep.subr.mxu0 %v7237
        %v7239 = vand.u32 %v515, 4294901760
        %7240 = vmatpush1.msra.mxu0 %v7239
        %v7241 = vand.u32 %v518, 4294901760
        %7242 = vmatprep.subr.mxu0 %v7241
        %v7243 = vand.u32 %v517, 4294901760
        %7244 = vmatpush1.msra.mxu0 %v7243
        %v7245 = vand.u32 %v520, 4294901760
        %7246 = vmatprep.subr.mxu0 %v7245
        %v7247 = vand.u32 %v519, 4294901760
        %7248 = vmatpush1.msra.mxu0 %v7247
        %v7249 = vand.u32 %v522, 4294901760
        %7250 = vmatprep.subr.mxu0 %v7249
        %v7251 = vand.u32 %v521, 4294901760
        %7252 = vmatpush1.msra.mxu0 %v7251
        %v7253 = vand.u32 %v524, 4294901760
        %7254 = vmatprep.subr.mxu0 %v7253
        %v7255 = vand.u32 %v523, 4294901760
        %7256 = vmatpush1.msra.mxu0 %v7255
        %v7257 = vand.u32 %v526, 4294901760
        %7258 = vmatprep.subr.mxu0 %v7257
        %v7259 = vand.u32 %v525, 4294901760
        %7260 = vmatpush1.msra.mxu0 %v7259
        %v7261 = vand.u32 %v528, 4294901760
        %7262 = vmatprep.subr.mxu0 %v7261
        %v7263 = vand.u32 %v527, 4294901760
        %7264 = vmatpush1.msra.mxu0 %v7263
        %v7265 = vand.u32 %v530, 4294901760
        %7266 = vmatprep.subr.mxu0 %v7265
        %v7267 = vand.u32 %v529, 4294901760
        %7268 = vmatpush1.msra.mxu0 %v7267
        %v7269 = vand.u32 %v532, 4294901760
        %7270 = vmatprep.subr.mxu0 %v7269
        %v7271 = vand.u32 %v531, 4294901760
        %7272 = vmatpush1.msra.mxu0 %v7271
        %v7273 = vand.u32 %v534, 4294901760
        %7274 = vmatprep.subr.mxu0 %v7273
        %v7275 = vand.u32 %v533, 4294901760
        %7276 = vmatpush1.msra.mxu0 %v7275
        %v7277 = vand.u32 %v536, 4294901760
        %7278 = vmatprep.subr.mxu0 %v7277
        %v7279 = vand.u32 %v535, 4294901760
        %7280 = vmatpush1.msra.mxu0 %v7279
        %v7281 = vand.u32 %v538, 4294901760
        %7282 = vmatprep.subr.mxu0 %v7281
        %v7283 = vand.u32 %v537, 4294901760
        %7284 = vmatpush1.msra.mxu0 %v7283
        %v7285 = vand.u32 %v540, 4294901760
        %7286 = vmatprep.subr.mxu0 %v7285
        %v7287 = vand.u32 %v539, 4294901760
        %7288 = vmatpush1.msra.mxu0 %v7287
        %v7289 = vand.u32 %v542, 4294901760
        %7290 = vmatprep.subr.mxu0 %v7289
        %v7291 = vand.u32 %v541, 4294901760
        %7292 = vmatpush1.msra.mxu0 %v7291
        %v7293 = vand.u32 %v544, 4294901760
        %7294 = vmatprep.subr.mxu0 %v7293
        %v7295 = vand.u32 %v543, 4294901760
        %7296 = vmatpush1.msra.mxu0 %v7295
        %v7297 = vand.u32 %v546, 4294901760
        %7298 = vmatprep.subr.mxu0 %v7297
        %v7299 = vand.u32 %v545, 4294901760
        %7300 = vmatpush1.msra.mxu0 %v7299
        %v7301 = vand.u32 %v548, 4294901760
        %7302 = vmatprep.subr.mxu0 %v7301
        %v7303 = vand.u32 %v547, 4294901760
        %7304 = vmatpush1.msra.mxu0 %v7303
        %v7305 = vand.u32 %v550, 4294901760
        %7306 = vmatprep.subr.mxu0 %v7305
        %v7307 = vand.u32 %v549, 4294901760
        %7308 = vmatpush1.msra.mxu0 %v7307
        %v7309 = vand.u32 %v552, 4294901760
        %7310 = vmatprep.subr.mxu0 %v7309
        %v7311 = vand.u32 %v551, 4294901760
        %7312 = vmatpush1.msra.mxu0 %v7311
        %v7313 = vand.u32 %v554, 4294901760
        %7314 = vmatprep.subr.mxu0 %v7313
        %v7315 = vand.u32 %v553, 4294901760
        %7316 = vmatpush1.msra.mxu0 %v7315
        %v7317 = vand.u32 %v556, 4294901760
        %7318 = vmatprep.subr.mxu0 %v7317
        %v7319 = vand.u32 %v555, 4294901760
        %7320 = vmatpush1.msra.mxu0 %v7319
        %v7321 = vand.u32 %v558, 4294901760
        %7322 = vmatprep.subr.mxu0 %v7321
        %v7323 = vand.u32 %v557, 4294901760
        %7324 = vmatpush1.msra.mxu0 %v7323
        %v7325 = vand.u32 %v560, 4294901760
        %7326 = vmatprep.subr.mxu0 %v7325
        %v7327 = vand.u32 %v559, 4294901760
        %7328 = vmatpush1.msra.mxu0 %v7327
        %v7329 = vand.u32 %v562, 4294901760
        %7330 = vmatprep.subr.mxu0 %v7329
        %v7331 = vand.u32 %v561, 4294901760
        %7332 = vmatpush1.msra.mxu0 %v7331
        %v7333 = vand.u32 %v186, 4294901760
        %v7334 = vsub.f32 %v186, %v7333
        %v7335 = vand.u32 %v7334, 4294901760
        %v7336 = vsub.f32 %v7334, %v7335
        %v7337 = vand.u32 %v7336, 4294901760
        %7338 = vmatprep.mubr.f32.mxu0 %v7337
        %v7339 = vand.u32 %v185, 4294901760
        %v7340 = vsub.f32 %v185, %v7339
        %v7341 = vand.u32 %v7340, 4294901760
        %v7342 = vsub.f32 %v7340, %v7341
        %v7343 = vand.u32 %v7342, 4294901760
        %7344 = vmatmul.mubr.f32.gmra.mrb[0].mxu0 %v7343
        %v7345 = vpop.f32.mrb[0].mxu0
        %v7346 = vadd.f32 %v7081, %v7345
        %v7347 = vpop.f32.mrb[0].mxu0
        %v7348 = vadd.f32 %v7083, %v7347
        %v7349 = vand.u32 %v194, 4294901760
        %v7350 = vsub.f32 %v194, %v7349
        %v7351 = vand.u32 %v7350, 4294901760
        %v7352 = vsub.f32 %v7350, %v7351
        %v7353 = vand.u32 %v7352, 4294901760
        %7354 = vmatprep.mubr.f32.mxu0 %v7353
        %v7355 = vand.u32 %v193, 4294901760
        %v7356 = vsub.f32 %v193, %v7355
        %v7357 = vand.u32 %v7356, 4294901760
        %v7358 = vsub.f32 %v7356, %v7357
        %v7359 = vand.u32 %v7358, 4294901760
        %7360 = vmatmul.mubr.f32.gmra.mrb[0].mxu0 %v7359
        %v7361 = vpop.f32.mrb[0].mxu0
        %v7362 = vadd.f32 %v7089, %v7361
        %v7363 = vpop.f32.mrb[0].mxu0
        %v7364 = vadd.f32 %v7091, %v7363
        %v7365 = vand.u32 %v202, 4294901760
        %v7366 = vsub.f32 %v202, %v7365
        %v7367 = vand.u32 %v7366, 4294901760
        %v7368 = vsub.f32 %v7366, %v7367
        %v7369 = vand.u32 %v7368, 4294901760
        %7370 = vmatprep.mubr.f32.mxu0 %v7369
        %v7371 = vand.u32 %v201, 4294901760
        %v7372 = vsub.f32 %v201, %v7371
        %v7373 = vand.u32 %v7372, 4294901760
        %v7374 = vsub.f32 %v7372, %v7373
        %v7375 = vand.u32 %v7374, 4294901760
        %7376 = vmatmul.mubr.f32.gmra.mrb[0].mxu0 %v7375
        %v7377 = vpop.f32.mrb[0].mxu0
        %v7378 = vadd.f32 %v7097, %v7377
        %v7379 = vpop.f32.mrb[0].mxu0
        %v7380 = vadd.f32 %v7099, %v7379
        %v7381 = vand.u32 %v210, 4294901760
        %v7382 = vsub.f32 %v210, %v7381
        %v7383 = vand.u32 %v7382, 4294901760
        %v7384 = vsub.f32 %v7382, %v7383
        %v7385 = vand.u32 %v7384, 4294901760
        %7386 = vmatprep.mubr.f32.mxu0 %v7385
        %v7387 = vand.u32 %v209, 4294901760
        %v7388 = vsub.f32 %v209, %v7387
        %v7389 = vand.u32 %v7388, 4294901760
        %v7390 = vsub.f32 %v7388, %v7389
        %v7391 = vand.u32 %v7390, 4294901760
        %7392 = vmatmul.mubr.f32.gmra.mrb[0].mxu0 %v7391
        %v7393 = vpop.f32.mrb[0].mxu0
        %v7394 = vadd.f32 %v7105, %v7393
        %v7395 = vpop.f32.mrb[0].mxu0
        %v7396 = vadd.f32 %v7107, %v7395
        %v7397 = vand.u32 %v218, 4294901760
        %v7398 = vsub.f32 %v218, %v7397
        %v7399 = vand.u32 %v7398, 4294901760
        %v7400 = vsub.f32 %v7398, %v7399
        %v7401 = vand.u32 %v7400, 4294901760
        %7402 = vmatprep.mubr.f32.mxu0 %v7401
        %v7403 = vand.u32 %v217, 4294901760
        %v7404 = vsub.f32 %v217, %v7403
        %v7405 = vand.u32 %v7404, 4294901760
        %v7406 = vsub.f32 %v7404, %v7405
        %v7407 = vand.u32 %v7406, 4294901760
        %7408 = vmatmul.mubr.f32.gmra.mrb[0].mxu0 %v7407
        %v7409 = vpop.f32.mrb[0].mxu0
        %v7410 = vadd.f32 %v7113, %v7409
        %v7411 = vpop.f32.mrb[0].mxu0
        %v7412 = vadd.f32 %v7115, %v7411
        %v7413 = vand.u32 %v226, 4294901760
        %v7414 = vsub.f32 %v226, %v7413
        %v7415 = vand.u32 %v7414, 4294901760
        %v7416 = vsub.f32 %v7414, %v7415
        %v7417 = vand.u32 %v7416, 4294901760
        %7418 = vmatprep.mubr.f32.mxu0 %v7417
        %v7419 = vand.u32 %v225, 4294901760
        %v7420 = vsub.f32 %v225, %v7419
        %v7421 = vand.u32 %v7420, 4294901760
        %v7422 = vsub.f32 %v7420, %v7421
        %v7423 = vand.u32 %v7422, 4294901760
        %7424 = vmatmul.mubr.f32.gmra.mrb[0].mxu0 %v7423
        %v7425 = vpop.f32.mrb[0].mxu0
        %v7426 = vadd.f32 %v7121, %v7425
        %v7427 = vpop.f32.mrb[0].mxu0
        %v7428 = vadd.f32 %v7123, %v7427
        %v7429 = vand.u32 %v234, 4294901760
        %v7430 = vsub.f32 %v234, %v7429
        %v7431 = vand.u32 %v7430, 4294901760
        %v7432 = vsub.f32 %v7430, %v7431
        %v7433 = vand.u32 %v7432, 4294901760
        %7434 = vmatprep.mubr.f32.mxu0 %v7433
        %v7435 = vand.u32 %v233, 4294901760
        %v7436 = vsub.f32 %v233, %v7435
        %v7437 = vand.u32 %v7436, 4294901760
        %v7438 = vsub.f32 %v7436, %v7437
        %v7439 = vand.u32 %v7438, 4294901760
        %7440 = vmatmul.mubr.f32.gmra.mrb[0].mxu0 %v7439
        %v7441 = vpop.f32.mrb[0].mxu0
        %v7442 = vadd.f32 %v7129, %v7441
        %v7443 = vpop.f32.mrb[0].mxu0
        %v7444 = vadd.f32 %v7131, %v7443
        %v7445 = vand.u32 %v242, 4294901760
        %v7446 = vsub.f32 %v242, %v7445
        %v7447 = vand.u32 %v7446, 4294901760
        %v7448 = vsub.f32 %v7446, %v7447
        %v7449 = vand.u32 %v7448, 4294901760
        %7450 = vmatprep.mubr.f32.mxu0 %v7449
        %v7451 = vand.u32 %v241, 4294901760
        %v7452 = vsub.f32 %v241, %v7451
        %v7453 = vand.u32 %v7452, 4294901760
        %v7454 = vsub.f32 %v7452, %v7453
        %v7455 = vand.u32 %v7454, 4294901760
        %7456 = vmatmul.mubr.f32.gmra.mrb[0].mxu0 %v7455
        %v7457 = vpop.f32.mrb[0].mxu0
        %v7458 = vadd.f32 %v7137, %v7457
        %v7459 = vpop.f32.mrb[0].mxu0
        %v7460 = vadd.f32 %v7139, %v7459
        %v7461 = vand.u32 %v250, 4294901760
        %v7462 = vsub.f32 %v250, %v7461
        %v7463 = vand.u32 %v7462, 4294901760
        %v7464 = vsub.f32 %v7462, %v7463
        %v7465 = vand.u32 %v7464, 4294901760
        %7466 = vmatprep.mubr.f32.mxu0 %v7465
        %v7467 = vand.u32 %v249, 4294901760
        %v7468 = vsub.f32 %v249, %v7467
        %v7469 = vand.u32 %v7468, 4294901760
        %v7470 = vsub.f32 %v7468, %v7469
        %v7471 = vand.u32 %v7470, 4294901760
        %7472 = vmatmul.mubr.f32.gmra.mrb[0].mxu0 %v7471
        %v7473 = vpop.f32.mrb[0].mxu0
        %v7474 = vadd.f32 %v7145, %v7473
        %v7475 = vpop.f32.mrb[0].mxu0
        %v7476 = vadd.f32 %v7147, %v7475
        %v7477 = vand.u32 %v258, 4294901760
        %v7478 = vsub.f32 %v258, %v7477
        %v7479 = vand.u32 %v7478, 4294901760
        %v7480 = vsub.f32 %v7478, %v7479
        %v7481 = vand.u32 %v7480, 4294901760
        %7482 = vmatprep.mubr.f32.mxu0 %v7481
        %v7483 = vand.u32 %v257, 4294901760
        %v7484 = vsub.f32 %v257, %v7483
        %v7485 = vand.u32 %v7484, 4294901760
        %v7486 = vsub.f32 %v7484, %v7485
        %v7487 = vand.u32 %v7486, 4294901760
        %7488 = vmatmul.mubr.f32.gmra.mrb[0].mxu0 %v7487
        %v7489 = vpop.f32.mrb[0].mxu0
        %v7490 = vadd.f32 %v7153, %v7489
        %v7491 = vpop.f32.mrb[0].mxu0
        %v7492 = vadd.f32 %v7155, %v7491
        %v7493 = vand.u32 %v266, 4294901760
        %v7494 = vsub.f32 %v266, %v7493
        %v7495 = vand.u32 %v7494, 4294901760
        %v7496 = vsub.f32 %v7494, %v7495
        %v7497 = vand.u32 %v7496, 4294901760
        %7498 = vmatprep.mubr.f32.mxu0 %v7497
        %v7499 = vand.u32 %v265, 4294901760
        %v7500 = vsub.f32 %v265, %v7499
        %v7501 = vand.u32 %v7500, 4294901760
        %v7502 = vsub.f32 %v7500, %v7501
        %v7503 = vand.u32 %v7502, 4294901760
        %7504 = vmatmul.mubr.f32.gmra.mrb[0].mxu0 %v7503
        %v7505 = vpop.f32.mrb[0].mxu0
        %v7506 = vadd.f32 %v7161, %v7505
        %v7507 = vpop.f32.mrb[0].mxu0
        %v7508 = vadd.f32 %v7163, %v7507
        %v7509 = vand.u32 %v274, 4294901760
        %v7510 = vsub.f32 %v274, %v7509
        %v7511 = vand.u32 %v7510, 4294901760
        %v7512 = vsub.f32 %v7510, %v7511
        %v7513 = vand.u32 %v7512, 4294901760
        %7514 = vmatprep.mubr.f32.mxu0 %v7513
        %v7515 = vand.u32 %v273, 4294901760
        %v7516 = vsub.f32 %v273, %v7515
        %v7517 = vand.u32 %v7516, 4294901760
        %v7518 = vsub.f32 %v7516, %v7517
        %v7519 = vand.u32 %v7518, 4294901760
        %7520 = vmatmul.mubr.f32.gmra.mrb[0].mxu0 %v7519
        %v7521 = vpop.f32.mrb[0].mxu0
        %v7522 = vadd.f32 %v7169, %v7521
        %v7523 = vpop.f32.mrb[0].mxu0
        %v7524 = vadd.f32 %v7171, %v7523
        %v7525 = vand.u32 %v282, 4294901760
        %v7526 = vsub.f32 %v282, %v7525
        %v7527 = vand.u32 %v7526, 4294901760
        %v7528 = vsub.f32 %v7526, %v7527
        %v7529 = vand.u32 %v7528, 4294901760
        %7530 = vmatprep.mubr.f32.mxu0 %v7529
        %v7531 = vand.u32 %v281, 4294901760
        %v7532 = vsub.f32 %v281, %v7531
        %v7533 = vand.u32 %v7532, 4294901760
        %v7534 = vsub.f32 %v7532, %v7533
        %v7535 = vand.u32 %v7534, 4294901760
        %7536 = vmatmul.mubr.f32.gmra.mrb[0].mxu0 %v7535
        %v7537 = vpop.f32.mrb[0].mxu0
        %v7538 = vadd.f32 %v7177, %v7537
        %v7539 = vpop.f32.mrb[0].mxu0
        %v7540 = vadd.f32 %v7179, %v7539
        %v7541 = vand.u32 %v290, 4294901760
        %v7542 = vsub.f32 %v290, %v7541
        %v7543 = vand.u32 %v7542, 4294901760
        %v7544 = vsub.f32 %v7542, %v7543
        %v7545 = vand.u32 %v7544, 4294901760
        %7546 = vmatprep.mubr.f32.mxu0 %v7545
        %v7547 = vand.u32 %v289, 4294901760
        %v7548 = vsub.f32 %v289, %v7547
        %v7549 = vand.u32 %v7548, 4294901760
        %v7550 = vsub.f32 %v7548, %v7549
        %v7551 = vand.u32 %v7550, 4294901760
        %7552 = vmatmul.mubr.f32.gmra.mrb[0].mxu0 %v7551
        %v7553 = vpop.f32.mrb[0].mxu0
        %v7554 = vadd.f32 %v7185, %v7553
        %v7555 = vpop.f32.mrb[0].mxu0
        %v7556 = vadd.f32 %v7187, %v7555
        %v7557 = vand.u32 %v298, 4294901760
        %v7558 = vsub.f32 %v298, %v7557
        %v7559 = vand.u32 %v7558, 4294901760
        %v7560 = vsub.f32 %v7558, %v7559
        %v7561 = vand.u32 %v7560, 4294901760
        %7562 = vmatprep.mubr.f32.mxu0 %v7561
        %v7563 = vand.u32 %v297, 4294901760
        %v7564 = vsub.f32 %v297, %v7563
        %v7565 = vand.u32 %v7564, 4294901760
        %v7566 = vsub.f32 %v7564, %v7565
        %v7567 = vand.u32 %v7566, 4294901760
        %7568 = vmatmul.mubr.f32.gmra.mrb[0].mxu0 %v7567
        %v7569 = vpop.f32.mrb[0].mxu0
        %v7570 = vadd.f32 %v7193, %v7569
        %v7571 = vpop.f32.mrb[0].mxu0
        %v7572 = vadd.f32 %v7195, %v7571
        %v7573 = vand.u32 %v306, 4294901760
        %v7574 = vsub.f32 %v306, %v7573
        %v7575 = vand.u32 %v7574, 4294901760
        %v7576 = vsub.f32 %v7574, %v7575
        %v7577 = vand.u32 %v7576, 4294901760
        %7578 = vmatprep.mubr.f32.mxu0 %v7577
        %v7579 = vand.u32 %v305, 4294901760
        %v7580 = vsub.f32 %v305, %v7579
        %v7581 = vand.u32 %v7580, 4294901760
        %v7582 = vsub.f32 %v7580, %v7581
        %v7583 = vand.u32 %v7582, 4294901760
        %7584 = vmatmul.mubr.f32.gmra.mrb[0].mxu0 %v7583
        %v7585 = vpop.f32.mrb[0].mxu0
        %v7586 = vadd.f32 %v7201, %v7585
        %v7587 = vpop.f32.mrb[0].mxu0
        %v7588 = vadd.f32 %v7203, %v7587
        %7589 = vdwg.mxu0
        %v7590 = vand.u32 %v500, 4294901760
        %v7591 = vsub.f32 %v500, %v7590
        %v7592 = vand.u32 %v7591, 4294901760
        %v7593 = vsub.f32 %v7591, %v7592
        %v7594 = vand.u32 %v7593, 4294901760
        %7595 = vmatprep.subr.mxu0 %v7594
        %v7596 = vand.u32 %v499, 4294901760
        %v7597 = vsub.f32 %v499, %v7596
        %v7598 = vand.u32 %v7597, 4294901760
        %v7599 = vsub.f32 %v7597, %v7598
        %v7600 = vand.u32 %v7599, 4294901760
        %7601 = vmatpush1.msra.mxu0 %v7600
        %v7602 = vand.u32 %v502, 4294901760
        %v7603 = vsub.f32 %v502, %v7602
        %v7604 = vand.u32 %v7603, 4294901760
        %v7605 = vsub.f32 %v7603, %v7604
        %v7606 = vand.u32 %v7605, 4294901760
        %7607 = vmatprep.subr.mxu0 %v7606
        %v7608 = vand.u32 %v501, 4294901760
        %v7609 = vsub.f32 %v501, %v7608
        %v7610 = vand.u32 %v7609, 4294901760
        %v7611 = vsub.f32 %v7609, %v7610
        %v7612 = vand.u32 %v7611, 4294901760
        %7613 = vmatpush1.msra.mxu0 %v7612
        %v7614 = vand.u32 %v504, 4294901760
        %v7615 = vsub.f32 %v504, %v7614
        %v7616 = vand.u32 %v7615, 4294901760
        %v7617 = vsub.f32 %v7615, %v7616
        %v7618 = vand.u32 %v7617, 4294901760
        %7619 = vmatprep.subr.mxu0 %v7618
        %v7620 = vand.u32 %v503, 4294901760
        %v7621 = vsub.f32 %v503, %v7620
        %v7622 = vand.u32 %v7621, 4294901760
        %v7623 = vsub.f32 %v7621, %v7622
        %v7624 = vand.u32 %v7623, 4294901760
        %7625 = vmatpush1.msra.mxu0 %v7624
        %v7626 = vand.u32 %v506, 4294901760
        %v7627 = vsub.f32 %v506, %v7626
        %v7628 = vand.u32 %v7627, 4294901760
        %v7629 = vsub.f32 %v7627, %v7628
        %v7630 = vand.u32 %v7629, 4294901760
        %7631 = vmatprep.subr.mxu0 %v7630
        %v7632 = vand.u32 %v505, 4294901760
        %v7633 = vsub.f32 %v505, %v7632
        %v7634 = vand.u32 %v7633, 4294901760
        %v7635 = vsub.f32 %v7633, %v7634
        %v7636 = vand.u32 %v7635, 4294901760
        %7637 = vmatpush1.msra.mxu0 %v7636
        %v7638 = vand.u32 %v508, 4294901760
        %v7639 = vsub.f32 %v508, %v7638
        %v7640 = vand.u32 %v7639, 4294901760
        %v7641 = vsub.f32 %v7639, %v7640
        %v7642 = vand.u32 %v7641, 4294901760
        %7643 = vmatprep.subr.mxu0 %v7642
        %v7644 = vand.u32 %v507, 4294901760
        %v7645 = vsub.f32 %v507, %v7644
        %v7646 = vand.u32 %v7645, 4294901760
        %v7647 = vsub.f32 %v7645, %v7646
        %v7648 = vand.u32 %v7647, 4294901760
        %7649 = vmatpush1.msra.mxu0 %v7648
        %v7650 = vand.u32 %v510, 4294901760
        %v7651 = vsub.f32 %v510, %v7650
        %v7652 = vand.u32 %v7651, 4294901760
        %v7653 = vsub.f32 %v7651, %v7652
        %v7654 = vand.u32 %v7653, 4294901760
        %7655 = vmatprep.subr.mxu0 %v7654
        %v7656 = vand.u32 %v509, 4294901760
        %v7657 = vsub.f32 %v509, %v7656
        %v7658 = vand.u32 %v7657, 4294901760
        %v7659 = vsub.f32 %v7657, %v7658
        %v7660 = vand.u32 %v7659, 4294901760
        %7661 = vmatpush1.msra.mxu0 %v7660
        %v7662 = vand.u32 %v512, 4294901760
        %v7663 = vsub.f32 %v512, %v7662
        %v7664 = vand.u32 %v7663, 4294901760
        %v7665 = vsub.f32 %v7663, %v7664
        %v7666 = vand.u32 %v7665, 4294901760
        %7667 = vmatprep.subr.mxu0 %v7666
        %v7668 = vand.u32 %v511, 4294901760
        %v7669 = vsub.f32 %v511, %v7668
        %v7670 = vand.u32 %v7669, 4294901760
        %v7671 = vsub.f32 %v7669, %v7670
        %v7672 = vand.u32 %v7671, 4294901760
        %7673 = vmatpush1.msra.mxu0 %v7672
        %v7674 = vand.u32 %v514, 4294901760
        %v7675 = vsub.f32 %v514, %v7674
        %v7676 = vand.u32 %v7675, 4294901760
        %v7677 = vsub.f32 %v7675, %v7676
        %v7678 = vand.u32 %v7677, 4294901760
        %7679 = vmatprep.subr.mxu0 %v7678
        %v7680 = vand.u32 %v513, 4294901760
        %v7681 = vsub.f32 %v513, %v7680
        %v7682 = vand.u32 %v7681, 4294901760
        %v7683 = vsub.f32 %v7681, %v7682
        %v7684 = vand.u32 %v7683, 4294901760
        %7685 = vmatpush1.msra.mxu0 %v7684
        %v7686 = vand.u32 %v516, 4294901760
        %v7687 = vsub.f32 %v516, %v7686
        %v7688 = vand.u32 %v7687, 4294901760
        %v7689 = vsub.f32 %v7687, %v7688
        %v7690 = vand.u32 %v7689, 4294901760
        %7691 = vmatprep.subr.mxu0 %v7690
        %v7692 = vand.u32 %v515, 4294901760
        %v7693 = vsub.f32 %v515, %v7692
        %v7694 = vand.u32 %v7693, 4294901760
        %v7695 = vsub.f32 %v7693, %v7694
        %v7696 = vand.u32 %v7695, 4294901760
        %7697 = vmatpush1.msra.mxu0 %v7696
        %v7698 = vand.u32 %v518, 4294901760
        %v7699 = vsub.f32 %v518, %v7698
        %v7700 = vand.u32 %v7699, 4294901760
        %v7701 = vsub.f32 %v7699, %v7700
        %v7702 = vand.u32 %v7701, 4294901760
        %7703 = vmatprep.subr.mxu0 %v7702
        %v7704 = vand.u32 %v517, 4294901760
        %v7705 = vsub.f32 %v517, %v7704
        %v7706 = vand.u32 %v7705, 4294901760
        %v7707 = vsub.f32 %v7705, %v7706
        %v7708 = vand.u32 %v7707, 4294901760
        %7709 = vmatpush1.msra.mxu0 %v7708
        %v7710 = vand.u32 %v520, 4294901760
        %v7711 = vsub.f32 %v520, %v7710
        %v7712 = vand.u32 %v7711, 4294901760
        %v7713 = vsub.f32 %v7711, %v7712
        %v7714 = vand.u32 %v7713, 4294901760
        %7715 = vmatprep.subr.mxu0 %v7714
        %v7716 = vand.u32 %v519, 4294901760
        %v7717 = vsub.f32 %v519, %v7716
        %v7718 = vand.u32 %v7717, 4294901760
        %v7719 = vsub.f32 %v7717, %v7718
        %v7720 = vand.u32 %v7719, 4294901760
        %7721 = vmatpush1.msra.mxu0 %v7720
        %v7722 = vand.u32 %v522, 4294901760
        %v7723 = vsub.f32 %v522, %v7722
        %v7724 = vand.u32 %v7723, 4294901760
        %v7725 = vsub.f32 %v7723, %v7724
        %v7726 = vand.u32 %v7725, 4294901760
        %7727 = vmatprep.subr.mxu0 %v7726
        %v7728 = vand.u32 %v521, 4294901760
        %v7729 = vsub.f32 %v521, %v7728
        %v7730 = vand.u32 %v7729, 4294901760
        %v7731 = vsub.f32 %v7729, %v7730
        %v7732 = vand.u32 %v7731, 4294901760
        %7733 = vmatpush1.msra.mxu0 %v7732
        %v7734 = vand.u32 %v524, 4294901760
        %v7735 = vsub.f32 %v524, %v7734
        %v7736 = vand.u32 %v7735, 4294901760
        %v7737 = vsub.f32 %v7735, %v7736
        %v7738 = vand.u32 %v7737, 4294901760
        %7739 = vmatprep.subr.mxu0 %v7738
        %v7740 = vand.u32 %v523, 4294901760
        %v7741 = vsub.f32 %v523, %v7740
        %v7742 = vand.u32 %v7741, 4294901760
        %v7743 = vsub.f32 %v7741, %v7742
        %v7744 = vand.u32 %v7743, 4294901760
        %7745 = vmatpush1.msra.mxu0 %v7744
        %v7746 = vand.u32 %v526, 4294901760
        %v7747 = vsub.f32 %v526, %v7746
        %v7748 = vand.u32 %v7747, 4294901760
        %v7749 = vsub.f32 %v7747, %v7748
        %v7750 = vand.u32 %v7749, 4294901760
        %7751 = vmatprep.subr.mxu0 %v7750
        %v7752 = vand.u32 %v525, 4294901760
        %v7753 = vsub.f32 %v525, %v7752
        %v7754 = vand.u32 %v7753, 4294901760
        %v7755 = vsub.f32 %v7753, %v7754
        %v7756 = vand.u32 %v7755, 4294901760
        %7757 = vmatpush1.msra.mxu0 %v7756
        %v7758 = vand.u32 %v528, 4294901760
        %v7759 = vsub.f32 %v528, %v7758
        %v7760 = vand.u32 %v7759, 4294901760
        %v7761 = vsub.f32 %v7759, %v7760
        %v7762 = vand.u32 %v7761, 4294901760
        %7763 = vmatprep.subr.mxu0 %v7762
        %v7764 = vand.u32 %v527, 4294901760
        %v7765 = vsub.f32 %v527, %v7764
        %v7766 = vand.u32 %v7765, 4294901760
        %v7767 = vsub.f32 %v7765, %v7766
        %v7768 = vand.u32 %v7767, 4294901760
        %7769 = vmatpush1.msra.mxu0 %v7768
        %v7770 = vand.u32 %v530, 4294901760
        %v7771 = vsub.f32 %v530, %v7770
        %v7772 = vand.u32 %v7771, 4294901760
        %v7773 = vsub.f32 %v7771, %v7772
        %v7774 = vand.u32 %v7773, 4294901760
        %7775 = vmatprep.subr.mxu0 %v7774
        %v7776 = vand.u32 %v529, 4294901760
        %v7777 = vsub.f32 %v529, %v7776
        %v7778 = vand.u32 %v7777, 4294901760
        %v7779 = vsub.f32 %v7777, %v7778
        %v7780 = vand.u32 %v7779, 4294901760
        %7781 = vmatpush1.msra.mxu0 %v7780
        %v7782 = vand.u32 %v532, 4294901760
        %v7783 = vsub.f32 %v532, %v7782
        %v7784 = vand.u32 %v7783, 4294901760
        %v7785 = vsub.f32 %v7783, %v7784
        %v7786 = vand.u32 %v7785, 4294901760
        %7787 = vmatprep.subr.mxu0 %v7786
        %v7788 = vand.u32 %v531, 4294901760
        %v7789 = vsub.f32 %v531, %v7788
        %v7790 = vand.u32 %v7789, 4294901760
        %v7791 = vsub.f32 %v7789, %v7790
        %v7792 = vand.u32 %v7791, 4294901760
        %7793 = vmatpush1.msra.mxu0 %v7792
        %v7794 = vand.u32 %v534, 4294901760
        %v7795 = vsub.f32 %v534, %v7794
        %v7796 = vand.u32 %v7795, 4294901760
        %v7797 = vsub.f32 %v7795, %v7796
        %v7798 = vand.u32 %v7797, 4294901760
        %7799 = vmatprep.subr.mxu0 %v7798
        %v7800 = vand.u32 %v533, 4294901760
        %v7801 = vsub.f32 %v533, %v7800
        %v7802 = vand.u32 %v7801, 4294901760
        %v7803 = vsub.f32 %v7801, %v7802
        %v7804 = vand.u32 %v7803, 4294901760
        %7805 = vmatpush1.msra.mxu0 %v7804
        %v7806 = vand.u32 %v536, 4294901760
        %v7807 = vsub.f32 %v536, %v7806
        %v7808 = vand.u32 %v7807, 4294901760
        %v7809 = vsub.f32 %v7807, %v7808
        %v7810 = vand.u32 %v7809, 4294901760
        %7811 = vmatprep.subr.mxu0 %v7810
        %v7812 = vand.u32 %v535, 4294901760
        %v7813 = vsub.f32 %v535, %v7812
        %v7814 = vand.u32 %v7813, 4294901760
        %v7815 = vsub.f32 %v7813, %v7814
        %v7816 = vand.u32 %v7815, 4294901760
        %7817 = vmatpush1.msra.mxu0 %v7816
        %v7818 = vand.u32 %v538, 4294901760
        %v7819 = vsub.f32 %v538, %v7818
        %v7820 = vand.u32 %v7819, 4294901760
        %v7821 = vsub.f32 %v7819, %v7820
        %v7822 = vand.u32 %v7821, 4294901760
        %7823 = vmatprep.subr.mxu0 %v7822
        %v7824 = vand.u32 %v537, 4294901760
        %v7825 = vsub.f32 %v537, %v7824
        %v7826 = vand.u32 %v7825, 4294901760
        %v7827 = vsub.f32 %v7825, %v7826
        %v7828 = vand.u32 %v7827, 4294901760
        %7829 = vmatpush1.msra.mxu0 %v7828
        %v7830 = vand.u32 %v540, 4294901760
        %v7831 = vsub.f32 %v540, %v7830
        %v7832 = vand.u32 %v7831, 4294901760
        %v7833 = vsub.f32 %v7831, %v7832
        %v7834 = vand.u32 %v7833, 4294901760
        %7835 = vmatprep.subr.mxu0 %v7834
        %v7836 = vand.u32 %v539, 4294901760
        %v7837 = vsub.f32 %v539, %v7836
        %v7838 = vand.u32 %v7837, 4294901760
        %v7839 = vsub.f32 %v7837, %v7838
        %v7840 = vand.u32 %v7839, 4294901760
        %7841 = vmatpush1.msra.mxu0 %v7840
        %v7842 = vand.u32 %v542, 4294901760
        %v7843 = vsub.f32 %v542, %v7842
        %v7844 = vand.u32 %v7843, 4294901760
        %v7845 = vsub.f32 %v7843, %v7844
        %v7846 = vand.u32 %v7845, 4294901760
        %7847 = vmatprep.subr.mxu0 %v7846
        %v7848 = vand.u32 %v541, 4294901760
        %v7849 = vsub.f32 %v541, %v7848
        %v7850 = vand.u32 %v7849, 4294901760
        %v7851 = vsub.f32 %v7849, %v7850
        %v7852 = vand.u32 %v7851, 4294901760
        %7853 = vmatpush1.msra.mxu0 %v7852
        %v7854 = vand.u32 %v544, 4294901760
        %v7855 = vsub.f32 %v544, %v7854
        %v7856 = vand.u32 %v7855, 4294901760
        %v7857 = vsub.f32 %v7855, %v7856
        %v7858 = vand.u32 %v7857, 4294901760
        %7859 = vmatprep.subr.mxu0 %v7858
        %v7860 = vand.u32 %v543, 4294901760
        %v7861 = vsub.f32 %v543, %v7860
        %v7862 = vand.u32 %v7861, 4294901760
        %v7863 = vsub.f32 %v7861, %v7862
        %v7864 = vand.u32 %v7863, 4294901760
        %7865 = vmatpush1.msra.mxu0 %v7864
        %v7866 = vand.u32 %v546, 4294901760
        %v7867 = vsub.f32 %v546, %v7866
        %v7868 = vand.u32 %v7867, 4294901760
        %v7869 = vsub.f32 %v7867, %v7868
        %v7870 = vand.u32 %v7869, 4294901760
        %7871 = vmatprep.subr.mxu0 %v7870
        %v7872 = vand.u32 %v545, 4294901760
        %v7873 = vsub.f32 %v545, %v7872
        %v7874 = vand.u32 %v7873, 4294901760
        %v7875 = vsub.f32 %v7873, %v7874
        %v7876 = vand.u32 %v7875, 4294901760
        %7877 = vmatpush1.msra.mxu0 %v7876
        %v7878 = vand.u32 %v548, 4294901760
        %v7879 = vsub.f32 %v548, %v7878
        %v7880 = vand.u32 %v7879, 4294901760
        %v7881 = vsub.f32 %v7879, %v7880
        %v7882 = vand.u32 %v7881, 4294901760
        %7883 = vmatprep.subr.mxu0 %v7882
        %v7884 = vand.u32 %v547, 4294901760
        %v7885 = vsub.f32 %v547, %v7884
        %v7886 = vand.u32 %v7885, 4294901760
        %v7887 = vsub.f32 %v7885, %v7886
        %v7888 = vand.u32 %v7887, 4294901760
        %7889 = vmatpush1.msra.mxu0 %v7888
        %v7890 = vand.u32 %v550, 4294901760
        %v7891 = vsub.f32 %v550, %v7890
        %v7892 = vand.u32 %v7891, 4294901760
        %v7893 = vsub.f32 %v7891, %v7892
        %v7894 = vand.u32 %v7893, 4294901760
        %7895 = vmatprep.subr.mxu0 %v7894
        %v7896 = vand.u32 %v549, 4294901760
        %v7897 = vsub.f32 %v549, %v7896
        %v7898 = vand.u32 %v7897, 4294901760
        %v7899 = vsub.f32 %v7897, %v7898
        %v7900 = vand.u32 %v7899, 4294901760
        %7901 = vmatpush1.msra.mxu0 %v7900
        %v7902 = vand.u32 %v552, 4294901760
        %v7903 = vsub.f32 %v552, %v7902
        %v7904 = vand.u32 %v7903, 4294901760
        %v7905 = vsub.f32 %v7903, %v7904
        %v7906 = vand.u32 %v7905, 4294901760
        %7907 = vmatprep.subr.mxu0 %v7906
        %v7908 = vand.u32 %v551, 4294901760
        %v7909 = vsub.f32 %v551, %v7908
        %v7910 = vand.u32 %v7909, 4294901760
        %v7911 = vsub.f32 %v7909, %v7910
        %v7912 = vand.u32 %v7911, 4294901760
        %7913 = vmatpush1.msra.mxu0 %v7912
        %v7914 = vand.u32 %v554, 4294901760
        %v7915 = vsub.f32 %v554, %v7914
        %v7916 = vand.u32 %v7915, 4294901760
        %v7917 = vsub.f32 %v7915, %v7916
        %v7918 = vand.u32 %v7917, 4294901760
        %7919 = vmatprep.subr.mxu0 %v7918
        %v7920 = vand.u32 %v553, 4294901760
        %v7921 = vsub.f32 %v553, %v7920
        %v7922 = vand.u32 %v7921, 4294901760
        %v7923 = vsub.f32 %v7921, %v7922
        %v7924 = vand.u32 %v7923, 4294901760
        %7925 = vmatpush1.msra.mxu0 %v7924
        %v7926 = vand.u32 %v556, 4294901760
        %v7927 = vsub.f32 %v556, %v7926
        %v7928 = vand.u32 %v7927, 4294901760
        %v7929 = vsub.f32 %v7927, %v7928
        %v7930 = vand.u32 %v7929, 4294901760
        %7931 = vmatprep.subr.mxu0 %v7930
        %v7932 = vand.u32 %v555, 4294901760
        %v7933 = vsub.f32 %v555, %v7932
        %v7934 = vand.u32 %v7933, 4294901760
        %v7935 = vsub.f32 %v7933, %v7934
        %v7936 = vand.u32 %v7935, 4294901760
        %7937 = vmatpush1.msra.mxu0 %v7936
        %v7938 = vand.u32 %v558, 4294901760
        %v7939 = vsub.f32 %v558, %v7938
        %v7940 = vand.u32 %v7939, 4294901760
        %v7941 = vsub.f32 %v7939, %v7940
        %v7942 = vand.u32 %v7941, 4294901760
        %7943 = vmatprep.subr.mxu0 %v7942
        %v7944 = vand.u32 %v557, 4294901760
        %v7945 = vsub.f32 %v557, %v7944
        %v7946 = vand.u32 %v7945, 4294901760
        %v7947 = vsub.f32 %v7945, %v7946
        %v7948 = vand.u32 %v7947, 4294901760
        %7949 = vmatpush1.msra.mxu0 %v7948
        %v7950 = vand.u32 %v560, 4294901760
        %v7951 = vsub.f32 %v560, %v7950
        %v7952 = vand.u32 %v7951, 4294901760
        %v7953 = vsub.f32 %v7951, %v7952
        %v7954 = vand.u32 %v7953, 4294901760
        %7955 = vmatprep.subr.mxu0 %v7954
        %v7956 = vand.u32 %v559, 4294901760
        %v7957 = vsub.f32 %v559, %v7956
        %v7958 = vand.u32 %v7957, 4294901760
        %v7959 = vsub.f32 %v7957, %v7958
        %v7960 = vand.u32 %v7959, 4294901760
        %7961 = vmatpush1.msra.mxu0 %v7960
        %v7962 = vand.u32 %v562, 4294901760
        %v7963 = vsub.f32 %v562, %v7962
        %v7964 = vand.u32 %v7963, 4294901760
        %v7965 = vsub.f32 %v7963, %v7964
        %v7966 = vand.u32 %v7965, 4294901760
        %7967 = vmatprep.subr.mxu0 %v7966
        %v7968 = vand.u32 %v561, 4294901760
        %v7969 = vsub.f32 %v561, %v7968
        %v7970 = vand.u32 %v7969, 4294901760
        %v7971 = vsub.f32 %v7969, %v7970
        %v7972 = vand.u32 %v7971, 4294901760
        %7973 = vmatpush1.msra.mxu0 %v7972
        %v7974 = vand.u32 %v186, 4294901760
        %7975 = vmatprep.mubr.f32.mxu0 %v7974
        %v7976 = vand.u32 %v185, 4294901760
        %7977 = vmatmul.mubr.f32.gmra.mrb[0].mxu0 %v7976
        %v7978 = vpop.f32.mrb[0].mxu0
        %v7979 = vadd.f32 %v7346, %v7978
        %v7980 = vpop.f32.mrb[0].mxu0
        %v7981 = vadd.f32 %v7348, %v7980
        %v7982 = vand.u32 %v194, 4294901760
        %7983 = vmatprep.mubr.f32.mxu0 %v7982
        %v7984 = vand.u32 %v193, 4294901760
        %7985 = vmatmul.mubr.f32.gmra.mrb[0].mxu0 %v7984
        %v7986 = vpop.f32.mrb[0].mxu0
        %v7987 = vadd.f32 %v7362, %v7986
        %v7988 = vpop.f32.mrb[0].mxu0
        %v7989 = vadd.f32 %v7364, %v7988
        %v7990 = vand.u32 %v202, 4294901760
        %7991 = vmatprep.mubr.f32.mxu0 %v7990
        %v7992 = vand.u32 %v201, 4294901760
        %7993 = vmatmul.mubr.f32.gmra.mrb[0].mxu0 %v7992
        %v7994 = vpop.f32.mrb[0].mxu0
        %v7995 = vadd.f32 %v7378, %v7994
        %v7996 = vpop.f32.mrb[0].mxu0
        %v7997 = vadd.f32 %v7380, %v7996
        %v7998 = vand.u32 %v210, 4294901760
        %7999 = vmatprep.mubr.f32.mxu0 %v7998
        %v8000 = vand.u32 %v209, 4294901760
        %8001 = vmatmul.mubr.f32.gmra.mrb[0].mxu0 %v8000
        %v8002 = vpop.f32.mrb[0].mxu0
        %v8003 = vadd.f32 %v7394, %v8002
        %v8004 = vpop.f32.mrb[0].mxu0
        %v8005 = vadd.f32 %v7396, %v8004
        %v8006 = vand.u32 %v218, 4294901760
        %8007 = vmatprep.mubr.f32.mxu0 %v8006
        %v8008 = vand.u32 %v217, 4294901760
        %8009 = vmatmul.mubr.f32.gmra.mrb[0].mxu0 %v8008
        %v8010 = vpop.f32.mrb[0].mxu0
        %v8011 = vadd.f32 %v7410, %v8010
        %v8012 = vpop.f32.mrb[0].mxu0
        %v8013 = vadd.f32 %v7412, %v8012
        %v8014 = vand.u32 %v226, 4294901760
        %8015 = vmatprep.mubr.f32.mxu0 %v8014
        %v8016 = vand.u32 %v225, 4294901760
        %8017 = vmatmul.mubr.f32.gmra.mrb[0].mxu0 %v8016
        %v8018 = vpop.f32.mrb[0].mxu0
        %v8019 = vadd.f32 %v7426, %v8018
        %v8020 = vpop.f32.mrb[0].mxu0
        %v8021 = vadd.f32 %v7428, %v8020
        %v8022 = vand.u32 %v234, 4294901760
        %8023 = vmatprep.mubr.f32.mxu0 %v8022
        %v8024 = vand.u32 %v233, 4294901760
        %8025 = vmatmul.mubr.f32.gmra.mrb[0].mxu0 %v8024
        %v8026 = vpop.f32.mrb[0].mxu0
        %v8027 = vadd.f32 %v7442, %v8026
        %v8028 = vpop.f32.mrb[0].mxu0
        %v8029 = vadd.f32 %v7444, %v8028
        %v8030 = vand.u32 %v242, 4294901760
        %8031 = vmatprep.mubr.f32.mxu0 %v8030
        %v8032 = vand.u32 %v241, 4294901760
        %8033 = vmatmul.mubr.f32.gmra.mrb[0].mxu0 %v8032
        %v8034 = vpop.f32.mrb[0].mxu0
        %v8035 = vadd.f32 %v7458, %v8034
        %v8036 = vpop.f32.mrb[0].mxu0
        %v8037 = vadd.f32 %v7460, %v8036
        %v8038 = vand.u32 %v250, 4294901760
        %8039 = vmatprep.mubr.f32.mxu0 %v8038
        %v8040 = vand.u32 %v249, 4294901760
        %8041 = vmatmul.mubr.f32.gmra.mrb[0].mxu0 %v8040
        %v8042 = vpop.f32.mrb[0].mxu0
        %v8043 = vadd.f32 %v7474, %v8042
        %v8044 = vpop.f32.mrb[0].mxu0
        %v8045 = vadd.f32 %v7476, %v8044
        %v8046 = vand.u32 %v258, 4294901760
        %8047 = vmatprep.mubr.f32.mxu0 %v8046
        %v8048 = vand.u32 %v257, 4294901760
        %8049 = vmatmul.mubr.f32.gmra.mrb[0].mxu0 %v8048
        %v8050 = vpop.f32.mrb[0].mxu0
        %v8051 = vadd.f32 %v7490, %v8050
        %v8052 = vpop.f32.mrb[0].mxu0
        %v8053 = vadd.f32 %v7492, %v8052
        %v8054 = vand.u32 %v266, 4294901760
        %8055 = vmatprep.mubr.f32.mxu0 %v8054
        %v8056 = vand.u32 %v265, 4294901760
        %8057 = vmatmul.mubr.f32.gmra.mrb[0].mxu0 %v8056
        %v8058 = vpop.f32.mrb[0].mxu0
        %v8059 = vadd.f32 %v7506, %v8058
        %v8060 = vpop.f32.mrb[0].mxu0
        %v8061 = vadd.f32 %v7508, %v8060
        %v8062 = vand.u32 %v274, 4294901760
        %8063 = vmatprep.mubr.f32.mxu0 %v8062
        %v8064 = vand.u32 %v273, 4294901760
        %8065 = vmatmul.mubr.f32.gmra.mrb[0].mxu0 %v8064
        %v8066 = vpop.f32.mrb[0].mxu0
        %v8067 = vadd.f32 %v7522, %v8066
        %v8068 = vpop.f32.mrb[0].mxu0
        %v8069 = vadd.f32 %v7524, %v8068
        %v8070 = vand.u32 %v282, 4294901760
        %8071 = vmatprep.mubr.f32.mxu0 %v8070
        %v8072 = vand.u32 %v281, 4294901760
        %8073 = vmatmul.mubr.f32.gmra.mrb[0].mxu0 %v8072
        %v8074 = vpop.f32.mrb[0].mxu0
        %v8075 = vadd.f32 %v7538, %v8074
        %v8076 = vpop.f32.mrb[0].mxu0
        %v8077 = vadd.f32 %v7540, %v8076
        %v8078 = vand.u32 %v290, 4294901760
        %8079 = vmatprep.mubr.f32.mxu0 %v8078
        %v8080 = vand.u32 %v289, 4294901760
        %8081 = vmatmul.mubr.f32.gmra.mrb[0].mxu0 %v8080
        %v8082 = vpop.f32.mrb[0].mxu0
        %v8083 = vadd.f32 %v7554, %v8082
        %v8084 = vpop.f32.mrb[0].mxu0
        %v8085 = vadd.f32 %v7556, %v8084
        %v8086 = vand.u32 %v298, 4294901760
        %8087 = vmatprep.mubr.f32.mxu0 %v8086
        %v8088 = vand.u32 %v297, 4294901760
        %8089 = vmatmul.mubr.f32.gmra.mrb[0].mxu0 %v8088
        %v8090 = vpop.f32.mrb[0].mxu0
        %v8091 = vadd.f32 %v7570, %v8090
        %v8092 = vpop.f32.mrb[0].mxu0
        %v8093 = vadd.f32 %v7572, %v8092
        %v8094 = vand.u32 %v306, 4294901760
        %8095 = vmatprep.mubr.f32.mxu0 %v8094
        %v8096 = vand.u32 %v305, 4294901760
        %8097 = vmatmul.mubr.f32.gmra.mrb[0].mxu0 %v8096
        %v8098 = vpop.f32.mrb[0].mxu0
        %v8099 = vadd.f32 %v7586, %v8098
        %v8100 = vpop.f32.mrb[0].mxu0
        %v8101 = vadd.f32 %v7588, %v8100
        %8102 = vdwg.mxu0
        %v8103 = vand.u32 %v500, 4294901760
        %v8104 = vsub.f32 %v500, %v8103
        %8105 = vmatprep.subr.mxu0 %v8104
        %v8106 = vand.u32 %v499, 4294901760
        %v8107 = vsub.f32 %v499, %v8106
        %8108 = vmatpush1.msra.mxu0 %v8107
        %v8109 = vand.u32 %v502, 4294901760
        %v8110 = vsub.f32 %v502, %v8109
        %8111 = vmatprep.subr.mxu0 %v8110
        %v8112 = vand.u32 %v501, 4294901760
        %v8113 = vsub.f32 %v501, %v8112
        %8114 = vmatpush1.msra.mxu0 %v8113
        %v8115 = vand.u32 %v504, 4294901760
        %v8116 = vsub.f32 %v504, %v8115
        %8117 = vmatprep.subr.mxu0 %v8116
        %v8118 = vand.u32 %v503, 4294901760
        %v8119 = vsub.f32 %v503, %v8118
        %8120 = vmatpush1.msra.mxu0 %v8119
        %v8121 = vand.u32 %v506, 4294901760
        %v8122 = vsub.f32 %v506, %v8121
        %8123 = vmatprep.subr.mxu0 %v8122
        %v8124 = vand.u32 %v505, 4294901760
        %v8125 = vsub.f32 %v505, %v8124
        %8126 = vmatpush1.msra.mxu0 %v8125
        %v8127 = vand.u32 %v508, 4294901760
        %v8128 = vsub.f32 %v508, %v8127
        %8129 = vmatprep.subr.mxu0 %v8128
        %v8130 = vand.u32 %v507, 4294901760
        %v8131 = vsub.f32 %v507, %v8130
        %8132 = vmatpush1.msra.mxu0 %v8131
        %v8133 = vand.u32 %v510, 4294901760
        %v8134 = vsub.f32 %v510, %v8133
        %8135 = vmatprep.subr.mxu0 %v8134
        %v8136 = vand.u32 %v509, 4294901760
        %v8137 = vsub.f32 %v509, %v8136
        %8138 = vmatpush1.msra.mxu0 %v8137
        %v8139 = vand.u32 %v512, 4294901760
        %v8140 = vsub.f32 %v512, %v8139
        %8141 = vmatprep.subr.mxu0 %v8140
        %v8142 = vand.u32 %v511, 4294901760
        %v8143 = vsub.f32 %v511, %v8142
        %8144 = vmatpush1.msra.mxu0 %v8143
        %v8145 = vand.u32 %v514, 4294901760
        %v8146 = vsub.f32 %v514, %v8145
        %8147 = vmatprep.subr.mxu0 %v8146
        %v8148 = vand.u32 %v513, 4294901760
        %v8149 = vsub.f32 %v513, %v8148
        %8150 = vmatpush1.msra.mxu0 %v8149
        %v8151 = vand.u32 %v516, 4294901760
        %v8152 = vsub.f32 %v516, %v8151
        %8153 = vmatprep.subr.mxu0 %v8152
        %v8154 = vand.u32 %v515, 4294901760
        %v8155 = vsub.f32 %v515, %v8154
        %8156 = vmatpush1.msra.mxu0 %v8155
        %v8157 = vand.u32 %v518, 4294901760
        %v8158 = vsub.f32 %v518, %v8157
        %8159 = vmatprep.subr.mxu0 %v8158
        %v8160 = vand.u32 %v517, 4294901760
        %v8161 = vsub.f32 %v517, %v8160
        %8162 = vmatpush1.msra.mxu0 %v8161
        %v8163 = vand.u32 %v520, 4294901760
        %v8164 = vsub.f32 %v520, %v8163
        %8165 = vmatprep.subr.mxu0 %v8164
        %v8166 = vand.u32 %v519, 4294901760
        %v8167 = vsub.f32 %v519, %v8166
        %8168 = vmatpush1.msra.mxu0 %v8167
        %v8169 = vand.u32 %v522, 4294901760
        %v8170 = vsub.f32 %v522, %v8169
        %8171 = vmatprep.subr.mxu0 %v8170
        %v8172 = vand.u32 %v521, 4294901760
        %v8173 = vsub.f32 %v521, %v8172
        %8174 = vmatpush1.msra.mxu0 %v8173
        %v8175 = vand.u32 %v524, 4294901760
        %v8176 = vsub.f32 %v524, %v8175
        %8177 = vmatprep.subr.mxu0 %v8176
        %v8178 = vand.u32 %v523, 4294901760
        %v8179 = vsub.f32 %v523, %v8178
        %8180 = vmatpush1.msra.mxu0 %v8179
        %v8181 = vand.u32 %v526, 4294901760
        %v8182 = vsub.f32 %v526, %v8181
        %8183 = vmatprep.subr.mxu0 %v8182
        %v8184 = vand.u32 %v525, 4294901760
        %v8185 = vsub.f32 %v525, %v8184
        %8186 = vmatpush1.msra.mxu0 %v8185
        %v8187 = vand.u32 %v528, 4294901760
        %v8188 = vsub.f32 %v528, %v8187
        %8189 = vmatprep.subr.mxu0 %v8188
        %v8190 = vand.u32 %v527, 4294901760
        %v8191 = vsub.f32 %v527, %v8190
        %8192 = vmatpush1.msra.mxu0 %v8191
        %v8193 = vand.u32 %v530, 4294901760
        %v8194 = vsub.f32 %v530, %v8193
        %8195 = vmatprep.subr.mxu0 %v8194
        %v8196 = vand.u32 %v529, 4294901760
        %v8197 = vsub.f32 %v529, %v8196
        %8198 = vmatpush1.msra.mxu0 %v8197
        %v8199 = vand.u32 %v532, 4294901760
        %v8200 = vsub.f32 %v532, %v8199
        %8201 = vmatprep.subr.mxu0 %v8200
        %v8202 = vand.u32 %v531, 4294901760
        %v8203 = vsub.f32 %v531, %v8202
        %8204 = vmatpush1.msra.mxu0 %v8203
        %v8205 = vand.u32 %v534, 4294901760
        %v8206 = vsub.f32 %v534, %v8205
        %8207 = vmatprep.subr.mxu0 %v8206
        %v8208 = vand.u32 %v533, 4294901760
        %v8209 = vsub.f32 %v533, %v8208
        %8210 = vmatpush1.msra.mxu0 %v8209
        %v8211 = vand.u32 %v536, 4294901760
        %v8212 = vsub.f32 %v536, %v8211
        %8213 = vmatprep.subr.mxu0 %v8212
        %v8214 = vand.u32 %v535, 4294901760
        %v8215 = vsub.f32 %v535, %v8214
        %8216 = vmatpush1.msra.mxu0 %v8215
        %v8217 = vand.u32 %v538, 4294901760
        %v8218 = vsub.f32 %v538, %v8217
        %8219 = vmatprep.subr.mxu0 %v8218
        %v8220 = vand.u32 %v537, 4294901760
        %v8221 = vsub.f32 %v537, %v8220
        %8222 = vmatpush1.msra.mxu0 %v8221
        %v8223 = vand.u32 %v540, 4294901760
        %v8224 = vsub.f32 %v540, %v8223
        %8225 = vmatprep.subr.mxu0 %v8224
        %v8226 = vand.u32 %v539, 4294901760
        %v8227 = vsub.f32 %v539, %v8226
        %8228 = vmatpush1.msra.mxu0 %v8227
        %v8229 = vand.u32 %v542, 4294901760
        %v8230 = vsub.f32 %v542, %v8229
        %8231 = vmatprep.subr.mxu0 %v8230
        %v8232 = vand.u32 %v541, 4294901760
        %v8233 = vsub.f32 %v541, %v8232
        %8234 = vmatpush1.msra.mxu0 %v8233
        %v8235 = vand.u32 %v544, 4294901760
        %v8236 = vsub.f32 %v544, %v8235
        %8237 = vmatprep.subr.mxu0 %v8236
        %v8238 = vand.u32 %v543, 4294901760
        %v8239 = vsub.f32 %v543, %v8238
        %8240 = vmatpush1.msra.mxu0 %v8239
        %v8241 = vand.u32 %v546, 4294901760
        %v8242 = vsub.f32 %v546, %v8241
        %8243 = vmatprep.subr.mxu0 %v8242
        %v8244 = vand.u32 %v545, 4294901760
        %v8245 = vsub.f32 %v545, %v8244
        %8246 = vmatpush1.msra.mxu0 %v8245
        %v8247 = vand.u32 %v548, 4294901760
        %v8248 = vsub.f32 %v548, %v8247
        %8249 = vmatprep.subr.mxu0 %v8248
        %v8250 = vand.u32 %v547, 4294901760
        %v8251 = vsub.f32 %v547, %v8250
        %8252 = vmatpush1.msra.mxu0 %v8251
        %v8253 = vand.u32 %v550, 4294901760
        %v8254 = vsub.f32 %v550, %v8253
        %8255 = vmatprep.subr.mxu0 %v8254
        %v8256 = vand.u32 %v549, 4294901760
        %v8257 = vsub.f32 %v549, %v8256
        %8258 = vmatpush1.msra.mxu0 %v8257
        %v8259 = vand.u32 %v552, 4294901760
        %v8260 = vsub.f32 %v552, %v8259
        %8261 = vmatprep.subr.mxu0 %v8260
        %v8262 = vand.u32 %v551, 4294901760
        %v8263 = vsub.f32 %v551, %v8262
        %8264 = vmatpush1.msra.mxu0 %v8263
        %v8265 = vand.u32 %v554, 4294901760
        %v8266 = vsub.f32 %v554, %v8265
        %8267 = vmatprep.subr.mxu0 %v8266
        %v8268 = vand.u32 %v553, 4294901760
        %v8269 = vsub.f32 %v553, %v8268
        %8270 = vmatpush1.msra.mxu0 %v8269
        %v8271 = vand.u32 %v556, 4294901760
        %v8272 = vsub.f32 %v556, %v8271
        %8273 = vmatprep.subr.mxu0 %v8272
        %v8274 = vand.u32 %v555, 4294901760
        %v8275 = vsub.f32 %v555, %v8274
        %8276 = vmatpush1.msra.mxu0 %v8275
        %v8277 = vand.u32 %v558, 4294901760
        %v8278 = vsub.f32 %v558, %v8277
        %8279 = vmatprep.subr.mxu0 %v8278
        %v8280 = vand.u32 %v557, 4294901760
        %v8281 = vsub.f32 %v557, %v8280
        %8282 = vmatpush1.msra.mxu0 %v8281
        %v8283 = vand.u32 %v560, 4294901760
        %v8284 = vsub.f32 %v560, %v8283
        %8285 = vmatprep.subr.mxu0 %v8284
        %v8286 = vand.u32 %v559, 4294901760
        %v8287 = vsub.f32 %v559, %v8286
        %8288 = vmatpush1.msra.mxu0 %v8287
        %v8289 = vand.u32 %v562, 4294901760
        %v8290 = vsub.f32 %v562, %v8289
        %8291 = vmatprep.subr.mxu0 %v8290
        %v8292 = vand.u32 %v561, 4294901760
        %v8293 = vsub.f32 %v561, %v8292
        %8294 = vmatpush1.msra.mxu0 %v8293
        %v8295 = vand.u32 %v186, 4294901760
        %v8296 = vsub.f32 %v186, %v8295
        %8297 = vmatprep.mubr.f32.mxu0 %v8296
        %v8298 = vand.u32 %v185, 4294901760
        %v8299 = vsub.f32 %v185, %v8298
        %8300 = vmatmul.mubr.f32.gmra.mrb[0].mxu0 %v8299
        %v8301 = vpop.f32.mrb[0].mxu0
        %v8302 = vadd.f32 %v7979, %v8301
        %v8303 = vpop.f32.mrb[0].mxu0
        %v8304 = vadd.f32 %v7981, %v8303
        %v8305 = vand.u32 %v194, 4294901760
        %v8306 = vsub.f32 %v194, %v8305
        %8307 = vmatprep.mubr.f32.mxu0 %v8306
        %v8308 = vand.u32 %v193, 4294901760
        %v8309 = vsub.f32 %v193, %v8308
        %8310 = vmatmul.mubr.f32.gmra.mrb[0].mxu0 %v8309
        %v8311 = vpop.f32.mrb[0].mxu0
        %v8312 = vadd.f32 %v7987, %v8311
        %v8313 = vpop.f32.mrb[0].mxu0
        %v8314 = vadd.f32 %v7989, %v8313
        %v8315 = vand.u32 %v202, 4294901760
        %v8316 = vsub.f32 %v202, %v8315
        %8317 = vmatprep.mubr.f32.mxu0 %v8316
        %v8318 = vand.u32 %v201, 4294901760
        %v8319 = vsub.f32 %v201, %v8318
        %8320 = vmatmul.mubr.f32.gmra.mrb[0].mxu0 %v8319
        %v8321 = vpop.f32.mrb[0].mxu0
        %v8322 = vadd.f32 %v7995, %v8321
        %v8323 = vpop.f32.mrb[0].mxu0
        %v8324 = vadd.f32 %v7997, %v8323
        %v8325 = vand.u32 %v210, 4294901760
        %v8326 = vsub.f32 %v210, %v8325
        %8327 = vmatprep.mubr.f32.mxu0 %v8326
        %v8328 = vand.u32 %v209, 4294901760
        %v8329 = vsub.f32 %v209, %v8328
        %8330 = vmatmul.mubr.f32.gmra.mrb[0].mxu0 %v8329
        %v8331 = vpop.f32.mrb[0].mxu0
        %v8332 = vadd.f32 %v8003, %v8331
        %v8333 = vpop.f32.mrb[0].mxu0
        %v8334 = vadd.f32 %v8005, %v8333
        %v8335 = vand.u32 %v218, 4294901760
        %v8336 = vsub.f32 %v218, %v8335
        %8337 = vmatprep.mubr.f32.mxu0 %v8336
        %v8338 = vand.u32 %v217, 4294901760
        %v8339 = vsub.f32 %v217, %v8338
        %8340 = vmatmul.mubr.f32.gmra.mrb[0].mxu0 %v8339
        %v8341 = vpop.f32.mrb[0].mxu0
        %v8342 = vadd.f32 %v8011, %v8341
        %v8343 = vpop.f32.mrb[0].mxu0
        %v8344 = vadd.f32 %v8013, %v8343
        %v8345 = vand.u32 %v226, 4294901760
        %v8346 = vsub.f32 %v226, %v8345
        %8347 = vmatprep.mubr.f32.mxu0 %v8346
        %v8348 = vand.u32 %v225, 4294901760
        %v8349 = vsub.f32 %v225, %v8348
        %8350 = vmatmul.mubr.f32.gmra.mrb[0].mxu0 %v8349
        %v8351 = vpop.f32.mrb[0].mxu0
        %v8352 = vadd.f32 %v8019, %v8351
        %v8353 = vpop.f32.mrb[0].mxu0
        %v8354 = vadd.f32 %v8021, %v8353
        %v8355 = vand.u32 %v234, 4294901760
        %v8356 = vsub.f32 %v234, %v8355
        %8357 = vmatprep.mubr.f32.mxu0 %v8356
        %v8358 = vand.u32 %v233, 4294901760
        %v8359 = vsub.f32 %v233, %v8358
        %8360 = vmatmul.mubr.f32.gmra.mrb[0].mxu0 %v8359
        %v8361 = vpop.f32.mrb[0].mxu0
        %v8362 = vadd.f32 %v8027, %v8361
        %v8363 = vpop.f32.mrb[0].mxu0
        %v8364 = vadd.f32 %v8029, %v8363
        %v8365 = vand.u32 %v242, 4294901760
        %v8366 = vsub.f32 %v242, %v8365
        %8367 = vmatprep.mubr.f32.mxu0 %v8366
        %v8368 = vand.u32 %v241, 4294901760
        %v8369 = vsub.f32 %v241, %v8368
        %8370 = vmatmul.mubr.f32.gmra.mrb[0].mxu0 %v8369
        %v8371 = vpop.f32.mrb[0].mxu0
        %v8372 = vadd.f32 %v8035, %v8371
        %v8373 = vpop.f32.mrb[0].mxu0
        %v8374 = vadd.f32 %v8037, %v8373
        %v8375 = vand.u32 %v250, 4294901760
        %v8376 = vsub.f32 %v250, %v8375
        %8377 = vmatprep.mubr.f32.mxu0 %v8376
        %v8378 = vand.u32 %v249, 4294901760
        %v8379 = vsub.f32 %v249, %v8378
        %8380 = vmatmul.mubr.f32.gmra.mrb[0].mxu0 %v8379
        %v8381 = vpop.f32.mrb[0].mxu0
        %v8382 = vadd.f32 %v8043, %v8381
        %v8383 = vpop.f32.mrb[0].mxu0
        %v8384 = vadd.f32 %v8045, %v8383
        %v8385 = vand.u32 %v258, 4294901760
        %v8386 = vsub.f32 %v258, %v8385
        %8387 = vmatprep.mubr.f32.mxu0 %v8386
        %v8388 = vand.u32 %v257, 4294901760
        %v8389 = vsub.f32 %v257, %v8388
        %8390 = vmatmul.mubr.f32.gmra.mrb[0].mxu0 %v8389
        %v8391 = vpop.f32.mrb[0].mxu0
        %v8392 = vadd.f32 %v8051, %v8391
        %v8393 = vpop.f32.mrb[0].mxu0
        %v8394 = vadd.f32 %v8053, %v8393
        %v8395 = vand.u32 %v266, 4294901760
        %v8396 = vsub.f32 %v266, %v8395
        %8397 = vmatprep.mubr.f32.mxu0 %v8396
        %v8398 = vand.u32 %v265, 4294901760
        %v8399 = vsub.f32 %v265, %v8398
        %8400 = vmatmul.mubr.f32.gmra.mrb[0].mxu0 %v8399
        %v8401 = vpop.f32.mrb[0].mxu0
        %v8402 = vadd.f32 %v8059, %v8401
        %v8403 = vpop.f32.mrb[0].mxu0
        %v8404 = vadd.f32 %v8061, %v8403
        %v8405 = vand.u32 %v274, 4294901760
        %v8406 = vsub.f32 %v274, %v8405
        %8407 = vmatprep.mubr.f32.mxu0 %v8406
        %v8408 = vand.u32 %v273, 4294901760
        %v8409 = vsub.f32 %v273, %v8408
        %8410 = vmatmul.mubr.f32.gmra.mrb[0].mxu0 %v8409
        %v8411 = vpop.f32.mrb[0].mxu0
        %v8412 = vadd.f32 %v8067, %v8411
        %v8413 = vpop.f32.mrb[0].mxu0
        %v8414 = vadd.f32 %v8069, %v8413
        %v8415 = vand.u32 %v282, 4294901760
        %v8416 = vsub.f32 %v282, %v8415
        %8417 = vmatprep.mubr.f32.mxu0 %v8416
        %v8418 = vand.u32 %v281, 4294901760
        %v8419 = vsub.f32 %v281, %v8418
        %8420 = vmatmul.mubr.f32.gmra.mrb[0].mxu0 %v8419
        %v8421 = vpop.f32.mrb[0].mxu0
        %v8422 = vadd.f32 %v8075, %v8421
        %v8423 = vpop.f32.mrb[0].mxu0
        %v8424 = vadd.f32 %v8077, %v8423
        %v8425 = vand.u32 %v290, 4294901760
        %v8426 = vsub.f32 %v290, %v8425
        %8427 = vmatprep.mubr.f32.mxu0 %v8426
        %v8428 = vand.u32 %v289, 4294901760
        %v8429 = vsub.f32 %v289, %v8428
        %8430 = vmatmul.mubr.f32.gmra.mrb[0].mxu0 %v8429
        %v8431 = vpop.f32.mrb[0].mxu0
        %v8432 = vadd.f32 %v8083, %v8431
        %v8433 = vpop.f32.mrb[0].mxu0
        %v8434 = vadd.f32 %v8085, %v8433
        %v8435 = vand.u32 %v298, 4294901760
        %v8436 = vsub.f32 %v298, %v8435
        %8437 = vmatprep.mubr.f32.mxu0 %v8436
        %v8438 = vand.u32 %v297, 4294901760
        %v8439 = vsub.f32 %v297, %v8438
        %8440 = vmatmul.mubr.f32.gmra.mrb[0].mxu0 %v8439
        %v8441 = vpop.f32.mrb[0].mxu0
        %v8442 = vadd.f32 %v8091, %v8441
        %v8443 = vpop.f32.mrb[0].mxu0
        %v8444 = vadd.f32 %v8093, %v8443
        %v8445 = vand.u32 %v306, 4294901760
        %v8446 = vsub.f32 %v306, %v8445
        %8447 = vmatprep.mubr.f32.mxu0 %v8446
        %v8448 = vand.u32 %v305, 4294901760
        %v8449 = vsub.f32 %v305, %v8448
        %8450 = vmatmul.mubr.f32.gmra.mrb[0].mxu0 %v8449
        %v8451 = vpop.f32.mrb[0].mxu0
        %v8452 = vadd.f32 %v8099, %v8451
        %v8453 = vpop.f32.mrb[0].mxu0
        %v8454 = vadd.f32 %v8101, %v8453
        %8455 = vdwg.mxu0
        %v8456 = vand.u32 %v500, 4294901760
        %8457 = vmatprep.subr.mxu0 %v8456
        %v8458 = vand.u32 %v499, 4294901760
        %8459 = vmatpush1.msra.mxu0 %v8458
        %v8460 = vand.u32 %v502, 4294901760
        %8461 = vmatprep.subr.mxu0 %v8460
        %v8462 = vand.u32 %v501, 4294901760
        %8463 = vmatpush1.msra.mxu0 %v8462
        %v8464 = vand.u32 %v504, 4294901760
        %8465 = vmatprep.subr.mxu0 %v8464
        %v8466 = vand.u32 %v503, 4294901760
        %8467 = vmatpush1.msra.mxu0 %v8466
        %v8468 = vand.u32 %v506, 4294901760
        %8469 = vmatprep.subr.mxu0 %v8468
        %v8470 = vand.u32 %v505, 4294901760
        %8471 = vmatpush1.msra.mxu0 %v8470
        %v8472 = vand.u32 %v508, 4294901760
        %8473 = vmatprep.subr.mxu0 %v8472
        %v8474 = vand.u32 %v507, 4294901760
        %8475 = vmatpush1.msra.mxu0 %v8474
        %v8476 = vand.u32 %v510, 4294901760
        %8477 = vmatprep.subr.mxu0 %v8476
        %v8478 = vand.u32 %v509, 4294901760
        %8479 = vmatpush1.msra.mxu0 %v8478
        %v8480 = vand.u32 %v512, 4294901760
        %8481 = vmatprep.subr.mxu0 %v8480
        %v8482 = vand.u32 %v511, 4294901760
        %8483 = vmatpush1.msra.mxu0 %v8482
        %v8484 = vand.u32 %v514, 4294901760
        %8485 = vmatprep.subr.mxu0 %v8484
        %v8486 = vand.u32 %v513, 4294901760
        %8487 = vmatpush1.msra.mxu0 %v8486
        %v8488 = vand.u32 %v516, 4294901760
        %8489 = vmatprep.subr.mxu0 %v8488
        %v8490 = vand.u32 %v515, 4294901760
        %8491 = vmatpush1.msra.mxu0 %v8490
        %v8492 = vand.u32 %v518, 4294901760
        %8493 = vmatprep.subr.mxu0 %v8492
        %v8494 = vand.u32 %v517, 4294901760
        %8495 = vmatpush1.msra.mxu0 %v8494
        %v8496 = vand.u32 %v520, 4294901760
        %8497 = vmatprep.subr.mxu0 %v8496
        %v8498 = vand.u32 %v519, 4294901760
        %8499 = vmatpush1.msra.mxu0 %v8498
        %v8500 = vand.u32 %v522, 4294901760
        %8501 = vmatprep.subr.mxu0 %v8500
        %v8502 = vand.u32 %v521, 4294901760
        %8503 = vmatpush1.msra.mxu0 %v8502
        %v8504 = vand.u32 %v524, 4294901760
        %8505 = vmatprep.subr.mxu0 %v8504
        %v8506 = vand.u32 %v523, 4294901760
        %8507 = vmatpush1.msra.mxu0 %v8506
        %v8508 = vand.u32 %v526, 4294901760
        %8509 = vmatprep.subr.mxu0 %v8508
        %v8510 = vand.u32 %v525, 4294901760
        %8511 = vmatpush1.msra.mxu0 %v8510
        %v8512 = vand.u32 %v528, 4294901760
        %8513 = vmatprep.subr.mxu0 %v8512
        %v8514 = vand.u32 %v527, 4294901760
        %8515 = vmatpush1.msra.mxu0 %v8514
        %v8516 = vand.u32 %v530, 4294901760
        %8517 = vmatprep.subr.mxu0 %v8516
        %v8518 = vand.u32 %v529, 4294901760
        %8519 = vmatpush1.msra.mxu0 %v8518
        %v8520 = vand.u32 %v532, 4294901760
        %8521 = vmatprep.subr.mxu0 %v8520
        %v8522 = vand.u32 %v531, 4294901760
        %8523 = vmatpush1.msra.mxu0 %v8522
        %v8524 = vand.u32 %v534, 4294901760
        %8525 = vmatprep.subr.mxu0 %v8524
        %v8526 = vand.u32 %v533, 4294901760
        %8527 = vmatpush1.msra.mxu0 %v8526
        %v8528 = vand.u32 %v536, 4294901760
        %8529 = vmatprep.subr.mxu0 %v8528
        %v8530 = vand.u32 %v535, 4294901760
        %8531 = vmatpush1.msra.mxu0 %v8530
        %v8532 = vand.u32 %v538, 4294901760
        %8533 = vmatprep.subr.mxu0 %v8532
        %v8534 = vand.u32 %v537, 4294901760
        %8535 = vmatpush1.msra.mxu0 %v8534
        %v8536 = vand.u32 %v540, 4294901760
        %8537 = vmatprep.subr.mxu0 %v8536
        %v8538 = vand.u32 %v539, 4294901760
        %8539 = vmatpush1.msra.mxu0 %v8538
        %v8540 = vand.u32 %v542, 4294901760
        %8541 = vmatprep.subr.mxu0 %v8540
        %v8542 = vand.u32 %v541, 4294901760
        %8543 = vmatpush1.msra.mxu0 %v8542
        %v8544 = vand.u32 %v544, 4294901760
        %8545 = vmatprep.subr.mxu0 %v8544
        %v8546 = vand.u32 %v543, 4294901760
        %8547 = vmatpush1.msra.mxu0 %v8546
        %v8548 = vand.u32 %v546, 4294901760
        %8549 = vmatprep.subr.mxu0 %v8548
        %v8550 = vand.u32 %v545, 4294901760
        %8551 = vmatpush1.msra.mxu0 %v8550
        %v8552 = vand.u32 %v548, 4294901760
        %8553 = vmatprep.subr.mxu0 %v8552
        %v8554 = vand.u32 %v547, 4294901760
        %8555 = vmatpush1.msra.mxu0 %v8554
        %v8556 = vand.u32 %v550, 4294901760
        %8557 = vmatprep.subr.mxu0 %v8556
        %v8558 = vand.u32 %v549, 4294901760
        %8559 = vmatpush1.msra.mxu0 %v8558
        %v8560 = vand.u32 %v552, 4294901760
        %8561 = vmatprep.subr.mxu0 %v8560
        %v8562 = vand.u32 %v551, 4294901760
        %8563 = vmatpush1.msra.mxu0 %v8562
        %v8564 = vand.u32 %v554, 4294901760
        %8565 = vmatprep.subr.mxu0 %v8564
        %v8566 = vand.u32 %v553, 4294901760
        %8567 = vmatpush1.msra.mxu0 %v8566
        %v8568 = vand.u32 %v556, 4294901760
        %8569 = vmatprep.subr.mxu0 %v8568
        %v8570 = vand.u32 %v555, 4294901760
        %8571 = vmatpush1.msra.mxu0 %v8570
        %v8572 = vand.u32 %v558, 4294901760
        %8573 = vmatprep.subr.mxu0 %v8572
        %v8574 = vand.u32 %v557, 4294901760
        %8575 = vmatpush1.msra.mxu0 %v8574
        %v8576 = vand.u32 %v560, 4294901760
        %8577 = vmatprep.subr.mxu0 %v8576
        %v8578 = vand.u32 %v559, 4294901760
        %8579 = vmatpush1.msra.mxu0 %v8578
        %v8580 = vand.u32 %v562, 4294901760
        %8581 = vmatprep.subr.mxu0 %v8580
        %v8582 = vand.u32 %v561, 4294901760
        %8583 = vmatpush1.msra.mxu0 %v8582
        %v8584 = vand.u32 %v186, 4294901760
        %v8585 = vsub.f32 %v186, %v8584
        %v8586 = vand.u32 %v8585, 4294901760
        %8587 = vmatprep.mubr.f32.mxu0 %v8586
        %v8588 = vand.u32 %v185, 4294901760
        %v8589 = vsub.f32 %v185, %v8588
        %v8590 = vand.u32 %v8589, 4294901760
        %8591 = vmatmul.mubr.f32.gmra.mrb[0].mxu0 %v8590
        %v8592 = vpop.f32.mrb[0].mxu0
        %v8593 = vadd.f32 %v8302, %v8592
        %v8594 = vpop.f32.mrb[0].mxu0
        %v8595 = vadd.f32 %v8304, %v8594
        %v8596 = vand.u32 %v194, 4294901760
        %v8597 = vsub.f32 %v194, %v8596
        %v8598 = vand.u32 %v8597, 4294901760
        %8599 = vmatprep.mubr.f32.mxu0 %v8598
        %v8600 = vand.u32 %v193, 4294901760
        %v8601 = vsub.f32 %v193, %v8600
        %v8602 = vand.u32 %v8601, 4294901760
        %8603 = vmatmul.mubr.f32.gmra.mrb[0].mxu0 %v8602
        %v8604 = vpop.f32.mrb[0].mxu0
        %v8605 = vadd.f32 %v8312, %v8604
        %v8606 = vpop.f32.mrb[0].mxu0
        %v8607 = vadd.f32 %v8314, %v8606
        %v8608 = vand.u32 %v202, 4294901760
        %v8609 = vsub.f32 %v202, %v8608
        %v8610 = vand.u32 %v8609, 4294901760
        %8611 = vmatprep.mubr.f32.mxu0 %v8610
        %v8612 = vand.u32 %v201, 4294901760
        %v8613 = vsub.f32 %v201, %v8612
        %v8614 = vand.u32 %v8613, 4294901760
        %8615 = vmatmul.mubr.f32.gmra.mrb[0].mxu0 %v8614
        %v8616 = vpop.f32.mrb[0].mxu0
        %v8617 = vadd.f32 %v8322, %v8616
        %v8618 = vpop.f32.mrb[0].mxu0
        %v8619 = vadd.f32 %v8324, %v8618
        %v8620 = vand.u32 %v210, 4294901760
        %v8621 = vsub.f32 %v210, %v8620
        %v8622 = vand.u32 %v8621, 4294901760
        %8623 = vmatprep.mubr.f32.mxu0 %v8622
        %v8624 = vand.u32 %v209, 4294901760
        %v8625 = vsub.f32 %v209, %v8624
        %v8626 = vand.u32 %v8625, 4294901760
        %8627 = vmatmul.mubr.f32.gmra.mrb[0].mxu0 %v8626
        %v8628 = vpop.f32.mrb[0].mxu0
        %v8629 = vadd.f32 %v8332, %v8628
        %v8630 = vpop.f32.mrb[0].mxu0
        %v8631 = vadd.f32 %v8334, %v8630
        %v8632 = vand.u32 %v218, 4294901760
        %v8633 = vsub.f32 %v218, %v8632
        %v8634 = vand.u32 %v8633, 4294901760
        %8635 = vmatprep.mubr.f32.mxu0 %v8634
        %v8636 = vand.u32 %v217, 4294901760
        %v8637 = vsub.f32 %v217, %v8636
        %v8638 = vand.u32 %v8637, 4294901760
        %8639 = vmatmul.mubr.f32.gmra.mrb[0].mxu0 %v8638
        %v8640 = vpop.f32.mrb[0].mxu0
        %v8641 = vadd.f32 %v8342, %v8640
        %v8642 = vpop.f32.mrb[0].mxu0
        %v8643 = vadd.f32 %v8344, %v8642
        %v8644 = vand.u32 %v226, 4294901760
        %v8645 = vsub.f32 %v226, %v8644
        %v8646 = vand.u32 %v8645, 4294901760
        %8647 = vmatprep.mubr.f32.mxu0 %v8646
        %v8648 = vand.u32 %v225, 4294901760
        %v8649 = vsub.f32 %v225, %v8648
        %v8650 = vand.u32 %v8649, 4294901760
        %8651 = vmatmul.mubr.f32.gmra.mrb[0].mxu0 %v8650
        %v8652 = vpop.f32.mrb[0].mxu0
        %v8653 = vadd.f32 %v8352, %v8652
        %v8654 = vpop.f32.mrb[0].mxu0
        %v8655 = vadd.f32 %v8354, %v8654
        %v8656 = vand.u32 %v234, 4294901760
        %v8657 = vsub.f32 %v234, %v8656
        %v8658 = vand.u32 %v8657, 4294901760
        %8659 = vmatprep.mubr.f32.mxu0 %v8658
        %v8660 = vand.u32 %v233, 4294901760
        %v8661 = vsub.f32 %v233, %v8660
        %v8662 = vand.u32 %v8661, 4294901760
        %8663 = vmatmul.mubr.f32.gmra.mrb[0].mxu0 %v8662
        %v8664 = vpop.f32.mrb[0].mxu0
        %v8665 = vadd.f32 %v8362, %v8664
        %v8666 = vpop.f32.mrb[0].mxu0
        %v8667 = vadd.f32 %v8364, %v8666
        %v8668 = vand.u32 %v242, 4294901760
        %v8669 = vsub.f32 %v242, %v8668
        %v8670 = vand.u32 %v8669, 4294901760
        %8671 = vmatprep.mubr.f32.mxu0 %v8670
        %v8672 = vand.u32 %v241, 4294901760
        %v8673 = vsub.f32 %v241, %v8672
        %v8674 = vand.u32 %v8673, 4294901760
        %8675 = vmatmul.mubr.f32.gmra.mrb[0].mxu0 %v8674
        %v8676 = vpop.f32.mrb[0].mxu0
        %v8677 = vadd.f32 %v8372, %v8676
        %v8678 = vpop.f32.mrb[0].mxu0
        %v8679 = vadd.f32 %v8374, %v8678
        %v8680 = vand.u32 %v250, 4294901760
        %v8681 = vsub.f32 %v250, %v8680
        %v8682 = vand.u32 %v8681, 4294901760
        %8683 = vmatprep.mubr.f32.mxu0 %v8682
        %v8684 = vand.u32 %v249, 4294901760
        %v8685 = vsub.f32 %v249, %v8684
        %v8686 = vand.u32 %v8685, 4294901760
        %8687 = vmatmul.mubr.f32.gmra.mrb[0].mxu0 %v8686
        %v8688 = vpop.f32.mrb[0].mxu0
        %v8689 = vadd.f32 %v8382, %v8688
        %v8690 = vpop.f32.mrb[0].mxu0
        %v8691 = vadd.f32 %v8384, %v8690
        %v8692 = vand.u32 %v258, 4294901760
        %v8693 = vsub.f32 %v258, %v8692
        %v8694 = vand.u32 %v8693, 4294901760
        %8695 = vmatprep.mubr.f32.mxu0 %v8694
        %v8696 = vand.u32 %v257, 4294901760
        %v8697 = vsub.f32 %v257, %v8696
        %v8698 = vand.u32 %v8697, 4294901760
        %8699 = vmatmul.mubr.f32.gmra.mrb[0].mxu0 %v8698
        %v8700 = vpop.f32.mrb[0].mxu0
        %v8701 = vadd.f32 %v8392, %v8700
        %v8702 = vpop.f32.mrb[0].mxu0
        %v8703 = vadd.f32 %v8394, %v8702
        %v8704 = vand.u32 %v266, 4294901760
        %v8705 = vsub.f32 %v266, %v8704
        %v8706 = vand.u32 %v8705, 4294901760
        %8707 = vmatprep.mubr.f32.mxu0 %v8706
        %v8708 = vand.u32 %v265, 4294901760
        %v8709 = vsub.f32 %v265, %v8708
        %v8710 = vand.u32 %v8709, 4294901760
        %8711 = vmatmul.mubr.f32.gmra.mrb[0].mxu0 %v8710
        %v8712 = vpop.f32.mrb[0].mxu0
        %v8713 = vadd.f32 %v8402, %v8712
        %v8714 = vpop.f32.mrb[0].mxu0
        %v8715 = vadd.f32 %v8404, %v8714
        %v8716 = vand.u32 %v274, 4294901760
        %v8717 = vsub.f32 %v274, %v8716
        %v8718 = vand.u32 %v8717, 4294901760
        %8719 = vmatprep.mubr.f32.mxu0 %v8718
        %v8720 = vand.u32 %v273, 4294901760
        %v8721 = vsub.f32 %v273, %v8720
        %v8722 = vand.u32 %v8721, 4294901760
        %8723 = vmatmul.mubr.f32.gmra.mrb[0].mxu0 %v8722
        %v8724 = vpop.f32.mrb[0].mxu0
        %v8725 = vadd.f32 %v8412, %v8724
        %v8726 = vpop.f32.mrb[0].mxu0
        %v8727 = vadd.f32 %v8414, %v8726
        %v8728 = vand.u32 %v282, 4294901760
        %v8729 = vsub.f32 %v282, %v8728
        %v8730 = vand.u32 %v8729, 4294901760
        %8731 = vmatprep.mubr.f32.mxu0 %v8730
        %v8732 = vand.u32 %v281, 4294901760
        %v8733 = vsub.f32 %v281, %v8732
        %v8734 = vand.u32 %v8733, 4294901760
        %8735 = vmatmul.mubr.f32.gmra.mrb[0].mxu0 %v8734
        %v8736 = vpop.f32.mrb[0].mxu0
        %v8737 = vadd.f32 %v8422, %v8736
        %v8738 = vpop.f32.mrb[0].mxu0
        %v8739 = vadd.f32 %v8424, %v8738
        %v8740 = vand.u32 %v290, 4294901760
        %v8741 = vsub.f32 %v290, %v8740
        %v8742 = vand.u32 %v8741, 4294901760
        %8743 = vmatprep.mubr.f32.mxu0 %v8742
        %v8744 = vand.u32 %v289, 4294901760
        %v8745 = vsub.f32 %v289, %v8744
        %v8746 = vand.u32 %v8745, 4294901760
        %8747 = vmatmul.mubr.f32.gmra.mrb[0].mxu0 %v8746
        %v8748 = vpop.f32.mrb[0].mxu0
        %v8749 = vadd.f32 %v8432, %v8748
        %v8750 = vpop.f32.mrb[0].mxu0
        %v8751 = vadd.f32 %v8434, %v8750
        %v8752 = vand.u32 %v298, 4294901760
        %v8753 = vsub.f32 %v298, %v8752
        %v8754 = vand.u32 %v8753, 4294901760
        %8755 = vmatprep.mubr.f32.mxu0 %v8754
        %v8756 = vand.u32 %v297, 4294901760
        %v8757 = vsub.f32 %v297, %v8756
        %v8758 = vand.u32 %v8757, 4294901760
        %8759 = vmatmul.mubr.f32.gmra.mrb[0].mxu0 %v8758
        %v8760 = vpop.f32.mrb[0].mxu0
        %v8761 = vadd.f32 %v8442, %v8760
        %v8762 = vpop.f32.mrb[0].mxu0
        %v8763 = vadd.f32 %v8444, %v8762
        %v8764 = vand.u32 %v306, 4294901760
        %v8765 = vsub.f32 %v306, %v8764
        %v8766 = vand.u32 %v8765, 4294901760
        %8767 = vmatprep.mubr.f32.mxu0 %v8766
        %v8768 = vand.u32 %v305, 4294901760
        %v8769 = vsub.f32 %v305, %v8768
        %v8770 = vand.u32 %v8769, 4294901760
        %8771 = vmatmul.mubr.f32.gmra.mrb[0].mxu0 %v8770
        %v8772 = vpop.f32.mrb[0].mxu0
        %v8773 = vadd.f32 %v8452, %v8772
        %v8774 = vpop.f32.mrb[0].mxu0
        %v8775 = vadd.f32 %v8454, %v8774
        %8776 = vdwg.mxu0
        %v8777 = vand.u32 %v500, 4294901760
        %v8778 = vsub.f32 %v500, %v8777
        %v8779 = vand.u32 %v8778, 4294901760
        %8780 = vmatprep.subr.mxu0 %v8779
        %v8781 = vand.u32 %v499, 4294901760
        %v8782 = vsub.f32 %v499, %v8781
        %v8783 = vand.u32 %v8782, 4294901760
        %8784 = vmatpush1.msra.mxu0 %v8783
        %v8785 = vand.u32 %v502, 4294901760
        %v8786 = vsub.f32 %v502, %v8785
        %v8787 = vand.u32 %v8786, 4294901760
        %8788 = vmatprep.subr.mxu0 %v8787
        %v8789 = vand.u32 %v501, 4294901760
        %v8790 = vsub.f32 %v501, %v8789
        %v8791 = vand.u32 %v8790, 4294901760
        %8792 = vmatpush1.msra.mxu0 %v8791
        %v8793 = vand.u32 %v504, 4294901760
        %v8794 = vsub.f32 %v504, %v8793
        %v8795 = vand.u32 %v8794, 4294901760
        %8796 = vmatprep.subr.mxu0 %v8795
        %v8797 = vand.u32 %v503, 4294901760
        %v8798 = vsub.f32 %v503, %v8797
        %v8799 = vand.u32 %v8798, 4294901760
        %8800 = vmatpush1.msra.mxu0 %v8799
        %v8801 = vand.u32 %v506, 4294901760
        %v8802 = vsub.f32 %v506, %v8801
        %v8803 = vand.u32 %v8802, 4294901760
        %8804 = vmatprep.subr.mxu0 %v8803
        %v8805 = vand.u32 %v505, 4294901760
        %v8806 = vsub.f32 %v505, %v8805
        %v8807 = vand.u32 %v8806, 4294901760
        %8808 = vmatpush1.msra.mxu0 %v8807
        %v8809 = vand.u32 %v508, 4294901760
        %v8810 = vsub.f32 %v508, %v8809
        %v8811 = vand.u32 %v8810, 4294901760
        %8812 = vmatprep.subr.mxu0 %v8811
        %v8813 = vand.u32 %v507, 4294901760
        %v8814 = vsub.f32 %v507, %v8813
        %v8815 = vand.u32 %v8814, 4294901760
        %8816 = vmatpush1.msra.mxu0 %v8815
        %v8817 = vand.u32 %v510, 4294901760
        %v8818 = vsub.f32 %v510, %v8817
        %v8819 = vand.u32 %v8818, 4294901760
        %8820 = vmatprep.subr.mxu0 %v8819
        %v8821 = vand.u32 %v509, 4294901760
        %v8822 = vsub.f32 %v509, %v8821
        %v8823 = vand.u32 %v8822, 4294901760
        %8824 = vmatpush1.msra.mxu0 %v8823
        %v8825 = vand.u32 %v512, 4294901760
        %v8826 = vsub.f32 %v512, %v8825
        %v8827 = vand.u32 %v8826, 4294901760
        %8828 = vmatprep.subr.mxu0 %v8827
        %v8829 = vand.u32 %v511, 4294901760
        %v8830 = vsub.f32 %v511, %v8829
        %v8831 = vand.u32 %v8830, 4294901760
        %8832 = vmatpush1.msra.mxu0 %v8831
        %v8833 = vand.u32 %v514, 4294901760
        %v8834 = vsub.f32 %v514, %v8833
        %v8835 = vand.u32 %v8834, 4294901760
        %8836 = vmatprep.subr.mxu0 %v8835
        %v8837 = vand.u32 %v513, 4294901760
        %v8838 = vsub.f32 %v513, %v8837
        %v8839 = vand.u32 %v8838, 4294901760
        %8840 = vmatpush1.msra.mxu0 %v8839
        %v8841 = vand.u32 %v516, 4294901760
        %v8842 = vsub.f32 %v516, %v8841
        %v8843 = vand.u32 %v8842, 4294901760
        %8844 = vmatprep.subr.mxu0 %v8843
        %v8845 = vand.u32 %v515, 4294901760
        %v8846 = vsub.f32 %v515, %v8845
        %v8847 = vand.u32 %v8846, 4294901760
        %8848 = vmatpush1.msra.mxu0 %v8847
        %v8849 = vand.u32 %v518, 4294901760
        %v8850 = vsub.f32 %v518, %v8849
        %v8851 = vand.u32 %v8850, 4294901760
        %8852 = vmatprep.subr.mxu0 %v8851
        %v8853 = vand.u32 %v517, 4294901760
        %v8854 = vsub.f32 %v517, %v8853
        %v8855 = vand.u32 %v8854, 4294901760
        %8856 = vmatpush1.msra.mxu0 %v8855
        %v8857 = vand.u32 %v520, 4294901760
        %v8858 = vsub.f32 %v520, %v8857
        %v8859 = vand.u32 %v8858, 4294901760
        %8860 = vmatprep.subr.mxu0 %v8859
        %v8861 = vand.u32 %v519, 4294901760
        %v8862 = vsub.f32 %v519, %v8861
        %v8863 = vand.u32 %v8862, 4294901760
        %8864 = vmatpush1.msra.mxu0 %v8863
        %v8865 = vand.u32 %v522, 4294901760
        %v8866 = vsub.f32 %v522, %v8865
        %v8867 = vand.u32 %v8866, 4294901760
        %8868 = vmatprep.subr.mxu0 %v8867
        %v8869 = vand.u32 %v521, 4294901760
        %v8870 = vsub.f32 %v521, %v8869
        %v8871 = vand.u32 %v8870, 4294901760
        %8872 = vmatpush1.msra.mxu0 %v8871
        %v8873 = vand.u32 %v524, 4294901760
        %v8874 = vsub.f32 %v524, %v8873
        %v8875 = vand.u32 %v8874, 4294901760
        %8876 = vmatprep.subr.mxu0 %v8875
        %v8877 = vand.u32 %v523, 4294901760
        %v8878 = vsub.f32 %v523, %v8877
        %v8879 = vand.u32 %v8878, 4294901760
        %8880 = vmatpush1.msra.mxu0 %v8879
        %v8881 = vand.u32 %v526, 4294901760
        %v8882 = vsub.f32 %v526, %v8881
        %v8883 = vand.u32 %v8882, 4294901760
        %8884 = vmatprep.subr.mxu0 %v8883
        %v8885 = vand.u32 %v525, 4294901760
        %v8886 = vsub.f32 %v525, %v8885
        %v8887 = vand.u32 %v8886, 4294901760
        %8888 = vmatpush1.msra.mxu0 %v8887
        %v8889 = vand.u32 %v528, 4294901760
        %v8890 = vsub.f32 %v528, %v8889
        %v8891 = vand.u32 %v8890, 4294901760
        %8892 = vmatprep.subr.mxu0 %v8891
        %v8893 = vand.u32 %v527, 4294901760
        %v8894 = vsub.f32 %v527, %v8893
        %v8895 = vand.u32 %v8894, 4294901760
        %8896 = vmatpush1.msra.mxu0 %v8895
        %v8897 = vand.u32 %v530, 4294901760
        %v8898 = vsub.f32 %v530, %v8897
        %v8899 = vand.u32 %v8898, 4294901760
        %8900 = vmatprep.subr.mxu0 %v8899
        %v8901 = vand.u32 %v529, 4294901760
        %v8902 = vsub.f32 %v529, %v8901
        %v8903 = vand.u32 %v8902, 4294901760
        %8904 = vmatpush1.msra.mxu0 %v8903
        %v8905 = vand.u32 %v532, 4294901760
        %v8906 = vsub.f32 %v532, %v8905
        %v8907 = vand.u32 %v8906, 4294901760
        %8908 = vmatprep.subr.mxu0 %v8907
        %v8909 = vand.u32 %v531, 4294901760
        %v8910 = vsub.f32 %v531, %v8909
        %v8911 = vand.u32 %v8910, 4294901760
        %8912 = vmatpush1.msra.mxu0 %v8911
        %v8913 = vand.u32 %v534, 4294901760
        %v8914 = vsub.f32 %v534, %v8913
        %v8915 = vand.u32 %v8914, 4294901760
        %8916 = vmatprep.subr.mxu0 %v8915
        %v8917 = vand.u32 %v533, 4294901760
        %v8918 = vsub.f32 %v533, %v8917
        %v8919 = vand.u32 %v8918, 4294901760
        %8920 = vmatpush1.msra.mxu0 %v8919
        %v8921 = vand.u32 %v536, 4294901760
        %v8922 = vsub.f32 %v536, %v8921
        %v8923 = vand.u32 %v8922, 4294901760
        %8924 = vmatprep.subr.mxu0 %v8923
        %v8925 = vand.u32 %v535, 4294901760
        %v8926 = vsub.f32 %v535, %v8925
        %v8927 = vand.u32 %v8926, 4294901760
        %8928 = vmatpush1.msra.mxu0 %v8927
        %v8929 = vand.u32 %v538, 4294901760
        %v8930 = vsub.f32 %v538, %v8929
        %v8931 = vand.u32 %v8930, 4294901760
        %8932 = vmatprep.subr.mxu0 %v8931
        %v8933 = vand.u32 %v537, 4294901760
        %v8934 = vsub.f32 %v537, %v8933
        %v8935 = vand.u32 %v8934, 4294901760
        %8936 = vmatpush1.msra.mxu0 %v8935
        %v8937 = vand.u32 %v540, 4294901760
        %v8938 = vsub.f32 %v540, %v8937
        %v8939 = vand.u32 %v8938, 4294901760
        %8940 = vmatprep.subr.mxu0 %v8939
        %v8941 = vand.u32 %v539, 4294901760
        %v8942 = vsub.f32 %v539, %v8941
        %v8943 = vand.u32 %v8942, 4294901760
        %8944 = vmatpush1.msra.mxu0 %v8943
        %v8945 = vand.u32 %v542, 4294901760
        %v8946 = vsub.f32 %v542, %v8945
        %v8947 = vand.u32 %v8946, 4294901760
        %8948 = vmatprep.subr.mxu0 %v8947
        %v8949 = vand.u32 %v541, 4294901760
        %v8950 = vsub.f32 %v541, %v8949
        %v8951 = vand.u32 %v8950, 4294901760
        %8952 = vmatpush1.msra.mxu0 %v8951
        %v8953 = vand.u32 %v544, 4294901760
        %v8954 = vsub.f32 %v544, %v8953
        %v8955 = vand.u32 %v8954, 4294901760
        %8956 = vmatprep.subr.mxu0 %v8955
        %v8957 = vand.u32 %v543, 4294901760
        %v8958 = vsub.f32 %v543, %v8957
        %v8959 = vand.u32 %v8958, 4294901760
        %8960 = vmatpush1.msra.mxu0 %v8959
        %v8961 = vand.u32 %v546, 4294901760
        %v8962 = vsub.f32 %v546, %v8961
        %v8963 = vand.u32 %v8962, 4294901760
        %8964 = vmatprep.subr.mxu0 %v8963
        %v8965 = vand.u32 %v545, 4294901760
        %v8966 = vsub.f32 %v545, %v8965
        %v8967 = vand.u32 %v8966, 4294901760
        %8968 = vmatpush1.msra.mxu0 %v8967
        %v8969 = vand.u32 %v548, 4294901760
        %v8970 = vsub.f32 %v548, %v8969
        %v8971 = vand.u32 %v8970, 4294901760
        %8972 = vmatprep.subr.mxu0 %v8971
        %v8973 = vand.u32 %v547, 4294901760
        %v8974 = vsub.f32 %v547, %v8973
        %v8975 = vand.u32 %v8974, 4294901760
        %8976 = vmatpush1.msra.mxu0 %v8975
        %v8977 = vand.u32 %v550, 4294901760
        %v8978 = vsub.f32 %v550, %v8977
        %v8979 = vand.u32 %v8978, 4294901760
        %8980 = vmatprep.subr.mxu0 %v8979
        %v8981 = vand.u32 %v549, 4294901760
        %v8982 = vsub.f32 %v549, %v8981
        %v8983 = vand.u32 %v8982, 4294901760
        %8984 = vmatpush1.msra.mxu0 %v8983
        %v8985 = vand.u32 %v552, 4294901760
        %v8986 = vsub.f32 %v552, %v8985
        %v8987 = vand.u32 %v8986, 4294901760
        %8988 = vmatprep.subr.mxu0 %v8987
        %v8989 = vand.u32 %v551, 4294901760
        %v8990 = vsub.f32 %v551, %v8989
        %v8991 = vand.u32 %v8990, 4294901760
        %8992 = vmatpush1.msra.mxu0 %v8991
        %v8993 = vand.u32 %v554, 4294901760
        %v8994 = vsub.f32 %v554, %v8993
        %v8995 = vand.u32 %v8994, 4294901760
        %8996 = vmatprep.subr.mxu0 %v8995
        %v8997 = vand.u32 %v553, 4294901760
        %v8998 = vsub.f32 %v553, %v8997
        %v8999 = vand.u32 %v8998, 4294901760
        %9000 = vmatpush1.msra.mxu0 %v8999
        %v9001 = vand.u32 %v556, 4294901760
        %v9002 = vsub.f32 %v556, %v9001
        %v9003 = vand.u32 %v9002, 4294901760
        %9004 = vmatprep.subr.mxu0 %v9003
        %v9005 = vand.u32 %v555, 4294901760
        %v9006 = vsub.f32 %v555, %v9005
        %v9007 = vand.u32 %v9006, 4294901760
        %9008 = vmatpush1.msra.mxu0 %v9007
        %v9009 = vand.u32 %v558, 4294901760
        %v9010 = vsub.f32 %v558, %v9009
        %v9011 = vand.u32 %v9010, 4294901760
        %9012 = vmatprep.subr.mxu0 %v9011
        %v9013 = vand.u32 %v557, 4294901760
        %v9014 = vsub.f32 %v557, %v9013
        %v9015 = vand.u32 %v9014, 4294901760
        %9016 = vmatpush1.msra.mxu0 %v9015
        %v9017 = vand.u32 %v560, 4294901760
        %v9018 = vsub.f32 %v560, %v9017
        %v9019 = vand.u32 %v9018, 4294901760
        %9020 = vmatprep.subr.mxu0 %v9019
        %v9021 = vand.u32 %v559, 4294901760
        %v9022 = vsub.f32 %v559, %v9021
        %v9023 = vand.u32 %v9022, 4294901760
        %9024 = vmatpush1.msra.mxu0 %v9023
        %v9025 = vand.u32 %v562, 4294901760
        %v9026 = vsub.f32 %v562, %v9025
        %v9027 = vand.u32 %v9026, 4294901760
        %9028 = vmatprep.subr.mxu0 %v9027
        %v9029 = vand.u32 %v561, 4294901760
        %v9030 = vsub.f32 %v561, %v9029
        %v9031 = vand.u32 %v9030, 4294901760
        %9032 = vmatpush1.msra.mxu0 %v9031
        %v9033 = vand.u32 %v186, 4294901760
        %9034 = vmatprep.mubr.f32.mxu0 %v9033
        %v9035 = vand.u32 %v185, 4294901760
        %9036 = vmatmul.mubr.f32.gmra.mrb[0].mxu0 %v9035
        %v9037 = vpop.f32.mrb[0].mxu0
        %v9038 = vadd.f32 %v8593, %v9037
        %v9039 = vpop.f32.mrb[0].mxu0
        %v9040 = vadd.f32 %v8595, %v9039
        %v9041 = vand.u32 %v194, 4294901760
        %9042 = vmatprep.mubr.f32.mxu0 %v9041
        %v9043 = vand.u32 %v193, 4294901760
        %9044 = vmatmul.mubr.f32.gmra.mrb[0].mxu0 %v9043
        %v9045 = vpop.f32.mrb[0].mxu0
        %v9046 = vadd.f32 %v8605, %v9045
        %v9047 = vpop.f32.mrb[0].mxu0
        %v9048 = vadd.f32 %v8607, %v9047
        %v9049 = vand.u32 %v202, 4294901760
        %9050 = vmatprep.mubr.f32.mxu0 %v9049
        %v9051 = vand.u32 %v201, 4294901760
        %9052 = vmatmul.mubr.f32.gmra.mrb[0].mxu0 %v9051
        %v9053 = vpop.f32.mrb[0].mxu0
        %v9054 = vadd.f32 %v8617, %v9053
        %v9055 = vpop.f32.mrb[0].mxu0
        %v9056 = vadd.f32 %v8619, %v9055
        %v9057 = vand.u32 %v210, 4294901760
        %9058 = vmatprep.mubr.f32.mxu0 %v9057
        %v9059 = vand.u32 %v209, 4294901760
        %9060 = vmatmul.mubr.f32.gmra.mrb[0].mxu0 %v9059
        %v9061 = vpop.f32.mrb[0].mxu0
        %v9062 = vadd.f32 %v8629, %v9061
        %v9063 = vpop.f32.mrb[0].mxu0
        %v9064 = vadd.f32 %v8631, %v9063
        %v9065 = vand.u32 %v218, 4294901760
        %9066 = vmatprep.mubr.f32.mxu0 %v9065
        %v9067 = vand.u32 %v217, 4294901760
        %9068 = vmatmul.mubr.f32.gmra.mrb[0].mxu0 %v9067
        %v9069 = vpop.f32.mrb[0].mxu0
        %v9070 = vadd.f32 %v8641, %v9069
        %v9071 = vpop.f32.mrb[0].mxu0
        %v9072 = vadd.f32 %v8643, %v9071
        %v9073 = vand.u32 %v226, 4294901760
        %9074 = vmatprep.mubr.f32.mxu0 %v9073
        %v9075 = vand.u32 %v225, 4294901760
        %9076 = vmatmul.mubr.f32.gmra.mrb[0].mxu0 %v9075
        %v9077 = vpop.f32.mrb[0].mxu0
        %v9078 = vadd.f32 %v8653, %v9077
        %v9079 = vpop.f32.mrb[0].mxu0
        %v9080 = vadd.f32 %v8655, %v9079
        %v9081 = vand.u32 %v234, 4294901760
        %9082 = vmatprep.mubr.f32.mxu0 %v9081
        %v9083 = vand.u32 %v233, 4294901760
        %9084 = vmatmul.mubr.f32.gmra.mrb[0].mxu0 %v9083
        %v9085 = vpop.f32.mrb[0].mxu0
        %v9086 = vadd.f32 %v8665, %v9085
        %v9087 = vpop.f32.mrb[0].mxu0
        %v9088 = vadd.f32 %v8667, %v9087
        %v9089 = vand.u32 %v242, 4294901760
        %9090 = vmatprep.mubr.f32.mxu0 %v9089
        %v9091 = vand.u32 %v241, 4294901760
        %9092 = vmatmul.mubr.f32.gmra.mrb[0].mxu0 %v9091
        %v9093 = vpop.f32.mrb[0].mxu0
        %v9094 = vadd.f32 %v8677, %v9093
        %v9095 = vpop.f32.mrb[0].mxu0
        %v9096 = vadd.f32 %v8679, %v9095
        %v9097 = vand.u32 %v250, 4294901760
        %9098 = vmatprep.mubr.f32.mxu0 %v9097
        %v9099 = vand.u32 %v249, 4294901760
        %9100 = vmatmul.mubr.f32.gmra.mrb[0].mxu0 %v9099
        %v9101 = vpop.f32.mrb[0].mxu0
        %v9102 = vadd.f32 %v8689, %v9101
        %v9103 = vpop.f32.mrb[0].mxu0
        %v9104 = vadd.f32 %v8691, %v9103
        %v9105 = vand.u32 %v258, 4294901760
        %9106 = vmatprep.mubr.f32.mxu0 %v9105
        %v9107 = vand.u32 %v257, 4294901760
        %9108 = vmatmul.mubr.f32.gmra.mrb[0].mxu0 %v9107
        %v9109 = vpop.f32.mrb[0].mxu0
        %v9110 = vadd.f32 %v8701, %v9109
        %v9111 = vpop.f32.mrb[0].mxu0
        %v9112 = vadd.f32 %v8703, %v9111
        %v9113 = vand.u32 %v266, 4294901760
        %9114 = vmatprep.mubr.f32.mxu0 %v9113
        %v9115 = vand.u32 %v265, 4294901760
        %9116 = vmatmul.mubr.f32.gmra.mrb[0].mxu0 %v9115
        %v9117 = vpop.f32.mrb[0].mxu0
        %v9118 = vadd.f32 %v8713, %v9117
        %v9119 = vpop.f32.mrb[0].mxu0
        %v9120 = vadd.f32 %v8715, %v9119
        %v9121 = vand.u32 %v274, 4294901760
        %9122 = vmatprep.mubr.f32.mxu0 %v9121
        %v9123 = vand.u32 %v273, 4294901760
        %9124 = vmatmul.mubr.f32.gmra.mrb[0].mxu0 %v9123
        %v9125 = vpop.f32.mrb[0].mxu0
        %v9126 = vadd.f32 %v8725, %v9125
        %v9127 = vpop.f32.mrb[0].mxu0
        %v9128 = vadd.f32 %v8727, %v9127
        %v9129 = vand.u32 %v282, 4294901760
        %9130 = vmatprep.mubr.f32.mxu0 %v9129
        %v9131 = vand.u32 %v281, 4294901760
        %9132 = vmatmul.mubr.f32.gmra.mrb[0].mxu0 %v9131
        %v9133 = vpop.f32.mrb[0].mxu0
        %v9134 = vadd.f32 %v8737, %v9133
        %v9135 = vpop.f32.mrb[0].mxu0
        %v9136 = vadd.f32 %v8739, %v9135
        %v9137 = vand.u32 %v290, 4294901760
        %9138 = vmatprep.mubr.f32.mxu0 %v9137
        %v9139 = vand.u32 %v289, 4294901760
        %9140 = vmatmul.mubr.f32.gmra.mrb[0].mxu0 %v9139
        %v9141 = vpop.f32.mrb[0].mxu0
        %v9142 = vadd.f32 %v8749, %v9141
        %v9143 = vpop.f32.mrb[0].mxu0
        %v9144 = vadd.f32 %v8751, %v9143
        %v9145 = vand.u32 %v298, 4294901760
        %9146 = vmatprep.mubr.f32.mxu0 %v9145
        %v9147 = vand.u32 %v297, 4294901760
        %9148 = vmatmul.mubr.f32.gmra.mrb[0].mxu0 %v9147
        %v9149 = vpop.f32.mrb[0].mxu0
        %v9150 = vadd.f32 %v8761, %v9149
        %v9151 = vpop.f32.mrb[0].mxu0
        %v9152 = vadd.f32 %v8763, %v9151
        %v9153 = vand.u32 %v306, 4294901760
        %9154 = vmatprep.mubr.f32.mxu0 %v9153
        %v9155 = vand.u32 %v305, 4294901760
        %9156 = vmatmul.mubr.f32.gmra.mrb[0].mxu0 %v9155
        %v9157 = vpop.f32.mrb[0].mxu0
        %v9158 = vadd.f32 %v8773, %v9157
        %v9159 = vpop.f32.mrb[0].mxu0
        %v9160 = vadd.f32 %v8775, %v9159
        %9161 = vdwg.mxu0
        %v9162 = vand.u32 %v500, 4294901760
        %9163 = vmatprep.subr.mxu0 %v9162
        %v9164 = vand.u32 %v499, 4294901760
        %9165 = vmatpush1.msra.mxu0 %v9164
        %v9166 = vand.u32 %v502, 4294901760
        %9167 = vmatprep.subr.mxu0 %v9166
        %v9168 = vand.u32 %v501, 4294901760
        %9169 = vmatpush1.msra.mxu0 %v9168
        %v9170 = vand.u32 %v504, 4294901760
        %9171 = vmatprep.subr.mxu0 %v9170
        %v9172 = vand.u32 %v503, 4294901760
        %9173 = vmatpush1.msra.mxu0 %v9172
        %v9174 = vand.u32 %v506, 4294901760
        %9175 = vmatprep.subr.mxu0 %v9174
        %v9176 = vand.u32 %v505, 4294901760
        %9177 = vmatpush1.msra.mxu0 %v9176
        %v9178 = vand.u32 %v508, 4294901760
        %9179 = vmatprep.subr.mxu0 %v9178
        %v9180 = vand.u32 %v507, 4294901760
        %9181 = vmatpush1.msra.mxu0 %v9180
        %v9182 = vand.u32 %v510, 4294901760
        %9183 = vmatprep.subr.mxu0 %v9182
        %v9184 = vand.u32 %v509, 4294901760
        %9185 = vmatpush1.msra.mxu0 %v9184
        %v9186 = vand.u32 %v512, 4294901760
        %9187 = vmatprep.subr.mxu0 %v9186
        %v9188 = vand.u32 %v511, 4294901760
        %9189 = vmatpush1.msra.mxu0 %v9188
        %v9190 = vand.u32 %v514, 4294901760
        %9191 = vmatprep.subr.mxu0 %v9190
        %v9192 = vand.u32 %v513, 4294901760
        %9193 = vmatpush1.msra.mxu0 %v9192
        %v9194 = vand.u32 %v516, 4294901760
        %9195 = vmatprep.subr.mxu0 %v9194
        %v9196 = vand.u32 %v515, 4294901760
        %9197 = vmatpush1.msra.mxu0 %v9196
        %v9198 = vand.u32 %v518, 4294901760
        %9199 = vmatprep.subr.mxu0 %v9198
        %v9200 = vand.u32 %v517, 4294901760
        %9201 = vmatpush1.msra.mxu0 %v9200
        %v9202 = vand.u32 %v520, 4294901760
        %9203 = vmatprep.subr.mxu0 %v9202
        %v9204 = vand.u32 %v519, 4294901760
        %9205 = vmatpush1.msra.mxu0 %v9204
        %v9206 = vand.u32 %v522, 4294901760
        %9207 = vmatprep.subr.mxu0 %v9206
        %v9208 = vand.u32 %v521, 4294901760
        %9209 = vmatpush1.msra.mxu0 %v9208
        %v9210 = vand.u32 %v524, 4294901760
        %9211 = vmatprep.subr.mxu0 %v9210
        %v9212 = vand.u32 %v523, 4294901760
        %9213 = vmatpush1.msra.mxu0 %v9212
        %v9214 = vand.u32 %v526, 4294901760
        %9215 = vmatprep.subr.mxu0 %v9214
        %v9216 = vand.u32 %v525, 4294901760
        %9217 = vmatpush1.msra.mxu0 %v9216
        %v9218 = vand.u32 %v528, 4294901760
        %9219 = vmatprep.subr.mxu0 %v9218
        %v9220 = vand.u32 %v527, 4294901760
        %9221 = vmatpush1.msra.mxu0 %v9220
        %v9222 = vand.u32 %v530, 4294901760
        %9223 = vmatprep.subr.mxu0 %v9222
        %v9224 = vand.u32 %v529, 4294901760
        %9225 = vmatpush1.msra.mxu0 %v9224
        %v9226 = vand.u32 %v532, 4294901760
        %9227 = vmatprep.subr.mxu0 %v9226
        %v9228 = vand.u32 %v531, 4294901760
        %9229 = vmatpush1.msra.mxu0 %v9228
        %v9230 = vand.u32 %v534, 4294901760
        %9231 = vmatprep.subr.mxu0 %v9230
        %v9232 = vand.u32 %v533, 4294901760
        %9233 = vmatpush1.msra.mxu0 %v9232
        %v9234 = vand.u32 %v536, 4294901760
        %9235 = vmatprep.subr.mxu0 %v9234
        %v9236 = vand.u32 %v535, 4294901760
        %9237 = vmatpush1.msra.mxu0 %v9236
        %v9238 = vand.u32 %v538, 4294901760
        %9239 = vmatprep.subr.mxu0 %v9238
        %v9240 = vand.u32 %v537, 4294901760
        %9241 = vmatpush1.msra.mxu0 %v9240
        %v9242 = vand.u32 %v540, 4294901760
        %9243 = vmatprep.subr.mxu0 %v9242
        %v9244 = vand.u32 %v539, 4294901760
        %9245 = vmatpush1.msra.mxu0 %v9244
        %v9246 = vand.u32 %v542, 4294901760
        %9247 = vmatprep.subr.mxu0 %v9246
        %v9248 = vand.u32 %v541, 4294901760
        %9249 = vmatpush1.msra.mxu0 %v9248
        %v9250 = vand.u32 %v544, 4294901760
        %9251 = vmatprep.subr.mxu0 %v9250
        %v9252 = vand.u32 %v543, 4294901760
        %9253 = vmatpush1.msra.mxu0 %v9252
        %v9254 = vand.u32 %v546, 4294901760
        %9255 = vmatprep.subr.mxu0 %v9254
        %v9256 = vand.u32 %v545, 4294901760
        %9257 = vmatpush1.msra.mxu0 %v9256
        %v9258 = vand.u32 %v548, 4294901760
        %9259 = vmatprep.subr.mxu0 %v9258
        %v9260 = vand.u32 %v547, 4294901760
        %9261 = vmatpush1.msra.mxu0 %v9260
        %v9262 = vand.u32 %v550, 4294901760
        %9263 = vmatprep.subr.mxu0 %v9262
        %v9264 = vand.u32 %v549, 4294901760
        %9265 = vmatpush1.msra.mxu0 %v9264
        %v9266 = vand.u32 %v552, 4294901760
        %9267 = vmatprep.subr.mxu0 %v9266
        %v9268 = vand.u32 %v551, 4294901760
        %9269 = vmatpush1.msra.mxu0 %v9268
        %v9270 = vand.u32 %v554, 4294901760
        %9271 = vmatprep.subr.mxu0 %v9270
        %v9272 = vand.u32 %v553, 4294901760
        %9273 = vmatpush1.msra.mxu0 %v9272
        %v9274 = vand.u32 %v556, 4294901760
        %9275 = vmatprep.subr.mxu0 %v9274
        %v9276 = vand.u32 %v555, 4294901760
        %9277 = vmatpush1.msra.mxu0 %v9276
        %v9278 = vand.u32 %v558, 4294901760
        %9279 = vmatprep.subr.mxu0 %v9278
        %v9280 = vand.u32 %v557, 4294901760
        %9281 = vmatpush1.msra.mxu0 %v9280
        %v9282 = vand.u32 %v560, 4294901760
        %9283 = vmatprep.subr.mxu0 %v9282
        %v9284 = vand.u32 %v559, 4294901760
        %9285 = vmatpush1.msra.mxu0 %v9284
        %v9286 = vand.u32 %v562, 4294901760
        %9287 = vmatprep.subr.mxu0 %v9286
        %v9288 = vand.u32 %v561, 4294901760
        %9289 = vmatpush1.msra.mxu0 %v9288
        %v9290 = vand.u32 %v186, 4294901760
        %9291 = vmatprep.mubr.f32.mxu0 %v9290
        %v9292 = vand.u32 %v185, 4294901760
        %9293 = vmatmul.mubr.f32.gmra.mrb[0].mxu0 %v9292
        %v9294 = vpop.f32.mrb[0].mxu0
        %v9295 = vadd.f32 %v9038, %v9294
        %v9296 = vpop.f32.mrb[0].mxu0
        %v9297 = vadd.f32 %v9040, %v9296
        %v9298 = vand.u32 %v194, 4294901760
        %9299 = vmatprep.mubr.f32.mxu0 %v9298
        %v9300 = vand.u32 %v193, 4294901760
        %9301 = vmatmul.mubr.f32.gmra.mrb[0].mxu0 %v9300
        %v9302 = vpop.f32.mrb[0].mxu0
        %v9303 = vadd.f32 %v9046, %v9302
        %v9304 = vpop.f32.mrb[0].mxu0
        %v9305 = vadd.f32 %v9048, %v9304
        %v9306 = vand.u32 %v202, 4294901760
        %9307 = vmatprep.mubr.f32.mxu0 %v9306
        %v9308 = vand.u32 %v201, 4294901760
        %9309 = vmatmul.mubr.f32.gmra.mrb[0].mxu0 %v9308
        %v9310 = vpop.f32.mrb[0].mxu0
        %v9311 = vadd.f32 %v9054, %v9310
        %v9312 = vpop.f32.mrb[0].mxu0
        %v9313 = vadd.f32 %v9056, %v9312
        %v9314 = vand.u32 %v210, 4294901760
        %9315 = vmatprep.mubr.f32.mxu0 %v9314
        %v9316 = vand.u32 %v209, 4294901760
        %9317 = vmatmul.mubr.f32.gmra.mrb[0].mxu0 %v9316
        %v9318 = vpop.f32.mrb[0].mxu0
        %v9319 = vadd.f32 %v9062, %v9318
        %v9320 = vpop.f32.mrb[0].mxu0
        %v9321 = vadd.f32 %v9064, %v9320
        %v9322 = vand.u32 %v218, 4294901760
        %9323 = vmatprep.mubr.f32.mxu0 %v9322
        %v9324 = vand.u32 %v217, 4294901760
        %9325 = vmatmul.mubr.f32.gmra.mrb[0].mxu0 %v9324
        %v9326 = vpop.f32.mrb[0].mxu0
        %v9327 = vadd.f32 %v9070, %v9326
        %v9328 = vpop.f32.mrb[0].mxu0
        %v9329 = vadd.f32 %v9072, %v9328
        %v9330 = vand.u32 %v226, 4294901760
        %9331 = vmatprep.mubr.f32.mxu0 %v9330
        %v9332 = vand.u32 %v225, 4294901760
        %9333 = vmatmul.mubr.f32.gmra.mrb[0].mxu0 %v9332
        %v9334 = vpop.f32.mrb[0].mxu0
        %v9335 = vadd.f32 %v9078, %v9334
        %v9336 = vpop.f32.mrb[0].mxu0
        %v9337 = vadd.f32 %v9080, %v9336
        %v9338 = vand.u32 %v234, 4294901760
        %9339 = vmatprep.mubr.f32.mxu0 %v9338
        %v9340 = vand.u32 %v233, 4294901760
        %9341 = vmatmul.mubr.f32.gmra.mrb[0].mxu0 %v9340
        %v9342 = vpop.f32.mrb[0].mxu0
        %v9343 = vadd.f32 %v9086, %v9342
        %v9344 = vpop.f32.mrb[0].mxu0
        %v9345 = vadd.f32 %v9088, %v9344
        %v9346 = vand.u32 %v242, 4294901760
        %9347 = vmatprep.mubr.f32.mxu0 %v9346
        %v9348 = vand.u32 %v241, 4294901760
        %9349 = vmatmul.mubr.f32.gmra.mrb[0].mxu0 %v9348
        %v9350 = vpop.f32.mrb[0].mxu0
        %v9351 = vadd.f32 %v9094, %v9350
        %v9352 = vpop.f32.mrb[0].mxu0
        %v9353 = vadd.f32 %v9096, %v9352
        %v9354 = vand.u32 %v250, 4294901760
        %9355 = vmatprep.mubr.f32.mxu0 %v9354
        %v9356 = vand.u32 %v249, 4294901760
        %9357 = vmatmul.mubr.f32.gmra.mrb[0].mxu0 %v9356
        %v9358 = vpop.f32.mrb[0].mxu0
        %v9359 = vadd.f32 %v9102, %v9358
        %v9360 = vpop.f32.mrb[0].mxu0
        %v9361 = vadd.f32 %v9104, %v9360
        %v9362 = vand.u32 %v258, 4294901760
        %9363 = vmatprep.mubr.f32.mxu0 %v9362
        %v9364 = vand.u32 %v257, 4294901760
        %9365 = vmatmul.mubr.f32.gmra.mrb[0].mxu0 %v9364
        %v9366 = vpop.f32.mrb[0].mxu0
        %v9367 = vadd.f32 %v9110, %v9366
        %v9368 = vpop.f32.mrb[0].mxu0
        %v9369 = vadd.f32 %v9112, %v9368
        %v9370 = vand.u32 %v266, 4294901760
        %9371 = vmatprep.mubr.f32.mxu0 %v9370
        %v9372 = vand.u32 %v265, 4294901760
        %9373 = vmatmul.mubr.f32.gmra.mrb[0].mxu0 %v9372
        %v9374 = vpop.f32.mrb[0].mxu0
        %v9375 = vadd.f32 %v9118, %v9374
        %v9376 = vpop.f32.mrb[0].mxu0
        %v9377 = vadd.f32 %v9120, %v9376
        %v9378 = vand.u32 %v274, 4294901760
        %9379 = vmatprep.mubr.f32.mxu0 %v9378
        %v9380 = vand.u32 %v273, 4294901760
        %9381 = vmatmul.mubr.f32.gmra.mrb[0].mxu0 %v9380
        %v9382 = vpop.f32.mrb[0].mxu0
        %v9383 = vadd.f32 %v9126, %v9382
        %v9384 = vpop.f32.mrb[0].mxu0
        %v9385 = vadd.f32 %v9128, %v9384
        %v9386 = vand.u32 %v282, 4294901760
        %9387 = vmatprep.mubr.f32.mxu0 %v9386
        %v9388 = vand.u32 %v281, 4294901760
        %9389 = vmatmul.mubr.f32.gmra.mrb[0].mxu0 %v9388
        %v9390 = vpop.f32.mrb[0].mxu0
        %v9391 = vadd.f32 %v9134, %v9390
        %v9392 = vpop.f32.mrb[0].mxu0
        %v9393 = vadd.f32 %v9136, %v9392
        %v9394 = vand.u32 %v290, 4294901760
        %9395 = vmatprep.mubr.f32.mxu0 %v9394
        %v9396 = vand.u32 %v289, 4294901760
        %9397 = vmatmul.mubr.f32.gmra.mrb[0].mxu0 %v9396
        %v9398 = vpop.f32.mrb[0].mxu0
        %v9399 = vadd.f32 %v9142, %v9398
        %v9400 = vpop.f32.mrb[0].mxu0
        %v9401 = vadd.f32 %v9144, %v9400
        %v9402 = vand.u32 %v298, 4294901760
        %9403 = vmatprep.mubr.f32.mxu0 %v9402
        %v9404 = vand.u32 %v297, 4294901760
        %9405 = vmatmul.mubr.f32.gmra.mrb[0].mxu0 %v9404
        %v9406 = vpop.f32.mrb[0].mxu0
        %v9407 = vadd.f32 %v9150, %v9406
        %v9408 = vpop.f32.mrb[0].mxu0
        %v9409 = vadd.f32 %v9152, %v9408
        %v9410 = vand.u32 %v306, 4294901760
        %9411 = vmatprep.mubr.f32.mxu0 %v9410
        %v9412 = vand.u32 %v305, 4294901760
        %9413 = vmatmul.mubr.f32.gmra.mrb[0].mxu0 %v9412
        %v9414 = vpop.f32.mrb[0].mxu0
        %v9415 = vadd.f32 %v9158, %v9414
        %v9416 = vpop.f32.mrb[0].mxu0
        %v9417 = vadd.f32 %v9160, %v9416
        %9418 = vdwg.mxu0
        %v9419 = vmax.f32 %v9295, 0.0
        %v9420 = vmax.f32 %v9297, 0.0
        %v9421 = vmax.f32 %v9303, 0.0
        %v9422 = vmax.f32 %v9305, 0.0
        %v9423 = vmax.f32 %v9311, 0.0
        %v9424 = vmax.f32 %v9313, 0.0
        %v9425 = vmax.f32 %v9319, 0.0
        %v9426 = vmax.f32 %v9321, 0.0
        %v9427 = vmax.f32 %v9327, 0.0
        %v9428 = vmax.f32 %v9329, 0.0
        %v9429 = vmax.f32 %v9335, 0.0
        %v9430 = vmax.f32 %v9337, 0.0
        %v9431 = vmax.f32 %v9343, 0.0
        %v9432 = vmax.f32 %v9345, 0.0
        %v9433 = vmax.f32 %v9351, 0.0
        %v9434 = vmax.f32 %v9353, 0.0
        %v9435 = vmax.f32 %v9359, 0.0
        %v9436 = vmax.f32 %v9361, 0.0
        %v9437 = vmax.f32 %v9367, 0.0
        %v9438 = vmax.f32 %v9369, 0.0
        %v9439 = vmax.f32 %v9375, 0.0
        %v9440 = vmax.f32 %v9377, 0.0
        %v9441 = vmax.f32 %v9383, 0.0
        %v9442 = vmax.f32 %v9385, 0.0
        %v9443 = vmax.f32 %v9391, 0.0
        %v9444 = vmax.f32 %v9393, 0.0
        %v9445 = vmax.f32 %v9399, 0.0
        %v9446 = vmax.f32 %v9401, 0.0
        %v9447 = vmax.f32 %v9407, 0.0
        %v9448 = vmax.f32 %v9409, 0.0
        %v9449 = vmax.f32 %v9415, 0.0
        %v9450 = vmax.f32 %v9417, 0.0
        %v9451 = vrsqrt.pop %v9419
        %v9452 = vmul.f32 %v9419, %v9451
        %vm9453 = vcmp.eq.f32.partialorder %v9419, inf
        %v9454 = vsel %vm9453, %v9419, %v9452
        %vm9455 = vcmp.eq.f32.partialorder %v9419, 0.0
        %v9456 = vand.u32 %v9419, 2147483648
        %v9457 = vsel %vm9455, %v9456, %v9454
        %v9458 = vrsqrt.pop %v9420
        %v9459 = vmul.f32 %v9420, %v9458
        %vm9460 = vcmp.eq.f32.partialorder %v9420, inf
        %v9461 = vsel %vm9460, %v9420, %v9459
        %vm9462 = vcmp.eq.f32.partialorder %v9420, 0.0
        %v9463 = vand.u32 %v9420, 2147483648
        %v9464 = vsel %vm9462, %v9463, %v9461
        %v9465 = vrsqrt.pop %v9421
        %v9466 = vmul.f32 %v9421, %v9465
        %vm9467 = vcmp.eq.f32.partialorder %v9421, inf
        %v9468 = vsel %vm9467, %v9421, %v9466
        %vm9469 = vcmp.eq.f32.partialorder %v9421, 0.0
        %v9470 = vand.u32 %v9421, 2147483648
        %v9471 = vsel %vm9469, %v9470, %v9468
        %v9472 = vrsqrt.pop %v9422
        %v9473 = vmul.f32 %v9422, %v9472
        %vm9474 = vcmp.eq.f32.partialorder %v9422, inf
        %v9475 = vsel %vm9474, %v9422, %v9473
        %vm9476 = vcmp.eq.f32.partialorder %v9422, 0.0
        %v9477 = vand.u32 %v9422, 2147483648
        %v9478 = vsel %vm9476, %v9477, %v9475
        %v9479 = vrsqrt.pop %v9423
        %v9480 = vmul.f32 %v9423, %v9479
        %vm9481 = vcmp.eq.f32.partialorder %v9423, inf
        %v9482 = vsel %vm9481, %v9423, %v9480
        %vm9483 = vcmp.eq.f32.partialorder %v9423, 0.0
        %v9484 = vand.u32 %v9423, 2147483648
        %v9485 = vsel %vm9483, %v9484, %v9482
        %v9486 = vrsqrt.pop %v9424
        %v9487 = vmul.f32 %v9424, %v9486
        %vm9488 = vcmp.eq.f32.partialorder %v9424, inf
        %v9489 = vsel %vm9488, %v9424, %v9487
        %vm9490 = vcmp.eq.f32.partialorder %v9424, 0.0
        %v9491 = vand.u32 %v9424, 2147483648
        %v9492 = vsel %vm9490, %v9491, %v9489
        %v9493 = vrsqrt.pop %v9425
        %v9494 = vmul.f32 %v9425, %v9493
        %vm9495 = vcmp.eq.f32.partialorder %v9425, inf
        %v9496 = vsel %vm9495, %v9425, %v9494
        %vm9497 = vcmp.eq.f32.partialorder %v9425, 0.0
        %v9498 = vand.u32 %v9425, 2147483648
        %v9499 = vsel %vm9497, %v9498, %v9496
        %v9500 = vrsqrt.pop %v9426
        %v9501 = vmul.f32 %v9426, %v9500
        %vm9502 = vcmp.eq.f32.partialorder %v9426, inf
        %v9503 = vsel %vm9502, %v9426, %v9501
        %vm9504 = vcmp.eq.f32.partialorder %v9426, 0.0
        %v9505 = vand.u32 %v9426, 2147483648
        %v9506 = vsel %vm9504, %v9505, %v9503
        %v9507 = vrsqrt.pop %v9427
        %v9508 = vmul.f32 %v9427, %v9507
        %vm9509 = vcmp.eq.f32.partialorder %v9427, inf
        %v9510 = vsel %vm9509, %v9427, %v9508
        %vm9511 = vcmp.eq.f32.partialorder %v9427, 0.0
        %v9512 = vand.u32 %v9427, 2147483648
        %v9513 = vsel %vm9511, %v9512, %v9510
        %v9514 = vrsqrt.pop %v9428
        %v9515 = vmul.f32 %v9428, %v9514
        %vm9516 = vcmp.eq.f32.partialorder %v9428, inf
        %v9517 = vsel %vm9516, %v9428, %v9515
        %vm9518 = vcmp.eq.f32.partialorder %v9428, 0.0
        %v9519 = vand.u32 %v9428, 2147483648
        %v9520 = vsel %vm9518, %v9519, %v9517
        %v9521 = vrsqrt.pop %v9429
        %v9522 = vmul.f32 %v9429, %v9521
        %vm9523 = vcmp.eq.f32.partialorder %v9429, inf
        %v9524 = vsel %vm9523, %v9429, %v9522
        %vm9525 = vcmp.eq.f32.partialorder %v9429, 0.0
        %v9526 = vand.u32 %v9429, 2147483648
        %v9527 = vsel %vm9525, %v9526, %v9524
        %v9528 = vrsqrt.pop %v9430
        %v9529 = vmul.f32 %v9430, %v9528
        %vm9530 = vcmp.eq.f32.partialorder %v9430, inf
        %v9531 = vsel %vm9530, %v9430, %v9529
        %vm9532 = vcmp.eq.f32.partialorder %v9430, 0.0
        %v9533 = vand.u32 %v9430, 2147483648
        %v9534 = vsel %vm9532, %v9533, %v9531
        %v9535 = vrsqrt.pop %v9431
        %v9536 = vmul.f32 %v9431, %v9535
        %vm9537 = vcmp.eq.f32.partialorder %v9431, inf
        %v9538 = vsel %vm9537, %v9431, %v9536
        %vm9539 = vcmp.eq.f32.partialorder %v9431, 0.0
        %v9540 = vand.u32 %v9431, 2147483648
        %v9541 = vsel %vm9539, %v9540, %v9538
        %v9542 = vrsqrt.pop %v9432
        %v9543 = vmul.f32 %v9432, %v9542
        %vm9544 = vcmp.eq.f32.partialorder %v9432, inf
        %v9545 = vsel %vm9544, %v9432, %v9543
        %vm9546 = vcmp.eq.f32.partialorder %v9432, 0.0
        %v9547 = vand.u32 %v9432, 2147483648
        %v9548 = vsel %vm9546, %v9547, %v9545
        %v9549 = vrsqrt.pop %v9433
        %v9550 = vmul.f32 %v9433, %v9549
        %vm9551 = vcmp.eq.f32.partialorder %v9433, inf
        %v9552 = vsel %vm9551, %v9433, %v9550
        %vm9553 = vcmp.eq.f32.partialorder %v9433, 0.0
        %v9554 = vand.u32 %v9433, 2147483648
        %v9555 = vsel %vm9553, %v9554, %v9552
        %v9556 = vrsqrt.pop %v9434
        %v9557 = vmul.f32 %v9434, %v9556
        %vm9558 = vcmp.eq.f32.partialorder %v9434, inf
        %v9559 = vsel %vm9558, %v9434, %v9557
        %vm9560 = vcmp.eq.f32.partialorder %v9434, 0.0
        %v9561 = vand.u32 %v9434, 2147483648
        %v9562 = vsel %vm9560, %v9561, %v9559
        %v9563 = vrsqrt.pop %v9435
        %v9564 = vmul.f32 %v9435, %v9563
        %vm9565 = vcmp.eq.f32.partialorder %v9435, inf
        %v9566 = vsel %vm9565, %v9435, %v9564
        %vm9567 = vcmp.eq.f32.partialorder %v9435, 0.0
        %v9568 = vand.u32 %v9435, 2147483648
        %v9569 = vsel %vm9567, %v9568, %v9566
        %v9570 = vrsqrt.pop %v9436
        %v9571 = vmul.f32 %v9436, %v9570
        %vm9572 = vcmp.eq.f32.partialorder %v9436, inf
        %v9573 = vsel %vm9572, %v9436, %v9571
        %vm9574 = vcmp.eq.f32.partialorder %v9436, 0.0
        %v9575 = vand.u32 %v9436, 2147483648
        %v9576 = vsel %vm9574, %v9575, %v9573
        %v9577 = vrsqrt.pop %v9437
        %v9578 = vmul.f32 %v9437, %v9577
        %vm9579 = vcmp.eq.f32.partialorder %v9437, inf
        %v9580 = vsel %vm9579, %v9437, %v9578
        %vm9581 = vcmp.eq.f32.partialorder %v9437, 0.0
        %v9582 = vand.u32 %v9437, 2147483648
        %v9583 = vsel %vm9581, %v9582, %v9580
        %v9584 = vrsqrt.pop %v9438
        %v9585 = vmul.f32 %v9438, %v9584
        %vm9586 = vcmp.eq.f32.partialorder %v9438, inf
        %v9587 = vsel %vm9586, %v9438, %v9585
        %vm9588 = vcmp.eq.f32.partialorder %v9438, 0.0
        %v9589 = vand.u32 %v9438, 2147483648
        %v9590 = vsel %vm9588, %v9589, %v9587
        %v9591 = vrsqrt.pop %v9439
        %v9592 = vmul.f32 %v9439, %v9591
        %vm9593 = vcmp.eq.f32.partialorder %v9439, inf
        %v9594 = vsel %vm9593, %v9439, %v9592
        %vm9595 = vcmp.eq.f32.partialorder %v9439, 0.0
        %v9596 = vand.u32 %v9439, 2147483648
        %v9597 = vsel %vm9595, %v9596, %v9594
        %v9598 = vrsqrt.pop %v9440
        %v9599 = vmul.f32 %v9440, %v9598
        %vm9600 = vcmp.eq.f32.partialorder %v9440, inf
        %v9601 = vsel %vm9600, %v9440, %v9599
        %vm9602 = vcmp.eq.f32.partialorder %v9440, 0.0
        %v9603 = vand.u32 %v9440, 2147483648
        %v9604 = vsel %vm9602, %v9603, %v9601
        %v9605 = vrsqrt.pop %v9441
        %v9606 = vmul.f32 %v9441, %v9605
        %vm9607 = vcmp.eq.f32.partialorder %v9441, inf
        %v9608 = vsel %vm9607, %v9441, %v9606
        %vm9609 = vcmp.eq.f32.partialorder %v9441, 0.0
        %v9610 = vand.u32 %v9441, 2147483648
        %v9611 = vsel %vm9609, %v9610, %v9608
        %v9612 = vrsqrt.pop %v9442
        %v9613 = vmul.f32 %v9442, %v9612
        %vm9614 = vcmp.eq.f32.partialorder %v9442, inf
        %v9615 = vsel %vm9614, %v9442, %v9613
        %vm9616 = vcmp.eq.f32.partialorder %v9442, 0.0
        %v9617 = vand.u32 %v9442, 2147483648
        %v9618 = vsel %vm9616, %v9617, %v9615
        %v9619 = vrsqrt.pop %v9443
        %v9620 = vmul.f32 %v9443, %v9619
        %vm9621 = vcmp.eq.f32.partialorder %v9443, inf
        %v9622 = vsel %vm9621, %v9443, %v9620
        %vm9623 = vcmp.eq.f32.partialorder %v9443, 0.0
        %v9624 = vand.u32 %v9443, 2147483648
        %v9625 = vsel %vm9623, %v9624, %v9622
        %v9626 = vrsqrt.pop %v9444
        %v9627 = vmul.f32 %v9444, %v9626
        %vm9628 = vcmp.eq.f32.partialorder %v9444, inf
        %v9629 = vsel %vm9628, %v9444, %v9627
        %vm9630 = vcmp.eq.f32.partialorder %v9444, 0.0
        %v9631 = vand.u32 %v9444, 2147483648
        %v9632 = vsel %vm9630, %v9631, %v9629
        %v9633 = vrsqrt.pop %v9445
        %v9634 = vmul.f32 %v9445, %v9633
        %vm9635 = vcmp.eq.f32.partialorder %v9445, inf
        %v9636 = vsel %vm9635, %v9445, %v9634
        %vm9637 = vcmp.eq.f32.partialorder %v9445, 0.0
        %v9638 = vand.u32 %v9445, 2147483648
        %v9639 = vsel %vm9637, %v9638, %v9636
        %v9640 = vrsqrt.pop %v9446
        %v9641 = vmul.f32 %v9446, %v9640
        %vm9642 = vcmp.eq.f32.partialorder %v9446, inf
        %v9643 = vsel %vm9642, %v9446, %v9641
        %vm9644 = vcmp.eq.f32.partialorder %v9446, 0.0
        %v9645 = vand.u32 %v9446, 2147483648
        %v9646 = vsel %vm9644, %v9645, %v9643
        %v9647 = vrsqrt.pop %v9447
        %v9648 = vmul.f32 %v9447, %v9647
        %vm9649 = vcmp.eq.f32.partialorder %v9447, inf
        %v9650 = vsel %vm9649, %v9447, %v9648
        %vm9651 = vcmp.eq.f32.partialorder %v9447, 0.0
        %v9652 = vand.u32 %v9447, 2147483648
        %v9653 = vsel %vm9651, %v9652, %v9650
        %v9654 = vrsqrt.pop %v9448
        %v9655 = vmul.f32 %v9448, %v9654
        %vm9656 = vcmp.eq.f32.partialorder %v9448, inf
        %v9657 = vsel %vm9656, %v9448, %v9655
        %vm9658 = vcmp.eq.f32.partialorder %v9448, 0.0
        %v9659 = vand.u32 %v9448, 2147483648
        %v9660 = vsel %vm9658, %v9659, %v9657
        %v9661 = vrsqrt.pop %v9449
        %v9662 = vmul.f32 %v9449, %v9661
        %vm9663 = vcmp.eq.f32.partialorder %v9449, inf
        %v9664 = vsel %vm9663, %v9449, %v9662
        %vm9665 = vcmp.eq.f32.partialorder %v9449, 0.0
        %v9666 = vand.u32 %v9449, 2147483648
        %v9667 = vsel %vm9665, %v9666, %v9664
        %v9668 = vrsqrt.pop %v9450
        %v9669 = vmul.f32 %v9450, %v9668
        %vm9670 = vcmp.eq.f32.partialorder %v9450, inf
        %v9671 = vsel %vm9670, %v9450, %v9669
        %vm9672 = vcmp.eq.f32.partialorder %v9450, 0.0
        %v9673 = vand.u32 %v9450, 2147483648
        %v9674 = vsel %vm9672, %v9673, %v9671
        %9675 = vst [vmem:[%s176] sm:$0xff] %v9457
        %9676 = vst [vmem:[%s176 + $0x8] sm:$0xff] %v9464
        %9677 = vst [vmem:[%s176 + $0x10] sm:$0xff] %v9471
        %9678 = vst [vmem:[%s176 + $0x18] sm:$0xff] %v9478
        %9679 = vst [vmem:[%s176 + $0x20] sm:$0xff] %v9485
        %9680 = vst [vmem:[%s176 + $0x28] sm:$0xff] %v9492
        %9681 = vst [vmem:[%s176 + $0x30] sm:$0xff] %v9499
        %9682 = vst [vmem:[%s176 + $0x38] sm:$0xff] %v9506
        %9683 = vst [vmem:[%s176 + $0x40] sm:$0xff] %v9513
        %9684 = vst [vmem:[%s176 + $0x48] sm:$0xff] %v9520
        %9685 = vst [vmem:[%s176 + $0x50] sm:$0xff] %v9527
        %9686 = vst [vmem:[%s176 + $0x58] sm:$0xff] %v9534
        %9687 = vst [vmem:[%s176 + $0x60] sm:$0xff] %v9541
        %9688 = vst [vmem:[%s176 + $0x68] sm:$0xff] %v9548
        %9689 = vst [vmem:[%s176 + $0x70] sm:$0xff] %v9555
        %9690 = vst [vmem:[%s176 + $0x78] sm:$0xff] %v9562
        %9691 = vst [vmem:[%s176 + $0x80] sm:$0xff] %v9569
        %9692 = vst [vmem:[%s176 + $0x88] sm:$0xff] %v9576
        %9693 = vst [vmem:[%s176 + $0x90] sm:$0xff] %v9583
        %9694 = vst [vmem:[%s176 + $0x98] sm:$0xff] %v9590
        %9695 = vst [vmem:[%s176 + $0xa0] sm:$0xff] %v9597
        %9696 = vst [vmem:[%s176 + $0xa8] sm:$0xff] %v9604
        %9697 = vst [vmem:[%s176 + $0xb0] sm:$0xff] %v9611
        %9698 = vst [vmem:[%s176 + $0xb8] sm:$0xff] %v9618
        %9699 = vst [vmem:[%s176 + $0xc0] sm:$0xff] %v9625
        %9700 = vst [vmem:[%s176 + $0xc8] sm:$0xff] %v9632
        %9701 = vst [vmem:[%s176 + $0xd0] sm:$0xff] %v9639
        %9702 = vst [vmem:[%s176 + $0xd8] sm:$0xff] %v9646
        %9703 = vst [vmem:[%s176 + $0xe0] sm:$0xff] %v9653
        %9704 = vst [vmem:[%s176 + $0xe8] sm:$0xff] %v9660
        %9705 = vst [vmem:[%s176 + $0xf0] sm:$0xff] %v9667
        %9706 = vst [vmem:[%s176 + $0xf8] sm:$0xff] %v9674
        %s9707 = sand.u32 %s75, 1
        %s9708 = scalar_lea.sflag [#allocation4], %s9707
        %s9709 = sand.u32 %s75, 1
        %s9710 = smul.addr %s9709, 256
        %s9711 = scalar_lea.vmem [#allocation7], %s9710
        // Predicated region
        $region37: #{tpu_custom_call.1} parent=27 // pred_check
          %p9712 = pneg %p85
        $region38: #{tpu_custom_call.1} parent=27 // pred_check_branch
          %9714 = sbr.rel (%p9712) target = $region40
        $region39: #{tpu_custom_call.1} parent=27 // pred_region
          %s9715 = smul.u32 2, %s20
          %s9717 = ssub.s32 4096, 4096
          %9718 = vsyncadd %s9708, %s9717
          %s9719 = smul.addr %s9715, 128
          %s9720 = scalar_lea.hbm %s2, %s9719
          %s9721 = sshll.u32 %s9711, 4
          %s9722 = int_to_ptr.vmem [resolvable:$true] %s9721
          %9727 = dma.vmem_to_hbm [thread:$0]  %s9722, 4096, %s9720, %s9708, 256, 1024, 16
        $region40: #{tpu_custom_call.1} parent=27 // pred_fallthru
          _
      $region28: #{tpu_custom_call.1} parent=5 // pred_fallthru
        _
      %p9728 = scmp.le.s32.totalorder 2, %s15
      // Predicated region
      $region41: #{tpu_custom_call.1} parent=5 // pred_check
        %p9729 = pneg %p9728
      $region42: #{tpu_custom_call.1} parent=5 // pred_check_branch
        %9731 = sbr.rel (%p9729) target = $region44
      $region43: #{tpu_custom_call.1} parent=5 // pred_region
        %s9732 = ssub.s32 %s15, 2
        // Predicated region
        $region45: #{tpu_custom_call.1} parent=43 // pred_check
          %p9733 = pneg %p91
        $region46: #{tpu_custom_call.1} parent=43 // pred_check_branch
          %9735 = sbr.rel (%p9733) target = $region48
        $region47: #{tpu_custom_call.1} parent=43 // pred_region
          %s9736 = sand.u32 %s76, 1
          %s9737 = scalar_lea.sflag [#allocation4], %s9736
          %s9738 = sand.u32 %s76, 1
          %s9739 = smul.addr %s9738, 256
          %s9740 = scalar_lea.vmem [#allocation7], %s9739
          %9741 = dma.done %s9737, 4096
        $region48: #{tpu_custom_call.1} parent=43 // pred_fallthru
          _
      $region44: #{tpu_custom_call.1} parent=5 // pred_fallthru
        _
    $region6: #{tpu_custom_call.1} parent=1 // loop_footer
      %s19 = sadd.s32 1, %s15
    $region7: #{tpu_custom_call.1} parent=1 // loop_footer_branch
      %14 = sbr.rel target = $region3
    $region8: #{tpu_custom_call.1} parent=1 // loop_exit
      _
    %9742 = vsyncpa [#allocation3], 1
    %s9743 = scalar_lea.sflag [#allocation3], 1
    %9744 = vsyncpa %s9743, 1
    %9745 = vsyncpa [#allocation6], 1
    %s9746 = scalar_lea.sflag [#allocation6], 1
    %9747 = vsyncpa %s9746, 1
    %9748 = vsyncpa [#allocation4], 1
    %s9749 = scalar_lea.sflag [#allocation4], 1
    %9750 = vsyncpa %s9749, 1

</llo_original>
